<compile_context>
chip_gen: v7x
topology: tpu7x:2x2x1
jax: 0.10.0
libtpu: 0.0.40
codegen_flags: <defaults>
</compile_context>

<pallas_src>
import functools

import numpy as np
import jax
import jax.numpy as jnp
from jax.experimental import pallas as pl
from jax.experimental.pallas import tpu as pltpu


# ---------------------------------------------------------------------------
# One-time weight preparation (hoisted out of the forward path)
# ---------------------------------------------------------------------------
def _pool_selectors(h, w, planes):
    """0/1 selection matrices used to compact the 2x2 pooled values.

    Ec: (w-1, w//2)              picks even columns of the column-pair max.
    Er: (planes*h//2, planes*h-1) picks even rows (within each stacked plane)
                                  of the row-pair max.
    """
    Ec = np.zeros((w - 1, w // 2), np.float32)
    Ec[2 * np.arange(w // 2), np.arange(w // 2)] = 1.0
    nk = planes * (h // 2)
    Er = np.zeros((nk, planes * h - 1), np.float32)
    Er[np.arange(nk), 2 * np.arange(nk)] = 1.0
    return jnp.asarray(Ec), jnp.asarray(Er)


def prepare_params(params):
    """PyTorch-layout params -> kernel-ready stacked matrices (done once)."""
    w1, b1, w2, b2, wf1, bf1, wf2, bf2 = [jnp.asarray(p, jnp.float32) for p in params]

    # conv1 as 5 shifted matmuls:
    #   y1_stack[co*24+i, j] = b1[co] + sum_dj (Bp[dj] @ x_pad[:, dj:dj+24])[co*24+i, j]
    # x_pad is the 28x28 image with its row (H) axis zero-padded to 32 (aligned K).
    co, i1, di, dj = np.meshgrid(np.arange(10), np.arange(24), np.arange(5),
                                 np.arange(5), indexing="ij")
    Bp = jnp.zeros((5, 240, 32), jnp.float32).at[
        dj.ravel(), (co * 24 + i1).ravel(), (i1 + di).ravel()
    ].set(w1[co.ravel(), 0, di.ravel(), dj.ravel()])
    b1c = jnp.repeat(b1, 24).reshape(240, 1)

    # conv2 as 5 shifted matmuls on the channel-stacked pooled planes:
    #   y2_stack[d*8+i, j] = b2[d] + sum_dj (Ap[dj] @ p1_stack[:, dj:dj+8])[d*8+i, j]
    d, i2, c, di2, dj2 = np.meshgrid(np.arange(20), np.arange(8), np.arange(10),
                                     np.arange(5), np.arange(5), indexing="ij")
    Ap = jnp.zeros((5, 160, 120), jnp.float32).at[
        dj2.ravel(), (d * 8 + i2).ravel(), (c * 12 + i2 + di2).ravel()
    ].set(w2[d.ravel(), c.ravel(), di2.ravel(), dj2.ravel()])
    b2c = jnp.repeat(b2, 8).reshape(160, 1)

    Ec1, Er1 = _pool_selectors(24, 24, 10)   # (23, 12), (120, 239)
    Ec2, Er2 = _pool_selectors(8, 8, 20)     # (7, 4),   (80, 159)

    # fc1 with the PyTorch channel-major flatten folded in:
    #   feat[(c*4+u)*4 + v] = p2_stack[c*4+u, v]  ->  h = bf1 + sum_v Wf1s[v] @ p2[:, v:v+1]
    Wf1s = jnp.transpose(wf1.reshape(50, 80, 4), (2, 0, 1))   # (4, 50, 80)
    bf1c = bf1.reshape(50, 1)
    bf2c = bf2.reshape(10, 1)

    return (Bp, b1c, Ec1, Er1, Ap, b2c, Ec2, Er2, Wf1s, bf1c, wf2, bf2c)


# ---------------------------------------------------------------------------
# Fused forward kernel: conv1 -> pool1 -> conv2 -> pool2 -> fc1 -> fc2
# ---------------------------------------------------------------------------
def _mnist_fused_kernel(x_ref, Bp_ref, b1_ref, Ec1_ref, Er1_ref,
                        Ap_ref, b2_ref, Ec2_ref, Er2_ref,
                        Wf1_ref, bf1_ref, wf2_ref, bf2_ref, o_ref, *, bt):
    f32 = jnp.float32
    for t in range(bt):                                   # images in this batch tile
        x = x_ref[t]                                      # (32, 28); rows 28..31 are zero pad

        # ---- conv1 (+bias) -> (240, 24); rows = co*24 + i, cols = j -------------
        y1 = b1_ref[...] + jnp.dot(Bp_ref[0], x[:, 0:24], preferred_element_type=f32)
        for dj in range(1, 5):
            y1 = y1 + jnp.dot(Bp_ref[dj], x[:, dj:dj + 24], preferred_element_type=f32)
        y1 = jnp.maximum(y1, 0.0)                         # relu

        # ---- maxpool 2x2 -> (120, 12) -------------------------------------------
        m = jnp.maximum(y1[:, :-1], y1[:, 1:])            # (240, 23) column-pair max
        m = jnp.dot(m, Ec1_ref[...], preferred_element_type=f32)    # (240, 12)
        m = jnp.maximum(m[:-1, :], m[1:, :])              # (239, 12) row-pair max
        p1 = jnp.dot(Er1_ref[...], m, preferred_element_type=f32)   # (120, 12)

        # ---- conv2 (+bias) -> (160, 8); rows = d*8 + i ---------------------------
        y2 = b2_ref[...] + jnp.dot(Ap_ref[0], p1[:, 0:8], preferred_element_type=f32)
        for dj in range(1, 5):
            y2 = y2 + jnp.dot(Ap_ref[dj], p1[:, dj:dj + 8], preferred_element_type=f32)
        y2 = jnp.maximum(y2, 0.0)                         # relu

        # ---- maxpool 2x2 -> (80, 4) ----------------------------------------------
        m = jnp.maximum(y2[:, :-1], y2[:, 1:])            # (160, 7)
        m = jnp.dot(m, Ec2_ref[...], preferred_element_type=f32)    # (160, 4)
        m = jnp.maximum(m[:-1, :], m[1:, :])              # (159, 4)
        p2 = jnp.dot(Er2_ref[...], m, preferred_element_type=f32)   # (80, 4)

        # ---- fc1 (+relu); channel-major flatten folded into 4 column matmuls ----
        h = bf1_ref[...]                                  # (50, 1)
        for v in range(4):
            h = h + jnp.dot(Wf1_ref[v], p2[:, v:v + 1], preferred_element_type=f32)
        h = jnp.maximum(h, 0.0)

        # ---- fc2 (+relu) ----------------------------------------------------------
        out = jnp.dot(wf2_ref[...], h, preferred_element_type=f32) + bf2_ref[...]
        o_ref[t] = jnp.maximum(out, 0.0)                  # (10, 1)


def mnist_cnn_forward(x_nchw, prepped, *, batch_tile=None):
    """x_nchw: (B, 1, 28, 28) float32 -> (B, 10)."""
    B = x_nchw.shape[0]
    assert x_nchw.shape[1:] == (1, 28, 28), x_nchw.shape
    if batch_tile is None:
        batch_tile = next(bt for bt in (8, 4, 2, 1) if B % bt == 0)
    bt = batch_tile
    assert B % bt == 0

    # Pad the H (contraction) axis 28 -> 32 once, outside the kernel.
    x = x_nchw.reshape(B, 28, 28).astype(jnp.float32)
    x = jnp.pad(x, ((0, 0), (0, 4), (0, 0)))              # (B, 32, 28)

    Bp, b1c, Ec1, Er1, Ap, b2c, Ec2, Er2, Wf1s, bf1c, wf2, bf2c = prepped

    def full(a):
        return pl.BlockSpec(a.shape, lambda b, _nd=a.ndim: (0,) * _nd)

    out = pl.pallas_call(
        functools.partial(_mnist_fused_kernel, bt=bt),
        out_shape=jax.ShapeDtypeStruct((B, 10, 1), jnp.float32),
        grid=(B // bt,),
        in_specs=[
            pl.BlockSpec((bt, 32, 28), lambda b: (b, 0, 0)),
            full(Bp), full(b1c), full(Ec1), full(Er1),
            full(Ap), full(b2c), full(Ec2), full(Er2),
            full(Wf1s), full(bf1c), full(wf2), full(bf2c),
        ],
        out_specs=pl.BlockSpec((bt, 10, 1), lambda b: (b, 0, 0)),
        compiler_params=pltpu.CompilerParams(
            dimension_semantics=("parallel",),
        ),
    )(x, Bp, b1c, Ec1, Er1, Ap, b2c, Ec2, Er2, Wf1s, bf1c, wf2, bf2c)
    return out.reshape(B, 10)


# ---------------------------------------------------------------------------
# Pure-JAX reference (independent formulation) for the correctness check
# ---------------------------------------------------------------------------
def reference_forward(x_nchw, params):
    w1, b1, w2, b2, wf1, bf1, wf2, bf2 = params
    hi = jax.lax.Precision.HIGHEST
    x = jnp.transpose(x_nchw, (0, 2, 3, 1)).astype(jnp.float32)   # NHWC

    def conv(a, w, b):
        out = jax.lax.conv_general_dilated(
            a, jnp.transpose(w, (2, 3, 1, 0)), (1, 1), "VALID",
            dimension_numbers=("NHWC", "HWIO", "NHWC"), precision=hi)
        return out + b

    def pool(y):
        n, hh, ww, cc = y.shape
        return jnp.max(y.reshape(n, hh // 2, 2, ww // 2, 2, cc), axis=(2, 4))

    y1 = pool(jax.nn.relu(conv(x, w1, b1)))
    y2 = pool(jax.nn.relu(conv(y1, w2, b2)))
    feat = jnp.transpose(y2, (0, 3, 1, 2)).reshape(y2.shape[0], -1)   # channel-major, like .view
    h = jax.nn.relu(jnp.dot(feat, wf1.T, precision=hi) + bf1)
    return jax.nn.relu(jnp.dot(h, wf2.T, precision=hi) + bf2)


def init_params(key):
    ks = jax.random.split(key, 8)
    scale = 0.1
    w1 = scale * jax.random.normal(ks[0], (10, 1, 5, 5), jnp.float32)
    b1 = scale * jax.random.normal(ks[1], (10,), jnp.float32)
    w2 = scale * jax.random.normal(ks[2], (20, 10, 5, 5), jnp.float32)
    b2 = scale * jax.random.normal(ks[3], (20,), jnp.float32)
    wf1 = scale * jax.random.normal(ks[4], (50, 320), jnp.float32)
    bf1 = scale * jax.random.normal(ks[5], (50,), jnp.float32)
    wf2 = scale * jax.random.normal(ks[6], (10, 50), jnp.float32)
    bf2 = scale * jax.random.normal(ks[7], (10,), jnp.float32)
    return (w1, b1, w2, b2, wf1, bf1, wf2, bf2)


if __name__ == "__main__":
    key = jax.random.PRNGKey(0)
    kx, kp = jax.random.split(key)
    # MNIST geometry is required by the 320-wide fc1 (20 * 4 * 4); small batch of 2.
    x = jax.random.normal(kx, (2, 1, 28, 28), jnp.float32)
    params = init_params(kp)
    prepped = prepare_params(params)          # one-time weight prep (hoisted)

    fwd = jax.jit(mnist_cnn_forward)
    out = jax.block_until_ready(fwd(x, prepped))
    ref = jax.block_until_ready(reference_forward(x, params))

    assert out.shape == (2, 10), out.shape
    assert bool(jnp.all(jnp.isfinite(out)))
    # Kernel matmuls run at default MXU precision (no HIGHEST) -> allow bf16-level noise.
    max_err = float(jnp.max(jnp.abs(out - ref)))
    assert jnp.allclose(out, ref, rtol=2e-2, atol=2e-2), max_err
    print("KERNEL_OK")
</pallas_src>

<mosaic_0001>
module attributes {stable_mosaic.version = 11 : i64} {
  func.func @_mnist_fused_kernel(%arg0: i32, %arg1: memref<2x32x28xf32, #tpu.memory_space<vmem>>, %arg2: memref<5x240x32xf32, #tpu.memory_space<vmem>>, %arg3: memref<240x1xf32, #tpu.memory_space<vmem>>, %arg4: memref<23x12xf32, #tpu.memory_space<vmem>>, %arg5: memref<120x239xf32, #tpu.memory_space<vmem>>, %arg6: memref<5x160x120xf32, #tpu.memory_space<vmem>>, %arg7: memref<160x1xf32, #tpu.memory_space<vmem>>, %arg8: memref<7x4xf32, #tpu.memory_space<vmem>>, %arg9: memref<80x159xf32, #tpu.memory_space<vmem>>, %arg10: memref<4x50x80xf32, #tpu.memory_space<vmem>>, %arg11: memref<50x1xf32, #tpu.memory_space<vmem>>, %arg12: memref<10x50xf32, #tpu.memory_space<vmem>>, %arg13: memref<10x1xf32, #tpu.memory_space<vmem>>, %arg14: memref<2x10x1xf32, #tpu.memory_space<vmem>>) attributes {dimension_semantics = [#tpu.dimension_semantics<parallel>], iteration_bounds = array<i64: 1>, scalar_prefetch = 0 : i64, scratch_operands = 0 : i64, tpu.core_type = #tpu.core_type<tc>, window_params = [{transform_indices = @transform_0, window_bounds = array<i64: 2, 32, 28>}, {pipeline_mode = #tpu.pipeline_mode<synchronous>, transform_indices = @transform_1, window_bounds = array<i64: 5, 240, 32>}, {pipeline_mode = #tpu.pipeline_mode<synchronous>, transform_indices = @transform_2, window_bounds = array<i64: 240, 1>}, {pipeline_mode = #tpu.pipeline_mode<synchronous>, transform_indices = @transform_3, window_bounds = array<i64: 23, 12>}, {pipeline_mode = #tpu.pipeline_mode<synchronous>, transform_indices = @transform_4, window_bounds = array<i64: 120, 239>}, {pipeline_mode = #tpu.pipeline_mode<synchronous>, transform_indices = @transform_5, window_bounds = array<i64: 5, 160, 120>}, {pipeline_mode = #tpu.pipeline_mode<synchronous>, transform_indices = @transform_6, window_bounds = array<i64: 160, 1>}, {pipeline_mode = #tpu.pipeline_mode<synchronous>, transform_indices = @transform_7, window_bounds = array<i64: 7, 4>}, {pipeline_mode = #tpu.pipeline_mode<synchronous>, transform_indices = @transform_8, window_bounds = array<i64: 80, 159>}, {pipeline_mode = #tpu.pipeline_mode<synchronous>, transform_indices = @transform_9, window_bounds = array<i64: 4, 50, 80>}, {pipeline_mode = #tpu.pipeline_mode<synchronous>, transform_indices = @transform_10, window_bounds = array<i64: 50, 1>}, {pipeline_mode = #tpu.pipeline_mode<synchronous>, transform_indices = @transform_11, window_bounds = array<i64: 10, 50>}, {pipeline_mode = #tpu.pipeline_mode<synchronous>, transform_indices = @transform_12, window_bounds = array<i64: 10, 1>}, {transform_indices = @transform_13, window_bounds = array<i64: 2, 10, 1>}]} {
    %c0 = arith.constant 0 : index
    %c0_0 = arith.constant 0 : index
    %c0_1 = arith.constant 0 : index
    %0 = vector.load %arg1[%c0, %c0_0, %c0_1] : memref<2x32x28xf32, #tpu.memory_space<vmem>>, vector<1x32x28xf32>
    %1 = vector.shape_cast %0 : vector<1x32x28xf32> to vector<32x28xf32>
    %c0_2 = arith.constant 0 : index
    %c0_3 = arith.constant 0 : index
    %2 = vector.load %arg3[%c0_2, %c0_3] : memref<240x1xf32, #tpu.memory_space<vmem>>, vector<240x1xf32>
    %c0_4 = arith.constant 0 : index
    %c0_5 = arith.constant 0 : index
    %c0_6 = arith.constant 0 : index
    %3 = vector.load %arg2[%c0_4, %c0_5, %c0_6] : memref<5x240x32xf32, #tpu.memory_space<vmem>>, vector<1x240x32xf32>
    %4 = vector.shape_cast %3 : vector<1x240x32xf32> to vector<240x32xf32>
    %5 = vector.extract_strided_slice %1 {offsets = [0, 0], sizes = [32, 24], strides = [1, 1]} : vector<32x28xf32> to vector<32x24xf32>
    %cst = arith.constant dense<0.000000e+00> : vector<240x24xf32>
    %6 = tpu.matmul %4, %5, %cst {dimension_numbers = #tpu.dot_dimension_numbers<[1], [0], [0], [1], [0, 0, 1, 1], [], []>} : vector<240x32xf32>, vector<32x24xf32>, vector<240x24xf32> -> vector<240x24xf32>
    %7 = vector.broadcast %2 : vector<240x1xf32> to vector<240x24xf32>
    %8 = arith.addf %7, %6 : vector<240x24xf32>
    %c1 = arith.constant 1 : index
    %c0_7 = arith.constant 0 : index
    %c0_8 = arith.constant 0 : index
    %9 = vector.load %arg2[%c1, %c0_7, %c0_8] : memref<5x240x32xf32, #tpu.memory_space<vmem>>, vector<1x240x32xf32>
    %10 = vector.shape_cast %9 : vector<1x240x32xf32> to vector<240x32xf32>
    %11 = vector.extract_strided_slice %1 {offsets = [0, 1], sizes = [32, 24], strides = [1, 1]} : vector<32x28xf32> to vector<32x24xf32>
    %cst_9 = arith.constant dense<0.000000e+00> : vector<240x24xf32>
    %12 = tpu.matmul %10, %11, %cst_9 {dimension_numbers = #tpu.dot_dimension_numbers<[1], [0], [0], [1], [0, 0, 1, 1], [], []>} : vector<240x32xf32>, vector<32x24xf32>, vector<240x24xf32> -> vector<240x24xf32>
    %13 = arith.addf %8, %12 : vector<240x24xf32>
    %c2 = arith.constant 2 : index
    %c0_10 = arith.constant 0 : index
    %c0_11 = arith.constant 0 : index
    %14 = vector.load %arg2[%c2, %c0_10, %c0_11] : memref<5x240x32xf32, #tpu.memory_space<vmem>>, vector<1x240x32xf32>
    %15 = vector.shape_cast %14 : vector<1x240x32xf32> to vector<240x32xf32>
    %16 = vector.extract_strided_slice %1 {offsets = [0, 2], sizes = [32, 24], strides = [1, 1]} : vector<32x28xf32> to vector<32x24xf32>
    %cst_12 = arith.constant dense<0.000000e+00> : vector<240x24xf32>
    %17 = tpu.matmul %15, %16, %cst_12 {dimension_numbers = #tpu.dot_dimension_numbers<[1], [0], [0], [1], [0, 0, 1, 1], [], []>} : vector<240x32xf32>, vector<32x24xf32>, vector<240x24xf32> -> vector<240x24xf32>
    %18 = arith.addf %13, %17 : vector<240x24xf32>
    %c3 = arith.constant 3 : index
    %c0_13 = arith.constant 0 : index
    %c0_14 = arith.constant 0 : index
    %19 = vector.load %arg2[%c3, %c0_13, %c0_14] : memref<5x240x32xf32, #tpu.memory_space<vmem>>, vector<1x240x32xf32>
    %20 = vector.shape_cast %19 : vector<1x240x32xf32> to vector<240x32xf32>
    %21 = vector.extract_strided_slice %1 {offsets = [0, 3], sizes = [32, 24], strides = [1, 1]} : vector<32x28xf32> to vector<32x24xf32>
    %cst_15 = arith.constant dense<0.000000e+00> : vector<240x24xf32>
    %22 = tpu.matmul %20, %21, %cst_15 {dimension_numbers = #tpu.dot_dimension_numbers<[1], [0], [0], [1], [0, 0, 1, 1], [], []>} : vector<240x32xf32>, vector<32x24xf32>, vector<240x24xf32> -> vector<240x24xf32>
    %23 = arith.addf %18, %22 : vector<240x24xf32>
    %c4 = arith.constant 4 : index
    %c0_16 = arith.constant 0 : index
    %c0_17 = arith.constant 0 : index
    %24 = vector.load %arg2[%c4, %c0_16, %c0_17] : memref<5x240x32xf32, #tpu.memory_space<vmem>>, vector<1x240x32xf32>
    %25 = vector.shape_cast %24 : vector<1x240x32xf32> to vector<240x32xf32>
    %26 = vector.extract_strided_slice %1 {offsets = [0, 4], sizes = [32, 24], strides = [1, 1]} : vector<32x28xf32> to vector<32x24xf32>
    %cst_18 = arith.constant dense<0.000000e+00> : vector<240x24xf32>
    %27 = tpu.matmul %25, %26, %cst_18 {dimension_numbers = #tpu.dot_dimension_numbers<[1], [0], [0], [1], [0, 0, 1, 1], [], []>} : vector<240x32xf32>, vector<32x24xf32>, vector<240x24xf32> -> vector<240x24xf32>
    %28 = arith.addf %23, %27 : vector<240x24xf32>
    %cst_19 = arith.constant 0.000000e+00 : f32
    %29 = vector.broadcast %cst_19 : f32 to vector<240x24xf32>
    %30 = arith.maximumf %28, %29 : vector<240x24xf32>
    %31 = vector.extract_strided_slice %30 {offsets = [0, 0], sizes = [240, 23], strides = [1, 1]} : vector<240x24xf32> to vector<240x23xf32>
    %32 = vector.extract_strided_slice %30 {offsets = [0, 1], sizes = [240, 23], strides = [1, 1]} : vector<240x24xf32> to vector<240x23xf32>
    %33 = arith.maximumf %31, %32 : vector<240x23xf32>
    %c0_20 = arith.constant 0 : index
    %c0_21 = arith.constant 0 : index
    %34 = vector.load %arg4[%c0_20, %c0_21] : memref<23x12xf32, #tpu.memory_space<vmem>>, vector<23x12xf32>
    %cst_22 = arith.constant dense<0.000000e+00> : vector<240x12xf32>
    %35 = tpu.matmul %33, %34, %cst_22 {dimension_numbers = #tpu.dot_dimension_numbers<[1], [0], [0], [1], [0, 0, 1, 1], [], []>} : vector<240x23xf32>, vector<23x12xf32>, vector<240x12xf32> -> vector<240x12xf32>
    %36 = vector.extract_strided_slice %35 {offsets = [0, 0], sizes = [239, 12], strides = [1, 1]} : vector<240x12xf32> to vector<239x12xf32>
    %37 = vector.extract_strided_slice %35 {offsets = [1, 0], sizes = [239, 12], strides = [1, 1]} : vector<240x12xf32> to vector<239x12xf32>
    %38 = arith.maximumf %36, %37 : vector<239x12xf32>
    %c0_23 = arith.constant 0 : index
    %c0_24 = arith.constant 0 : index
    %39 = vector.load %arg5[%c0_23, %c0_24] : memref<120x239xf32, #tpu.memory_space<vmem>>, vector<120x239xf32>
    %cst_25 = arith.constant dense<0.000000e+00> : vector<120x12xf32>
    %40 = tpu.matmul %39, %38, %cst_25 {dimension_numbers = #tpu.dot_dimension_numbers<[1], [0], [0], [1], [0, 0, 1, 1], [], []>} : vector<120x239xf32>, vector<239x12xf32>, vector<120x12xf32> -> vector<120x12xf32>
    %c0_26 = arith.constant 0 : index
    %c0_27 = arith.constant 0 : index
    %41 = vector.load %arg7[%c0_26, %c0_27] : memref<160x1xf32, #tpu.memory_space<vmem>>, vector<160x1xf32>
    %c0_28 = arith.constant 0 : index
    %c0_29 = arith.constant 0 : index
    %c0_30 = arith.constant 0 : index
    %42 = vector.load %arg6[%c0_28, %c0_29, %c0_30] : memref<5x160x120xf32, #tpu.memory_space<vmem>>, vector<1x160x120xf32>
    %43 = vector.shape_cast %42 : vector<1x160x120xf32> to vector<160x120xf32>
    %44 = vector.extract_strided_slice %40 {offsets = [0, 0], sizes = [120, 8], strides = [1, 1]} : vector<120x12xf32> to vector<120x8xf32>
    %cst_31 = arith.constant dense<0.000000e+00> : vector<160x8xf32>
    %45 = tpu.matmul %43, %44, %cst_31 {dimension_numbers = #tpu.dot_dimension_numbers<[1], [0], [0], [1], [0, 0, 1, 1], [], []>} : vector<160x120xf32>, vector<120x8xf32>, vector<160x8xf32> -> vector<160x8xf32>
    %46 = vector.broadcast %41 : vector<160x1xf32> to vector<160x8xf32>
    %47 = arith.addf %46, %45 : vector<160x8xf32>
    %c1_32 = arith.constant 1 : index
    %c0_33 = arith.constant 0 : index
    %c0_34 = arith.constant 0 : index
    %48 = vector.load %arg6[%c1_32, %c0_33, %c0_34] : memref<5x160x120xf32, #tpu.memory_space<vmem>>, vector<1x160x120xf32>
    %49 = vector.shape_cast %48 : vector<1x160x120xf32> to vector<160x120xf32>
    %50 = vector.extract_strided_slice %40 {offsets = [0, 1], sizes = [120, 8], strides = [1, 1]} : vector<120x12xf32> to vector<120x8xf32>
    %cst_35 = arith.constant dense<0.000000e+00> : vector<160x8xf32>
    %51 = tpu.matmul %49, %50, %cst_35 {dimension_numbers = #tpu.dot_dimension_numbers<[1], [0], [0], [1], [0, 0, 1, 1], [], []>} : vector<160x120xf32>, vector<120x8xf32>, vector<160x8xf32> -> vector<160x8xf32>
    %52 = arith.addf %47, %51 : vector<160x8xf32>
    %c2_36 = arith.constant 2 : index
    %c0_37 = arith.constant 0 : index
    %c0_38 = arith.constant 0 : index
    %53 = vector.load %arg6[%c2_36, %c0_37, %c0_38] : memref<5x160x120xf32, #tpu.memory_space<vmem>>, vector<1x160x120xf32>
    %54 = vector.shape_cast %53 : vector<1x160x120xf32> to vector<160x120xf32>
    %55 = vector.extract_strided_slice %40 {offsets = [0, 2], sizes = [120, 8], strides = [1, 1]} : vector<120x12xf32> to vector<120x8xf32>
    %cst_39 = arith.constant dense<0.000000e+00> : vector<160x8xf32>
    %56 = tpu.matmul %54, %55, %cst_39 {dimension_numbers = #tpu.dot_dimension_numbers<[1], [0], [0], [1], [0, 0, 1, 1], [], []>} : vector<160x120xf32>, vector<120x8xf32>, vector<160x8xf32> -> vector<160x8xf32>
    %57 = arith.addf %52, %56 : vector<160x8xf32>
    %c3_40 = arith.constant 3 : index
    %c0_41 = arith.constant 0 : index
    %c0_42 = arith.constant 0 : index
    %58 = vector.load %arg6[%c3_40, %c0_41, %c0_42] : memref<5x160x120xf32, #tpu.memory_space<vmem>>, vector<1x160x120xf32>
    %59 = vector.shape_cast %58 : vector<1x160x120xf32> to vector<160x120xf32>
    %60 = vector.extract_strided_slice %40 {offsets = [0, 3], sizes = [120, 8], strides = [1, 1]} : vector<120x12xf32> to vector<120x8xf32>
    %cst_43 = arith.constant dense<0.000000e+00> : vector<160x8xf32>
    %61 = tpu.matmul %59, %60, %cst_43 {dimension_numbers = #tpu.dot_dimension_numbers<[1], [0], [0], [1], [0, 0, 1, 1], [], []>} : vector<160x120xf32>, vector<120x8xf32>, vector<160x8xf32> -> vector<160x8xf32>
    %62 = arith.addf %57, %61 : vector<160x8xf32>
    %c4_44 = arith.constant 4 : index
    %c0_45 = arith.constant 0 : index
    %c0_46 = arith.constant 0 : index
    %63 = vector.load %arg6[%c4_44, %c0_45, %c0_46] : memref<5x160x120xf32, #tpu.memory_space<vmem>>, vector<1x160x120xf32>
    %64 = vector.shape_cast %63 : vector<1x160x120xf32> to vector<160x120xf32>
    %65 = vector.extract_strided_slice %40 {offsets = [0, 4], sizes = [120, 8], strides = [1, 1]} : vector<120x12xf32> to vector<120x8xf32>
    %cst_47 = arith.constant dense<0.000000e+00> : vector<160x8xf32>
    %66 = tpu.matmul %64, %65, %cst_47 {dimension_numbers = #tpu.dot_dimension_numbers<[1], [0], [0], [1], [0, 0, 1, 1], [], []>} : vector<160x120xf32>, vector<120x8xf32>, vector<160x8xf32> -> vector<160x8xf32>
    %67 = arith.addf %62, %66 : vector<160x8xf32>
    %cst_48 = arith.constant 0.000000e+00 : f32
    %68 = vector.broadcast %cst_48 : f32 to vector<160x8xf32>
    %69 = arith.maximumf %67, %68 : vector<160x8xf32>
    %70 = vector.extract_strided_slice %69 {offsets = [0, 0], sizes = [160, 7], strides = [1, 1]} : vector<160x8xf32> to vector<160x7xf32>
    %71 = vector.extract_strided_slice %69 {offsets = [0, 1], sizes = [160, 7], strides = [1, 1]} : vector<160x8xf32> to vector<160x7xf32>
    %72 = arith.maximumf %70, %71 : vector<160x7xf32>
    %c0_49 = arith.constant 0 : index
    %c0_50 = arith.constant 0 : index
    %73 = vector.load %arg8[%c0_49, %c0_50] : memref<7x4xf32, #tpu.memory_space<vmem>>, vector<7x4xf32>
    %cst_51 = arith.constant dense<0.000000e+00> : vector<160x4xf32>
    %74 = tpu.matmul %72, %73, %cst_51 {dimension_numbers = #tpu.dot_dimension_numbers<[1], [0], [0], [1], [0, 0, 1, 1], [], []>} : vector<160x7xf32>, vector<7x4xf32>, vector<160x4xf32> -> vector<160x4xf32>
    %75 = vector.extract_strided_slice %74 {offsets = [0, 0], sizes = [159, 4], strides = [1, 1]} : vector<160x4xf32> to vector<159x4xf32>
    %76 = vector.extract_strided_slice %74 {offsets = [1, 0], sizes = [159, 4], strides = [1, 1]} : vector<160x4xf32> to vector<159x4xf32>
    %77 = arith.maximumf %75, %76 : vector<159x4xf32>
    %c0_52 = arith.constant 0 : index
    %c0_53 = arith.constant 0 : index
    %78 = vector.load %arg9[%c0_52, %c0_53] : memref<80x159xf32, #tpu.memory_space<vmem>>, vector<80x159xf32>
    %cst_54 = arith.constant dense<0.000000e+00> : vector<80x4xf32>
    %79 = tpu.matmul %78, %77, %cst_54 {dimension_numbers = #tpu.dot_dimension_numbers<[1], [0], [0], [1], [0, 0, 1, 1], [], []>} : vector<80x159xf32>, vector<159x4xf32>, vector<80x4xf32> -> vector<80x4xf32>
    %c0_55 = arith.constant 0 : index
    %c0_56 = arith.constant 0 : index
    %80 = vector.load %arg11[%c0_55, %c0_56] : memref<50x1xf32, #tpu.memory_space<vmem>>, vector<50x1xf32>
    %c0_57 = arith.constant 0 : index
    %c0_58 = arith.constant 0 : index
    %c0_59 = arith.constant 0 : index
    %81 = vector.load %arg10[%c0_57, %c0_58, %c0_59] : memref<4x50x80xf32, #tpu.memory_space<vmem>>, vector<1x50x80xf32>
    %82 = vector.shape_cast %81 : vector<1x50x80xf32> to vector<50x80xf32>
    %83 = vector.extract_strided_slice %79 {offsets = [0, 0], sizes = [80, 1], strides = [1, 1]} : vector<80x4xf32> to vector<80x1xf32>
    %cst_60 = arith.constant dense<0.000000e+00> : vector<50x1xf32>
    %84 = tpu.matmul %82, %83, %cst_60 {dimension_numbers = #tpu.dot_dimension_numbers<[1], [0], [0], [1], [0, 0, 1, 1], [], []>} : vector<50x80xf32>, vector<80x1xf32>, vector<50x1xf32> -> vector<50x1xf32>
    %85 = arith.addf %80, %84 : vector<50x1xf32>
    %c1_61 = arith.constant 1 : index
    %c0_62 = arith.constant 0 : index
    %c0_63 = arith.constant 0 : index
    %86 = vector.load %arg10[%c1_61, %c0_62, %c0_63] : memref<4x50x80xf32, #tpu.memory_space<vmem>>, vector<1x50x80xf32>
    %87 = vector.shape_cast %86 : vector<1x50x80xf32> to vector<50x80xf32>
    %88 = vector.extract_strided_slice %79 {offsets = [0, 1], sizes = [80, 1], strides = [1, 1]} : vector<80x4xf32> to vector<80x1xf32>
    %cst_64 = arith.constant dense<0.000000e+00> : vector<50x1xf32>
    %89 = tpu.matmul %87, %88, %cst_64 {dimension_numbers = #tpu.dot_dimension_numbers<[1], [0], [0], [1], [0, 0, 1, 1], [], []>} : vector<50x80xf32>, vector<80x1xf32>, vector<50x1xf32> -> vector<50x1xf32>
    %90 = arith.addf %85, %89 : vector<50x1xf32>
    %c2_65 = arith.constant 2 : index
    %c0_66 = arith.constant 0 : index
    %c0_67 = arith.constant 0 : index
    %91 = vector.load %arg10[%c2_65, %c0_66, %c0_67] : memref<4x50x80xf32, #tpu.memory_space<vmem>>, vector<1x50x80xf32>
    %92 = vector.shape_cast %91 : vector<1x50x80xf32> to vector<50x80xf32>
    %93 = vector.extract_strided_slice %79 {offsets = [0, 2], sizes = [80, 1], strides = [1, 1]} : vector<80x4xf32> to vector<80x1xf32>
    %cst_68 = arith.constant dense<0.000000e+00> : vector<50x1xf32>
    %94 = tpu.matmul %92, %93, %cst_68 {dimension_numbers = #tpu.dot_dimension_numbers<[1], [0], [0], [1], [0, 0, 1, 1], [], []>} : vector<50x80xf32>, vector<80x1xf32>, vector<50x1xf32> -> vector<50x1xf32>
    %95 = arith.addf %90, %94 : vector<50x1xf32>
    %c3_69 = arith.constant 3 : index
    %c0_70 = arith.constant 0 : index
    %c0_71 = arith.constant 0 : index
    %96 = vector.load %arg10[%c3_69, %c0_70, %c0_71] : memref<4x50x80xf32, #tpu.memory_space<vmem>>, vector<1x50x80xf32>
    %97 = vector.shape_cast %96 : vector<1x50x80xf32> to vector<50x80xf32>
    %98 = vector.extract_strided_slice %79 {offsets = [0, 3], sizes = [80, 1], strides = [1, 1]} : vector<80x4xf32> to vector<80x1xf32>
    %cst_72 = arith.constant dense<0.000000e+00> : vector<50x1xf32>
    %99 = tpu.matmul %97, %98, %cst_72 {dimension_numbers = #tpu.dot_dimension_numbers<[1], [0], [0], [1], [0, 0, 1, 1], [], []>} : vector<50x80xf32>, vector<80x1xf32>, vector<50x1xf32> -> vector<50x1xf32>
    %100 = arith.addf %95, %99 : vector<50x1xf32>
    %cst_73 = arith.constant 0.000000e+00 : f32
    %101 = vector.broadcast %cst_73 : f32 to vector<50x1xf32>
    %102 = arith.maximumf %100, %101 : vector<50x1xf32>
    %c0_74 = arith.constant 0 : index
    %c0_75 = arith.constant 0 : index
    %103 = vector.load %arg12[%c0_74, %c0_75] : memref<10x50xf32, #tpu.memory_space<vmem>>, vector<10x50xf32>
    %cst_76 = arith.constant dense<0.000000e+00> : vector<10x1xf32>
    %104 = tpu.matmul %103, %102, %cst_76 {dimension_numbers = #tpu.dot_dimension_numbers<[1], [0], [0], [1], [0, 0, 1, 1], [], []>} : vector<10x50xf32>, vector<50x1xf32>, vector<10x1xf32> -> vector<10x1xf32>
    %c0_77 = arith.constant 0 : index
    %c0_78 = arith.constant 0 : index
    %105 = vector.load %arg13[%c0_77, %c0_78] : memref<10x1xf32, #tpu.memory_space<vmem>>, vector<10x1xf32>
    %106 = arith.addf %104, %105 : vector<10x1xf32>
    %cst_79 = arith.constant 0.000000e+00 : f32
    %107 = vector.broadcast %cst_79 : f32 to vector<10x1xf32>
    %108 = arith.maximumf %106, %107 : vector<10x1xf32>
    %c0_80 = arith.constant 0 : index
    %c0_81 = arith.constant 0 : index
    %c0_82 = arith.constant 0 : index
    %109 = vector.load %arg14[%c0_80, %c0_81, %c0_82] : memref<2x10x1xf32, #tpu.memory_space<vmem>>, vector<1x10x1xf32>
    %110 = vector.shape_cast %109 : vector<1x10x1xf32> to vector<10x1xf32>
    %111 = vector.shape_cast %108 : vector<10x1xf32> to vector<1x10x1xf32>
    tpu.vector_store %arg14[%c0_80, %c0_81, %c0_82], %111 {strides = array<i32>} : memref<2x10x1xf32, #tpu.memory_space<vmem>>, vector<1x10x1xf32>,
    %c1_83 = arith.constant 1 : index
    %c0_84 = arith.constant 0 : index
    %c0_85 = arith.constant 0 : index
    %112 = vector.load %arg1[%c1_83, %c0_84, %c0_85] : memref<2x32x28xf32, #tpu.memory_space<vmem>>, vector<1x32x28xf32>
    %113 = vector.shape_cast %112 : vector<1x32x28xf32> to vector<32x28xf32>
    %c0_86 = arith.constant 0 : index
    %c0_87 = arith.constant 0 : index
    %114 = vector.load %arg3[%c0_86, %c0_87] : memref<240x1xf32, #tpu.memory_space<vmem>>, vector<240x1xf32>
    %c0_88 = arith.constant 0 : index
    %c0_89 = arith.constant 0 : index
    %c0_90 = arith.constant 0 : index
    %115 = vector.load %arg2[%c0_88, %c0_89, %c0_90] : memref<5x240x32xf32, #tpu.memory_space<vmem>>, vector<1x240x32xf32>
    %116 = vector.shape_cast %115 : vector<1x240x32xf32> to vector<240x32xf32>
    %117 = vector.extract_strided_slice %113 {offsets = [0, 0], sizes = [32, 24], strides = [1, 1]} : vector<32x28xf32> to vector<32x24xf32>
    %cst_91 = arith.constant dense<0.000000e+00> : vector<240x24xf32>
    %118 = tpu.matmul %116, %117, %cst_91 {dimension_numbers = #tpu.dot_dimension_numbers<[1], [0], [0], [1], [0, 0, 1, 1], [], []>} : vector<240x32xf32>, vector<32x24xf32>, vector<240x24xf32> -> vector<240x24xf32>
    %119 = vector.broadcast %114 : vector<240x1xf32> to vector<240x24xf32>
    %120 = arith.addf %119, %118 : vector<240x24xf32>
    %c1_92 = arith.constant 1 : index
    %c0_93 = arith.constant 0 : index
    %c0_94 = arith.constant 0 : index
    %121 = vector.load %arg2[%c1_92, %c0_93, %c0_94] : memref<5x240x32xf32, #tpu.memory_space<vmem>>, vector<1x240x32xf32>
    %122 = vector.shape_cast %121 : vector<1x240x32xf32> to vector<240x32xf32>
    %123 = vector.extract_strided_slice %113 {offsets = [0, 1], sizes = [32, 24], strides = [1, 1]} : vector<32x28xf32> to vector<32x24xf32>
    %cst_95 = arith.constant dense<0.000000e+00> : vector<240x24xf32>
    %124 = tpu.matmul %122, %123, %cst_95 {dimension_numbers = #tpu.dot_dimension_numbers<[1], [0], [0], [1], [0, 0, 1, 1], [], []>} : vector<240x32xf32>, vector<32x24xf32>, vector<240x24xf32> -> vector<240x24xf32>
    %125 = arith.addf %120, %124 : vector<240x24xf32>
    %c2_96 = arith.constant 2 : index
    %c0_97 = arith.constant 0 : index
    %c0_98 = arith.constant 0 : index
    %126 = vector.load %arg2[%c2_96, %c0_97, %c0_98] : memref<5x240x32xf32, #tpu.memory_space<vmem>>, vector<1x240x32xf32>
    %127 = vector.shape_cast %126 : vector<1x240x32xf32> to vector<240x32xf32>
    %128 = vector.extract_strided_slice %113 {offsets = [0, 2], sizes = [32, 24], strides = [1, 1]} : vector<32x28xf32> to vector<32x24xf32>
    %cst_99 = arith.constant dense<0.000000e+00> : vector<240x24xf32>
    %129 = tpu.matmul %127, %128, %cst_99 {dimension_numbers = #tpu.dot_dimension_numbers<[1], [0], [0], [1], [0, 0, 1, 1], [], []>} : vector<240x32xf32>, vector<32x24xf32>, vector<240x24xf32> -> vector<240x24xf32>
    %130 = arith.addf %125, %129 : vector<240x24xf32>
    %c3_100 = arith.constant 3 : index
    %c0_101 = arith.constant 0 : index
    %c0_102 = arith.constant 0 : index
    %131 = vector.load %arg2[%c3_100, %c0_101, %c0_102] : memref<5x240x32xf32, #tpu.memory_space<vmem>>, vector<1x240x32xf32>
    %132 = vector.shape_cast %131 : vector<1x240x32xf32> to vector<240x32xf32>
    %133 = vector.extract_strided_slice %113 {offsets = [0, 3], sizes = [32, 24], strides = [1, 1]} : vector<32x28xf32> to vector<32x24xf32>
    %cst_103 = arith.constant dense<0.000000e+00> : vector<240x24xf32>
    %134 = tpu.matmul %132, %133, %cst_103 {dimension_numbers = #tpu.dot_dimension_numbers<[1], [0], [0], [1], [0, 0, 1, 1], [], []>} : vector<240x32xf32>, vector<32x24xf32>, vector<240x24xf32> -> vector<240x24xf32>
    %135 = arith.addf %130, %134 : vector<240x24xf32>
    %c4_104 = arith.constant 4 : index
    %c0_105 = arith.constant 0 : index
    %c0_106 = arith.constant 0 : index
    %136 = vector.load %arg2[%c4_104, %c0_105, %c0_106] : memref<5x240x32xf32, #tpu.memory_space<vmem>>, vector<1x240x32xf32>
    %137 = vector.shape_cast %136 : vector<1x240x32xf32> to vector<240x32xf32>
    %138 = vector.extract_strided_slice %113 {offsets = [0, 4], sizes = [32, 24], strides = [1, 1]} : vector<32x28xf32> to vector<32x24xf32>
    %cst_107 = arith.constant dense<0.000000e+00> : vector<240x24xf32>
    %139 = tpu.matmul %137, %138, %cst_107 {dimension_numbers = #tpu.dot_dimension_numbers<[1], [0], [0], [1], [0, 0, 1, 1], [], []>} : vector<240x32xf32>, vector<32x24xf32>, vector<240x24xf32> -> vector<240x24xf32>
    %140 = arith.addf %135, %139 : vector<240x24xf32>
    %cst_108 = arith.constant 0.000000e+00 : f32
    %141 = vector.broadcast %cst_108 : f32 to vector<240x24xf32>
    %142 = arith.maximumf %140, %141 : vector<240x24xf32>
    %143 = vector.extract_strided_slice %142 {offsets = [0, 0], sizes = [240, 23], strides = [1, 1]} : vector<240x24xf32> to vector<240x23xf32>
    %144 = vector.extract_strided_slice %142 {offsets = [0, 1], sizes = [240, 23], strides = [1, 1]} : vector<240x24xf32> to vector<240x23xf32>
    %145 = arith.maximumf %143, %144 : vector<240x23xf32>
    %c0_109 = arith.constant 0 : index
    %c0_110 = arith.constant 0 : index
    %146 = vector.load %arg4[%c0_109, %c0_110] : memref<23x12xf32, #tpu.memory_space<vmem>>, vector<23x12xf32>
    %cst_111 = arith.constant dense<0.000000e+00> : vector<240x12xf32>
    %147 = tpu.matmul %145, %146, %cst_111 {dimension_numbers = #tpu.dot_dimension_numbers<[1], [0], [0], [1], [0, 0, 1, 1], [], []>} : vector<240x23xf32>, vector<23x12xf32>, vector<240x12xf32> -> vector<240x12xf32>
    %148 = vector.extract_strided_slice %147 {offsets = [0, 0], sizes = [239, 12], strides = [1, 1]} : vector<240x12xf32> to vector<239x12xf32>
    %149 = vector.extract_strided_slice %147 {offsets = [1, 0], sizes = [239, 12], strides = [1, 1]} : vector<240x12xf32> to vector<239x12xf32>
    %150 = arith.maximumf %148, %149 : vector<239x12xf32>
    %c0_112 = arith.constant 0 : index
    %c0_113 = arith.constant 0 : index
    %151 = vector.load %arg5[%c0_112, %c0_113] : memref<120x239xf32, #tpu.memory_space<vmem>>, vector<120x239xf32>
    %cst_114 = arith.constant dense<0.000000e+00> : vector<120x12xf32>
    %152 = tpu.matmul %151, %150, %cst_114 {dimension_numbers = #tpu.dot_dimension_numbers<[1], [0], [0], [1], [0, 0, 1, 1], [], []>} : vector<120x239xf32>, vector<239x12xf32>, vector<120x12xf32> -> vector<120x12xf32>
    %c0_115 = arith.constant 0 : index
    %c0_116 = arith.constant 0 : index
    %153 = vector.load %arg7[%c0_115, %c0_116] : memref<160x1xf32, #tpu.memory_space<vmem>>, vector<160x1xf32>
    %c0_117 = arith.constant 0 : index
    %c0_118 = arith.constant 0 : index
    %c0_119 = arith.constant 0 : index
    %154 = vector.load %arg6[%c0_117, %c0_118, %c0_119] : memref<5x160x120xf32, #tpu.memory_space<vmem>>, vector<1x160x120xf32>
    %155 = vector.shape_cast %154 : vector<1x160x120xf32> to vector<160x120xf32>
    %156 = vector.extract_strided_slice %152 {offsets = [0, 0], sizes = [120, 8], strides = [1, 1]} : vector<120x12xf32> to vector<120x8xf32>
    %cst_120 = arith.constant dense<0.000000e+00> : vector<160x8xf32>
    %157 = tpu.matmul %155, %156, %cst_120 {dimension_numbers = #tpu.dot_dimension_numbers<[1], [0], [0], [1], [0, 0, 1, 1], [], []>} : vector<160x120xf32>, vector<120x8xf32>, vector<160x8xf32> -> vector<160x8xf32>
    %158 = vector.broadcast %153 : vector<160x1xf32> to vector<160x8xf32>
    %159 = arith.addf %158, %157 : vector<160x8xf32>
    %c1_121 = arith.constant 1 : index
    %c0_122 = arith.constant 0 : index
    %c0_123 = arith.constant 0 : index
    %160 = vector.load %arg6[%c1_121, %c0_122, %c0_123] : memref<5x160x120xf32, #tpu.memory_space<vmem>>, vector<1x160x120xf32>
    %161 = vector.shape_cast %160 : vector<1x160x120xf32> to vector<160x120xf32>
    %162 = vector.extract_strided_slice %152 {offsets = [0, 1], sizes = [120, 8], strides = [1, 1]} : vector<120x12xf32> to vector<120x8xf32>
    %cst_124 = arith.constant dense<0.000000e+00> : vector<160x8xf32>
    %163 = tpu.matmul %161, %162, %cst_124 {dimension_numbers = #tpu.dot_dimension_numbers<[1], [0], [0], [1], [0, 0, 1, 1], [], []>} : vector<160x120xf32>, vector<120x8xf32>, vector<160x8xf32> -> vector<160x8xf32>
    %164 = arith.addf %159, %163 : vector<160x8xf32>
    %c2_125 = arith.constant 2 : index
    %c0_126 = arith.constant 0 : index
    %c0_127 = arith.constant 0 : index
    %165 = vector.load %arg6[%c2_125, %c0_126, %c0_127] : memref<5x160x120xf32, #tpu.memory_space<vmem>>, vector<1x160x120xf32>
    %166 = vector.shape_cast %165 : vector<1x160x120xf32> to vector<160x120xf32>
    %167 = vector.extract_strided_slice %152 {offsets = [0, 2], sizes = [120, 8], strides = [1, 1]} : vector<120x12xf32> to vector<120x8xf32>
    %cst_128 = arith.constant dense<0.000000e+00> : vector<160x8xf32>
    %168 = tpu.matmul %166, %167, %cst_128 {dimension_numbers = #tpu.dot_dimension_numbers<[1], [0], [0], [1], [0, 0, 1, 1], [], []>} : vector<160x120xf32>, vector<120x8xf32>, vector<160x8xf32> -> vector<160x8xf32>
    %169 = arith.addf %164, %168 : vector<160x8xf32>
    %c3_129 = arith.constant 3 : index
    %c0_130 = arith.constant 0 : index
    %c0_131 = arith.constant 0 : index
    %170 = vector.load %arg6[%c3_129, %c0_130, %c0_131] : memref<5x160x120xf32, #tpu.memory_space<vmem>>, vector<1x160x120xf32>
    %171 = vector.shape_cast %170 : vector<1x160x120xf32> to vector<160x120xf32>
    %172 = vector.extract_strided_slice %152 {offsets = [0, 3], sizes = [120, 8], strides = [1, 1]} : vector<120x12xf32> to vector<120x8xf32>
    %cst_132 = arith.constant dense<0.000000e+00> : vector<160x8xf32>
    %173 = tpu.matmul %171, %172, %cst_132 {dimension_numbers = #tpu.dot_dimension_numbers<[1], [0], [0], [1], [0, 0, 1, 1], [], []>} : vector<160x120xf32>, vector<120x8xf32>, vector<160x8xf32> -> vector<160x8xf32>
    %174 = arith.addf %169, %173 : vector<160x8xf32>
    %c4_133 = arith.constant 4 : index
    %c0_134 = arith.constant 0 : index
    %c0_135 = arith.constant 0 : index
    %175 = vector.load %arg6[%c4_133, %c0_134, %c0_135] : memref<5x160x120xf32, #tpu.memory_space<vmem>>, vector<1x160x120xf32>
    %176 = vector.shape_cast %175 : vector<1x160x120xf32> to vector<160x120xf32>
    %177 = vector.extract_strided_slice %152 {offsets = [0, 4], sizes = [120, 8], strides = [1, 1]} : vector<120x12xf32> to vector<120x8xf32>
    %cst_136 = arith.constant dense<0.000000e+00> : vector<160x8xf32>
    %178 = tpu.matmul %176, %177, %cst_136 {dimension_numbers = #tpu.dot_dimension_numbers<[1], [0], [0], [1], [0, 0, 1, 1], [], []>} : vector<160x120xf32>, vector<120x8xf32>, vector<160x8xf32> -> vector<160x8xf32>
    %179 = arith.addf %174, %178 : vector<160x8xf32>
    %cst_137 = arith.constant 0.000000e+00 : f32
    %180 = vector.broadcast %cst_137 : f32 to vector<160x8xf32>
    %181 = arith.maximumf %179, %180 : vector<160x8xf32>
    %182 = vector.extract_strided_slice %181 {offsets = [0, 0], sizes = [160, 7], strides = [1, 1]} : vector<160x8xf32> to vector<160x7xf32>
    %183 = vector.extract_strided_slice %181 {offsets = [0, 1], sizes = [160, 7], strides = [1, 1]} : vector<160x8xf32> to vector<160x7xf32>
    %184 = arith.maximumf %182, %183 : vector<160x7xf32>
    %c0_138 = arith.constant 0 : index
    %c0_139 = arith.constant 0 : index
    %185 = vector.load %arg8[%c0_138, %c0_139] : memref<7x4xf32, #tpu.memory_space<vmem>>, vector<7x4xf32>
    %cst_140 = arith.constant dense<0.000000e+00> : vector<160x4xf32>
    %186 = tpu.matmul %184, %185, %cst_140 {dimension_numbers = #tpu.dot_dimension_numbers<[1], [0], [0], [1], [0, 0, 1, 1], [], []>} : vector<160x7xf32>, vector<7x4xf32>, vector<160x4xf32> -> vector<160x4xf32>
    %187 = vector.extract_strided_slice %186 {offsets = [0, 0], sizes = [159, 4], strides = [1, 1]} : vector<160x4xf32> to vector<159x4xf32>
    %188 = vector.extract_strided_slice %186 {offsets = [1, 0], sizes = [159, 4], strides = [1, 1]} : vector<160x4xf32> to vector<159x4xf32>
    %189 = arith.maximumf %187, %188 : vector<159x4xf32>
    %c0_141 = arith.constant 0 : index
    %c0_142 = arith.constant 0 : index
    %190 = vector.load %arg9[%c0_141, %c0_142] : memref<80x159xf32, #tpu.memory_space<vmem>>, vector<80x159xf32>
    %cst_143 = arith.constant dense<0.000000e+00> : vector<80x4xf32>
    %191 = tpu.matmul %190, %189, %cst_143 {dimension_numbers = #tpu.dot_dimension_numbers<[1], [0], [0], [1], [0, 0, 1, 1], [], []>} : vector<80x159xf32>, vector<159x4xf32>, vector<80x4xf32> -> vector<80x4xf32>
    %c0_144 = arith.constant 0 : index
    %c0_145 = arith.constant 0 : index
    %192 = vector.load %arg11[%c0_144, %c0_145] : memref<50x1xf32, #tpu.memory_space<vmem>>, vector<50x1xf32>
    %c0_146 = arith.constant 0 : index
    %c0_147 = arith.constant 0 : index
    %c0_148 = arith.constant 0 : index
    %193 = vector.load %arg10[%c0_146, %c0_147, %c0_148] : memref<4x50x80xf32, #tpu.memory_space<vmem>>, vector<1x50x80xf32>
    %194 = vector.shape_cast %193 : vector<1x50x80xf32> to vector<50x80xf32>
    %195 = vector.extract_strided_slice %191 {offsets = [0, 0], sizes = [80, 1], strides = [1, 1]} : vector<80x4xf32> to vector<80x1xf32>
    %cst_149 = arith.constant dense<0.000000e+00> : vector<50x1xf32>
    %196 = tpu.matmul %194, %195, %cst_149 {dimension_numbers = #tpu.dot_dimension_numbers<[1], [0], [0], [1], [0, 0, 1, 1], [], []>} : vector<50x80xf32>, vector<80x1xf32>, vector<50x1xf32> -> vector<50x1xf32>
    %197 = arith.addf %192, %196 : vector<50x1xf32>
    %c1_150 = arith.constant 1 : index
    %c0_151 = arith.constant 0 : index
    %c0_152 = arith.constant 0 : index
    %198 = vector.load %arg10[%c1_150, %c0_151, %c0_152] : memref<4x50x80xf32, #tpu.memory_space<vmem>>, vector<1x50x80xf32>
    %199 = vector.shape_cast %198 : vector<1x50x80xf32> to vector<50x80xf32>
    %200 = vector.extract_strided_slice %191 {offsets = [0, 1], sizes = [80, 1], strides = [1, 1]} : vector<80x4xf32> to vector<80x1xf32>
    %cst_153 = arith.constant dense<0.000000e+00> : vector<50x1xf32>
    %201 = tpu.matmul %199, %200, %cst_153 {dimension_numbers = #tpu.dot_dimension_numbers<[1], [0], [0], [1], [0, 0, 1, 1], [], []>} : vector<50x80xf32>, vector<80x1xf32>, vector<50x1xf32> -> vector<50x1xf32>
    %202 = arith.addf %197, %201 : vector<50x1xf32>
    %c2_154 = arith.constant 2 : index
    %c0_155 = arith.constant 0 : index
    %c0_156 = arith.constant 0 : index
    %203 = vector.load %arg10[%c2_154, %c0_155, %c0_156] : memref<4x50x80xf32, #tpu.memory_space<vmem>>, vector<1x50x80xf32>
    %204 = vector.shape_cast %203 : vector<1x50x80xf32> to vector<50x80xf32>
    %205 = vector.extract_strided_slice %191 {offsets = [0, 2], sizes = [80, 1], strides = [1, 1]} : vector<80x4xf32> to vector<80x1xf32>
    %cst_157 = arith.constant dense<0.000000e+00> : vector<50x1xf32>
    %206 = tpu.matmul %204, %205, %cst_157 {dimension_numbers = #tpu.dot_dimension_numbers<[1], [0], [0], [1], [0, 0, 1, 1], [], []>} : vector<50x80xf32>, vector<80x1xf32>, vector<50x1xf32> -> vector<50x1xf32>
    %207 = arith.addf %202, %206 : vector<50x1xf32>
    %c3_158 = arith.constant 3 : index
    %c0_159 = arith.constant 0 : index
    %c0_160 = arith.constant 0 : index
    %208 = vector.load %arg10[%c3_158, %c0_159, %c0_160] : memref<4x50x80xf32, #tpu.memory_space<vmem>>, vector<1x50x80xf32>
    %209 = vector.shape_cast %208 : vector<1x50x80xf32> to vector<50x80xf32>
    %210 = vector.extract_strided_slice %191 {offsets = [0, 3], sizes = [80, 1], strides = [1, 1]} : vector<80x4xf32> to vector<80x1xf32>
    %cst_161 = arith.constant dense<0.000000e+00> : vector<50x1xf32>
    %211 = tpu.matmul %209, %210, %cst_161 {dimension_numbers = #tpu.dot_dimension_numbers<[1], [0], [0], [1], [0, 0, 1, 1], [], []>} : vector<50x80xf32>, vector<80x1xf32>, vector<50x1xf32> -> vector<50x1xf32>
    %212 = arith.addf %207, %211 : vector<50x1xf32>
    %cst_162 = arith.constant 0.000000e+00 : f32
    %213 = vector.broadcast %cst_162 : f32 to vector<50x1xf32>
    %214 = arith.maximumf %212, %213 : vector<50x1xf32>
    %c0_163 = arith.constant 0 : index
    %c0_164 = arith.constant 0 : index
    %215 = vector.load %arg12[%c0_163, %c0_164] : memref<10x50xf32, #tpu.memory_space<vmem>>, vector<10x50xf32>
    %cst_165 = arith.constant dense<0.000000e+00> : vector<10x1xf32>
    %216 = tpu.matmul %215, %214, %cst_165 {dimension_numbers = #tpu.dot_dimension_numbers<[1], [0], [0], [1], [0, 0, 1, 1], [], []>} : vector<10x50xf32>, vector<50x1xf32>, vector<10x1xf32> -> vector<10x1xf32>
    %c0_166 = arith.constant 0 : index
    %c0_167 = arith.constant 0 : index
    %217 = vector.load %arg13[%c0_166, %c0_167] : memref<10x1xf32, #tpu.memory_space<vmem>>, vector<10x1xf32>
    %218 = arith.addf %216, %217 : vector<10x1xf32>
    %cst_168 = arith.constant 0.000000e+00 : f32
    %219 = vector.broadcast %cst_168 : f32 to vector<10x1xf32>
    %220 = arith.maximumf %218, %219 : vector<10x1xf32>
    %c1_169 = arith.constant 1 : index
    %c0_170 = arith.constant 0 : index
    %c0_171 = arith.constant 0 : index
    %221 = vector.load %arg14[%c1_169, %c0_170, %c0_171] : memref<2x10x1xf32, #tpu.memory_space<vmem>>, vector<1x10x1xf32>
    %222 = vector.shape_cast %221 : vector<1x10x1xf32> to vector<10x1xf32>
    %223 = vector.shape_cast %220 : vector<10x1xf32> to vector<1x10x1xf32>
    tpu.vector_store %arg14[%c1_169, %c0_170, %c0_171], %223 {strides = array<i32>} : memref<2x10x1xf32, #tpu.memory_space<vmem>>, vector<1x10x1xf32>,
    return
  }
  func.func @transform_0(%arg0: i32) -> (i32, i32, i32) {
    %c0_i32 = arith.constant 0 : i32
    %c0_i32_0 = arith.constant 0 : i32
    %c0_i32_1 = arith.constant 0 : i32
    return %arg0, %c0_i32, %c0_i32_0 : i32, i32, i32
  }
  func.func @transform_1(%arg0: i32) -> (i32, i32, i32) {
    %c0_i32 = arith.constant 0 : i32
    %c0_i32_0 = arith.constant 0 : i32
    %c0_i32_1 = arith.constant 0 : i32
    %c0_i32_2 = arith.constant 0 : i32
    return %c0_i32, %c0_i32_0, %c0_i32_1 : i32, i32, i32
  }
  func.func @transform_2(%arg0: i32) -> (i32, i32) {
    %c0_i32 = arith.constant 0 : i32
    %c0_i32_0 = arith.constant 0 : i32
    %c0_i32_1 = arith.constant 0 : i32
    return %c0_i32, %c0_i32_0 : i32, i32
  }
  func.func @transform_3(%arg0: i32) -> (i32, i32) {
    %c0_i32 = arith.constant 0 : i32
    %c0_i32_0 = arith.constant 0 : i32
    %c0_i32_1 = arith.constant 0 : i32
    return %c0_i32, %c0_i32_0 : i32, i32
  }
  func.func @transform_4(%arg0: i32) -> (i32, i32) {
    %c0_i32 = arith.constant 0 : i32
    %c0_i32_0 = arith.constant 0 : i32
    %c0_i32_1 = arith.constant 0 : i32
    return %c0_i32, %c0_i32_0 : i32, i32
  }
  func.func @transform_5(%arg0: i32) -> (i32, i32, i32) {
    %c0_i32 = arith.constant 0 : i32
    %c0_i32_0 = arith.constant 0 : i32
    %c0_i32_1 = arith.constant 0 : i32
    %c0_i32_2 = arith.constant 0 : i32
    return %c0_i32, %c0_i32_0, %c0_i32_1 : i32, i32, i32
  }
  func.func @transform_6(%arg0: i32) -> (i32, i32) {
    %c0_i32 = arith.constant 0 : i32
    %c0_i32_0 = arith.constant 0 : i32
    %c0_i32_1 = arith.constant 0 : i32
    return %c0_i32, %c0_i32_0 : i32, i32
  }
  func.func @transform_7(%arg0: i32) -> (i32, i32) {
    %c0_i32 = arith.constant 0 : i32
    %c0_i32_0 = arith.constant 0 : i32
    %c0_i32_1 = arith.constant 0 : i32
    return %c0_i32, %c0_i32_0 : i32, i32
  }
  func.func @transform_8(%arg0: i32) -> (i32, i32) {
    %c0_i32 = arith.constant 0 : i32
    %c0_i32_0 = arith.constant 0 : i32
    %c0_i32_1 = arith.constant 0 : i32
    return %c0_i32, %c0_i32_0 : i32, i32
  }
  func.func @transform_9(%arg0: i32) -> (i32, i32, i32) {
    %c0_i32 = arith.constant 0 : i32
    %c0_i32_0 = arith.constant 0 : i32
    %c0_i32_1 = arith.constant 0 : i32
    %c0_i32_2 = arith.constant 0 : i32
    return %c0_i32, %c0_i32_0, %c0_i32_1 : i32, i32, i32
  }
  func.func @transform_10(%arg0: i32) -> (i32, i32) {
    %c0_i32 = arith.constant 0 : i32
    %c0_i32_0 = arith.constant 0 : i32
    %c0_i32_1 = arith.constant 0 : i32
    return %c0_i32, %c0_i32_0 : i32, i32
  }
  func.func @transform_11(%arg0: i32) -> (i32, i32) {
    %c0_i32 = arith.constant 0 : i32
    %c0_i32_0 = arith.constant 0 : i32
    %c0_i32_1 = arith.constant 0 : i32
    return %c0_i32, %c0_i32_0 : i32, i32
  }
  func.func @transform_12(%arg0: i32) -> (i32, i32) {
    %c0_i32 = arith.constant 0 : i32
    %c0_i32_0 = arith.constant 0 : i32
    %c0_i32_1 = arith.constant 0 : i32
    return %c0_i32, %c0_i32_0 : i32, i32
  }
  func.func @transform_13(%arg0: i32) -> (i32, i32, i32) {
    %c0_i32 = arith.constant 0 : i32
    %c0_i32_0 = arith.constant 0 : i32
    %c0_i32_1 = arith.constant 0 : i32
    return %arg0, %c0_i32, %c0_i32_0 : i32, i32, i32
  }
}

</mosaic_0001>

<llo_original>
// kernel: mnist_cnn_forward.1
$region0: #{mnist_cnn_forward.1}
  #allocation0 [shape = 'u32[]', space=smem, size = 0x4, offset = 0x4, fixed_abs, tag = 'smem constant byte address 0x4 - core index']
  #allocation1 [shape = 'u32[144,128]{1,0:T(1,128)}', space=vmem, size = 0x12000, scoped, tag = 'internal scratch']
  %s0 = inlined_call_operand.vmem [shape: f32[2,32,28], index: 0, kind: input, shape index: {}]
  %s1 = inlined_call_operand.vmem [shape: f32[5,240,32], index: 1, kind: input, shape index: {}]
  %s2 = inlined_call_operand.vmem [shape: f32[240,1], index: 2, kind: input, shape index: {}]
  %s3 = inlined_call_operand.vmem [shape: f32[23,12], index: 3, kind: input, shape index: {}]
  %s4 = inlined_call_operand.vmem [shape: f32[120,239], index: 4, kind: input, shape index: {}]
  %s5 = inlined_call_operand.vmem [shape: f32[5,160,120], index: 5, kind: input, shape index: {}]
  %s6 = inlined_call_operand.vmem [shape: f32[160,1], index: 6, kind: input, shape index: {}]
  %s7 = inlined_call_operand.vmem [shape: f32[7,4], index: 7, kind: input, shape index: {}]
  %s8 = inlined_call_operand.vmem [shape: f32[80,159], index: 8, kind: input, shape index: {}]
  %s9 = inlined_call_operand.vmem [shape: f32[4,50,80], index: 9, kind: input, shape index: {}]
  %s10 = inlined_call_operand.vmem [shape: f32[50,1], index: 10, kind: input, shape index: {}]
  %s11 = inlined_call_operand.vmem [shape: f32[10,50], index: 11, kind: input, shape index: {}]
  %s12 = inlined_call_operand.vmem [shape: f32[10,1], index: 12, kind: input, shape index: {}]
  %s13 = inlined_call_operand.vmem [shape: f32[2,10,1], index: 13, kind: output, shape index: {}]
  %s14 = sld [smem:[#allocation0]]
  $region62: #{mnist_cnn_forward.1} parent=0
    _
  %s16 = ssub.s32 1, %s14
  %s17 = scalar_select 0, %s16, %s14
  // Predicated region
  $region2: #{mnist_cnn_forward.1} parent=0 // pred_check
    _
  $region3: #{mnist_cnn_forward.1} parent=0 // pred_check_branch
    %19 = sbr.rel (0) target = $region5
  $region4: #{mnist_cnn_forward.1} parent=0 // pred_region
    _
  $region5: #{mnist_cnn_forward.1} parent=0 // pred_fallthru
    _
  // Predicated region
  $region6: #{mnist_cnn_forward.1} parent=0 // pred_check
    _
  $region7: #{mnist_cnn_forward.1} parent=0 // pred_check_branch
    %21 = sbr.rel (0) target = $region9
  $region8: #{mnist_cnn_forward.1} parent=0 // pred_region
    _
  $region9: #{mnist_cnn_forward.1} parent=0 // pred_fallthru
    _
  // Predicated region
  $region10: #{mnist_cnn_forward.1} parent=0 // pred_check
    _
  $region11: #{mnist_cnn_forward.1} parent=0 // pred_check_branch
    %23 = sbr.rel (0) target = $region13
  $region12: #{mnist_cnn_forward.1} parent=0 // pred_region
    _
  $region13: #{mnist_cnn_forward.1} parent=0 // pred_fallthru
    _
  // Predicated region
  $region14: #{mnist_cnn_forward.1} parent=0 // pred_check
    _
  $region15: #{mnist_cnn_forward.1} parent=0 // pred_check_branch
    %25 = sbr.rel (0) target = $region17
  $region16: #{mnist_cnn_forward.1} parent=0 // pred_region
    _
  $region17: #{mnist_cnn_forward.1} parent=0 // pred_fallthru
    _
  // Predicated region
  $region18: #{mnist_cnn_forward.1} parent=0 // pred_check
    _
  $region19: #{mnist_cnn_forward.1} parent=0 // pred_check_branch
    %27 = sbr.rel (0) target = $region21
  $region20: #{mnist_cnn_forward.1} parent=0 // pred_region
    _
  $region21: #{mnist_cnn_forward.1} parent=0 // pred_fallthru
    _
  // Predicated region
  $region22: #{mnist_cnn_forward.1} parent=0 // pred_check
    _
  $region23: #{mnist_cnn_forward.1} parent=0 // pred_check_branch
    %29 = sbr.rel (0) target = $region25
  $region24: #{mnist_cnn_forward.1} parent=0 // pred_region
    _
  $region25: #{mnist_cnn_forward.1} parent=0 // pred_fallthru
    _
  // Predicated region
  $region26: #{mnist_cnn_forward.1} parent=0 // pred_check
    _
  $region27: #{mnist_cnn_forward.1} parent=0 // pred_check_branch
    %31 = sbr.rel (0) target = $region29
  $region28: #{mnist_cnn_forward.1} parent=0 // pred_region
    _
  $region29: #{mnist_cnn_forward.1} parent=0 // pred_fallthru
    _
  // Predicated region
  $region30: #{mnist_cnn_forward.1} parent=0 // pred_check
    _
  $region31: #{mnist_cnn_forward.1} parent=0 // pred_check_branch
    %33 = sbr.rel (0) target = $region33
  $region32: #{mnist_cnn_forward.1} parent=0 // pred_region
    _
  $region33: #{mnist_cnn_forward.1} parent=0 // pred_fallthru
    _
  // Predicated region
  $region34: #{mnist_cnn_forward.1} parent=0 // pred_check
    _
  $region35: #{mnist_cnn_forward.1} parent=0 // pred_check_branch
    %35 = sbr.rel (0) target = $region37
  $region36: #{mnist_cnn_forward.1} parent=0 // pred_region
    _
  $region37: #{mnist_cnn_forward.1} parent=0 // pred_fallthru
    _
  // Predicated region
  $region38: #{mnist_cnn_forward.1} parent=0 // pred_check
    _
  $region39: #{mnist_cnn_forward.1} parent=0 // pred_check_branch
    %37 = sbr.rel (0) target = $region41
  $region40: #{mnist_cnn_forward.1} parent=0 // pred_region
    _
  $region41: #{mnist_cnn_forward.1} parent=0 // pred_fallthru
    _
  // Predicated region
  $region42: #{mnist_cnn_forward.1} parent=0 // pred_check
    _
  $region43: #{mnist_cnn_forward.1} parent=0 // pred_check_branch
    %39 = sbr.rel (0) target = $region45
  $region44: #{mnist_cnn_forward.1} parent=0 // pred_region
    _
  $region45: #{mnist_cnn_forward.1} parent=0 // pred_fallthru
    _
  // Predicated region
  $region46: #{mnist_cnn_forward.1} parent=0 // pred_check
    _
  $region47: #{mnist_cnn_forward.1} parent=0 // pred_check_branch
    %41 = sbr.rel (0) target = $region49
  $region48: #{mnist_cnn_forward.1} parent=0 // pred_region
    _
  $region49: #{mnist_cnn_forward.1} parent=0 // pred_fallthru
    _
  // Predicated region
  $region50: #{mnist_cnn_forward.1} parent=0 // pred_check
    _
  $region51: #{mnist_cnn_forward.1} parent=0 // pred_check_branch
    %43 = sbr.rel (0) target = $region53
  $region52: #{mnist_cnn_forward.1} parent=0 // pred_region
    _
  $region53: #{mnist_cnn_forward.1} parent=0 // pred_fallthru
    _
  %v44 = vld [vmem:[%s0] sm:$0xff]
  %v45 = vld [vmem:[%s0 + $0x8] sm:$0xff]
  %v46 = vld [vmem:[%s0 + $0x10] sm:$0xff]
  %v47 = vld [vmem:[%s0 + $0x18] sm:$0xff]
  %v48 = vld [vmem:[%s2] sm:$0xff]
  %v49 = vld [vmem:[%s2 + $0x8] sm:$0xff]
  %v50 = vld [vmem:[%s2 + $0x10] sm:$0xff]
  %v51 = vld [vmem:[%s2 + $0x18] sm:$0xff]
  %v52 = vld [vmem:[%s2 + $0x20] sm:$0xff]
  %v53 = vld [vmem:[%s2 + $0x28] sm:$0xff]
  %v54 = vld [vmem:[%s2 + $0x30] sm:$0xff]
  %v55 = vld [vmem:[%s2 + $0x38] sm:$0xff]
  %v56 = vld [vmem:[%s2 + $0x40] sm:$0xff]
  %v57 = vld [vmem:[%s2 + $0x48] sm:$0xff]
  %v58 = vld [vmem:[%s2 + $0x50] sm:$0xff]
  %v59 = vld [vmem:[%s2 + $0x58] sm:$0xff]
  %v60 = vld [vmem:[%s2 + $0x60] sm:$0xff]
  %v61 = vld [vmem:[%s2 + $0x68] sm:$0xff]
  %v62 = vld [vmem:[%s2 + $0x70] sm:$0xff]
  %v63 = vld [vmem:[%s2 + $0x78] sm:$0xff]
  %v64 = vld [vmem:[%s2 + $0x80] sm:$0xff]
  %v65 = vld [vmem:[%s2 + $0x88] sm:$0xff]
  %v66 = vld [vmem:[%s2 + $0x90] sm:$0xff]
  %v67 = vld [vmem:[%s2 + $0x98] sm:$0xff]
  %v68 = vld [vmem:[%s2 + $0xa0] sm:$0xff]
  %v69 = vld [vmem:[%s2 + $0xa8] sm:$0xff]
  %v70 = vld [vmem:[%s2 + $0xb0] sm:$0xff]
  %v71 = vld [vmem:[%s2 + $0xb8] sm:$0xff]
  %v72 = vld [vmem:[%s2 + $0xc0] sm:$0xff]
  %v73 = vld [vmem:[%s2 + $0xc8] sm:$0xff]
  %v74 = vld [vmem:[%s2 + $0xd0] sm:$0xff]
  %v75 = vld [vmem:[%s2 + $0xd8] sm:$0xff]
  %v76 = vld [vmem:[%s2 + $0xe0] sm:$0xff]
  %v77 = vld [vmem:[%s2 + $0xe8] sm:$0xff]
  %v78 = vld [vmem:[%s1] sm:$0xff]
  %v79 = vld [vmem:[%s1 + $0x8] sm:$0xff]
  %v80 = vld [vmem:[%s1 + $0x10] sm:$0xff]
  %v81 = vld [vmem:[%s1 + $0x18] sm:$0xff]
  %v82 = vld [vmem:[%s1 + $0x20] sm:$0xff]
  %v83 = vld [vmem:[%s1 + $0x28] sm:$0xff]
  %v84 = vld [vmem:[%s1 + $0x30] sm:$0xff]
  %v85 = vld [vmem:[%s1 + $0x38] sm:$0xff]
  %v86 = vld [vmem:[%s1 + $0x40] sm:$0xff]
  %v87 = vld [vmem:[%s1 + $0x48] sm:$0xff]
  %v88 = vld [vmem:[%s1 + $0x50] sm:$0xff]
  %v89 = vld [vmem:[%s1 + $0x58] sm:$0xff]
  %v90 = vld [vmem:[%s1 + $0x60] sm:$0xff]
  %v91 = vld [vmem:[%s1 + $0x68] sm:$0xff]
  %v92 = vld [vmem:[%s1 + $0x70] sm:$0xff]
  %v93 = vld [vmem:[%s1 + $0x78] sm:$0xff]
  %v94 = vld [vmem:[%s1 + $0x80] sm:$0xff]
  %v95 = vld [vmem:[%s1 + $0x88] sm:$0xff]
  %v96 = vld [vmem:[%s1 + $0x90] sm:$0xff]
  %v97 = vld [vmem:[%s1 + $0x98] sm:$0xff]
  %v98 = vld [vmem:[%s1 + $0xa0] sm:$0xff]
  %v99 = vld [vmem:[%s1 + $0xa8] sm:$0xff]
  %v100 = vld [vmem:[%s1 + $0xb0] sm:$0xff]
  %v101 = vld [vmem:[%s1 + $0xb8] sm:$0xff]
  %v102 = vld [vmem:[%s1 + $0xc0] sm:$0xff]
  %v103 = vld [vmem:[%s1 + $0xc8] sm:$0xff]
  %v104 = vld [vmem:[%s1 + $0xd0] sm:$0xff]
  %v105 = vld [vmem:[%s1 + $0xd8] sm:$0xff]
  %v106 = vld [vmem:[%s1 + $0xe0] sm:$0xff]
  %v107 = vld [vmem:[%s1 + $0xe8] sm:$0xff]
  %vm108 = vcmask 261120
  %v110 = vsel %vm108, %v78, 0
  %v113 = vsel %vm108, %v79, 0
  %v116 = vsel %vm108, %v80, 0
  %v119 = vsel %vm108, %v81, 0
  %v122 = vsel %vm108, %v82, 0
  %v125 = vsel %vm108, %v83, 0
  %v128 = vsel %vm108, %v84, 0
  %v131 = vsel %vm108, %v85, 0
  %v134 = vsel %vm108, %v86, 0
  %v137 = vsel %vm108, %v87, 0
  %v140 = vsel %vm108, %v88, 0
  %v143 = vsel %vm108, %v89, 0
  %v146 = vsel %vm108, %v90, 0
  %v149 = vsel %vm108, %v91, 0
  %v152 = vsel %vm108, %v92, 0
  %v155 = vsel %vm108, %v93, 0
  %v158 = vsel %vm108, %v94, 0
  %v161 = vsel %vm108, %v95, 0
  %v164 = vsel %vm108, %v96, 0
  %v167 = vsel %vm108, %v97, 0
  %v170 = vsel %vm108, %v98, 0
  %v173 = vsel %vm108, %v99, 0
  %v176 = vsel %vm108, %v100, 0
  %v179 = vsel %vm108, %v101, 0
  %v182 = vsel %vm108, %v102, 0
  %v185 = vsel %vm108, %v103, 0
  %v188 = vsel %vm108, %v104, 0
  %v191 = vsel %vm108, %v105, 0
  %v194 = vsel %vm108, %v106, 0
  %v197 = vsel %vm108, %v107, 0
  %199 = vmatprep.subr.mxu0 0.0
  %200 = vmatpush1.msra.mxu0 %v44
  %201 = vmatprep.subr.mxu0 0.0
  %202 = vmatpush1.msra.mxu0 %v45
  %203 = vmatprep.subr.mxu0 0.0
  %204 = vmatpush1.msra.mxu0 %v46
  %205 = vmatprep.subr.mxu0 0.0
  %206 = vmatpush1.msra.mxu0 %v47
  %207 = vmatprep.subr.mxu0 0.0
  %208 = vmatpush1.msra.mxu0 0.0
  %209 = vmatprep.subr.mxu0 0.0
  %210 = vmatpush1.msra.mxu0 0.0
  %211 = vmatprep.subr.mxu0 0.0
  %212 = vmatpush1.msra.mxu0 0.0
  %213 = vmatprep.subr.mxu0 0.0
  %214 = vmatpush1.msra.mxu0 0.0
  %215 = vmatprep.subr.mxu0 0.0
  %216 = vmatpush1.msra.mxu0 0.0
  %217 = vmatprep.subr.mxu0 0.0
  %218 = vmatpush1.msra.mxu0 0.0
  %219 = vmatprep.subr.mxu0 0.0
  %220 = vmatpush1.msra.mxu0 0.0
  %221 = vmatprep.subr.mxu0 0.0
  %222 = vmatpush1.msra.mxu0 0.0
  %223 = vmatprep.subr.mxu0 0.0
  %224 = vmatpush1.msra.mxu0 0.0
  %225 = vmatprep.subr.mxu0 0.0
  %226 = vmatpush1.msra.mxu0 0.0
  %227 = vmatprep.subr.mxu0 0.0
  %228 = vmatpush1.msra.mxu0 0.0
  %229 = vmatprep.subr.mxu0 0.0
  %230 = vmatpush1.msra.mxu0 0.0
  %231 = vmatprep.subr.mxu0 0.0
  %232 = vmatpush1.msra.mxu0 0.0
  %233 = vmatprep.subr.mxu0 0.0
  %234 = vmatpush1.msra.mxu0 0.0
  %235 = vmatprep.subr.mxu0 0.0
  %236 = vmatpush1.msra.mxu0 0.0
  %237 = vmatprep.subr.mxu0 0.0
  %238 = vmatpush1.msra.mxu0 0.0
  %239 = vmatprep.subr.mxu0 0.0
  %240 = vmatpush1.msra.mxu0 0.0
  %241 = vmatprep.subr.mxu0 0.0
  %242 = vmatpush1.msra.mxu0 0.0
  %243 = vmatprep.subr.mxu0 0.0
  %244 = vmatpush1.msra.mxu0 0.0
  %245 = vmatprep.subr.mxu0 0.0
  %246 = vmatpush1.msra.mxu0 0.0
  %247 = vmatprep.subr.mxu0 0.0
  %248 = vmatpush1.msra.mxu0 0.0
  %249 = vmatprep.subr.mxu0 0.0
  %250 = vmatpush1.msra.mxu0 0.0
  %251 = vmatprep.subr.mxu0 0.0
  %252 = vmatpush1.msra.mxu0 0.0
  %253 = vmatprep.subr.mxu0 0.0
  %254 = vmatpush1.msra.mxu0 0.0
  %255 = vmatprep.subr.mxu0 0.0
  %256 = vmatpush1.msra.mxu0 0.0
  %257 = vmatprep.subr.mxu0 0.0
  %258 = vmatpush1.msra.mxu0 0.0
  %259 = vmatprep.subr.mxu0 0.0
  %260 = vmatpush1.msra.mxu0 0.0
  %261 = vmatprep.subr.mxu0 0.0
  %262 = vmatpush1.msra.mxu0 0.0
  %263 = vmatprep.mubr.f32.mxu0 0.0
  %264 = vmatmul.mubr.f32.gmra.mrb[0].mxu0 %v110
  %v265 = vpop.f32.mrb[0].mxu0
  %v266 = vadd.f32 0.0, %v265
  %v267 = vpop.f32.mrb[0].mxu0
  %268 = vmatprep.mubr.f32.mxu0 0.0
  %269 = vmatmul.mubr.f32.gmra.mrb[0].mxu0 %v113
  %v270 = vpop.f32.mrb[0].mxu0
  %v271 = vadd.f32 0.0, %v270
  %v272 = vpop.f32.mrb[0].mxu0
  %273 = vmatprep.mubr.f32.mxu0 0.0
  %274 = vmatmul.mubr.f32.gmra.mrb[0].mxu0 %v116
  %v275 = vpop.f32.mrb[0].mxu0
  %v276 = vadd.f32 0.0, %v275
  %v277 = vpop.f32.mrb[0].mxu0
  %278 = vmatprep.mubr.f32.mxu0 0.0
  %279 = vmatmul.mubr.f32.gmra.mrb[0].mxu0 %v119
  %v280 = vpop.f32.mrb[0].mxu0
  %v281 = vadd.f32 0.0, %v280
  %v282 = vpop.f32.mrb[0].mxu0
  %283 = vmatprep.mubr.f32.mxu0 0.0
  %284 = vmatmul.mubr.f32.gmra.mrb[0].mxu0 %v122
  %v285 = vpop.f32.mrb[0].mxu0
  %v286 = vadd.f32 0.0, %v285
  %v287 = vpop.f32.mrb[0].mxu0
  %288 = vmatprep.mubr.f32.mxu0 0.0
  %289 = vmatmul.mubr.f32.gmra.mrb[0].mxu0 %v125
  %v290 = vpop.f32.mrb[0].mxu0
  %v291 = vadd.f32 0.0, %v290
  %v292 = vpop.f32.mrb[0].mxu0
  %293 = vmatprep.mubr.f32.mxu0 0.0
  %294 = vmatmul.mubr.f32.gmra.mrb[0].mxu0 %v128
  %v295 = vpop.f32.mrb[0].mxu0
  %v296 = vadd.f32 0.0, %v295
  %v297 = vpop.f32.mrb[0].mxu0
  %298 = vmatprep.mubr.f32.mxu0 0.0
  %299 = vmatmul.mubr.f32.gmra.mrb[0].mxu0 %v131
  %v300 = vpop.f32.mrb[0].mxu0
  %v301 = vadd.f32 0.0, %v300
  %v302 = vpop.f32.mrb[0].mxu0
  %303 = vmatprep.mubr.f32.mxu0 0.0
  %304 = vmatmul.mubr.f32.gmra.mrb[0].mxu0 %v134
  %v305 = vpop.f32.mrb[0].mxu0
  %v306 = vadd.f32 0.0, %v305
  %v307 = vpop.f32.mrb[0].mxu0
  %308 = vmatprep.mubr.f32.mxu0 0.0
  %309 = vmatmul.mubr.f32.gmra.mrb[0].mxu0 %v137
  %v310 = vpop.f32.mrb[0].mxu0
  %v311 = vadd.f32 0.0, %v310
  %v312 = vpop.f32.mrb[0].mxu0
  %313 = vmatprep.mubr.f32.mxu0 0.0
  %314 = vmatmul.mubr.f32.gmra.mrb[0].mxu0 %v140
  %v315 = vpop.f32.mrb[0].mxu0
  %v316 = vadd.f32 0.0, %v315
  %v317 = vpop.f32.mrb[0].mxu0
  %318 = vmatprep.mubr.f32.mxu0 0.0
  %319 = vmatmul.mubr.f32.gmra.mrb[0].mxu0 %v143
  %v320 = vpop.f32.mrb[0].mxu0
  %v321 = vadd.f32 0.0, %v320
  %v322 = vpop.f32.mrb[0].mxu0
  %323 = vmatprep.mubr.f32.mxu0 0.0
  %324 = vmatmul.mubr.f32.gmra.mrb[0].mxu0 %v146
  %v325 = vpop.f32.mrb[0].mxu0
  %v326 = vadd.f32 0.0, %v325
  %v327 = vpop.f32.mrb[0].mxu0
  %328 = vmatprep.mubr.f32.mxu0 0.0
  %329 = vmatmul.mubr.f32.gmra.mrb[0].mxu0 %v149
  %v330 = vpop.f32.mrb[0].mxu0
  %v331 = vadd.f32 0.0, %v330
  %v332 = vpop.f32.mrb[0].mxu0
  %333 = vmatprep.mubr.f32.mxu0 0.0
  %334 = vmatmul.mubr.f32.gmra.mrb[0].mxu0 %v152
  %v335 = vpop.f32.mrb[0].mxu0
  %v336 = vadd.f32 0.0, %v335
  %v337 = vpop.f32.mrb[0].mxu0
  %338 = vmatprep.mubr.f32.mxu0 0.0
  %339 = vmatmul.mubr.f32.gmra.mrb[0].mxu0 %v155
  %v340 = vpop.f32.mrb[0].mxu0
  %v341 = vadd.f32 0.0, %v340
  %v342 = vpop.f32.mrb[0].mxu0
  %343 = vmatprep.mubr.f32.mxu0 0.0
  %344 = vmatmul.mubr.f32.gmra.mrb[0].mxu0 %v158
  %v345 = vpop.f32.mrb[0].mxu0
  %v346 = vadd.f32 0.0, %v345
  %v347 = vpop.f32.mrb[0].mxu0
  %348 = vmatprep.mubr.f32.mxu0 0.0
  %349 = vmatmul.mubr.f32.gmra.mrb[0].mxu0 %v161
  %v350 = vpop.f32.mrb[0].mxu0
  %v351 = vadd.f32 0.0, %v350
  %v352 = vpop.f32.mrb[0].mxu0
  %353 = vmatprep.mubr.f32.mxu0 0.0
  %354 = vmatmul.mubr.f32.gmra.mrb[0].mxu0 %v164
  %v355 = vpop.f32.mrb[0].mxu0
  %v356 = vadd.f32 0.0, %v355
  %v357 = vpop.f32.mrb[0].mxu0
  %358 = vmatprep.mubr.f32.mxu0 0.0
  %359 = vmatmul.mubr.f32.gmra.mrb[0].mxu0 %v167
  %v360 = vpop.f32.mrb[0].mxu0
  %v361 = vadd.f32 0.0, %v360
  %v362 = vpop.f32.mrb[0].mxu0
  %363 = vmatprep.mubr.f32.mxu0 0.0
  %364 = vmatmul.mubr.f32.gmra.mrb[0].mxu0 %v170
  %v365 = vpop.f32.mrb[0].mxu0
  %v366 = vadd.f32 0.0, %v365
  %v367 = vpop.f32.mrb[0].mxu0
  %368 = vmatprep.mubr.f32.mxu0 0.0
  %369 = vmatmul.mubr.f32.gmra.mrb[0].mxu0 %v173
  %v370 = vpop.f32.mrb[0].mxu0
  %v371 = vadd.f32 0.0, %v370
  %v372 = vpop.f32.mrb[0].mxu0
  %373 = vmatprep.mubr.f32.mxu0 0.0
  %374 = vmatmul.mubr.f32.gmra.mrb[0].mxu0 %v176
  %v375 = vpop.f32.mrb[0].mxu0
  %v376 = vadd.f32 0.0, %v375
  %v377 = vpop.f32.mrb[0].mxu0
  %378 = vmatprep.mubr.f32.mxu0 0.0
  %379 = vmatmul.mubr.f32.gmra.mrb[0].mxu0 %v179
  %v380 = vpop.f32.mrb[0].mxu0
  %v381 = vadd.f32 0.0, %v380
  %v382 = vpop.f32.mrb[0].mxu0
  %383 = vmatprep.mubr.f32.mxu0 0.0
  %384 = vmatmul.mubr.f32.gmra.mrb[0].mxu0 %v182
  %v385 = vpop.f32.mrb[0].mxu0
  %v386 = vadd.f32 0.0, %v385
  %v387 = vpop.f32.mrb[0].mxu0
  %388 = vmatprep.mubr.f32.mxu0 0.0
  %389 = vmatmul.mubr.f32.gmra.mrb[0].mxu0 %v185
  %v390 = vpop.f32.mrb[0].mxu0
  %v391 = vadd.f32 0.0, %v390
  %v392 = vpop.f32.mrb[0].mxu0
  %393 = vmatprep.mubr.f32.mxu0 0.0
  %394 = vmatmul.mubr.f32.gmra.mrb[0].mxu0 %v188
  %v395 = vpop.f32.mrb[0].mxu0
  %v396 = vadd.f32 0.0, %v395
  %v397 = vpop.f32.mrb[0].mxu0
  %398 = vmatprep.mubr.f32.mxu0 0.0
  %399 = vmatmul.mubr.f32.gmra.mrb[0].mxu0 %v191
  %v400 = vpop.f32.mrb[0].mxu0
  %v401 = vadd.f32 0.0, %v400
  %v402 = vpop.f32.mrb[0].mxu0
  %403 = vmatprep.mubr.f32.mxu0 0.0
  %404 = vmatmul.mubr.f32.gmra.mrb[0].mxu0 %v194
  %v405 = vpop.f32.mrb[0].mxu0
  %v406 = vadd.f32 0.0, %v405
  %v407 = vpop.f32.mrb[0].mxu0
  %408 = vmatprep.mubr.f32.mxu0 0.0
  %409 = vmatmul.mubr.f32.gmra.mrb[0].mxu0 %v197
  %v410 = vpop.f32.mrb[0].mxu0
  %v411 = vadd.f32 0.0, %v410
  %v412 = vpop.f32.mrb[0].mxu0
  %413 = vdwg.mxu0
  %415 = vset.pattern.permute.xlu0 0
  %416 = vperm.xlu0 %415, %v48
  %v417 = vpop.permute.xlu0 %416
  %420 = vset.pattern.permute.xlu0 0
  %421 = vperm.xlu0 %420, %v49
  %v422 = vpop.permute.xlu0 %421
  %425 = vset.pattern.permute.xlu0 0
  %426 = vperm.xlu0 %425, %v50
  %v427 = vpop.permute.xlu0 %426
  %430 = vset.pattern.permute.xlu0 0
  %431 = vperm.xlu0 %430, %v51
  %v432 = vpop.permute.xlu0 %431
  %435 = vset.pattern.permute.xlu0 0
  %436 = vperm.xlu0 %435, %v52
  %v437 = vpop.permute.xlu0 %436
  %440 = vset.pattern.permute.xlu0 0
  %441 = vperm.xlu0 %440, %v53
  %v442 = vpop.permute.xlu0 %441
  %445 = vset.pattern.permute.xlu0 0
  %446 = vperm.xlu0 %445, %v54
  %v447 = vpop.permute.xlu0 %446
  %450 = vset.pattern.permute.xlu0 0
  %451 = vperm.xlu0 %450, %v55
  %v452 = vpop.permute.xlu0 %451
  %455 = vset.pattern.permute.xlu0 0
  %456 = vperm.xlu0 %455, %v56
  %v457 = vpop.permute.xlu0 %456
  %460 = vset.pattern.permute.xlu0 0
  %461 = vperm.xlu0 %460, %v57
  %v462 = vpop.permute.xlu0 %461
  %465 = vset.pattern.permute.xlu0 0
  %466 = vperm.xlu0 %465, %v58
  %v467 = vpop.permute.xlu0 %466
  %470 = vset.pattern.permute.xlu0 0
  %471 = vperm.xlu0 %470, %v59
  %v472 = vpop.permute.xlu0 %471
  %475 = vset.pattern.permute.xlu0 0
  %476 = vperm.xlu0 %475, %v60
  %v477 = vpop.permute.xlu0 %476
  %480 = vset.pattern.permute.xlu0 0
  %481 = vperm.xlu0 %480, %v61
  %v482 = vpop.permute.xlu0 %481
  %485 = vset.pattern.permute.xlu0 0
  %486 = vperm.xlu0 %485, %v62
  %v487 = vpop.permute.xlu0 %486
  %490 = vset.pattern.permute.xlu0 0
  %491 = vperm.xlu0 %490, %v63
  %v492 = vpop.permute.xlu0 %491
  %495 = vset.pattern.permute.xlu0 0
  %496 = vperm.xlu0 %495, %v64
  %v497 = vpop.permute.xlu0 %496
  %500 = vset.pattern.permute.xlu0 0
  %501 = vperm.xlu0 %500, %v65
  %v502 = vpop.permute.xlu0 %501
  %505 = vset.pattern.permute.xlu0 0
  %506 = vperm.xlu0 %505, %v66
  %v507 = vpop.permute.xlu0 %506
  %510 = vset.pattern.permute.xlu0 0
  %511 = vperm.xlu0 %510, %v67
  %v512 = vpop.permute.xlu0 %511
  %515 = vset.pattern.permute.xlu0 0
  %516 = vperm.xlu0 %515, %v68
  %v517 = vpop.permute.xlu0 %516
  %520 = vset.pattern.permute.xlu0 0
  %521 = vperm.xlu0 %520, %v69
  %v522 = vpop.permute.xlu0 %521
  %525 = vset.pattern.permute.xlu0 0
  %526 = vperm.xlu0 %525, %v70
  %v527 = vpop.permute.xlu0 %526
  %530 = vset.pattern.permute.xlu0 0
  %531 = vperm.xlu0 %530, %v71
  %v532 = vpop.permute.xlu0 %531
  %535 = vset.pattern.permute.xlu0 0
  %536 = vperm.xlu0 %535, %v72
  %v537 = vpop.permute.xlu0 %536
  %540 = vset.pattern.permute.xlu0 0
  %541 = vperm.xlu0 %540, %v73
  %v542 = vpop.permute.xlu0 %541
  %545 = vset.pattern.permute.xlu0 0
  %546 = vperm.xlu0 %545, %v74
  %v547 = vpop.permute.xlu0 %546
  %550 = vset.pattern.permute.xlu0 0
  %551 = vperm.xlu0 %550, %v75
  %v552 = vpop.permute.xlu0 %551
  %555 = vset.pattern.permute.xlu0 0
  %556 = vperm.xlu0 %555, %v76
  %v557 = vpop.permute.xlu0 %556
  %560 = vset.pattern.permute.xlu0 0
  %561 = vperm.xlu0 %560, %v77
  %v562 = vpop.permute.xlu0 %561
  %v564 = vadd.f32 %v417, %v266
  %v565 = vadd.f32 %v422, %v271
  %v566 = vadd.f32 %v427, %v276
  %v567 = vadd.f32 %v432, %v281
  %v568 = vadd.f32 %v437, %v286
  %v569 = vadd.f32 %v442, %v291
  %v570 = vadd.f32 %v447, %v296
  %v571 = vadd.f32 %v452, %v301
  %v572 = vadd.f32 %v457, %v306
  %v573 = vadd.f32 %v462, %v311
  %v574 = vadd.f32 %v467, %v316
  %v575 = vadd.f32 %v472, %v321
  %v576 = vadd.f32 %v477, %v326
  %v577 = vadd.f32 %v482, %v331
  %v578 = vadd.f32 %v487, %v336
  %v579 = vadd.f32 %v492, %v341
  %v580 = vadd.f32 %v497, %v346
  %v581 = vadd.f32 %v502, %v351
  %v582 = vadd.f32 %v507, %v356
  %v583 = vadd.f32 %v512, %v361
  %v584 = vadd.f32 %v517, %v366
  %v585 = vadd.f32 %v522, %v371
  %v586 = vadd.f32 %v527, %v376
  %v587 = vadd.f32 %v532, %v381
  %v588 = vadd.f32 %v537, %v386
  %v589 = vadd.f32 %v542, %v391
  %v590 = vadd.f32 %v547, %v396
  %v591 = vadd.f32 %v552, %v401
  %v592 = vadd.f32 %v557, %v406
  %v593 = vadd.f32 %v562, %v411
  %s594 = scalar_lea.vmem %s1, 240
  %v595 = vld [vmem:[%s594] sm:$0xff]
  %v596 = vld [vmem:[%s594 + $0x8] sm:$0xff]
  %v597 = vld [vmem:[%s594 + $0x10] sm:$0xff]
  %v598 = vld [vmem:[%s594 + $0x18] sm:$0xff]
  %v599 = vld [vmem:[%s594 + $0x20] sm:$0xff]
  %v600 = vld [vmem:[%s594 + $0x28] sm:$0xff]
  %v601 = vld [vmem:[%s594 + $0x30] sm:$0xff]
  %v602 = vld [vmem:[%s594 + $0x38] sm:$0xff]
  %v603 = vld [vmem:[%s594 + $0x40] sm:$0xff]
  %v604 = vld [vmem:[%s594 + $0x48] sm:$0xff]
  %v605 = vld [vmem:[%s594 + $0x50] sm:$0xff]
  %v606 = vld [vmem:[%s594 + $0x58] sm:$0xff]
  %v607 = vld [vmem:[%s594 + $0x60] sm:$0xff]
  %v608 = vld [vmem:[%s594 + $0x68] sm:$0xff]
  %v609 = vld [vmem:[%s594 + $0x70] sm:$0xff]
  %v610 = vld [vmem:[%s594 + $0x78] sm:$0xff]
  %v611 = vld [vmem:[%s594 + $0x80] sm:$0xff]
  %v612 = vld [vmem:[%s594 + $0x88] sm:$0xff]
  %v613 = vld [vmem:[%s594 + $0x90] sm:$0xff]
  %v614 = vld [vmem:[%s594 + $0x98] sm:$0xff]
  %v615 = vld [vmem:[%s594 + $0xa0] sm:$0xff]
  %v616 = vld [vmem:[%s594 + $0xa8] sm:$0xff]
  %v617 = vld [vmem:[%s594 + $0xb0] sm:$0xff]
  %v618 = vld [vmem:[%s594 + $0xb8] sm:$0xff]
  %v619 = vld [vmem:[%s594 + $0xc0] sm:$0xff]
  %v620 = vld [vmem:[%s594 + $0xc8] sm:$0xff]
  %v621 = vld [vmem:[%s594 + $0xd0] sm:$0xff]
  %v622 = vld [vmem:[%s594 + $0xd8] sm:$0xff]
  %v623 = vld [vmem:[%s594 + $0xe0] sm:$0xff]
  %v624 = vld [vmem:[%s594 + $0xe8] sm:$0xff]
  %629 = vrot.lane.b32.xlu0 %v44, 127
  %v630 = vpop.permute.xlu0 %629
  %631 = vrot.lane.b32.xlu0 %v45, 127
  %v632 = vpop.permute.xlu0 %631
  %633 = vrot.lane.b32.xlu0 %v46, 127
  %v634 = vpop.permute.xlu0 %633
  %635 = vrot.lane.b32.xlu0 %v47, 127
  %v636 = vpop.permute.xlu0 %635
  %v642 = vsel %vm108, %v595, 0
  %v645 = vsel %vm108, %v596, 0
  %v648 = vsel %vm108, %v597, 0
  %v651 = vsel %vm108, %v598, 0
  %v654 = vsel %vm108, %v599, 0
  %v657 = vsel %vm108, %v600, 0
  %v660 = vsel %vm108, %v601, 0
  %v663 = vsel %vm108, %v602, 0
  %v666 = vsel %vm108, %v603, 0
  %v669 = vsel %vm108, %v604, 0
  %v672 = vsel %vm108, %v605, 0
  %v675 = vsel %vm108, %v606, 0
  %v678 = vsel %vm108, %v607, 0
  %v681 = vsel %vm108, %v608, 0
  %v684 = vsel %vm108, %v609, 0
  %v687 = vsel %vm108, %v610, 0
  %v690 = vsel %vm108, %v611, 0
  %v693 = vsel %vm108, %v612, 0
  %v696 = vsel %vm108, %v613, 0
  %v699 = vsel %vm108, %v614, 0
  %v702 = vsel %vm108, %v615, 0
  %v705 = vsel %vm108, %v616, 0
  %v708 = vsel %vm108, %v617, 0
  %v711 = vsel %vm108, %v618, 0
  %v714 = vsel %vm108, %v619, 0
  %v717 = vsel %vm108, %v620, 0
  %v720 = vsel %vm108, %v621, 0
  %v723 = vsel %vm108, %v622, 0
  %v726 = vsel %vm108, %v623, 0
  %v729 = vsel %vm108, %v624, 0
  %731 = vmatprep.subr.mxu0 0.0
  %732 = vmatpush1.msra.mxu0 %v630
  %733 = vmatprep.subr.mxu0 0.0
  %734 = vmatpush1.msra.mxu0 %v632
  %735 = vmatprep.subr.mxu0 0.0
  %736 = vmatpush1.msra.mxu0 %v634
  %737 = vmatprep.subr.mxu0 0.0
  %738 = vmatpush1.msra.mxu0 %v636
  %739 = vmatprep.subr.mxu0 0.0
  %740 = vmatpush1.msra.mxu0 0.0
  %741 = vmatprep.subr.mxu0 0.0
  %742 = vmatpush1.msra.mxu0 0.0
  %743 = vmatprep.subr.mxu0 0.0
  %744 = vmatpush1.msra.mxu0 0.0
  %745 = vmatprep.subr.mxu0 0.0
  %746 = vmatpush1.msra.mxu0 0.0
  %747 = vmatprep.subr.mxu0 0.0
  %748 = vmatpush1.msra.mxu0 0.0
  %749 = vmatprep.subr.mxu0 0.0
  %750 = vmatpush1.msra.mxu0 0.0
  %751 = vmatprep.subr.mxu0 0.0
  %752 = vmatpush1.msra.mxu0 0.0
  %753 = vmatprep.subr.mxu0 0.0
  %754 = vmatpush1.msra.mxu0 0.0
  %755 = vmatprep.subr.mxu0 0.0
  %756 = vmatpush1.msra.mxu0 0.0
  %757 = vmatprep.subr.mxu0 0.0
  %758 = vmatpush1.msra.mxu0 0.0
  %759 = vmatprep.subr.mxu0 0.0
  %760 = vmatpush1.msra.mxu0 0.0
  %761 = vmatprep.subr.mxu0 0.0
  %762 = vmatpush1.msra.mxu0 0.0
  %763 = vmatprep.subr.mxu0 0.0
  %764 = vmatpush1.msra.mxu0 0.0
  %765 = vmatprep.subr.mxu0 0.0
  %766 = vmatpush1.msra.mxu0 0.0
  %767 = vmatprep.subr.mxu0 0.0
  %768 = vmatpush1.msra.mxu0 0.0
  %769 = vmatprep.subr.mxu0 0.0
  %770 = vmatpush1.msra.mxu0 0.0
  %771 = vmatprep.subr.mxu0 0.0
  %772 = vmatpush1.msra.mxu0 0.0
  %773 = vmatprep.subr.mxu0 0.0
  %774 = vmatpush1.msra.mxu0 0.0
  %775 = vmatprep.subr.mxu0 0.0
  %776 = vmatpush1.msra.mxu0 0.0
  %777 = vmatprep.subr.mxu0 0.0
  %778 = vmatpush1.msra.mxu0 0.0
  %779 = vmatprep.subr.mxu0 0.0
  %780 = vmatpush1.msra.mxu0 0.0
  %781 = vmatprep.subr.mxu0 0.0
  %782 = vmatpush1.msra.mxu0 0.0
  %783 = vmatprep.subr.mxu0 0.0
  %784 = vmatpush1.msra.mxu0 0.0
  %785 = vmatprep.subr.mxu0 0.0
  %786 = vmatpush1.msra.mxu0 0.0
  %787 = vmatprep.subr.mxu0 0.0
  %788 = vmatpush1.msra.mxu0 0.0
  %789 = vmatprep.subr.mxu0 0.0
  %790 = vmatpush1.msra.mxu0 0.0
  %791 = vmatprep.subr.mxu0 0.0
  %792 = vmatpush1.msra.mxu0 0.0
  %793 = vmatprep.subr.mxu0 0.0
  %794 = vmatpush1.msra.mxu0 0.0
  %795 = vmatprep.mubr.f32.mxu0 0.0
  %796 = vmatmul.mubr.f32.gmra.mrb[0].mxu0 %v642
  %v797 = vpop.f32.mrb[0].mxu0
  %v798 = vadd.f32 0.0, %v797
  %v799 = vpop.f32.mrb[0].mxu0
  %800 = vmatprep.mubr.f32.mxu0 0.0
  %801 = vmatmul.mubr.f32.gmra.mrb[0].mxu0 %v645
  %v802 = vpop.f32.mrb[0].mxu0
  %v803 = vadd.f32 0.0, %v802
  %v804 = vpop.f32.mrb[0].mxu0
  %805 = vmatprep.mubr.f32.mxu0 0.0
  %806 = vmatmul.mubr.f32.gmra.mrb[0].mxu0 %v648
  %v807 = vpop.f32.mrb[0].mxu0
  %v808 = vadd.f32 0.0, %v807
  %v809 = vpop.f32.mrb[0].mxu0
  %810 = vmatprep.mubr.f32.mxu0 0.0
  %811 = vmatmul.mubr.f32.gmra.mrb[0].mxu0 %v651
  %v812 = vpop.f32.mrb[0].mxu0
  %v813 = vadd.f32 0.0, %v812
  %v814 = vpop.f32.mrb[0].mxu0
  %815 = vmatprep.mubr.f32.mxu0 0.0
  %816 = vmatmul.mubr.f32.gmra.mrb[0].mxu0 %v654
  %v817 = vpop.f32.mrb[0].mxu0
  %v818 = vadd.f32 0.0, %v817
  %v819 = vpop.f32.mrb[0].mxu0
  %820 = vmatprep.mubr.f32.mxu0 0.0
  %821 = vmatmul.mubr.f32.gmra.mrb[0].mxu0 %v657
  %v822 = vpop.f32.mrb[0].mxu0
  %v823 = vadd.f32 0.0, %v822
  %v824 = vpop.f32.mrb[0].mxu0
  %825 = vmatprep.mubr.f32.mxu0 0.0
  %826 = vmatmul.mubr.f32.gmra.mrb[0].mxu0 %v660
  %v827 = vpop.f32.mrb[0].mxu0
  %v828 = vadd.f32 0.0, %v827
  %v829 = vpop.f32.mrb[0].mxu0
  %830 = vmatprep.mubr.f32.mxu0 0.0
  %831 = vmatmul.mubr.f32.gmra.mrb[0].mxu0 %v663
  %v832 = vpop.f32.mrb[0].mxu0
  %v833 = vadd.f32 0.0, %v832
  %v834 = vpop.f32.mrb[0].mxu0
  %835 = vmatprep.mubr.f32.mxu0 0.0
  %836 = vmatmul.mubr.f32.gmra.mrb[0].mxu0 %v666
  %v837 = vpop.f32.mrb[0].mxu0
  %v838 = vadd.f32 0.0, %v837
  %v839 = vpop.f32.mrb[0].mxu0
  %840 = vmatprep.mubr.f32.mxu0 0.0
  %841 = vmatmul.mubr.f32.gmra.mrb[0].mxu0 %v669
  %v842 = vpop.f32.mrb[0].mxu0
  %v843 = vadd.f32 0.0, %v842
  %v844 = vpop.f32.mrb[0].mxu0
  %845 = vmatprep.mubr.f32.mxu0 0.0
  %846 = vmatmul.mubr.f32.gmra.mrb[0].mxu0 %v672
  %v847 = vpop.f32.mrb[0].mxu0
  %v848 = vadd.f32 0.0, %v847
  %v849 = vpop.f32.mrb[0].mxu0
  %850 = vmatprep.mubr.f32.mxu0 0.0
  %851 = vmatmul.mubr.f32.gmra.mrb[0].mxu0 %v675
  %v852 = vpop.f32.mrb[0].mxu0
  %v853 = vadd.f32 0.0, %v852
  %v854 = vpop.f32.mrb[0].mxu0
  %855 = vmatprep.mubr.f32.mxu0 0.0
  %856 = vmatmul.mubr.f32.gmra.mrb[0].mxu0 %v678
  %v857 = vpop.f32.mrb[0].mxu0
  %v858 = vadd.f32 0.0, %v857
  %v859 = vpop.f32.mrb[0].mxu0
  %860 = vmatprep.mubr.f32.mxu0 0.0
  %861 = vmatmul.mubr.f32.gmra.mrb[0].mxu0 %v681
  %v862 = vpop.f32.mrb[0].mxu0
  %v863 = vadd.f32 0.0, %v862
  %v864 = vpop.f32.mrb[0].mxu0
  %865 = vmatprep.mubr.f32.mxu0 0.0
  %866 = vmatmul.mubr.f32.gmra.mrb[0].mxu0 %v684
  %v867 = vpop.f32.mrb[0].mxu0
  %v868 = vadd.f32 0.0, %v867
  %v869 = vpop.f32.mrb[0].mxu0
  %870 = vmatprep.mubr.f32.mxu0 0.0
  %871 = vmatmul.mubr.f32.gmra.mrb[0].mxu0 %v687
  %v872 = vpop.f32.mrb[0].mxu0
  %v873 = vadd.f32 0.0, %v872
  %v874 = vpop.f32.mrb[0].mxu0
  %875 = vmatprep.mubr.f32.mxu0 0.0
  %876 = vmatmul.mubr.f32.gmra.mrb[0].mxu0 %v690
  %v877 = vpop.f32.mrb[0].mxu0
  %v878 = vadd.f32 0.0, %v877
  %v879 = vpop.f32.mrb[0].mxu0
  %880 = vmatprep.mubr.f32.mxu0 0.0
  %881 = vmatmul.mubr.f32.gmra.mrb[0].mxu0 %v693
  %v882 = vpop.f32.mrb[0].mxu0
  %v883 = vadd.f32 0.0, %v882
  %v884 = vpop.f32.mrb[0].mxu0
  %885 = vmatprep.mubr.f32.mxu0 0.0
  %886 = vmatmul.mubr.f32.gmra.mrb[0].mxu0 %v696
  %v887 = vpop.f32.mrb[0].mxu0
  %v888 = vadd.f32 0.0, %v887
  %v889 = vpop.f32.mrb[0].mxu0
  %890 = vmatprep.mubr.f32.mxu0 0.0
  %891 = vmatmul.mubr.f32.gmra.mrb[0].mxu0 %v699
  %v892 = vpop.f32.mrb[0].mxu0
  %v893 = vadd.f32 0.0, %v892
  %v894 = vpop.f32.mrb[0].mxu0
  %895 = vmatprep.mubr.f32.mxu0 0.0
  %896 = vmatmul.mubr.f32.gmra.mrb[0].mxu0 %v702
  %v897 = vpop.f32.mrb[0].mxu0
  %v898 = vadd.f32 0.0, %v897
  %v899 = vpop.f32.mrb[0].mxu0
  %900 = vmatprep.mubr.f32.mxu0 0.0
  %901 = vmatmul.mubr.f32.gmra.mrb[0].mxu0 %v705
  %v902 = vpop.f32.mrb[0].mxu0
  %v903 = vadd.f32 0.0, %v902
  %v904 = vpop.f32.mrb[0].mxu0
  %905 = vmatprep.mubr.f32.mxu0 0.0
  %906 = vmatmul.mubr.f32.gmra.mrb[0].mxu0 %v708
  %v907 = vpop.f32.mrb[0].mxu0
  %v908 = vadd.f32 0.0, %v907
  %v909 = vpop.f32.mrb[0].mxu0
  %910 = vmatprep.mubr.f32.mxu0 0.0
  %911 = vmatmul.mubr.f32.gmra.mrb[0].mxu0 %v711
  %v912 = vpop.f32.mrb[0].mxu0
  %v913 = vadd.f32 0.0, %v912
  %v914 = vpop.f32.mrb[0].mxu0
  %915 = vmatprep.mubr.f32.mxu0 0.0
  %916 = vmatmul.mubr.f32.gmra.mrb[0].mxu0 %v714
  %v917 = vpop.f32.mrb[0].mxu0
  %v918 = vadd.f32 0.0, %v917
  %v919 = vpop.f32.mrb[0].mxu0
  %920 = vmatprep.mubr.f32.mxu0 0.0
  %921 = vmatmul.mubr.f32.gmra.mrb[0].mxu0 %v717
  %v922 = vpop.f32.mrb[0].mxu0
  %v923 = vadd.f32 0.0, %v922
  %v924 = vpop.f32.mrb[0].mxu0
  %925 = vmatprep.mubr.f32.mxu0 0.0
  %926 = vmatmul.mubr.f32.gmra.mrb[0].mxu0 %v720
  %v927 = vpop.f32.mrb[0].mxu0
  %v928 = vadd.f32 0.0, %v927
  %v929 = vpop.f32.mrb[0].mxu0
  %930 = vmatprep.mubr.f32.mxu0 0.0
  %931 = vmatmul.mubr.f32.gmra.mrb[0].mxu0 %v723
  %v932 = vpop.f32.mrb[0].mxu0
  %v933 = vadd.f32 0.0, %v932
  %v934 = vpop.f32.mrb[0].mxu0
  %935 = vmatprep.mubr.f32.mxu0 0.0
  %936 = vmatmul.mubr.f32.gmra.mrb[0].mxu0 %v726
  %v937 = vpop.f32.mrb[0].mxu0
  %v938 = vadd.f32 0.0, %v937
  %v939 = vpop.f32.mrb[0].mxu0
  %940 = vmatprep.mubr.f32.mxu0 0.0
  %941 = vmatmul.mubr.f32.gmra.mrb[0].mxu0 %v729
  %v942 = vpop.f32.mrb[0].mxu0
  %v943 = vadd.f32 0.0, %v942
  %v944 = vpop.f32.mrb[0].mxu0
  %945 = vdwg.mxu0
  %v946 = vadd.f32 %v564, %v798
  %v947 = vadd.f32 %v565, %v803
  %v948 = vadd.f32 %v566, %v808
  %v949 = vadd.f32 %v567, %v813
  %v950 = vadd.f32 %v568, %v818
  %v951 = vadd.f32 %v569, %v823
  %v952 = vadd.f32 %v570, %v828
  %v953 = vadd.f32 %v571, %v833
  %v954 = vadd.f32 %v572, %v838
  %v955 = vadd.f32 %v573, %v843
  %v956 = vadd.f32 %v574, %v848
  %v957 = vadd.f32 %v575, %v853
  %v958 = vadd.f32 %v576, %v858
  %v959 = vadd.f32 %v577, %v863
  %v960 = vadd.f32 %v578, %v868
  %v961 = vadd.f32 %v579, %v873
  %v962 = vadd.f32 %v580, %v878
  %v963 = vadd.f32 %v581, %v883
  %v964 = vadd.f32 %v582, %v888
  %v965 = vadd.f32 %v583, %v893
  %v966 = vadd.f32 %v584, %v898
  %v967 = vadd.f32 %v585, %v903
  %v968 = vadd.f32 %v586, %v908
  %v969 = vadd.f32 %v587, %v913
  %v970 = vadd.f32 %v588, %v918
  %v971 = vadd.f32 %v589, %v923
  %v972 = vadd.f32 %v590, %v928
  %v973 = vadd.f32 %v591, %v933
  %v974 = vadd.f32 %v592, %v938
  %v975 = vadd.f32 %v593, %v943
  %s976 = scalar_lea.vmem %s1, 480
  %v977 = vld [vmem:[%s976] sm:$0xff]
  %v978 = vld [vmem:[%s976 + $0x8] sm:$0xff]
  %v979 = vld [vmem:[%s976 + $0x10] sm:$0xff]
  %v980 = vld [vmem:[%s976 + $0x18] sm:$0xff]
  %v981 = vld [vmem:[%s976 + $0x20] sm:$0xff]
  %v982 = vld [vmem:[%s976 + $0x28] sm:$0xff]
  %v983 = vld [vmem:[%s976 + $0x30] sm:$0xff]
  %v984 = vld [vmem:[%s976 + $0x38] sm:$0xff]
  %v985 = vld [vmem:[%s976 + $0x40] sm:$0xff]
  %v986 = vld [vmem:[%s976 + $0x48] sm:$0xff]
  %v987 = vld [vmem:[%s976 + $0x50] sm:$0xff]
  %v988 = vld [vmem:[%s976 + $0x58] sm:$0xff]
  %v989 = vld [vmem:[%s976 + $0x60] sm:$0xff]
  %v990 = vld [vmem:[%s976 + $0x68] sm:$0xff]
  %v991 = vld [vmem:[%s976 + $0x70] sm:$0xff]
  %v992 = vld [vmem:[%s976 + $0x78] sm:$0xff]
  %v993 = vld [vmem:[%s976 + $0x80] sm:$0xff]
  %v994 = vld [vmem:[%s976 + $0x88] sm:$0xff]
  %v995 = vld [vmem:[%s976 + $0x90] sm:$0xff]
  %v996 = vld [vmem:[%s976 + $0x98] sm:$0xff]
  %v997 = vld [vmem:[%s976 + $0xa0] sm:$0xff]
  %v998 = vld [vmem:[%s976 + $0xa8] sm:$0xff]
  %v999 = vld [vmem:[%s976 + $0xb0] sm:$0xff]
  %v1000 = vld [vmem:[%s976 + $0xb8] sm:$0xff]
  %v1001 = vld [vmem:[%s976 + $0xc0] sm:$0xff]
  %v1002 = vld [vmem:[%s976 + $0xc8] sm:$0xff]
  %v1003 = vld [vmem:[%s976 + $0xd0] sm:$0xff]
  %v1004 = vld [vmem:[%s976 + $0xd8] sm:$0xff]
  %v1005 = vld [vmem:[%s976 + $0xe0] sm:$0xff]
  %v1006 = vld [vmem:[%s976 + $0xe8] sm:$0xff]
  %1007 = vrot.lane.b32.xlu0 %v44, 126
  %v1008 = vpop.permute.xlu0 %1007
  %1009 = vrot.lane.b32.xlu0 %v45, 126
  %v1010 = vpop.permute.xlu0 %1009
  %1011 = vrot.lane.b32.xlu0 %v46, 126
  %v1012 = vpop.permute.xlu0 %1011
  %1013 = vrot.lane.b32.xlu0 %v47, 126
  %v1014 = vpop.permute.xlu0 %1013
  %v1020 = vsel %vm108, %v977, 0
  %v1023 = vsel %vm108, %v978, 0
  %v1026 = vsel %vm108, %v979, 0
  %v1029 = vsel %vm108, %v980, 0
  %v1032 = vsel %vm108, %v981, 0
  %v1035 = vsel %vm108, %v982, 0
  %v1038 = vsel %vm108, %v983, 0
  %v1041 = vsel %vm108, %v984, 0
  %v1044 = vsel %vm108, %v985, 0
  %v1047 = vsel %vm108, %v986, 0
  %v1050 = vsel %vm108, %v987, 0
  %v1053 = vsel %vm108, %v988, 0
  %v1056 = vsel %vm108, %v989, 0
  %v1059 = vsel %vm108, %v990, 0
  %v1062 = vsel %vm108, %v991, 0
  %v1065 = vsel %vm108, %v992, 0
  %v1068 = vsel %vm108, %v993, 0
  %v1071 = vsel %vm108, %v994, 0
  %v1074 = vsel %vm108, %v995, 0
  %v1077 = vsel %vm108, %v996, 0
  %v1080 = vsel %vm108, %v997, 0
  %v1083 = vsel %vm108, %v998, 0
  %v1086 = vsel %vm108, %v999, 0
  %v1089 = vsel %vm108, %v1000, 0
  %v1092 = vsel %vm108, %v1001, 0
  %v1095 = vsel %vm108, %v1002, 0
  %v1098 = vsel %vm108, %v1003, 0
  %v1101 = vsel %vm108, %v1004, 0
  %v1104 = vsel %vm108, %v1005, 0
  %v1107 = vsel %vm108, %v1006, 0
  %1109 = vmatprep.subr.mxu0 0.0
  %1110 = vmatpush1.msra.mxu0 %v1008
  %1111 = vmatprep.subr.mxu0 0.0
  %1112 = vmatpush1.msra.mxu0 %v1010
  %1113 = vmatprep.subr.mxu0 0.0
  %1114 = vmatpush1.msra.mxu0 %v1012
  %1115 = vmatprep.subr.mxu0 0.0
  %1116 = vmatpush1.msra.mxu0 %v1014
  %1117 = vmatprep.subr.mxu0 0.0
  %1118 = vmatpush1.msra.mxu0 0.0
  %1119 = vmatprep.subr.mxu0 0.0
  %1120 = vmatpush1.msra.mxu0 0.0
  %1121 = vmatprep.subr.mxu0 0.0
  %1122 = vmatpush1.msra.mxu0 0.0
  %1123 = vmatprep.subr.mxu0 0.0
  %1124 = vmatpush1.msra.mxu0 0.0
  %1125 = vmatprep.subr.mxu0 0.0
  %1126 = vmatpush1.msra.mxu0 0.0
  %1127 = vmatprep.subr.mxu0 0.0
  %1128 = vmatpush1.msra.mxu0 0.0
  %1129 = vmatprep.subr.mxu0 0.0
  %1130 = vmatpush1.msra.mxu0 0.0
  %1131 = vmatprep.subr.mxu0 0.0
  %1132 = vmatpush1.msra.mxu0 0.0
  %1133 = vmatprep.subr.mxu0 0.0
  %1134 = vmatpush1.msra.mxu0 0.0
  %1135 = vmatprep.subr.mxu0 0.0
  %1136 = vmatpush1.msra.mxu0 0.0
  %1137 = vmatprep.subr.mxu0 0.0
  %1138 = vmatpush1.msra.mxu0 0.0
  %1139 = vmatprep.subr.mxu0 0.0
  %1140 = vmatpush1.msra.mxu0 0.0
  %1141 = vmatprep.subr.mxu0 0.0
  %1142 = vmatpush1.msra.mxu0 0.0
  %1143 = vmatprep.subr.mxu0 0.0
  %1144 = vmatpush1.msra.mxu0 0.0
  %1145 = vmatprep.subr.mxu0 0.0
  %1146 = vmatpush1.msra.mxu0 0.0
  %1147 = vmatprep.subr.mxu0 0.0
  %1148 = vmatpush1.msra.mxu0 0.0
  %1149 = vmatprep.subr.mxu0 0.0
  %1150 = vmatpush1.msra.mxu0 0.0
  %1151 = vmatprep.subr.mxu0 0.0
  %1152 = vmatpush1.msra.mxu0 0.0
  %1153 = vmatprep.subr.mxu0 0.0
  %1154 = vmatpush1.msra.mxu0 0.0
  %1155 = vmatprep.subr.mxu0 0.0
  %1156 = vmatpush1.msra.mxu0 0.0
  %1157 = vmatprep.subr.mxu0 0.0
  %1158 = vmatpush1.msra.mxu0 0.0
  %1159 = vmatprep.subr.mxu0 0.0
  %1160 = vmatpush1.msra.mxu0 0.0
  %1161 = vmatprep.subr.mxu0 0.0
  %1162 = vmatpush1.msra.mxu0 0.0
  %1163 = vmatprep.subr.mxu0 0.0
  %1164 = vmatpush1.msra.mxu0 0.0
  %1165 = vmatprep.subr.mxu0 0.0
  %1166 = vmatpush1.msra.mxu0 0.0
  %1167 = vmatprep.subr.mxu0 0.0
  %1168 = vmatpush1.msra.mxu0 0.0
  %1169 = vmatprep.subr.mxu0 0.0
  %1170 = vmatpush1.msra.mxu0 0.0
  %1171 = vmatprep.subr.mxu0 0.0
  %1172 = vmatpush1.msra.mxu0 0.0
  %1173 = vmatprep.mubr.f32.mxu0 0.0
  %1174 = vmatmul.mubr.f32.gmra.mrb[0].mxu0 %v1020
  %v1175 = vpop.f32.mrb[0].mxu0
  %v1176 = vadd.f32 0.0, %v1175
  %v1177 = vpop.f32.mrb[0].mxu0
  %1178 = vmatprep.mubr.f32.mxu0 0.0
  %1179 = vmatmul.mubr.f32.gmra.mrb[0].mxu0 %v1023
  %v1180 = vpop.f32.mrb[0].mxu0
  %v1181 = vadd.f32 0.0, %v1180
  %v1182 = vpop.f32.mrb[0].mxu0
  %1183 = vmatprep.mubr.f32.mxu0 0.0
  %1184 = vmatmul.mubr.f32.gmra.mrb[0].mxu0 %v1026
  %v1185 = vpop.f32.mrb[0].mxu0
  %v1186 = vadd.f32 0.0, %v1185
  %v1187 = vpop.f32.mrb[0].mxu0
  %1188 = vmatprep.mubr.f32.mxu0 0.0
  %1189 = vmatmul.mubr.f32.gmra.mrb[0].mxu0 %v1029
  %v1190 = vpop.f32.mrb[0].mxu0
  %v1191 = vadd.f32 0.0, %v1190
  %v1192 = vpop.f32.mrb[0].mxu0
  %1193 = vmatprep.mubr.f32.mxu0 0.0
  %1194 = vmatmul.mubr.f32.gmra.mrb[0].mxu0 %v1032
  %v1195 = vpop.f32.mrb[0].mxu0
  %v1196 = vadd.f32 0.0, %v1195
  %v1197 = vpop.f32.mrb[0].mxu0
  %1198 = vmatprep.mubr.f32.mxu0 0.0
  %1199 = vmatmul.mubr.f32.gmra.mrb[0].mxu0 %v1035
  %v1200 = vpop.f32.mrb[0].mxu0
  %v1201 = vadd.f32 0.0, %v1200
  %v1202 = vpop.f32.mrb[0].mxu0
  %1203 = vmatprep.mubr.f32.mxu0 0.0
  %1204 = vmatmul.mubr.f32.gmra.mrb[0].mxu0 %v1038
  %v1205 = vpop.f32.mrb[0].mxu0
  %v1206 = vadd.f32 0.0, %v1205
  %v1207 = vpop.f32.mrb[0].mxu0
  %1208 = vmatprep.mubr.f32.mxu0 0.0
  %1209 = vmatmul.mubr.f32.gmra.mrb[0].mxu0 %v1041
  %v1210 = vpop.f32.mrb[0].mxu0
  %v1211 = vadd.f32 0.0, %v1210
  %v1212 = vpop.f32.mrb[0].mxu0
  %1213 = vmatprep.mubr.f32.mxu0 0.0
  %1214 = vmatmul.mubr.f32.gmra.mrb[0].mxu0 %v1044
  %v1215 = vpop.f32.mrb[0].mxu0
  %v1216 = vadd.f32 0.0, %v1215
  %v1217 = vpop.f32.mrb[0].mxu0
  %1218 = vmatprep.mubr.f32.mxu0 0.0
  %1219 = vmatmul.mubr.f32.gmra.mrb[0].mxu0 %v1047
  %v1220 = vpop.f32.mrb[0].mxu0
  %v1221 = vadd.f32 0.0, %v1220
  %v1222 = vpop.f32.mrb[0].mxu0
  %1223 = vmatprep.mubr.f32.mxu0 0.0
  %1224 = vmatmul.mubr.f32.gmra.mrb[0].mxu0 %v1050
  %v1225 = vpop.f32.mrb[0].mxu0
  %v1226 = vadd.f32 0.0, %v1225
  %v1227 = vpop.f32.mrb[0].mxu0
  %1228 = vmatprep.mubr.f32.mxu0 0.0
  %1229 = vmatmul.mubr.f32.gmra.mrb[0].mxu0 %v1053
  %v1230 = vpop.f32.mrb[0].mxu0
  %v1231 = vadd.f32 0.0, %v1230
  %v1232 = vpop.f32.mrb[0].mxu0
  %1233 = vmatprep.mubr.f32.mxu0 0.0
  %1234 = vmatmul.mubr.f32.gmra.mrb[0].mxu0 %v1056
  %v1235 = vpop.f32.mrb[0].mxu0
  %v1236 = vadd.f32 0.0, %v1235
  %v1237 = vpop.f32.mrb[0].mxu0
  %1238 = vmatprep.mubr.f32.mxu0 0.0
  %1239 = vmatmul.mubr.f32.gmra.mrb[0].mxu0 %v1059
  %v1240 = vpop.f32.mrb[0].mxu0
  %v1241 = vadd.f32 0.0, %v1240
  %v1242 = vpop.f32.mrb[0].mxu0
  %1243 = vmatprep.mubr.f32.mxu0 0.0
  %1244 = vmatmul.mubr.f32.gmra.mrb[0].mxu0 %v1062
  %v1245 = vpop.f32.mrb[0].mxu0
  %v1246 = vadd.f32 0.0, %v1245
  %v1247 = vpop.f32.mrb[0].mxu0
  %1248 = vmatprep.mubr.f32.mxu0 0.0
  %1249 = vmatmul.mubr.f32.gmra.mrb[0].mxu0 %v1065
  %v1250 = vpop.f32.mrb[0].mxu0
  %v1251 = vadd.f32 0.0, %v1250
  %v1252 = vpop.f32.mrb[0].mxu0
  %1253 = vmatprep.mubr.f32.mxu0 0.0
  %1254 = vmatmul.mubr.f32.gmra.mrb[0].mxu0 %v1068
  %v1255 = vpop.f32.mrb[0].mxu0
  %v1256 = vadd.f32 0.0, %v1255
  %v1257 = vpop.f32.mrb[0].mxu0
  %1258 = vmatprep.mubr.f32.mxu0 0.0
  %1259 = vmatmul.mubr.f32.gmra.mrb[0].mxu0 %v1071
  %v1260 = vpop.f32.mrb[0].mxu0
  %v1261 = vadd.f32 0.0, %v1260
  %v1262 = vpop.f32.mrb[0].mxu0
  %1263 = vmatprep.mubr.f32.mxu0 0.0
  %1264 = vmatmul.mubr.f32.gmra.mrb[0].mxu0 %v1074
  %v1265 = vpop.f32.mrb[0].mxu0
  %v1266 = vadd.f32 0.0, %v1265
  %v1267 = vpop.f32.mrb[0].mxu0
  %1268 = vmatprep.mubr.f32.mxu0 0.0
  %1269 = vmatmul.mubr.f32.gmra.mrb[0].mxu0 %v1077
  %v1270 = vpop.f32.mrb[0].mxu0
  %v1271 = vadd.f32 0.0, %v1270
  %v1272 = vpop.f32.mrb[0].mxu0
  %1273 = vmatprep.mubr.f32.mxu0 0.0
  %1274 = vmatmul.mubr.f32.gmra.mrb[0].mxu0 %v1080
  %v1275 = vpop.f32.mrb[0].mxu0
  %v1276 = vadd.f32 0.0, %v1275
  %v1277 = vpop.f32.mrb[0].mxu0
  %1278 = vmatprep.mubr.f32.mxu0 0.0
  %1279 = vmatmul.mubr.f32.gmra.mrb[0].mxu0 %v1083
  %v1280 = vpop.f32.mrb[0].mxu0
  %v1281 = vadd.f32 0.0, %v1280
  %v1282 = vpop.f32.mrb[0].mxu0
  %1283 = vmatprep.mubr.f32.mxu0 0.0
  %1284 = vmatmul.mubr.f32.gmra.mrb[0].mxu0 %v1086
  %v1285 = vpop.f32.mrb[0].mxu0
  %v1286 = vadd.f32 0.0, %v1285
  %v1287 = vpop.f32.mrb[0].mxu0
  %1288 = vmatprep.mubr.f32.mxu0 0.0
  %1289 = vmatmul.mubr.f32.gmra.mrb[0].mxu0 %v1089
  %v1290 = vpop.f32.mrb[0].mxu0
  %v1291 = vadd.f32 0.0, %v1290
  %v1292 = vpop.f32.mrb[0].mxu0
  %1293 = vmatprep.mubr.f32.mxu0 0.0
  %1294 = vmatmul.mubr.f32.gmra.mrb[0].mxu0 %v1092
  %v1295 = vpop.f32.mrb[0].mxu0
  %v1296 = vadd.f32 0.0, %v1295
  %v1297 = vpop.f32.mrb[0].mxu0
  %1298 = vmatprep.mubr.f32.mxu0 0.0
  %1299 = vmatmul.mubr.f32.gmra.mrb[0].mxu0 %v1095
  %v1300 = vpop.f32.mrb[0].mxu0
  %v1301 = vadd.f32 0.0, %v1300
  %v1302 = vpop.f32.mrb[0].mxu0
  %1303 = vmatprep.mubr.f32.mxu0 0.0
  %1304 = vmatmul.mubr.f32.gmra.mrb[0].mxu0 %v1098
  %v1305 = vpop.f32.mrb[0].mxu0
  %v1306 = vadd.f32 0.0, %v1305
  %v1307 = vpop.f32.mrb[0].mxu0
  %1308 = vmatprep.mubr.f32.mxu0 0.0
  %1309 = vmatmul.mubr.f32.gmra.mrb[0].mxu0 %v1101
  %v1310 = vpop.f32.mrb[0].mxu0
  %v1311 = vadd.f32 0.0, %v1310
  %v1312 = vpop.f32.mrb[0].mxu0
  %1313 = vmatprep.mubr.f32.mxu0 0.0
  %1314 = vmatmul.mubr.f32.gmra.mrb[0].mxu0 %v1104
  %v1315 = vpop.f32.mrb[0].mxu0
  %v1316 = vadd.f32 0.0, %v1315
  %v1317 = vpop.f32.mrb[0].mxu0
  %1318 = vmatprep.mubr.f32.mxu0 0.0
  %1319 = vmatmul.mubr.f32.gmra.mrb[0].mxu0 %v1107
  %v1320 = vpop.f32.mrb[0].mxu0
  %v1321 = vadd.f32 0.0, %v1320
  %v1322 = vpop.f32.mrb[0].mxu0
  %1323 = vdwg.mxu0
  %v1324 = vadd.f32 %v946, %v1176
  %v1325 = vadd.f32 %v947, %v1181
  %v1326 = vadd.f32 %v948, %v1186
  %v1327 = vadd.f32 %v949, %v1191
  %v1328 = vadd.f32 %v950, %v1196
  %v1329 = vadd.f32 %v951, %v1201
  %v1330 = vadd.f32 %v952, %v1206
  %v1331 = vadd.f32 %v953, %v1211
  %v1332 = vadd.f32 %v954, %v1216
  %v1333 = vadd.f32 %v955, %v1221
  %v1334 = vadd.f32 %v956, %v1226
  %v1335 = vadd.f32 %v957, %v1231
  %v1336 = vadd.f32 %v958, %v1236
  %v1337 = vadd.f32 %v959, %v1241
  %v1338 = vadd.f32 %v960, %v1246
  %v1339 = vadd.f32 %v961, %v1251
  %v1340 = vadd.f32 %v962, %v1256
  %v1341 = vadd.f32 %v963, %v1261
  %v1342 = vadd.f32 %v964, %v1266
  %v1343 = vadd.f32 %v965, %v1271
  %v1344 = vadd.f32 %v966, %v1276
  %v1345 = vadd.f32 %v967, %v1281
  %v1346 = vadd.f32 %v968, %v1286
  %v1347 = vadd.f32 %v969, %v1291
  %v1348 = vadd.f32 %v970, %v1296
  %v1349 = vadd.f32 %v971, %v1301
  %v1350 = vadd.f32 %v972, %v1306
  %v1351 = vadd.f32 %v973, %v1311
  %v1352 = vadd.f32 %v974, %v1316
  %v1353 = vadd.f32 %v975, %v1321
  %s1354 = scalar_lea.vmem %s1, 720
  %v1355 = vld [vmem:[%s1354] sm:$0xff]
  %v1356 = vld [vmem:[%s1354 + $0x8] sm:$0xff]
  %v1357 = vld [vmem:[%s1354 + $0x10] sm:$0xff]
  %v1358 = vld [vmem:[%s1354 + $0x18] sm:$0xff]
  %v1359 = vld [vmem:[%s1354 + $0x20] sm:$0xff]
  %v1360 = vld [vmem:[%s1354 + $0x28] sm:$0xff]
  %v1361 = vld [vmem:[%s1354 + $0x30] sm:$0xff]
  %v1362 = vld [vmem:[%s1354 + $0x38] sm:$0xff]
  %v1363 = vld [vmem:[%s1354 + $0x40] sm:$0xff]
  %v1364 = vld [vmem:[%s1354 + $0x48] sm:$0xff]
  %v1365 = vld [vmem:[%s1354 + $0x50] sm:$0xff]
  %v1366 = vld [vmem:[%s1354 + $0x58] sm:$0xff]
  %v1367 = vld [vmem:[%s1354 + $0x60] sm:$0xff]
  %v1368 = vld [vmem:[%s1354 + $0x68] sm:$0xff]
  %v1369 = vld [vmem:[%s1354 + $0x70] sm:$0xff]
  %v1370 = vld [vmem:[%s1354 + $0x78] sm:$0xff]
  %v1371 = vld [vmem:[%s1354 + $0x80] sm:$0xff]
  %v1372 = vld [vmem:[%s1354 + $0x88] sm:$0xff]
  %v1373 = vld [vmem:[%s1354 + $0x90] sm:$0xff]
  %v1374 = vld [vmem:[%s1354 + $0x98] sm:$0xff]
  %v1375 = vld [vmem:[%s1354 + $0xa0] sm:$0xff]
  %v1376 = vld [vmem:[%s1354 + $0xa8] sm:$0xff]
  %v1377 = vld [vmem:[%s1354 + $0xb0] sm:$0xff]
  %v1378 = vld [vmem:[%s1354 + $0xb8] sm:$0xff]
  %v1379 = vld [vmem:[%s1354 + $0xc0] sm:$0xff]
  %v1380 = vld [vmem:[%s1354 + $0xc8] sm:$0xff]
  %v1381 = vld [vmem:[%s1354 + $0xd0] sm:$0xff]
  %v1382 = vld [vmem:[%s1354 + $0xd8] sm:$0xff]
  %v1383 = vld [vmem:[%s1354 + $0xe0] sm:$0xff]
  %v1384 = vld [vmem:[%s1354 + $0xe8] sm:$0xff]
  %1385 = vrot.lane.b32.xlu0 %v44, 125
  %v1386 = vpop.permute.xlu0 %1385
  %1387 = vrot.lane.b32.xlu0 %v45, 125
  %v1388 = vpop.permute.xlu0 %1387
  %1389 = vrot.lane.b32.xlu0 %v46, 125
  %v1390 = vpop.permute.xlu0 %1389
  %1391 = vrot.lane.b32.xlu0 %v47, 125
  %v1392 = vpop.permute.xlu0 %1391
  %v1398 = vsel %vm108, %v1355, 0
  %v1401 = vsel %vm108, %v1356, 0
  %v1404 = vsel %vm108, %v1357, 0
  %v1407 = vsel %vm108, %v1358, 0
  %v1410 = vsel %vm108, %v1359, 0
  %v1413 = vsel %vm108, %v1360, 0
  %v1416 = vsel %vm108, %v1361, 0
  %v1419 = vsel %vm108, %v1362, 0
  %v1422 = vsel %vm108, %v1363, 0
  %v1425 = vsel %vm108, %v1364, 0
  %v1428 = vsel %vm108, %v1365, 0
  %v1431 = vsel %vm108, %v1366, 0
  %v1434 = vsel %vm108, %v1367, 0
  %v1437 = vsel %vm108, %v1368, 0
  %v1440 = vsel %vm108, %v1369, 0
  %v1443 = vsel %vm108, %v1370, 0
  %v1446 = vsel %vm108, %v1371, 0
  %v1449 = vsel %vm108, %v1372, 0
  %v1452 = vsel %vm108, %v1373, 0
  %v1455 = vsel %vm108, %v1374, 0
  %v1458 = vsel %vm108, %v1375, 0
  %v1461 = vsel %vm108, %v1376, 0
  %v1464 = vsel %vm108, %v1377, 0
  %v1467 = vsel %vm108, %v1378, 0
  %v1470 = vsel %vm108, %v1379, 0
  %v1473 = vsel %vm108, %v1380, 0
  %v1476 = vsel %vm108, %v1381, 0
  %v1479 = vsel %vm108, %v1382, 0
  %v1482 = vsel %vm108, %v1383, 0
  %v1485 = vsel %vm108, %v1384, 0
  %1487 = vmatprep.subr.mxu0 0.0
  %1488 = vmatpush1.msra.mxu0 %v1386
  %1489 = vmatprep.subr.mxu0 0.0
  %1490 = vmatpush1.msra.mxu0 %v1388
  %1491 = vmatprep.subr.mxu0 0.0
  %1492 = vmatpush1.msra.mxu0 %v1390
  %1493 = vmatprep.subr.mxu0 0.0
  %1494 = vmatpush1.msra.mxu0 %v1392
  %1495 = vmatprep.subr.mxu0 0.0
  %1496 = vmatpush1.msra.mxu0 0.0
  %1497 = vmatprep.subr.mxu0 0.0
  %1498 = vmatpush1.msra.mxu0 0.0
  %1499 = vmatprep.subr.mxu0 0.0
  %1500 = vmatpush1.msra.mxu0 0.0
  %1501 = vmatprep.subr.mxu0 0.0
  %1502 = vmatpush1.msra.mxu0 0.0
  %1503 = vmatprep.subr.mxu0 0.0
  %1504 = vmatpush1.msra.mxu0 0.0
  %1505 = vmatprep.subr.mxu0 0.0
  %1506 = vmatpush1.msra.mxu0 0.0
  %1507 = vmatprep.subr.mxu0 0.0
  %1508 = vmatpush1.msra.mxu0 0.0
  %1509 = vmatprep.subr.mxu0 0.0
  %1510 = vmatpush1.msra.mxu0 0.0
  %1511 = vmatprep.subr.mxu0 0.0
  %1512 = vmatpush1.msra.mxu0 0.0
  %1513 = vmatprep.subr.mxu0 0.0
  %1514 = vmatpush1.msra.mxu0 0.0
  %1515 = vmatprep.subr.mxu0 0.0
  %1516 = vmatpush1.msra.mxu0 0.0
  %1517 = vmatprep.subr.mxu0 0.0
  %1518 = vmatpush1.msra.mxu0 0.0
  %1519 = vmatprep.subr.mxu0 0.0
  %1520 = vmatpush1.msra.mxu0 0.0
  %1521 = vmatprep.subr.mxu0 0.0
  %1522 = vmatpush1.msra.mxu0 0.0
  %1523 = vmatprep.subr.mxu0 0.0
  %1524 = vmatpush1.msra.mxu0 0.0
  %1525 = vmatprep.subr.mxu0 0.0
  %1526 = vmatpush1.msra.mxu0 0.0
  %1527 = vmatprep.subr.mxu0 0.0
  %1528 = vmatpush1.msra.mxu0 0.0
  %1529 = vmatprep.subr.mxu0 0.0
  %1530 = vmatpush1.msra.mxu0 0.0
  %1531 = vmatprep.subr.mxu0 0.0
  %1532 = vmatpush1.msra.mxu0 0.0
  %1533 = vmatprep.subr.mxu0 0.0
  %1534 = vmatpush1.msra.mxu0 0.0
  %1535 = vmatprep.subr.mxu0 0.0
  %1536 = vmatpush1.msra.mxu0 0.0
  %1537 = vmatprep.subr.mxu0 0.0
  %1538 = vmatpush1.msra.mxu0 0.0
  %1539 = vmatprep.subr.mxu0 0.0
  %1540 = vmatpush1.msra.mxu0 0.0
  %1541 = vmatprep.subr.mxu0 0.0
  %1542 = vmatpush1.msra.mxu0 0.0
  %1543 = vmatprep.subr.mxu0 0.0
  %1544 = vmatpush1.msra.mxu0 0.0
  %1545 = vmatprep.subr.mxu0 0.0
  %1546 = vmatpush1.msra.mxu0 0.0
  %1547 = vmatprep.subr.mxu0 0.0
  %1548 = vmatpush1.msra.mxu0 0.0
  %1549 = vmatprep.subr.mxu0 0.0
  %1550 = vmatpush1.msra.mxu0 0.0
  %1551 = vmatprep.mubr.f32.mxu0 0.0
  %1552 = vmatmul.mubr.f32.gmra.mrb[0].mxu0 %v1398
  %v1553 = vpop.f32.mrb[0].mxu0
  %v1554 = vadd.f32 0.0, %v1553
  %v1555 = vpop.f32.mrb[0].mxu0
  %1556 = vmatprep.mubr.f32.mxu0 0.0
  %1557 = vmatmul.mubr.f32.gmra.mrb[0].mxu0 %v1401
  %v1558 = vpop.f32.mrb[0].mxu0
  %v1559 = vadd.f32 0.0, %v1558
  %v1560 = vpop.f32.mrb[0].mxu0
  %1561 = vmatprep.mubr.f32.mxu0 0.0
  %1562 = vmatmul.mubr.f32.gmra.mrb[0].mxu0 %v1404
  %v1563 = vpop.f32.mrb[0].mxu0
  %v1564 = vadd.f32 0.0, %v1563
  %v1565 = vpop.f32.mrb[0].mxu0
  %1566 = vmatprep.mubr.f32.mxu0 0.0
  %1567 = vmatmul.mubr.f32.gmra.mrb[0].mxu0 %v1407
  %v1568 = vpop.f32.mrb[0].mxu0
  %v1569 = vadd.f32 0.0, %v1568
  %v1570 = vpop.f32.mrb[0].mxu0
  %1571 = vmatprep.mubr.f32.mxu0 0.0
  %1572 = vmatmul.mubr.f32.gmra.mrb[0].mxu0 %v1410
  %v1573 = vpop.f32.mrb[0].mxu0
  %v1574 = vadd.f32 0.0, %v1573
  %v1575 = vpop.f32.mrb[0].mxu0
  %1576 = vmatprep.mubr.f32.mxu0 0.0
  %1577 = vmatmul.mubr.f32.gmra.mrb[0].mxu0 %v1413
  %v1578 = vpop.f32.mrb[0].mxu0
  %v1579 = vadd.f32 0.0, %v1578
  %v1580 = vpop.f32.mrb[0].mxu0
  %1581 = vmatprep.mubr.f32.mxu0 0.0
  %1582 = vmatmul.mubr.f32.gmra.mrb[0].mxu0 %v1416
  %v1583 = vpop.f32.mrb[0].mxu0
  %v1584 = vadd.f32 0.0, %v1583
  %v1585 = vpop.f32.mrb[0].mxu0
  %1586 = vmatprep.mubr.f32.mxu0 0.0
  %1587 = vmatmul.mubr.f32.gmra.mrb[0].mxu0 %v1419
  %v1588 = vpop.f32.mrb[0].mxu0
  %v1589 = vadd.f32 0.0, %v1588
  %v1590 = vpop.f32.mrb[0].mxu0
  %1591 = vmatprep.mubr.f32.mxu0 0.0
  %1592 = vmatmul.mubr.f32.gmra.mrb[0].mxu0 %v1422
  %v1593 = vpop.f32.mrb[0].mxu0
  %v1594 = vadd.f32 0.0, %v1593
  %v1595 = vpop.f32.mrb[0].mxu0
  %1596 = vmatprep.mubr.f32.mxu0 0.0
  %1597 = vmatmul.mubr.f32.gmra.mrb[0].mxu0 %v1425
  %v1598 = vpop.f32.mrb[0].mxu0
  %v1599 = vadd.f32 0.0, %v1598
  %v1600 = vpop.f32.mrb[0].mxu0
  %1601 = vmatprep.mubr.f32.mxu0 0.0
  %1602 = vmatmul.mubr.f32.gmra.mrb[0].mxu0 %v1428
  %v1603 = vpop.f32.mrb[0].mxu0
  %v1604 = vadd.f32 0.0, %v1603
  %v1605 = vpop.f32.mrb[0].mxu0
  %1606 = vmatprep.mubr.f32.mxu0 0.0
  %1607 = vmatmul.mubr.f32.gmra.mrb[0].mxu0 %v1431
  %v1608 = vpop.f32.mrb[0].mxu0
  %v1609 = vadd.f32 0.0, %v1608
  %v1610 = vpop.f32.mrb[0].mxu0
  %1611 = vmatprep.mubr.f32.mxu0 0.0
  %1612 = vmatmul.mubr.f32.gmra.mrb[0].mxu0 %v1434
  %v1613 = vpop.f32.mrb[0].mxu0
  %v1614 = vadd.f32 0.0, %v1613
  %v1615 = vpop.f32.mrb[0].mxu0
  %1616 = vmatprep.mubr.f32.mxu0 0.0
  %1617 = vmatmul.mubr.f32.gmra.mrb[0].mxu0 %v1437
  %v1618 = vpop.f32.mrb[0].mxu0
  %v1619 = vadd.f32 0.0, %v1618
  %v1620 = vpop.f32.mrb[0].mxu0
  %1621 = vmatprep.mubr.f32.mxu0 0.0
  %1622 = vmatmul.mubr.f32.gmra.mrb[0].mxu0 %v1440
  %v1623 = vpop.f32.mrb[0].mxu0
  %v1624 = vadd.f32 0.0, %v1623
  %v1625 = vpop.f32.mrb[0].mxu0
  %1626 = vmatprep.mubr.f32.mxu0 0.0
  %1627 = vmatmul.mubr.f32.gmra.mrb[0].mxu0 %v1443
  %v1628 = vpop.f32.mrb[0].mxu0
  %v1629 = vadd.f32 0.0, %v1628
  %v1630 = vpop.f32.mrb[0].mxu0
  %1631 = vmatprep.mubr.f32.mxu0 0.0
  %1632 = vmatmul.mubr.f32.gmra.mrb[0].mxu0 %v1446
  %v1633 = vpop.f32.mrb[0].mxu0
  %v1634 = vadd.f32 0.0, %v1633
  %v1635 = vpop.f32.mrb[0].mxu0
  %1636 = vmatprep.mubr.f32.mxu0 0.0
  %1637 = vmatmul.mubr.f32.gmra.mrb[0].mxu0 %v1449
  %v1638 = vpop.f32.mrb[0].mxu0
  %v1639 = vadd.f32 0.0, %v1638
  %v1640 = vpop.f32.mrb[0].mxu0
  %1641 = vmatprep.mubr.f32.mxu0 0.0
  %1642 = vmatmul.mubr.f32.gmra.mrb[0].mxu0 %v1452
  %v1643 = vpop.f32.mrb[0].mxu0
  %v1644 = vadd.f32 0.0, %v1643
  %v1645 = vpop.f32.mrb[0].mxu0
  %1646 = vmatprep.mubr.f32.mxu0 0.0
  %1647 = vmatmul.mubr.f32.gmra.mrb[0].mxu0 %v1455
  %v1648 = vpop.f32.mrb[0].mxu0
  %v1649 = vadd.f32 0.0, %v1648
  %v1650 = vpop.f32.mrb[0].mxu0
  %1651 = vmatprep.mubr.f32.mxu0 0.0
  %1652 = vmatmul.mubr.f32.gmra.mrb[0].mxu0 %v1458
  %v1653 = vpop.f32.mrb[0].mxu0
  %v1654 = vadd.f32 0.0, %v1653
  %v1655 = vpop.f32.mrb[0].mxu0
  %1656 = vmatprep.mubr.f32.mxu0 0.0
  %1657 = vmatmul.mubr.f32.gmra.mrb[0].mxu0 %v1461
  %v1658 = vpop.f32.mrb[0].mxu0
  %v1659 = vadd.f32 0.0, %v1658
  %v1660 = vpop.f32.mrb[0].mxu0
  %1661 = vmatprep.mubr.f32.mxu0 0.0
  %1662 = vmatmul.mubr.f32.gmra.mrb[0].mxu0 %v1464
  %v1663 = vpop.f32.mrb[0].mxu0
  %v1664 = vadd.f32 0.0, %v1663
  %v1665 = vpop.f32.mrb[0].mxu0
  %1666 = vmatprep.mubr.f32.mxu0 0.0
  %1667 = vmatmul.mubr.f32.gmra.mrb[0].mxu0 %v1467
  %v1668 = vpop.f32.mrb[0].mxu0
  %v1669 = vadd.f32 0.0, %v1668
  %v1670 = vpop.f32.mrb[0].mxu0
  %1671 = vmatprep.mubr.f32.mxu0 0.0
  %1672 = vmatmul.mubr.f32.gmra.mrb[0].mxu0 %v1470
  %v1673 = vpop.f32.mrb[0].mxu0
  %v1674 = vadd.f32 0.0, %v1673
  %v1675 = vpop.f32.mrb[0].mxu0
  %1676 = vmatprep.mubr.f32.mxu0 0.0
  %1677 = vmatmul.mubr.f32.gmra.mrb[0].mxu0 %v1473
  %v1678 = vpop.f32.mrb[0].mxu0
  %v1679 = vadd.f32 0.0, %v1678
  %v1680 = vpop.f32.mrb[0].mxu0
  %1681 = vmatprep.mubr.f32.mxu0 0.0
  %1682 = vmatmul.mubr.f32.gmra.mrb[0].mxu0 %v1476
  %v1683 = vpop.f32.mrb[0].mxu0
  %v1684 = vadd.f32 0.0, %v1683
  %v1685 = vpop.f32.mrb[0].mxu0
  %1686 = vmatprep.mubr.f32.mxu0 0.0
  %1687 = vmatmul.mubr.f32.gmra.mrb[0].mxu0 %v1479
  %v1688 = vpop.f32.mrb[0].mxu0
  %v1689 = vadd.f32 0.0, %v1688
  %v1690 = vpop.f32.mrb[0].mxu0
  %1691 = vmatprep.mubr.f32.mxu0 0.0
  %1692 = vmatmul.mubr.f32.gmra.mrb[0].mxu0 %v1482
  %v1693 = vpop.f32.mrb[0].mxu0
  %v1694 = vadd.f32 0.0, %v1693
  %v1695 = vpop.f32.mrb[0].mxu0
  %1696 = vmatprep.mubr.f32.mxu0 0.0
  %1697 = vmatmul.mubr.f32.gmra.mrb[0].mxu0 %v1485
  %v1698 = vpop.f32.mrb[0].mxu0
  %v1699 = vadd.f32 0.0, %v1698
  %v1700 = vpop.f32.mrb[0].mxu0
  %1701 = vdwg.mxu0
  %v1702 = vadd.f32 %v1324, %v1554
  %v1703 = vadd.f32 %v1325, %v1559
  %v1704 = vadd.f32 %v1326, %v1564
  %v1705 = vadd.f32 %v1327, %v1569
  %v1706 = vadd.f32 %v1328, %v1574
  %v1707 = vadd.f32 %v1329, %v1579
  %v1708 = vadd.f32 %v1330, %v1584
  %v1709 = vadd.f32 %v1331, %v1589
  %v1710 = vadd.f32 %v1332, %v1594
  %v1711 = vadd.f32 %v1333, %v1599
  %v1712 = vadd.f32 %v1334, %v1604
  %v1713 = vadd.f32 %v1335, %v1609
  %v1714 = vadd.f32 %v1336, %v1614
  %v1715 = vadd.f32 %v1337, %v1619
  %v1716 = vadd.f32 %v1338, %v1624
  %v1717 = vadd.f32 %v1339, %v1629
  %v1718 = vadd.f32 %v1340, %v1634
  %v1719 = vadd.f32 %v1341, %v1639
  %v1720 = vadd.f32 %v1342, %v1644
  %v1721 = vadd.f32 %v1343, %v1649
  %v1722 = vadd.f32 %v1344, %v1654
  %v1723 = vadd.f32 %v1345, %v1659
  %v1724 = vadd.f32 %v1346, %v1664
  %v1725 = vadd.f32 %v1347, %v1669
  %v1726 = vadd.f32 %v1348, %v1674
  %v1727 = vadd.f32 %v1349, %v1679
  %v1728 = vadd.f32 %v1350, %v1684
  %v1729 = vadd.f32 %v1351, %v1689
  %v1730 = vadd.f32 %v1352, %v1694
  %v1731 = vadd.f32 %v1353, %v1699
  %s1732 = scalar_lea.vmem %s1, 960
  %v1733 = vld [vmem:[%s1732] sm:$0xff]
  %v1734 = vld [vmem:[%s1732 + $0x8] sm:$0xff]
  %v1735 = vld [vmem:[%s1732 + $0x10] sm:$0xff]
  %v1736 = vld [vmem:[%s1732 + $0x18] sm:$0xff]
  %v1737 = vld [vmem:[%s1732 + $0x20] sm:$0xff]
  %v1738 = vld [vmem:[%s1732 + $0x28] sm:$0xff]
  %v1739 = vld [vmem:[%s1732 + $0x30] sm:$0xff]
  %v1740 = vld [vmem:[%s1732 + $0x38] sm:$0xff]
  %v1741 = vld [vmem:[%s1732 + $0x40] sm:$0xff]
  %v1742 = vld [vmem:[%s1732 + $0x48] sm:$0xff]
  %v1743 = vld [vmem:[%s1732 + $0x50] sm:$0xff]
  %v1744 = vld [vmem:[%s1732 + $0x58] sm:$0xff]
  %v1745 = vld [vmem:[%s1732 + $0x60] sm:$0xff]
  %v1746 = vld [vmem:[%s1732 + $0x68] sm:$0xff]
  %v1747 = vld [vmem:[%s1732 + $0x70] sm:$0xff]
  %v1748 = vld [vmem:[%s1732 + $0x78] sm:$0xff]
  %v1749 = vld [vmem:[%s1732 + $0x80] sm:$0xff]
  %v1750 = vld [vmem:[%s1732 + $0x88] sm:$0xff]
  %v1751 = vld [vmem:[%s1732 + $0x90] sm:$0xff]
  %v1752 = vld [vmem:[%s1732 + $0x98] sm:$0xff]
  %v1753 = vld [vmem:[%s1732 + $0xa0] sm:$0xff]
  %v1754 = vld [vmem:[%s1732 + $0xa8] sm:$0xff]
  %v1755 = vld [vmem:[%s1732 + $0xb0] sm:$0xff]
  %v1756 = vld [vmem:[%s1732 + $0xb8] sm:$0xff]
  %v1757 = vld [vmem:[%s1732 + $0xc0] sm:$0xff]
  %v1758 = vld [vmem:[%s1732 + $0xc8] sm:$0xff]
  %v1759 = vld [vmem:[%s1732 + $0xd0] sm:$0xff]
  %v1760 = vld [vmem:[%s1732 + $0xd8] sm:$0xff]
  %v1761 = vld [vmem:[%s1732 + $0xe0] sm:$0xff]
  %v1762 = vld [vmem:[%s1732 + $0xe8] sm:$0xff]
  %1763 = vrot.lane.b32.xlu0 %v44, 124
  %v1764 = vpop.permute.xlu0 %1763
  %1765 = vrot.lane.b32.xlu0 %v45, 124
  %v1766 = vpop.permute.xlu0 %1765
  %1767 = vrot.lane.b32.xlu0 %v46, 124
  %v1768 = vpop.permute.xlu0 %1767
  %1769 = vrot.lane.b32.xlu0 %v47, 124
  %v1770 = vpop.permute.xlu0 %1769
  %v1776 = vsel %vm108, %v1733, 0
  %v1779 = vsel %vm108, %v1734, 0
  %v1782 = vsel %vm108, %v1735, 0
  %v1785 = vsel %vm108, %v1736, 0
  %v1788 = vsel %vm108, %v1737, 0
  %v1791 = vsel %vm108, %v1738, 0
  %v1794 = vsel %vm108, %v1739, 0
  %v1797 = vsel %vm108, %v1740, 0
  %v1800 = vsel %vm108, %v1741, 0
  %v1803 = vsel %vm108, %v1742, 0
  %v1806 = vsel %vm108, %v1743, 0
  %v1809 = vsel %vm108, %v1744, 0
  %v1812 = vsel %vm108, %v1745, 0
  %v1815 = vsel %vm108, %v1746, 0
  %v1818 = vsel %vm108, %v1747, 0
  %v1821 = vsel %vm108, %v1748, 0
  %v1824 = vsel %vm108, %v1749, 0
  %v1827 = vsel %vm108, %v1750, 0
  %v1830 = vsel %vm108, %v1751, 0
  %v1833 = vsel %vm108, %v1752, 0
  %v1836 = vsel %vm108, %v1753, 0
  %v1839 = vsel %vm108, %v1754, 0
  %v1842 = vsel %vm108, %v1755, 0
  %v1845 = vsel %vm108, %v1756, 0
  %v1848 = vsel %vm108, %v1757, 0
  %v1851 = vsel %vm108, %v1758, 0
  %v1854 = vsel %vm108, %v1759, 0
  %v1857 = vsel %vm108, %v1760, 0
  %v1860 = vsel %vm108, %v1761, 0
  %v1863 = vsel %vm108, %v1762, 0
  %1865 = vmatprep.subr.mxu0 0.0
  %1866 = vmatpush1.msra.mxu0 %v1764
  %1867 = vmatprep.subr.mxu0 0.0
  %1868 = vmatpush1.msra.mxu0 %v1766
  %1869 = vmatprep.subr.mxu0 0.0
  %1870 = vmatpush1.msra.mxu0 %v1768
  %1871 = vmatprep.subr.mxu0 0.0
  %1872 = vmatpush1.msra.mxu0 %v1770
  %1873 = vmatprep.subr.mxu0 0.0
  %1874 = vmatpush1.msra.mxu0 0.0
  %1875 = vmatprep.subr.mxu0 0.0
  %1876 = vmatpush1.msra.mxu0 0.0
  %1877 = vmatprep.subr.mxu0 0.0
  %1878 = vmatpush1.msra.mxu0 0.0
  %1879 = vmatprep.subr.mxu0 0.0
  %1880 = vmatpush1.msra.mxu0 0.0
  %1881 = vmatprep.subr.mxu0 0.0
  %1882 = vmatpush1.msra.mxu0 0.0
  %1883 = vmatprep.subr.mxu0 0.0
  %1884 = vmatpush1.msra.mxu0 0.0
  %1885 = vmatprep.subr.mxu0 0.0
  %1886 = vmatpush1.msra.mxu0 0.0
  %1887 = vmatprep.subr.mxu0 0.0
  %1888 = vmatpush1.msra.mxu0 0.0
  %1889 = vmatprep.subr.mxu0 0.0
  %1890 = vmatpush1.msra.mxu0 0.0
  %1891 = vmatprep.subr.mxu0 0.0
  %1892 = vmatpush1.msra.mxu0 0.0
  %1893 = vmatprep.subr.mxu0 0.0
  %1894 = vmatpush1.msra.mxu0 0.0
  %1895 = vmatprep.subr.mxu0 0.0
  %1896 = vmatpush1.msra.mxu0 0.0
  %1897 = vmatprep.subr.mxu0 0.0
  %1898 = vmatpush1.msra.mxu0 0.0
  %1899 = vmatprep.subr.mxu0 0.0
  %1900 = vmatpush1.msra.mxu0 0.0
  %1901 = vmatprep.subr.mxu0 0.0
  %1902 = vmatpush1.msra.mxu0 0.0
  %1903 = vmatprep.subr.mxu0 0.0
  %1904 = vmatpush1.msra.mxu0 0.0
  %1905 = vmatprep.subr.mxu0 0.0
  %1906 = vmatpush1.msra.mxu0 0.0
  %1907 = vmatprep.subr.mxu0 0.0
  %1908 = vmatpush1.msra.mxu0 0.0
  %1909 = vmatprep.subr.mxu0 0.0
  %1910 = vmatpush1.msra.mxu0 0.0
  %1911 = vmatprep.subr.mxu0 0.0
  %1912 = vmatpush1.msra.mxu0 0.0
  %1913 = vmatprep.subr.mxu0 0.0
  %1914 = vmatpush1.msra.mxu0 0.0
  %1915 = vmatprep.subr.mxu0 0.0
  %1916 = vmatpush1.msra.mxu0 0.0
  %1917 = vmatprep.subr.mxu0 0.0
  %1918 = vmatpush1.msra.mxu0 0.0
  %1919 = vmatprep.subr.mxu0 0.0
  %1920 = vmatpush1.msra.mxu0 0.0
  %1921 = vmatprep.subr.mxu0 0.0
  %1922 = vmatpush1.msra.mxu0 0.0
  %1923 = vmatprep.subr.mxu0 0.0
  %1924 = vmatpush1.msra.mxu0 0.0
  %1925 = vmatprep.subr.mxu0 0.0
  %1926 = vmatpush1.msra.mxu0 0.0
  %1927 = vmatprep.subr.mxu0 0.0
  %1928 = vmatpush1.msra.mxu0 0.0
  %1929 = vmatprep.mubr.f32.mxu0 0.0
  %1930 = vmatmul.mubr.f32.gmra.mrb[0].mxu0 %v1776
  %v1931 = vpop.f32.mrb[0].mxu0
  %v1932 = vadd.f32 0.0, %v1931
  %v1933 = vpop.f32.mrb[0].mxu0
  %1934 = vmatprep.mubr.f32.mxu0 0.0
  %1935 = vmatmul.mubr.f32.gmra.mrb[0].mxu0 %v1779
  %v1936 = vpop.f32.mrb[0].mxu0
  %v1937 = vadd.f32 0.0, %v1936
  %v1938 = vpop.f32.mrb[0].mxu0
  %1939 = vmatprep.mubr.f32.mxu0 0.0
  %1940 = vmatmul.mubr.f32.gmra.mrb[0].mxu0 %v1782
  %v1941 = vpop.f32.mrb[0].mxu0
  %v1942 = vadd.f32 0.0, %v1941
  %v1943 = vpop.f32.mrb[0].mxu0
  %1944 = vmatprep.mubr.f32.mxu0 0.0
  %1945 = vmatmul.mubr.f32.gmra.mrb[0].mxu0 %v1785
  %v1946 = vpop.f32.mrb[0].mxu0
  %v1947 = vadd.f32 0.0, %v1946
  %v1948 = vpop.f32.mrb[0].mxu0
  %1949 = vmatprep.mubr.f32.mxu0 0.0
  %1950 = vmatmul.mubr.f32.gmra.mrb[0].mxu0 %v1788
  %v1951 = vpop.f32.mrb[0].mxu0
  %v1952 = vadd.f32 0.0, %v1951
  %v1953 = vpop.f32.mrb[0].mxu0
  %1954 = vmatprep.mubr.f32.mxu0 0.0
  %1955 = vmatmul.mubr.f32.gmra.mrb[0].mxu0 %v1791
  %v1956 = vpop.f32.mrb[0].mxu0
  %v1957 = vadd.f32 0.0, %v1956
  %v1958 = vpop.f32.mrb[0].mxu0
  %1959 = vmatprep.mubr.f32.mxu0 0.0
  %1960 = vmatmul.mubr.f32.gmra.mrb[0].mxu0 %v1794
  %v1961 = vpop.f32.mrb[0].mxu0
  %v1962 = vadd.f32 0.0, %v1961
  %v1963 = vpop.f32.mrb[0].mxu0
  %1964 = vmatprep.mubr.f32.mxu0 0.0
  %1965 = vmatmul.mubr.f32.gmra.mrb[0].mxu0 %v1797
  %v1966 = vpop.f32.mrb[0].mxu0
  %v1967 = vadd.f32 0.0, %v1966
  %v1968 = vpop.f32.mrb[0].mxu0
  %1969 = vmatprep.mubr.f32.mxu0 0.0
  %1970 = vmatmul.mubr.f32.gmra.mrb[0].mxu0 %v1800
  %v1971 = vpop.f32.mrb[0].mxu0
  %v1972 = vadd.f32 0.0, %v1971
  %v1973 = vpop.f32.mrb[0].mxu0
  %1974 = vmatprep.mubr.f32.mxu0 0.0
  %1975 = vmatmul.mubr.f32.gmra.mrb[0].mxu0 %v1803
  %v1976 = vpop.f32.mrb[0].mxu0
  %v1977 = vadd.f32 0.0, %v1976
  %v1978 = vpop.f32.mrb[0].mxu0
  %1979 = vmatprep.mubr.f32.mxu0 0.0
  %1980 = vmatmul.mubr.f32.gmra.mrb[0].mxu0 %v1806
  %v1981 = vpop.f32.mrb[0].mxu0
  %v1982 = vadd.f32 0.0, %v1981
  %v1983 = vpop.f32.mrb[0].mxu0
  %1984 = vmatprep.mubr.f32.mxu0 0.0
  %1985 = vmatmul.mubr.f32.gmra.mrb[0].mxu0 %v1809
  %v1986 = vpop.f32.mrb[0].mxu0
  %v1987 = vadd.f32 0.0, %v1986
  %v1988 = vpop.f32.mrb[0].mxu0
  %1989 = vmatprep.mubr.f32.mxu0 0.0
  %1990 = vmatmul.mubr.f32.gmra.mrb[0].mxu0 %v1812
  %v1991 = vpop.f32.mrb[0].mxu0
  %v1992 = vadd.f32 0.0, %v1991
  %v1993 = vpop.f32.mrb[0].mxu0
  %1994 = vmatprep.mubr.f32.mxu0 0.0
  %1995 = vmatmul.mubr.f32.gmra.mrb[0].mxu0 %v1815
  %v1996 = vpop.f32.mrb[0].mxu0
  %v1997 = vadd.f32 0.0, %v1996
  %v1998 = vpop.f32.mrb[0].mxu0
  %1999 = vmatprep.mubr.f32.mxu0 0.0
  %2000 = vmatmul.mubr.f32.gmra.mrb[0].mxu0 %v1818
  %v2001 = vpop.f32.mrb[0].mxu0
  %v2002 = vadd.f32 0.0, %v2001
  %v2003 = vpop.f32.mrb[0].mxu0
  %2004 = vmatprep.mubr.f32.mxu0 0.0
  %2005 = vmatmul.mubr.f32.gmra.mrb[0].mxu0 %v1821
  %v2006 = vpop.f32.mrb[0].mxu0
  %v2007 = vadd.f32 0.0, %v2006
  %v2008 = vpop.f32.mrb[0].mxu0
  %2009 = vmatprep.mubr.f32.mxu0 0.0
  %2010 = vmatmul.mubr.f32.gmra.mrb[0].mxu0 %v1824
  %v2011 = vpop.f32.mrb[0].mxu0
  %v2012 = vadd.f32 0.0, %v2011
  %v2013 = vpop.f32.mrb[0].mxu0
  %2014 = vmatprep.mubr.f32.mxu0 0.0
  %2015 = vmatmul.mubr.f32.gmra.mrb[0].mxu0 %v1827
  %v2016 = vpop.f32.mrb[0].mxu0
  %v2017 = vadd.f32 0.0, %v2016
  %v2018 = vpop.f32.mrb[0].mxu0
  %2019 = vmatprep.mubr.f32.mxu0 0.0
  %2020 = vmatmul.mubr.f32.gmra.mrb[0].mxu0 %v1830
  %v2021 = vpop.f32.mrb[0].mxu0
  %v2022 = vadd.f32 0.0, %v2021
  %v2023 = vpop.f32.mrb[0].mxu0
  %2024 = vmatprep.mubr.f32.mxu0 0.0
  %2025 = vmatmul.mubr.f32.gmra.mrb[0].mxu0 %v1833
  %v2026 = vpop.f32.mrb[0].mxu0
  %v2027 = vadd.f32 0.0, %v2026
  %v2028 = vpop.f32.mrb[0].mxu0
  %2029 = vmatprep.mubr.f32.mxu0 0.0
  %2030 = vmatmul.mubr.f32.gmra.mrb[0].mxu0 %v1836
  %v2031 = vpop.f32.mrb[0].mxu0
  %v2032 = vadd.f32 0.0, %v2031
  %v2033 = vpop.f32.mrb[0].mxu0
  %2034 = vmatprep.mubr.f32.mxu0 0.0
  %2035 = vmatmul.mubr.f32.gmra.mrb[0].mxu0 %v1839
  %v2036 = vpop.f32.mrb[0].mxu0
  %v2037 = vadd.f32 0.0, %v2036
  %v2038 = vpop.f32.mrb[0].mxu0
  %2039 = vmatprep.mubr.f32.mxu0 0.0
  %2040 = vmatmul.mubr.f32.gmra.mrb[0].mxu0 %v1842
  %v2041 = vpop.f32.mrb[0].mxu0
  %v2042 = vadd.f32 0.0, %v2041
  %v2043 = vpop.f32.mrb[0].mxu0
  %2044 = vmatprep.mubr.f32.mxu0 0.0
  %2045 = vmatmul.mubr.f32.gmra.mrb[0].mxu0 %v1845
  %v2046 = vpop.f32.mrb[0].mxu0
  %v2047 = vadd.f32 0.0, %v2046
  %v2048 = vpop.f32.mrb[0].mxu0
  %2049 = vmatprep.mubr.f32.mxu0 0.0
  %2050 = vmatmul.mubr.f32.gmra.mrb[0].mxu0 %v1848
  %v2051 = vpop.f32.mrb[0].mxu0
  %v2052 = vadd.f32 0.0, %v2051
  %v2053 = vpop.f32.mrb[0].mxu0
  %2054 = vmatprep.mubr.f32.mxu0 0.0
  %2055 = vmatmul.mubr.f32.gmra.mrb[0].mxu0 %v1851
  %v2056 = vpop.f32.mrb[0].mxu0
  %v2057 = vadd.f32 0.0, %v2056
  %v2058 = vpop.f32.mrb[0].mxu0
  %2059 = vmatprep.mubr.f32.mxu0 0.0
  %2060 = vmatmul.mubr.f32.gmra.mrb[0].mxu0 %v1854
  %v2061 = vpop.f32.mrb[0].mxu0
  %v2062 = vadd.f32 0.0, %v2061
  %v2063 = vpop.f32.mrb[0].mxu0
  %2064 = vmatprep.mubr.f32.mxu0 0.0
  %2065 = vmatmul.mubr.f32.gmra.mrb[0].mxu0 %v1857
  %v2066 = vpop.f32.mrb[0].mxu0
  %v2067 = vadd.f32 0.0, %v2066
  %v2068 = vpop.f32.mrb[0].mxu0
  %2069 = vmatprep.mubr.f32.mxu0 0.0
  %2070 = vmatmul.mubr.f32.gmra.mrb[0].mxu0 %v1860
  %v2071 = vpop.f32.mrb[0].mxu0
  %v2072 = vadd.f32 0.0, %v2071
  %v2073 = vpop.f32.mrb[0].mxu0
  %2074 = vmatprep.mubr.f32.mxu0 0.0
  %2075 = vmatmul.mubr.f32.gmra.mrb[0].mxu0 %v1863
  %v2076 = vpop.f32.mrb[0].mxu0
  %v2077 = vadd.f32 0.0, %v2076
  %v2078 = vpop.f32.mrb[0].mxu0
  %2079 = vdwg.mxu0
  %v2080 = vadd.f32 %v1702, %v1932
  %v2081 = vadd.f32 %v1703, %v1937
  %v2082 = vadd.f32 %v1704, %v1942
  %v2083 = vadd.f32 %v1705, %v1947
  %v2084 = vadd.f32 %v1706, %v1952
  %v2085 = vadd.f32 %v1707, %v1957
  %v2086 = vadd.f32 %v1708, %v1962
  %v2087 = vadd.f32 %v1709, %v1967
  %v2088 = vadd.f32 %v1710, %v1972
  %v2089 = vadd.f32 %v1711, %v1977
  %v2090 = vadd.f32 %v1712, %v1982
  %v2091 = vadd.f32 %v1713, %v1987
  %v2092 = vadd.f32 %v1714, %v1992
  %v2093 = vadd.f32 %v1715, %v1997
  %v2094 = vadd.f32 %v1716, %v2002
  %v2095 = vadd.f32 %v1717, %v2007
  %v2096 = vadd.f32 %v1718, %v2012
  %v2097 = vadd.f32 %v1719, %v2017
  %v2098 = vadd.f32 %v1720, %v2022
  %v2099 = vadd.f32 %v1721, %v2027
  %v2100 = vadd.f32 %v1722, %v2032
  %v2101 = vadd.f32 %v1723, %v2037
  %v2102 = vadd.f32 %v1724, %v2042
  %v2103 = vadd.f32 %v1725, %v2047
  %v2104 = vadd.f32 %v1726, %v2052
  %v2105 = vadd.f32 %v1727, %v2057
  %v2106 = vadd.f32 %v1728, %v2062
  %v2107 = vadd.f32 %v1729, %v2067
  %v2108 = vadd.f32 %v1730, %v2072
  %v2109 = vadd.f32 %v1731, %v2077
  %v2110 = vmax.f32 %v2080, 0.0
  %v2111 = vmax.f32 %v2081, 0.0
  %v2112 = vmax.f32 %v2082, 0.0
  %v2113 = vmax.f32 %v2083, 0.0
  %v2114 = vmax.f32 %v2084, 0.0
  %v2115 = vmax.f32 %v2085, 0.0
  %v2116 = vmax.f32 %v2086, 0.0
  %v2117 = vmax.f32 %v2087, 0.0
  %v2118 = vmax.f32 %v2088, 0.0
  %v2119 = vmax.f32 %v2089, 0.0
  %v2120 = vmax.f32 %v2090, 0.0
  %v2121 = vmax.f32 %v2091, 0.0
  %v2122 = vmax.f32 %v2092, 0.0
  %v2123 = vmax.f32 %v2093, 0.0
  %v2124 = vmax.f32 %v2094, 0.0
  %v2125 = vmax.f32 %v2095, 0.0
  %v2126 = vmax.f32 %v2096, 0.0
  %v2127 = vmax.f32 %v2097, 0.0
  %v2128 = vmax.f32 %v2098, 0.0
  %v2129 = vmax.f32 %v2099, 0.0
  %v2130 = vmax.f32 %v2100, 0.0
  %v2131 = vmax.f32 %v2101, 0.0
  %v2132 = vmax.f32 %v2102, 0.0
  %v2133 = vmax.f32 %v2103, 0.0
  %v2134 = vmax.f32 %v2104, 0.0
  %v2135 = vmax.f32 %v2105, 0.0
  %v2136 = vmax.f32 %v2106, 0.0
  %v2137 = vmax.f32 %v2107, 0.0
  %v2138 = vmax.f32 %v2108, 0.0
  %v2139 = vmax.f32 %v2109, 0.0
  %2170 = vrot.lane.b32.xlu0 %v2110, 127
  %v2171 = vpop.permute.xlu0 %2170
  %2172 = vrot.lane.b32.xlu0 %v2111, 127
  %v2173 = vpop.permute.xlu0 %2172
  %2174 = vrot.lane.b32.xlu0 %v2112, 127
  %v2175 = vpop.permute.xlu0 %2174
  %2176 = vrot.lane.b32.xlu0 %v2113, 127
  %v2177 = vpop.permute.xlu0 %2176
  %2178 = vrot.lane.b32.xlu0 %v2114, 127
  %v2179 = vpop.permute.xlu0 %2178
  %2180 = vrot.lane.b32.xlu0 %v2115, 127
  %v2181 = vpop.permute.xlu0 %2180
  %2182 = vrot.lane.b32.xlu0 %v2116, 127
  %v2183 = vpop.permute.xlu0 %2182
  %2184 = vrot.lane.b32.xlu0 %v2117, 127
  %v2185 = vpop.permute.xlu0 %2184
  %2186 = vrot.lane.b32.xlu0 %v2118, 127
  %v2187 = vpop.permute.xlu0 %2186
  %2188 = vrot.lane.b32.xlu0 %v2119, 127
  %v2189 = vpop.permute.xlu0 %2188
  %2190 = vrot.lane.b32.xlu0 %v2120, 127
  %v2191 = vpop.permute.xlu0 %2190
  %2192 = vrot.lane.b32.xlu0 %v2121, 127
  %v2193 = vpop.permute.xlu0 %2192
  %2194 = vrot.lane.b32.xlu0 %v2122, 127
  %v2195 = vpop.permute.xlu0 %2194
  %2196 = vrot.lane.b32.xlu0 %v2123, 127
  %v2197 = vpop.permute.xlu0 %2196
  %2198 = vrot.lane.b32.xlu0 %v2124, 127
  %v2199 = vpop.permute.xlu0 %2198
  %2200 = vrot.lane.b32.xlu0 %v2125, 127
  %v2201 = vpop.permute.xlu0 %2200
  %2202 = vrot.lane.b32.xlu0 %v2126, 127
  %v2203 = vpop.permute.xlu0 %2202
  %2204 = vrot.lane.b32.xlu0 %v2127, 127
  %v2205 = vpop.permute.xlu0 %2204
  %2206 = vrot.lane.b32.xlu0 %v2128, 127
  %v2207 = vpop.permute.xlu0 %2206
  %2208 = vrot.lane.b32.xlu0 %v2129, 127
  %v2209 = vpop.permute.xlu0 %2208
  %2210 = vrot.lane.b32.xlu0 %v2130, 127
  %v2211 = vpop.permute.xlu0 %2210
  %2212 = vrot.lane.b32.xlu0 %v2131, 127
  %v2213 = vpop.permute.xlu0 %2212
  %2214 = vrot.lane.b32.xlu0 %v2132, 127
  %v2215 = vpop.permute.xlu0 %2214
  %2216 = vrot.lane.b32.xlu0 %v2133, 127
  %v2217 = vpop.permute.xlu0 %2216
  %2218 = vrot.lane.b32.xlu0 %v2134, 127
  %v2219 = vpop.permute.xlu0 %2218
  %2220 = vrot.lane.b32.xlu0 %v2135, 127
  %v2221 = vpop.permute.xlu0 %2220
  %2222 = vrot.lane.b32.xlu0 %v2136, 127
  %v2223 = vpop.permute.xlu0 %2222
  %2224 = vrot.lane.b32.xlu0 %v2137, 127
  %v2225 = vpop.permute.xlu0 %2224
  %2226 = vrot.lane.b32.xlu0 %v2138, 127
  %v2227 = vpop.permute.xlu0 %2226
  %2228 = vrot.lane.b32.xlu0 %v2139, 127
  %v2229 = vpop.permute.xlu0 %2228
  %v2260 = vmax.f32 %v2110, %v2171
  %v2261 = vmax.f32 %v2111, %v2173
  %v2262 = vmax.f32 %v2112, %v2175
  %v2263 = vmax.f32 %v2113, %v2177
  %v2264 = vmax.f32 %v2114, %v2179
  %v2265 = vmax.f32 %v2115, %v2181
  %v2266 = vmax.f32 %v2116, %v2183
  %v2267 = vmax.f32 %v2117, %v2185
  %v2268 = vmax.f32 %v2118, %v2187
  %v2269 = vmax.f32 %v2119, %v2189
  %v2270 = vmax.f32 %v2120, %v2191
  %v2271 = vmax.f32 %v2121, %v2193
  %v2272 = vmax.f32 %v2122, %v2195
  %v2273 = vmax.f32 %v2123, %v2197
  %v2274 = vmax.f32 %v2124, %v2199
  %v2275 = vmax.f32 %v2125, %v2201
  %v2276 = vmax.f32 %v2126, %v2203
  %v2277 = vmax.f32 %v2127, %v2205
  %v2278 = vmax.f32 %v2128, %v2207
  %v2279 = vmax.f32 %v2129, %v2209
  %v2280 = vmax.f32 %v2130, %v2211
  %v2281 = vmax.f32 %v2131, %v2213
  %v2282 = vmax.f32 %v2132, %v2215
  %v2283 = vmax.f32 %v2133, %v2217
  %v2284 = vmax.f32 %v2134, %v2219
  %v2285 = vmax.f32 %v2135, %v2221
  %v2286 = vmax.f32 %v2136, %v2223
  %v2287 = vmax.f32 %v2137, %v2225
  %v2288 = vmax.f32 %v2138, %v2227
  %v2289 = vmax.f32 %v2139, %v2229
  %v2290 = vld [vmem:[%s3] sm:$0xff]
  %v2291 = vld [vmem:[%s3 + $0x8] sm:$0xff]
  %v2292 = vld [vmem:[%s3 + $0x10] sm:$0x7f]
  %vm2293 = vcmask 187392
  %v2295 = vsel %vm2293, %v2260, 0
  %v2298 = vsel %vm2293, %v2261, 0
  %v2301 = vsel %vm2293, %v2262, 0
  %v2304 = vsel %vm2293, %v2263, 0
  %v2307 = vsel %vm2293, %v2264, 0
  %v2310 = vsel %vm2293, %v2265, 0
  %v2313 = vsel %vm2293, %v2266, 0
  %v2316 = vsel %vm2293, %v2267, 0
  %v2319 = vsel %vm2293, %v2268, 0
  %v2322 = vsel %vm2293, %v2269, 0
  %v2325 = vsel %vm2293, %v2270, 0
  %v2328 = vsel %vm2293, %v2271, 0
  %v2331 = vsel %vm2293, %v2272, 0
  %v2334 = vsel %vm2293, %v2273, 0
  %v2337 = vsel %vm2293, %v2274, 0
  %v2340 = vsel %vm2293, %v2275, 0
  %v2343 = vsel %vm2293, %v2276, 0
  %v2346 = vsel %vm2293, %v2277, 0
  %v2349 = vsel %vm2293, %v2278, 0
  %v2352 = vsel %vm2293, %v2279, 0
  %v2355 = vsel %vm2293, %v2280, 0
  %v2358 = vsel %vm2293, %v2281, 0
  %v2361 = vsel %vm2293, %v2282, 0
  %v2364 = vsel %vm2293, %v2283, 0
  %v2367 = vsel %vm2293, %v2284, 0
  %v2370 = vsel %vm2293, %v2285, 0
  %v2373 = vsel %vm2293, %v2286, 0
  %v2376 = vsel %vm2293, %v2287, 0
  %v2379 = vsel %vm2293, %v2288, 0
  %v2382 = vsel %vm2293, %v2289, 0
  %vm2384 = vcmask 1046528
  %v2386 = vsel %vm2384, %v2292, 0
  %2388 = vmatprep.subr.mxu0 0.0
  %2389 = vmatpush1.msra.mxu0 %v2290
  %2390 = vmatprep.subr.mxu0 0.0
  %2391 = vmatpush1.msra.mxu0 %v2291
  %2392 = vmatprep.subr.mxu0 0.0
  %2393 = vmatpush1.msra.mxu0 %v2386
  %2394 = vmatprep.subr.mxu0 0.0
  %2395 = vmatpush1.msra.mxu0 0.0
  %2396 = vmatprep.subr.mxu0 0.0
  %2397 = vmatpush1.msra.mxu0 0.0
  %2398 = vmatprep.subr.mxu0 0.0
  %2399 = vmatpush1.msra.mxu0 0.0
  %2400 = vmatprep.subr.mxu0 0.0
  %2401 = vmatpush1.msra.mxu0 0.0
  %2402 = vmatprep.subr.mxu0 0.0
  %2403 = vmatpush1.msra.mxu0 0.0
  %2404 = vmatprep.subr.mxu0 0.0
  %2405 = vmatpush1.msra.mxu0 0.0
  %2406 = vmatprep.subr.mxu0 0.0
  %2407 = vmatpush1.msra.mxu0 0.0
  %2408 = vmatprep.subr.mxu0 0.0
  %2409 = vmatpush1.msra.mxu0 0.0
  %2410 = vmatprep.subr.mxu0 0.0
  %2411 = vmatpush1.msra.mxu0 0.0
  %2412 = vmatprep.subr.mxu0 0.0
  %2413 = vmatpush1.msra.mxu0 0.0
  %2414 = vmatprep.subr.mxu0 0.0
  %2415 = vmatpush1.msra.mxu0 0.0
  %2416 = vmatprep.subr.mxu0 0.0
  %2417 = vmatpush1.msra.mxu0 0.0
  %2418 = vmatprep.subr.mxu0 0.0
  %2419 = vmatpush1.msra.mxu0 0.0
  %2420 = vmatprep.subr.mxu0 0.0
  %2421 = vmatpush1.msra.mxu0 0.0
  %2422 = vmatprep.subr.mxu0 0.0
  %2423 = vmatpush1.msra.mxu0 0.0
  %2424 = vmatprep.subr.mxu0 0.0
  %2425 = vmatpush1.msra.mxu0 0.0
  %2426 = vmatprep.subr.mxu0 0.0
  %2427 = vmatpush1.msra.mxu0 0.0
  %2428 = vmatprep.subr.mxu0 0.0
  %2429 = vmatpush1.msra.mxu0 0.0
  %2430 = vmatprep.subr.mxu0 0.0
  %2431 = vmatpush1.msra.mxu0 0.0
  %2432 = vmatprep.subr.mxu0 0.0
  %2433 = vmatpush1.msra.mxu0 0.0
  %2434 = vmatprep.subr.mxu0 0.0
  %2435 = vmatpush1.msra.mxu0 0.0
  %2436 = vmatprep.subr.mxu0 0.0
  %2437 = vmatpush1.msra.mxu0 0.0
  %2438 = vmatprep.subr.mxu0 0.0
  %2439 = vmatpush1.msra.mxu0 0.0
  %2440 = vmatprep.subr.mxu0 0.0
  %2441 = vmatpush1.msra.mxu0 0.0
  %2442 = vmatprep.subr.mxu0 0.0
  %2443 = vmatpush1.msra.mxu0 0.0
  %2444 = vmatprep.subr.mxu0 0.0
  %2445 = vmatpush1.msra.mxu0 0.0
  %2446 = vmatprep.subr.mxu0 0.0
  %2447 = vmatpush1.msra.mxu0 0.0
  %2448 = vmatprep.subr.mxu0 0.0
  %2449 = vmatpush1.msra.mxu0 0.0
  %2450 = vmatprep.subr.mxu0 0.0
  %2451 = vmatpush1.msra.mxu0 0.0
  %2452 = vmatprep.mubr.f32.mxu0 0.0
  %2453 = vmatmul.mubr.f32.gmra.mrb[0].mxu0 %v2295
  %v2454 = vpop.f32.mrb[0].mxu0
  %v2455 = vadd.f32 0.0, %v2454
  %v2456 = vpop.f32.mrb[0].mxu0
  %2457 = vmatprep.mubr.f32.mxu0 0.0
  %2458 = vmatmul.mubr.f32.gmra.mrb[0].mxu0 %v2298
  %v2459 = vpop.f32.mrb[0].mxu0
  %v2460 = vadd.f32 0.0, %v2459
  %v2461 = vpop.f32.mrb[0].mxu0
  %2462 = vmatprep.mubr.f32.mxu0 0.0
  %2463 = vmatmul.mubr.f32.gmra.mrb[0].mxu0 %v2301
  %v2464 = vpop.f32.mrb[0].mxu0
  %v2465 = vadd.f32 0.0, %v2464
  %v2466 = vpop.f32.mrb[0].mxu0
  %2467 = vmatprep.mubr.f32.mxu0 0.0
  %2468 = vmatmul.mubr.f32.gmra.mrb[0].mxu0 %v2304
  %v2469 = vpop.f32.mrb[0].mxu0
  %v2470 = vadd.f32 0.0, %v2469
  %v2471 = vpop.f32.mrb[0].mxu0
  %2472 = vmatprep.mubr.f32.mxu0 0.0
  %2473 = vmatmul.mubr.f32.gmra.mrb[0].mxu0 %v2307
  %v2474 = vpop.f32.mrb[0].mxu0
  %v2475 = vadd.f32 0.0, %v2474
  %v2476 = vpop.f32.mrb[0].mxu0
  %2477 = vmatprep.mubr.f32.mxu0 0.0
  %2478 = vmatmul.mubr.f32.gmra.mrb[0].mxu0 %v2310
  %v2479 = vpop.f32.mrb[0].mxu0
  %v2480 = vadd.f32 0.0, %v2479
  %v2481 = vpop.f32.mrb[0].mxu0
  %2482 = vmatprep.mubr.f32.mxu0 0.0
  %2483 = vmatmul.mubr.f32.gmra.mrb[0].mxu0 %v2313
  %v2484 = vpop.f32.mrb[0].mxu0
  %v2485 = vadd.f32 0.0, %v2484
  %v2486 = vpop.f32.mrb[0].mxu0
  %2487 = vmatprep.mubr.f32.mxu0 0.0
  %2488 = vmatmul.mubr.f32.gmra.mrb[0].mxu0 %v2316
  %v2489 = vpop.f32.mrb[0].mxu0
  %v2490 = vadd.f32 0.0, %v2489
  %v2491 = vpop.f32.mrb[0].mxu0
  %2492 = vmatprep.mubr.f32.mxu0 0.0
  %2493 = vmatmul.mubr.f32.gmra.mrb[0].mxu0 %v2319
  %v2494 = vpop.f32.mrb[0].mxu0
  %v2495 = vadd.f32 0.0, %v2494
  %v2496 = vpop.f32.mrb[0].mxu0
  %2497 = vmatprep.mubr.f32.mxu0 0.0
  %2498 = vmatmul.mubr.f32.gmra.mrb[0].mxu0 %v2322
  %v2499 = vpop.f32.mrb[0].mxu0
  %v2500 = vadd.f32 0.0, %v2499
  %v2501 = vpop.f32.mrb[0].mxu0
  %2502 = vmatprep.mubr.f32.mxu0 0.0
  %2503 = vmatmul.mubr.f32.gmra.mrb[0].mxu0 %v2325
  %v2504 = vpop.f32.mrb[0].mxu0
  %v2505 = vadd.f32 0.0, %v2504
  %v2506 = vpop.f32.mrb[0].mxu0
  %2507 = vmatprep.mubr.f32.mxu0 0.0
  %2508 = vmatmul.mubr.f32.gmra.mrb[0].mxu0 %v2328
  %v2509 = vpop.f32.mrb[0].mxu0
  %v2510 = vadd.f32 0.0, %v2509
  %v2511 = vpop.f32.mrb[0].mxu0
  %2512 = vmatprep.mubr.f32.mxu0 0.0
  %2513 = vmatmul.mubr.f32.gmra.mrb[0].mxu0 %v2331
  %v2514 = vpop.f32.mrb[0].mxu0
  %v2515 = vadd.f32 0.0, %v2514
  %v2516 = vpop.f32.mrb[0].mxu0
  %2517 = vmatprep.mubr.f32.mxu0 0.0
  %2518 = vmatmul.mubr.f32.gmra.mrb[0].mxu0 %v2334
  %v2519 = vpop.f32.mrb[0].mxu0
  %v2520 = vadd.f32 0.0, %v2519
  %v2521 = vpop.f32.mrb[0].mxu0
  %2522 = vmatprep.mubr.f32.mxu0 0.0
  %2523 = vmatmul.mubr.f32.gmra.mrb[0].mxu0 %v2337
  %v2524 = vpop.f32.mrb[0].mxu0
  %v2525 = vadd.f32 0.0, %v2524
  %v2526 = vpop.f32.mrb[0].mxu0
  %2527 = vmatprep.mubr.f32.mxu0 0.0
  %2528 = vmatmul.mubr.f32.gmra.mrb[0].mxu0 %v2340
  %v2529 = vpop.f32.mrb[0].mxu0
  %v2530 = vadd.f32 0.0, %v2529
  %v2531 = vpop.f32.mrb[0].mxu0
  %2532 = vmatprep.mubr.f32.mxu0 0.0
  %2533 = vmatmul.mubr.f32.gmra.mrb[0].mxu0 %v2343
  %v2534 = vpop.f32.mrb[0].mxu0
  %v2535 = vadd.f32 0.0, %v2534
  %v2536 = vpop.f32.mrb[0].mxu0
  %2537 = vmatprep.mubr.f32.mxu0 0.0
  %2538 = vmatmul.mubr.f32.gmra.mrb[0].mxu0 %v2346
  %v2539 = vpop.f32.mrb[0].mxu0
  %v2540 = vadd.f32 0.0, %v2539
  %v2541 = vpop.f32.mrb[0].mxu0
  %2542 = vmatprep.mubr.f32.mxu0 0.0
  %2543 = vmatmul.mubr.f32.gmra.mrb[0].mxu0 %v2349
  %v2544 = vpop.f32.mrb[0].mxu0
  %v2545 = vadd.f32 0.0, %v2544
  %v2546 = vpop.f32.mrb[0].mxu0
  %2547 = vmatprep.mubr.f32.mxu0 0.0
  %2548 = vmatmul.mubr.f32.gmra.mrb[0].mxu0 %v2352
  %v2549 = vpop.f32.mrb[0].mxu0
  %v2550 = vadd.f32 0.0, %v2549
  %v2551 = vpop.f32.mrb[0].mxu0
  %2552 = vmatprep.mubr.f32.mxu0 0.0
  %2553 = vmatmul.mubr.f32.gmra.mrb[0].mxu0 %v2355
  %v2554 = vpop.f32.mrb[0].mxu0
  %v2555 = vadd.f32 0.0, %v2554
  %v2556 = vpop.f32.mrb[0].mxu0
  %2557 = vmatprep.mubr.f32.mxu0 0.0
  %2558 = vmatmul.mubr.f32.gmra.mrb[0].mxu0 %v2358
  %v2559 = vpop.f32.mrb[0].mxu0
  %v2560 = vadd.f32 0.0, %v2559
  %v2561 = vpop.f32.mrb[0].mxu0
  %2562 = vmatprep.mubr.f32.mxu0 0.0
  %2563 = vmatmul.mubr.f32.gmra.mrb[0].mxu0 %v2361
  %v2564 = vpop.f32.mrb[0].mxu0
  %v2565 = vadd.f32 0.0, %v2564
  %v2566 = vpop.f32.mrb[0].mxu0
  %2567 = vmatprep.mubr.f32.mxu0 0.0
  %2568 = vmatmul.mubr.f32.gmra.mrb[0].mxu0 %v2364
  %v2569 = vpop.f32.mrb[0].mxu0
  %v2570 = vadd.f32 0.0, %v2569
  %v2571 = vpop.f32.mrb[0].mxu0
  %2572 = vmatprep.mubr.f32.mxu0 0.0
  %2573 = vmatmul.mubr.f32.gmra.mrb[0].mxu0 %v2367
  %v2574 = vpop.f32.mrb[0].mxu0
  %v2575 = vadd.f32 0.0, %v2574
  %v2576 = vpop.f32.mrb[0].mxu0
  %2577 = vmatprep.mubr.f32.mxu0 0.0
  %2578 = vmatmul.mubr.f32.gmra.mrb[0].mxu0 %v2370
  %v2579 = vpop.f32.mrb[0].mxu0
  %v2580 = vadd.f32 0.0, %v2579
  %v2581 = vpop.f32.mrb[0].mxu0
  %2582 = vmatprep.mubr.f32.mxu0 0.0
  %2583 = vmatmul.mubr.f32.gmra.mrb[0].mxu0 %v2373
  %v2584 = vpop.f32.mrb[0].mxu0
  %v2585 = vadd.f32 0.0, %v2584
  %v2586 = vpop.f32.mrb[0].mxu0
  %2587 = vmatprep.mubr.f32.mxu0 0.0
  %2588 = vmatmul.mubr.f32.gmra.mrb[0].mxu0 %v2376
  %v2589 = vpop.f32.mrb[0].mxu0
  %v2590 = vadd.f32 0.0, %v2589
  %v2591 = vpop.f32.mrb[0].mxu0
  %2592 = vmatprep.mubr.f32.mxu0 0.0
  %2593 = vmatmul.mubr.f32.gmra.mrb[0].mxu0 %v2379
  %v2594 = vpop.f32.mrb[0].mxu0
  %v2595 = vadd.f32 0.0, %v2594
  %v2596 = vpop.f32.mrb[0].mxu0
  %2597 = vmatprep.mubr.f32.mxu0 0.0
  %2598 = vmatmul.mubr.f32.gmra.mrb[0].mxu0 %v2382
  %v2599 = vpop.f32.mrb[0].mxu0
  %v2600 = vadd.f32 0.0, %v2599
  %v2601 = vpop.f32.mrb[0].mxu0
  %2602 = vdwg.mxu0
  %v2633 = vrot.slane %v2455, 1
  %v2634 = vrot.slane %v2460, 1
  %v2635 = vsel %vm2384, %v2633, %v2634
  %v2636 = vrot.slane %v2465, 1
  %v2637 = vsel %vm2384, %v2634, %v2636
  %v2638 = vrot.slane %v2470, 1
  %v2639 = vsel %vm2384, %v2636, %v2638
  %v2640 = vrot.slane %v2475, 1
  %v2641 = vsel %vm2384, %v2638, %v2640
  %v2642 = vrot.slane %v2480, 1
  %v2643 = vsel %vm2384, %v2640, %v2642
  %v2644 = vrot.slane %v2485, 1
  %v2645 = vsel %vm2384, %v2642, %v2644
  %v2646 = vrot.slane %v2490, 1
  %v2647 = vsel %vm2384, %v2644, %v2646
  %v2648 = vrot.slane %v2495, 1
  %v2649 = vsel %vm2384, %v2646, %v2648
  %v2650 = vrot.slane %v2500, 1
  %v2651 = vsel %vm2384, %v2648, %v2650
  %v2652 = vrot.slane %v2505, 1
  %v2653 = vsel %vm2384, %v2650, %v2652
  %v2654 = vrot.slane %v2510, 1
  %v2655 = vsel %vm2384, %v2652, %v2654
  %v2656 = vrot.slane %v2515, 1
  %v2657 = vsel %vm2384, %v2654, %v2656
  %v2658 = vrot.slane %v2520, 1
  %v2659 = vsel %vm2384, %v2656, %v2658
  %v2660 = vrot.slane %v2525, 1
  %v2661 = vsel %vm2384, %v2658, %v2660
  %v2662 = vrot.slane %v2530, 1
  %v2663 = vsel %vm2384, %v2660, %v2662
  %v2664 = vrot.slane %v2535, 1
  %v2665 = vsel %vm2384, %v2662, %v2664
  %v2666 = vrot.slane %v2540, 1
  %v2667 = vsel %vm2384, %v2664, %v2666
  %v2668 = vrot.slane %v2545, 1
  %v2669 = vsel %vm2384, %v2666, %v2668
  %v2670 = vrot.slane %v2550, 1
  %v2671 = vsel %vm2384, %v2668, %v2670
  %v2672 = vrot.slane %v2555, 1
  %v2673 = vsel %vm2384, %v2670, %v2672
  %v2674 = vrot.slane %v2560, 1
  %v2675 = vsel %vm2384, %v2672, %v2674
  %v2676 = vrot.slane %v2565, 1
  %v2677 = vsel %vm2384, %v2674, %v2676
  %v2678 = vrot.slane %v2570, 1
  %v2679 = vsel %vm2384, %v2676, %v2678
  %v2680 = vrot.slane %v2575, 1
  %v2681 = vsel %vm2384, %v2678, %v2680
  %v2682 = vrot.slane %v2580, 1
  %v2683 = vsel %vm2384, %v2680, %v2682
  %v2684 = vrot.slane %v2585, 1
  %v2685 = vsel %vm2384, %v2682, %v2684
  %v2686 = vrot.slane %v2590, 1
  %v2687 = vsel %vm2384, %v2684, %v2686
  %v2688 = vrot.slane %v2595, 1
  %v2689 = vsel %vm2384, %v2686, %v2688
  %v2690 = vrot.slane %v2600, 1
  %v2691 = vsel %vm2384, %v2688, %v2690
  %v2722 = vmax.f32 %v2455, %v2635
  %v2723 = vmax.f32 %v2460, %v2637
  %v2724 = vmax.f32 %v2465, %v2639
  %v2725 = vmax.f32 %v2470, %v2641
  %v2726 = vmax.f32 %v2475, %v2643
  %v2727 = vmax.f32 %v2480, %v2645
  %v2728 = vmax.f32 %v2485, %v2647
  %v2729 = vmax.f32 %v2490, %v2649
  %v2730 = vmax.f32 %v2495, %v2651
  %v2731 = vmax.f32 %v2500, %v2653
  %v2732 = vmax.f32 %v2505, %v2655
  %v2733 = vmax.f32 %v2510, %v2657
  %v2734 = vmax.f32 %v2515, %v2659
  %v2735 = vmax.f32 %v2520, %v2661
  %v2736 = vmax.f32 %v2525, %v2663
  %v2737 = vmax.f32 %v2530, %v2665
  %v2738 = vmax.f32 %v2535, %v2667
  %v2739 = vmax.f32 %v2540, %v2669
  %v2740 = vmax.f32 %v2545, %v2671
  %v2741 = vmax.f32 %v2550, %v2673
  %v2742 = vmax.f32 %v2555, %v2675
  %v2743 = vmax.f32 %v2560, %v2677
  %v2744 = vmax.f32 %v2565, %v2679
  %v2745 = vmax.f32 %v2570, %v2681
  %v2746 = vmax.f32 %v2575, %v2683
  %v2747 = vmax.f32 %v2580, %v2685
  %v2748 = vmax.f32 %v2585, %v2687
  %v2749 = vmax.f32 %v2590, %v2689
  %v2750 = vmax.f32 %v2595, %v2691
  %v2751 = vmax.f32 %v2600, %v2690
  %v2752 = vld [vmem:[%s4] sm:$0xff]
  %v2753 = vld [vmem:[%s4 + $0x8] sm:$0xff]
  %v2754 = vld [vmem:[%s4 + $0x10] sm:$0xff]
  %v2755 = vld [vmem:[%s4 + $0x18] sm:$0xff]
  %v2756 = vld [vmem:[%s4 + $0x20] sm:$0xff]
  %v2757 = vld [vmem:[%s4 + $0x28] sm:$0xff]
  %v2758 = vld [vmem:[%s4 + $0x30] sm:$0xff]
  %v2759 = vld [vmem:[%s4 + $0x38] sm:$0xff]
  %v2760 = vld [vmem:[%s4 + $0x40] sm:$0xff]
  %v2761 = vld [vmem:[%s4 + $0x48] sm:$0xff]
  %v2762 = vld [vmem:[%s4 + $0x50] sm:$0xff]
  %v2763 = vld [vmem:[%s4 + $0x58] sm:$0xff]
  %v2764 = vld [vmem:[%s4 + $0x60] sm:$0xff]
  %v2765 = vld [vmem:[%s4 + $0x68] sm:$0xff]
  %v2766 = vld [vmem:[%s4 + $0x70] sm:$0xff]
  %v2767 = vld [vmem:[%s4 + $0x78] sm:$0xff]
  %v2768 = vld [vmem:[%s4 + $0x80] sm:$0xff]
  %v2769 = vld [vmem:[%s4 + $0x88] sm:$0xff]
  %v2770 = vld [vmem:[%s4 + $0x90] sm:$0xff]
  %v2771 = vld [vmem:[%s4 + $0x98] sm:$0xff]
  %v2772 = vld [vmem:[%s4 + $0xa0] sm:$0xff]
  %v2773 = vld [vmem:[%s4 + $0xa8] sm:$0xff]
  %v2774 = vld [vmem:[%s4 + $0xb0] sm:$0xff]
  %v2775 = vld [vmem:[%s4 + $0xb8] sm:$0xff]
  %v2776 = vld [vmem:[%s4 + $0xc0] sm:$0xff]
  %v2777 = vld [vmem:[%s4 + $0xc8] sm:$0xff]
  %v2778 = vld [vmem:[%s4 + $0xd0] sm:$0xff]
  %v2779 = vld [vmem:[%s4 + $0xd8] sm:$0xff]
  %v2780 = vld [vmem:[%s4 + $0xe0] sm:$0xff]
  %v2781 = vld [vmem:[%s4 + $0xe8] sm:$0xff]
  %vm2782 = vcmask 908288
  %v2784 = vsel %vm2782, %v2753, 0
  %v2787 = vsel %vm2782, %v2755, 0
  %v2790 = vsel %vm2782, %v2757, 0
  %v2793 = vsel %vm2782, %v2759, 0
  %v2796 = vsel %vm2782, %v2761, 0
  %v2799 = vsel %vm2782, %v2763, 0
  %v2802 = vsel %vm2782, %v2765, 0
  %v2805 = vsel %vm2782, %v2767, 0
  %v2808 = vsel %vm2782, %v2769, 0
  %v2811 = vsel %vm2782, %v2771, 0
  %v2814 = vsel %vm2782, %v2773, 0
  %v2817 = vsel %vm2782, %v2775, 0
  %v2820 = vsel %vm2782, %v2777, 0
  %v2823 = vsel %vm2782, %v2779, 0
  %v2826 = vsel %vm2782, %v2781, 0
  %v2829 = vsel %vm2384, %v2751, 0
  %2831 = vmatprep.subr.mxu0 0.0
  %2832 = vmatpush1.msra.mxu0 %v2722
  %2833 = vmatprep.subr.mxu0 0.0
  %2834 = vmatpush1.msra.mxu0 %v2723
  %2835 = vmatprep.subr.mxu0 0.0
  %2836 = vmatpush1.msra.mxu0 %v2724
  %2837 = vmatprep.subr.mxu0 0.0
  %2838 = vmatpush1.msra.mxu0 %v2725
  %2839 = vmatprep.subr.mxu0 0.0
  %2840 = vmatpush1.msra.mxu0 %v2726
  %2841 = vmatprep.subr.mxu0 0.0
  %2842 = vmatpush1.msra.mxu0 %v2727
  %2843 = vmatprep.subr.mxu0 0.0
  %2844 = vmatpush1.msra.mxu0 %v2728
  %2845 = vmatprep.subr.mxu0 0.0
  %2846 = vmatpush1.msra.mxu0 %v2729
  %2847 = vmatprep.subr.mxu0 0.0
  %2848 = vmatpush1.msra.mxu0 %v2730
  %2849 = vmatprep.subr.mxu0 0.0
  %2850 = vmatpush1.msra.mxu0 %v2731
  %2851 = vmatprep.subr.mxu0 0.0
  %2852 = vmatpush1.msra.mxu0 %v2732
  %2853 = vmatprep.subr.mxu0 0.0
  %2854 = vmatpush1.msra.mxu0 %v2733
  %2855 = vmatprep.subr.mxu0 0.0
  %2856 = vmatpush1.msra.mxu0 %v2734
  %2857 = vmatprep.subr.mxu0 0.0
  %2858 = vmatpush1.msra.mxu0 %v2735
  %2859 = vmatprep.subr.mxu0 0.0
  %2860 = vmatpush1.msra.mxu0 %v2736
  %2861 = vmatprep.subr.mxu0 0.0
  %2862 = vmatpush1.msra.mxu0 %v2737
  %2863 = vmatprep.subr.mxu0 0.0
  %2864 = vmatpush1.msra.mxu0 %v2738
  %2865 = vmatprep.subr.mxu0 0.0
  %2866 = vmatpush1.msra.mxu0 %v2739
  %2867 = vmatprep.subr.mxu0 0.0
  %2868 = vmatpush1.msra.mxu0 %v2740
  %2869 = vmatprep.subr.mxu0 0.0
  %2870 = vmatpush1.msra.mxu0 %v2741
  %2871 = vmatprep.subr.mxu0 0.0
  %2872 = vmatpush1.msra.mxu0 %v2742
  %2873 = vmatprep.subr.mxu0 0.0
  %2874 = vmatpush1.msra.mxu0 %v2743
  %2875 = vmatprep.subr.mxu0 0.0
  %2876 = vmatpush1.msra.mxu0 %v2744
  %2877 = vmatprep.subr.mxu0 0.0
  %2878 = vmatpush1.msra.mxu0 %v2745
  %2879 = vmatprep.subr.mxu0 0.0
  %2880 = vmatpush1.msra.mxu0 %v2746
  %2881 = vmatprep.subr.mxu0 0.0
  %2882 = vmatpush1.msra.mxu0 %v2747
  %2883 = vmatprep.subr.mxu0 0.0
  %2884 = vmatpush1.msra.mxu0 %v2748
  %2885 = vmatprep.subr.mxu0 0.0
  %2886 = vmatpush1.msra.mxu0 %v2749
  %2887 = vmatprep.subr.mxu0 0.0
  %2888 = vmatpush1.msra.mxu0 %v2750
  %2889 = vmatprep.subr.mxu0 0.0
  %2890 = vmatpush1.msra.mxu0 %v2829
  %2891 = vmatprep.subr.mxu0 0.0
  %2892 = vmatpush1.msra.mxu0 0.0
  %2893 = vmatprep.subr.mxu0 0.0
  %2894 = vmatpush1.msra.mxu0 0.0
  %2895 = vmatprep.mubr.f32.mxu0 %v2784
  %2896 = vmatmul.mubr.f32.gmra.mrb[0].mxu0 %v2752
  %v2897 = vpop.f32.mrb[0].mxu0
  %v2898 = vadd.f32 0.0, %v2897
  %v2899 = vpop.f32.mrb[0].mxu0
  %2900 = vmatprep.mubr.f32.mxu0 %v2787
  %2901 = vmatmul.mubr.f32.gmra.mrb[0].mxu0 %v2754
  %v2902 = vpop.f32.mrb[0].mxu0
  %v2903 = vadd.f32 0.0, %v2902
  %v2904 = vpop.f32.mrb[0].mxu0
  %2905 = vmatprep.mubr.f32.mxu0 %v2790
  %2906 = vmatmul.mubr.f32.gmra.mrb[0].mxu0 %v2756
  %v2907 = vpop.f32.mrb[0].mxu0
  %v2908 = vadd.f32 0.0, %v2907
  %v2909 = vpop.f32.mrb[0].mxu0
  %2910 = vmatprep.mubr.f32.mxu0 %v2793
  %2911 = vmatmul.mubr.f32.gmra.mrb[0].mxu0 %v2758
  %v2912 = vpop.f32.mrb[0].mxu0
  %v2913 = vadd.f32 0.0, %v2912
  %v2914 = vpop.f32.mrb[0].mxu0
  %2915 = vmatprep.mubr.f32.mxu0 %v2796
  %2916 = vmatmul.mubr.f32.gmra.mrb[0].mxu0 %v2760
  %v2917 = vpop.f32.mrb[0].mxu0
  %v2918 = vadd.f32 0.0, %v2917
  %v2919 = vpop.f32.mrb[0].mxu0
  %2920 = vmatprep.mubr.f32.mxu0 %v2799
  %2921 = vmatmul.mubr.f32.gmra.mrb[0].mxu0 %v2762
  %v2922 = vpop.f32.mrb[0].mxu0
  %v2923 = vadd.f32 0.0, %v2922
  %v2924 = vpop.f32.mrb[0].mxu0
  %2925 = vmatprep.mubr.f32.mxu0 %v2802
  %2926 = vmatmul.mubr.f32.gmra.mrb[0].mxu0 %v2764
  %v2927 = vpop.f32.mrb[0].mxu0
  %v2928 = vadd.f32 0.0, %v2927
  %v2929 = vpop.f32.mrb[0].mxu0
  %2930 = vmatprep.mubr.f32.mxu0 %v2805
  %2931 = vmatmul.mubr.f32.gmra.mrb[0].mxu0 %v2766
  %v2932 = vpop.f32.mrb[0].mxu0
  %v2933 = vadd.f32 0.0, %v2932
  %v2934 = vpop.f32.mrb[0].mxu0
  %2935 = vmatprep.mubr.f32.mxu0 %v2808
  %2936 = vmatmul.mubr.f32.gmra.mrb[0].mxu0 %v2768
  %v2937 = vpop.f32.mrb[0].mxu0
  %v2938 = vadd.f32 0.0, %v2937
  %v2939 = vpop.f32.mrb[0].mxu0
  %2940 = vmatprep.mubr.f32.mxu0 %v2811
  %2941 = vmatmul.mubr.f32.gmra.mrb[0].mxu0 %v2770
  %v2942 = vpop.f32.mrb[0].mxu0
  %v2943 = vadd.f32 0.0, %v2942
  %v2944 = vpop.f32.mrb[0].mxu0
  %2945 = vmatprep.mubr.f32.mxu0 %v2814
  %2946 = vmatmul.mubr.f32.gmra.mrb[0].mxu0 %v2772
  %v2947 = vpop.f32.mrb[0].mxu0
  %v2948 = vadd.f32 0.0, %v2947
  %v2949 = vpop.f32.mrb[0].mxu0
  %2950 = vmatprep.mubr.f32.mxu0 %v2817
  %2951 = vmatmul.mubr.f32.gmra.mrb[0].mxu0 %v2774
  %v2952 = vpop.f32.mrb[0].mxu0
  %v2953 = vadd.f32 0.0, %v2952
  %v2954 = vpop.f32.mrb[0].mxu0
  %2955 = vmatprep.mubr.f32.mxu0 %v2820
  %2956 = vmatmul.mubr.f32.gmra.mrb[0].mxu0 %v2776
  %v2957 = vpop.f32.mrb[0].mxu0
  %v2958 = vadd.f32 0.0, %v2957
  %v2959 = vpop.f32.mrb[0].mxu0
  %2960 = vmatprep.mubr.f32.mxu0 %v2823
  %2961 = vmatmul.mubr.f32.gmra.mrb[0].mxu0 %v2778
  %v2962 = vpop.f32.mrb[0].mxu0
  %v2963 = vadd.f32 0.0, %v2962
  %v2964 = vpop.f32.mrb[0].mxu0
  %2965 = vmatprep.mubr.f32.mxu0 %v2826
  %2966 = vmatmul.mubr.f32.gmra.mrb[0].mxu0 %v2780
  %v2967 = vpop.f32.mrb[0].mxu0
  %v2968 = vadd.f32 0.0, %v2967
  %v2969 = vpop.f32.mrb[0].mxu0
  %2970 = vdwg.mxu0
  %v2971 = vld [vmem:[%s6] sm:$0xff]
  %v2972 = vld [vmem:[%s6 + $0x8] sm:$0xff]
  %v2973 = vld [vmem:[%s6 + $0x10] sm:$0xff]
  %v2974 = vld [vmem:[%s6 + $0x18] sm:$0xff]
  %v2975 = vld [vmem:[%s6 + $0x20] sm:$0xff]
  %v2976 = vld [vmem:[%s6 + $0x28] sm:$0xff]
  %v2977 = vld [vmem:[%s6 + $0x30] sm:$0xff]
  %v2978 = vld [vmem:[%s6 + $0x38] sm:$0xff]
  %v2979 = vld [vmem:[%s6 + $0x40] sm:$0xff]
  %v2980 = vld [vmem:[%s6 + $0x48] sm:$0xff]
  %v2981 = vld [vmem:[%s6 + $0x50] sm:$0xff]
  %v2982 = vld [vmem:[%s6 + $0x58] sm:$0xff]
  %v2983 = vld [vmem:[%s6 + $0x60] sm:$0xff]
  %v2984 = vld [vmem:[%s6 + $0x68] sm:$0xff]
  %v2985 = vld [vmem:[%s6 + $0x70] sm:$0xff]
  %v2986 = vld [vmem:[%s6 + $0x78] sm:$0xff]
  %v2987 = vld [vmem:[%s6 + $0x80] sm:$0xff]
  %v2988 = vld [vmem:[%s6 + $0x88] sm:$0xff]
  %v2989 = vld [vmem:[%s6 + $0x90] sm:$0xff]
  %v2990 = vld [vmem:[%s6 + $0x98] sm:$0xff]
  %v2991 = vld [vmem:[%s5] sm:$0xff]
  %v2992 = vld [vmem:[%s5 + $0x8] sm:$0xff]
  %v2993 = vld [vmem:[%s5 + $0x10] sm:$0xff]
  %v2994 = vld [vmem:[%s5 + $0x18] sm:$0xff]
  %v2995 = vld [vmem:[%s5 + $0x20] sm:$0xff]
  %v2996 = vld [vmem:[%s5 + $0x28] sm:$0xff]
  %v2997 = vld [vmem:[%s5 + $0x30] sm:$0xff]
  %v2998 = vld [vmem:[%s5 + $0x38] sm:$0xff]
  %v2999 = vld [vmem:[%s5 + $0x40] sm:$0xff]
  %v3000 = vld [vmem:[%s5 + $0x48] sm:$0xff]
  %v3001 = vld [vmem:[%s5 + $0x50] sm:$0xff]
  %v3002 = vld [vmem:[%s5 + $0x58] sm:$0xff]
  %v3003 = vld [vmem:[%s5 + $0x60] sm:$0xff]
  %v3004 = vld [vmem:[%s5 + $0x68] sm:$0xff]
  %v3005 = vld [vmem:[%s5 + $0x70] sm:$0xff]
  %v3006 = vld [vmem:[%s5 + $0x78] sm:$0xff]
  %v3007 = vld [vmem:[%s5 + $0x80] sm:$0xff]
  %v3008 = vld [vmem:[%s5 + $0x88] sm:$0xff]
  %v3009 = vld [vmem:[%s5 + $0x90] sm:$0xff]
  %v3010 = vld [vmem:[%s5 + $0x98] sm:$0xff]
  %vm3011 = vcmask 982016
  %v3013 = vsel %vm3011, %v2991, 0
  %v3016 = vsel %vm3011, %v2992, 0
  %v3019 = vsel %vm3011, %v2993, 0
  %v3022 = vsel %vm3011, %v2994, 0
  %v3025 = vsel %vm3011, %v2995, 0
  %v3028 = vsel %vm3011, %v2996, 0
  %v3031 = vsel %vm3011, %v2997, 0
  %v3034 = vsel %vm3011, %v2998, 0
  %v3037 = vsel %vm3011, %v2999, 0
  %v3040 = vsel %vm3011, %v3000, 0
  %v3043 = vsel %vm3011, %v3001, 0
  %v3046 = vsel %vm3011, %v3002, 0
  %v3049 = vsel %vm3011, %v3003, 0
  %v3052 = vsel %vm3011, %v3004, 0
  %v3055 = vsel %vm3011, %v3005, 0
  %v3058 = vsel %vm3011, %v3006, 0
  %v3061 = vsel %vm3011, %v3007, 0
  %v3064 = vsel %vm3011, %v3008, 0
  %v3067 = vsel %vm3011, %v3009, 0
  %v3070 = vsel %vm3011, %v3010, 0
  %3072 = vmatprep.subr.mxu0 0.0
  %3073 = vmatpush1.msra.mxu0 %v2898
  %3074 = vmatprep.subr.mxu0 0.0
  %3075 = vmatpush1.msra.mxu0 %v2903
  %3076 = vmatprep.subr.mxu0 0.0
  %3077 = vmatpush1.msra.mxu0 %v2908
  %3078 = vmatprep.subr.mxu0 0.0
  %3079 = vmatpush1.msra.mxu0 %v2913
  %3080 = vmatprep.subr.mxu0 0.0
  %3081 = vmatpush1.msra.mxu0 %v2918
  %3082 = vmatprep.subr.mxu0 0.0
  %3083 = vmatpush1.msra.mxu0 %v2923
  %3084 = vmatprep.subr.mxu0 0.0
  %3085 = vmatpush1.msra.mxu0 %v2928
  %3086 = vmatprep.subr.mxu0 0.0
  %3087 = vmatpush1.msra.mxu0 %v2933
  %3088 = vmatprep.subr.mxu0 0.0
  %3089 = vmatpush1.msra.mxu0 %v2938
  %3090 = vmatprep.subr.mxu0 0.0
  %3091 = vmatpush1.msra.mxu0 %v2943
  %3092 = vmatprep.subr.mxu0 0.0
  %3093 = vmatpush1.msra.mxu0 %v2948
  %3094 = vmatprep.subr.mxu0 0.0
  %3095 = vmatpush1.msra.mxu0 %v2953
  %3096 = vmatprep.subr.mxu0 0.0
  %3097 = vmatpush1.msra.mxu0 %v2958
  %3098 = vmatprep.subr.mxu0 0.0
  %3099 = vmatpush1.msra.mxu0 %v2963
  %3100 = vmatprep.subr.mxu0 0.0
  %3101 = vmatpush1.msra.mxu0 %v2968
  %3102 = vmatprep.subr.mxu0 0.0
  %3103 = vmatpush1.msra.mxu0 0.0
  %3104 = vmatprep.subr.mxu0 0.0
  %3105 = vmatpush1.msra.mxu0 0.0
  %3106 = vmatprep.subr.mxu0 0.0
  %3107 = vmatpush1.msra.mxu0 0.0
  %3108 = vmatprep.subr.mxu0 0.0
  %3109 = vmatpush1.msra.mxu0 0.0
  %3110 = vmatprep.subr.mxu0 0.0
  %3111 = vmatpush1.msra.mxu0 0.0
  %3112 = vmatprep.subr.mxu0 0.0
  %3113 = vmatpush1.msra.mxu0 0.0
  %3114 = vmatprep.subr.mxu0 0.0
  %3115 = vmatpush1.msra.mxu0 0.0
  %3116 = vmatprep.subr.mxu0 0.0
  %3117 = vmatpush1.msra.mxu0 0.0
  %3118 = vmatprep.subr.mxu0 0.0
  %3119 = vmatpush1.msra.mxu0 0.0
  %3120 = vmatprep.subr.mxu0 0.0
  %3121 = vmatpush1.msra.mxu0 0.0
  %3122 = vmatprep.subr.mxu0 0.0
  %3123 = vmatpush1.msra.mxu0 0.0
  %3124 = vmatprep.subr.mxu0 0.0
  %3125 = vmatpush1.msra.mxu0 0.0
  %3126 = vmatprep.subr.mxu0 0.0
  %3127 = vmatpush1.msra.mxu0 0.0
  %3128 = vmatprep.subr.mxu0 0.0
  %3129 = vmatpush1.msra.mxu0 0.0
  %3130 = vmatprep.subr.mxu0 0.0
  %3131 = vmatpush1.msra.mxu0 0.0
  %3132 = vmatprep.subr.mxu0 0.0
  %3133 = vmatpush1.msra.mxu0 0.0
  %3134 = vmatprep.subr.mxu0 0.0
  %3135 = vmatpush1.msra.mxu0 0.0
  %3136 = vmatprep.mubr.f32.mxu0 0.0
  %3137 = vmatmul.mubr.f32.gmra.mrb[0].mxu0 %v3013
  %v3138 = vpop.f32.mrb[0].mxu0
  %v3139 = vadd.f32 0.0, %v3138
  %v3140 = vpop.f32.mrb[0].mxu0
  %3141 = vmatprep.mubr.f32.mxu0 0.0
  %3142 = vmatmul.mubr.f32.gmra.mrb[0].mxu0 %v3016
  %v3143 = vpop.f32.mrb[0].mxu0
  %v3144 = vadd.f32 0.0, %v3143
  %v3145 = vpop.f32.mrb[0].mxu0
  %3146 = vmatprep.mubr.f32.mxu0 0.0
  %3147 = vmatmul.mubr.f32.gmra.mrb[0].mxu0 %v3019
  %v3148 = vpop.f32.mrb[0].mxu0
  %v3149 = vadd.f32 0.0, %v3148
  %v3150 = vpop.f32.mrb[0].mxu0
  %3151 = vmatprep.mubr.f32.mxu0 0.0
  %3152 = vmatmul.mubr.f32.gmra.mrb[0].mxu0 %v3022
  %v3153 = vpop.f32.mrb[0].mxu0
  %v3154 = vadd.f32 0.0, %v3153
  %v3155 = vpop.f32.mrb[0].mxu0
  %3156 = vmatprep.mubr.f32.mxu0 0.0
  %3157 = vmatmul.mubr.f32.gmra.mrb[0].mxu0 %v3025
  %v3158 = vpop.f32.mrb[0].mxu0
  %v3159 = vadd.f32 0.0, %v3158
  %v3160 = vpop.f32.mrb[0].mxu0
  %3161 = vmatprep.mubr.f32.mxu0 0.0
  %3162 = vmatmul.mubr.f32.gmra.mrb[0].mxu0 %v3028
  %v3163 = vpop.f32.mrb[0].mxu0
  %v3164 = vadd.f32 0.0, %v3163
  %v3165 = vpop.f32.mrb[0].mxu0
  %3166 = vmatprep.mubr.f32.mxu0 0.0
  %3167 = vmatmul.mubr.f32.gmra.mrb[0].mxu0 %v3031
  %v3168 = vpop.f32.mrb[0].mxu0
  %v3169 = vadd.f32 0.0, %v3168
  %v3170 = vpop.f32.mrb[0].mxu0
  %3171 = vmatprep.mubr.f32.mxu0 0.0
  %3172 = vmatmul.mubr.f32.gmra.mrb[0].mxu0 %v3034
  %v3173 = vpop.f32.mrb[0].mxu0
  %v3174 = vadd.f32 0.0, %v3173
  %v3175 = vpop.f32.mrb[0].mxu0
  %3176 = vmatprep.mubr.f32.mxu0 0.0
  %3177 = vmatmul.mubr.f32.gmra.mrb[0].mxu0 %v3037
  %v3178 = vpop.f32.mrb[0].mxu0
  %v3179 = vadd.f32 0.0, %v3178
  %v3180 = vpop.f32.mrb[0].mxu0
  %3181 = vmatprep.mubr.f32.mxu0 0.0
  %3182 = vmatmul.mubr.f32.gmra.mrb[0].mxu0 %v3040
  %v3183 = vpop.f32.mrb[0].mxu0
  %v3184 = vadd.f32 0.0, %v3183
  %v3185 = vpop.f32.mrb[0].mxu0
  %3186 = vmatprep.mubr.f32.mxu0 0.0
  %3187 = vmatmul.mubr.f32.gmra.mrb[0].mxu0 %v3043
  %v3188 = vpop.f32.mrb[0].mxu0
  %v3189 = vadd.f32 0.0, %v3188
  %v3190 = vpop.f32.mrb[0].mxu0
  %3191 = vmatprep.mubr.f32.mxu0 0.0
  %3192 = vmatmul.mubr.f32.gmra.mrb[0].mxu0 %v3046
  %v3193 = vpop.f32.mrb[0].mxu0
  %v3194 = vadd.f32 0.0, %v3193
  %v3195 = vpop.f32.mrb[0].mxu0
  %3196 = vmatprep.mubr.f32.mxu0 0.0
  %3197 = vmatmul.mubr.f32.gmra.mrb[0].mxu0 %v3049
  %v3198 = vpop.f32.mrb[0].mxu0
  %v3199 = vadd.f32 0.0, %v3198
  %v3200 = vpop.f32.mrb[0].mxu0
  %3201 = vmatprep.mubr.f32.mxu0 0.0
  %3202 = vmatmul.mubr.f32.gmra.mrb[0].mxu0 %v3052
  %v3203 = vpop.f32.mrb[0].mxu0
  %v3204 = vadd.f32 0.0, %v3203
  %v3205 = vpop.f32.mrb[0].mxu0
  %3206 = vmatprep.mubr.f32.mxu0 0.0
  %3207 = vmatmul.mubr.f32.gmra.mrb[0].mxu0 %v3055
  %v3208 = vpop.f32.mrb[0].mxu0
  %v3209 = vadd.f32 0.0, %v3208
  %v3210 = vpop.f32.mrb[0].mxu0
  %3211 = vmatprep.mubr.f32.mxu0 0.0
  %3212 = vmatmul.mubr.f32.gmra.mrb[0].mxu0 %v3058
  %v3213 = vpop.f32.mrb[0].mxu0
  %v3214 = vadd.f32 0.0, %v3213
  %v3215 = vpop.f32.mrb[0].mxu0
  %3216 = vmatprep.mubr.f32.mxu0 0.0
  %3217 = vmatmul.mubr.f32.gmra.mrb[0].mxu0 %v3061
  %v3218 = vpop.f32.mrb[0].mxu0
  %v3219 = vadd.f32 0.0, %v3218
  %v3220 = vpop.f32.mrb[0].mxu0
  %3221 = vmatprep.mubr.f32.mxu0 0.0
  %3222 = vmatmul.mubr.f32.gmra.mrb[0].mxu0 %v3064
  %v3223 = vpop.f32.mrb[0].mxu0
  %v3224 = vadd.f32 0.0, %v3223
  %v3225 = vpop.f32.mrb[0].mxu0
  %3226 = vmatprep.mubr.f32.mxu0 0.0
  %3227 = vmatmul.mubr.f32.gmra.mrb[0].mxu0 %v3067
  %v3228 = vpop.f32.mrb[0].mxu0
  %v3229 = vadd.f32 0.0, %v3228
  %v3230 = vpop.f32.mrb[0].mxu0
  %3231 = vmatprep.mubr.f32.mxu0 0.0
  %3232 = vmatmul.mubr.f32.gmra.mrb[0].mxu0 %v3070
  %v3233 = vpop.f32.mrb[0].mxu0
  %v3234 = vadd.f32 0.0, %v3233
  %v3235 = vpop.f32.mrb[0].mxu0
  %3236 = vdwg.mxu0
  %3238 = vset.pattern.permute.xlu0 0
  %3239 = vperm.xlu0 %3238, %v2971
  %v3240 = vpop.permute.xlu0 %3239
  %3243 = vset.pattern.permute.xlu0 0
  %3244 = vperm.xlu0 %3243, %v2972
  %v3245 = vpop.permute.xlu0 %3244
  %3248 = vset.pattern.permute.xlu0 0
  %3249 = vperm.xlu0 %3248, %v2973
  %v3250 = vpop.permute.xlu0 %3249
  %3253 = vset.pattern.permute.xlu0 0
  %3254 = vperm.xlu0 %3253, %v2974
  %v3255 = vpop.permute.xlu0 %3254
  %3258 = vset.pattern.permute.xlu0 0
  %3259 = vperm.xlu0 %3258, %v2975
  %v3260 = vpop.permute.xlu0 %3259
  %3263 = vset.pattern.permute.xlu0 0
  %3264 = vperm.xlu0 %3263, %v2976
  %v3265 = vpop.permute.xlu0 %3264
  %3268 = vset.pattern.permute.xlu0 0
  %3269 = vperm.xlu0 %3268, %v2977
  %v3270 = vpop.permute.xlu0 %3269
  %3273 = vset.pattern.permute.xlu0 0
  %3274 = vperm.xlu0 %3273, %v2978
  %v3275 = vpop.permute.xlu0 %3274
  %3278 = vset.pattern.permute.xlu0 0
  %3279 = vperm.xlu0 %3278, %v2979
  %v3280 = vpop.permute.xlu0 %3279
  %3283 = vset.pattern.permute.xlu0 0
  %3284 = vperm.xlu0 %3283, %v2980
  %v3285 = vpop.permute.xlu0 %3284
  %3288 = vset.pattern.permute.xlu0 0
  %3289 = vperm.xlu0 %3288, %v2981
  %v3290 = vpop.permute.xlu0 %3289
  %3293 = vset.pattern.permute.xlu0 0
  %3294 = vperm.xlu0 %3293, %v2982
  %v3295 = vpop.permute.xlu0 %3294
  %3298 = vset.pattern.permute.xlu0 0
  %3299 = vperm.xlu0 %3298, %v2983
  %v3300 = vpop.permute.xlu0 %3299
  %3303 = vset.pattern.permute.xlu0 0
  %3304 = vperm.xlu0 %3303, %v2984
  %v3305 = vpop.permute.xlu0 %3304
  %3308 = vset.pattern.permute.xlu0 0
  %3309 = vperm.xlu0 %3308, %v2985
  %v3310 = vpop.permute.xlu0 %3309
  %3313 = vset.pattern.permute.xlu0 0
  %3314 = vperm.xlu0 %3313, %v2986
  %v3315 = vpop.permute.xlu0 %3314
  %3318 = vset.pattern.permute.xlu0 0
  %3319 = vperm.xlu0 %3318, %v2987
  %v3320 = vpop.permute.xlu0 %3319
  %3323 = vset.pattern.permute.xlu0 0
  %3324 = vperm.xlu0 %3323, %v2988
  %v3325 = vpop.permute.xlu0 %3324
  %3328 = vset.pattern.permute.xlu0 0
  %3329 = vperm.xlu0 %3328, %v2989
  %v3330 = vpop.permute.xlu0 %3329
  %3333 = vset.pattern.permute.xlu0 0
  %3334 = vperm.xlu0 %3333, %v2990
  %v3335 = vpop.permute.xlu0 %3334
  %v3337 = vadd.f32 %v3240, %v3139
  %v3338 = vadd.f32 %v3245, %v3144
  %v3339 = vadd.f32 %v3250, %v3149
  %v3340 = vadd.f32 %v3255, %v3154
  %v3341 = vadd.f32 %v3260, %v3159
  %v3342 = vadd.f32 %v3265, %v3164
  %v3343 = vadd.f32 %v3270, %v3169
  %v3344 = vadd.f32 %v3275, %v3174
  %v3345 = vadd.f32 %v3280, %v3179
  %v3346 = vadd.f32 %v3285, %v3184
  %v3347 = vadd.f32 %v3290, %v3189
  %v3348 = vadd.f32 %v3295, %v3194
  %v3349 = vadd.f32 %v3300, %v3199
  %v3350 = vadd.f32 %v3305, %v3204
  %v3351 = vadd.f32 %v3310, %v3209
  %v3352 = vadd.f32 %v3315, %v3214
  %v3353 = vadd.f32 %v3320, %v3219
  %v3354 = vadd.f32 %v3325, %v3224
  %v3355 = vadd.f32 %v3330, %v3229
  %v3356 = vadd.f32 %v3335, %v3234
  %s3357 = scalar_lea.vmem %s5, 160
  %v3358 = vld [vmem:[%s3357] sm:$0xff]
  %v3359 = vld [vmem:[%s3357 + $0x8] sm:$0xff]
  %v3360 = vld [vmem:[%s3357 + $0x10] sm:$0xff]
  %v3361 = vld [vmem:[%s3357 + $0x18] sm:$0xff]
  %v3362 = vld [vmem:[%s3357 + $0x20] sm:$0xff]
  %v3363 = vld [vmem:[%s3357 + $0x28] sm:$0xff]
  %v3364 = vld [vmem:[%s3357 + $0x30] sm:$0xff]
  %v3365 = vld [vmem:[%s3357 + $0x38] sm:$0xff]
  %v3366 = vld [vmem:[%s3357 + $0x40] sm:$0xff]
  %v3367 = vld [vmem:[%s3357 + $0x48] sm:$0xff]
  %v3368 = vld [vmem:[%s3357 + $0x50] sm:$0xff]
  %v3369 = vld [vmem:[%s3357 + $0x58] sm:$0xff]
  %v3370 = vld [vmem:[%s3357 + $0x60] sm:$0xff]
  %v3371 = vld [vmem:[%s3357 + $0x68] sm:$0xff]
  %v3372 = vld [vmem:[%s3357 + $0x70] sm:$0xff]
  %v3373 = vld [vmem:[%s3357 + $0x78] sm:$0xff]
  %v3374 = vld [vmem:[%s3357 + $0x80] sm:$0xff]
  %v3375 = vld [vmem:[%s3357 + $0x88] sm:$0xff]
  %v3376 = vld [vmem:[%s3357 + $0x90] sm:$0xff]
  %v3377 = vld [vmem:[%s3357 + $0x98] sm:$0xff]
  %3393 = vrot.lane.b32.xlu0 %v2898, 127
  %v3394 = vpop.permute.xlu0 %3393
  %3395 = vrot.lane.b32.xlu0 %v2903, 127
  %v3396 = vpop.permute.xlu0 %3395
  %3397 = vrot.lane.b32.xlu0 %v2908, 127
  %v3398 = vpop.permute.xlu0 %3397
  %3399 = vrot.lane.b32.xlu0 %v2913, 127
  %v3400 = vpop.permute.xlu0 %3399
  %3401 = vrot.lane.b32.xlu0 %v2918, 127
  %v3402 = vpop.permute.xlu0 %3401
  %3403 = vrot.lane.b32.xlu0 %v2923, 127
  %v3404 = vpop.permute.xlu0 %3403
  %3405 = vrot.lane.b32.xlu0 %v2928, 127
  %v3406 = vpop.permute.xlu0 %3405
  %3407 = vrot.lane.b32.xlu0 %v2933, 127
  %v3408 = vpop.permute.xlu0 %3407
  %3409 = vrot.lane.b32.xlu0 %v2938, 127
  %v3410 = vpop.permute.xlu0 %3409
  %3411 = vrot.lane.b32.xlu0 %v2943, 127
  %v3412 = vpop.permute.xlu0 %3411
  %3413 = vrot.lane.b32.xlu0 %v2948, 127
  %v3414 = vpop.permute.xlu0 %3413
  %3415 = vrot.lane.b32.xlu0 %v2953, 127
  %v3416 = vpop.permute.xlu0 %3415
  %3417 = vrot.lane.b32.xlu0 %v2958, 127
  %v3418 = vpop.permute.xlu0 %3417
  %3419 = vrot.lane.b32.xlu0 %v2963, 127
  %v3420 = vpop.permute.xlu0 %3419
  %3421 = vrot.lane.b32.xlu0 %v2968, 127
  %v3422 = vpop.permute.xlu0 %3421
  %v3439 = vsel %vm3011, %v3358, 0
  %v3442 = vsel %vm3011, %v3359, 0
  %v3445 = vsel %vm3011, %v3360, 0
  %v3448 = vsel %vm3011, %v3361, 0
  %v3451 = vsel %vm3011, %v3362, 0
  %v3454 = vsel %vm3011, %v3363, 0
  %v3457 = vsel %vm3011, %v3364, 0
  %v3460 = vsel %vm3011, %v3365, 0
  %v3463 = vsel %vm3011, %v3366, 0
  %v3466 = vsel %vm3011, %v3367, 0
  %v3469 = vsel %vm3011, %v3368, 0
  %v3472 = vsel %vm3011, %v3369, 0
  %v3475 = vsel %vm3011, %v3370, 0
  %v3478 = vsel %vm3011, %v3371, 0
  %v3481 = vsel %vm3011, %v3372, 0
  %v3484 = vsel %vm3011, %v3373, 0
  %v3487 = vsel %vm3011, %v3374, 0
  %v3490 = vsel %vm3011, %v3375, 0
  %v3493 = vsel %vm3011, %v3376, 0
  %v3496 = vsel %vm3011, %v3377, 0
  %3498 = vmatprep.subr.mxu0 0.0
  %3499 = vmatpush1.msra.mxu0 %v3394
  %3500 = vmatprep.subr.mxu0 0.0
  %3501 = vmatpush1.msra.mxu0 %v3396
  %3502 = vmatprep.subr.mxu0 0.0
  %3503 = vmatpush1.msra.mxu0 %v3398
  %3504 = vmatprep.subr.mxu0 0.0
  %3505 = vmatpush1.msra.mxu0 %v3400
  %3506 = vmatprep.subr.mxu0 0.0
  %3507 = vmatpush1.msra.mxu0 %v3402
  %3508 = vmatprep.subr.mxu0 0.0
  %3509 = vmatpush1.msra.mxu0 %v3404
  %3510 = vmatprep.subr.mxu0 0.0
  %3511 = vmatpush1.msra.mxu0 %v3406
  %3512 = vmatprep.subr.mxu0 0.0
  %3513 = vmatpush1.msra.mxu0 %v3408
  %3514 = vmatprep.subr.mxu0 0.0
  %3515 = vmatpush1.msra.mxu0 %v3410
  %3516 = vmatprep.subr.mxu0 0.0
  %3517 = vmatpush1.msra.mxu0 %v3412
  %3518 = vmatprep.subr.mxu0 0.0
  %3519 = vmatpush1.msra.mxu0 %v3414
  %3520 = vmatprep.subr.mxu0 0.0
  %3521 = vmatpush1.msra.mxu0 %v3416
  %3522 = vmatprep.subr.mxu0 0.0
  %3523 = vmatpush1.msra.mxu0 %v3418
  %3524 = vmatprep.subr.mxu0 0.0
  %3525 = vmatpush1.msra.mxu0 %v3420
  %3526 = vmatprep.subr.mxu0 0.0
  %3527 = vmatpush1.msra.mxu0 %v3422
  %3528 = vmatprep.subr.mxu0 0.0
  %3529 = vmatpush1.msra.mxu0 0.0
  %3530 = vmatprep.subr.mxu0 0.0
  %3531 = vmatpush1.msra.mxu0 0.0
  %3532 = vmatprep.subr.mxu0 0.0
  %3533 = vmatpush1.msra.mxu0 0.0
  %3534 = vmatprep.subr.mxu0 0.0
  %3535 = vmatpush1.msra.mxu0 0.0
  %3536 = vmatprep.subr.mxu0 0.0
  %3537 = vmatpush1.msra.mxu0 0.0
  %3538 = vmatprep.subr.mxu0 0.0
  %3539 = vmatpush1.msra.mxu0 0.0
  %3540 = vmatprep.subr.mxu0 0.0
  %3541 = vmatpush1.msra.mxu0 0.0
  %3542 = vmatprep.subr.mxu0 0.0
  %3543 = vmatpush1.msra.mxu0 0.0
  %3544 = vmatprep.subr.mxu0 0.0
  %3545 = vmatpush1.msra.mxu0 0.0
  %3546 = vmatprep.subr.mxu0 0.0
  %3547 = vmatpush1.msra.mxu0 0.0
  %3548 = vmatprep.subr.mxu0 0.0
  %3549 = vmatpush1.msra.mxu0 0.0
  %3550 = vmatprep.subr.mxu0 0.0
  %3551 = vmatpush1.msra.mxu0 0.0
  %3552 = vmatprep.subr.mxu0 0.0
  %3553 = vmatpush1.msra.mxu0 0.0
  %3554 = vmatprep.subr.mxu0 0.0
  %3555 = vmatpush1.msra.mxu0 0.0
  %3556 = vmatprep.subr.mxu0 0.0
  %3557 = vmatpush1.msra.mxu0 0.0
  %3558 = vmatprep.subr.mxu0 0.0
  %3559 = vmatpush1.msra.mxu0 0.0
  %3560 = vmatprep.subr.mxu0 0.0
  %3561 = vmatpush1.msra.mxu0 0.0
  %3562 = vmatprep.mubr.f32.mxu0 0.0
  %3563 = vmatmul.mubr.f32.gmra.mrb[0].mxu0 %v3439
  %v3564 = vpop.f32.mrb[0].mxu0
  %v3565 = vadd.f32 0.0, %v3564
  %v3566 = vpop.f32.mrb[0].mxu0
  %3567 = vmatprep.mubr.f32.mxu0 0.0
  %3568 = vmatmul.mubr.f32.gmra.mrb[0].mxu0 %v3442
  %v3569 = vpop.f32.mrb[0].mxu0
  %v3570 = vadd.f32 0.0, %v3569
  %v3571 = vpop.f32.mrb[0].mxu0
  %3572 = vmatprep.mubr.f32.mxu0 0.0
  %3573 = vmatmul.mubr.f32.gmra.mrb[0].mxu0 %v3445
  %v3574 = vpop.f32.mrb[0].mxu0
  %v3575 = vadd.f32 0.0, %v3574
  %v3576 = vpop.f32.mrb[0].mxu0
  %3577 = vmatprep.mubr.f32.mxu0 0.0
  %3578 = vmatmul.mubr.f32.gmra.mrb[0].mxu0 %v3448
  %v3579 = vpop.f32.mrb[0].mxu0
  %v3580 = vadd.f32 0.0, %v3579
  %v3581 = vpop.f32.mrb[0].mxu0
  %3582 = vmatprep.mubr.f32.mxu0 0.0
  %3583 = vmatmul.mubr.f32.gmra.mrb[0].mxu0 %v3451
  %v3584 = vpop.f32.mrb[0].mxu0
  %v3585 = vadd.f32 0.0, %v3584
  %v3586 = vpop.f32.mrb[0].mxu0
  %3587 = vmatprep.mubr.f32.mxu0 0.0
  %3588 = vmatmul.mubr.f32.gmra.mrb[0].mxu0 %v3454
  %v3589 = vpop.f32.mrb[0].mxu0
  %v3590 = vadd.f32 0.0, %v3589
  %v3591 = vpop.f32.mrb[0].mxu0
  %3592 = vmatprep.mubr.f32.mxu0 0.0
  %3593 = vmatmul.mubr.f32.gmra.mrb[0].mxu0 %v3457
  %v3594 = vpop.f32.mrb[0].mxu0
  %v3595 = vadd.f32 0.0, %v3594
  %v3596 = vpop.f32.mrb[0].mxu0
  %3597 = vmatprep.mubr.f32.mxu0 0.0
  %3598 = vmatmul.mubr.f32.gmra.mrb[0].mxu0 %v3460
  %v3599 = vpop.f32.mrb[0].mxu0
  %v3600 = vadd.f32 0.0, %v3599
  %v3601 = vpop.f32.mrb[0].mxu0
  %3602 = vmatprep.mubr.f32.mxu0 0.0
  %3603 = vmatmul.mubr.f32.gmra.mrb[0].mxu0 %v3463
  %v3604 = vpop.f32.mrb[0].mxu0
  %v3605 = vadd.f32 0.0, %v3604
  %v3606 = vpop.f32.mrb[0].mxu0
  %3607 = vmatprep.mubr.f32.mxu0 0.0
  %3608 = vmatmul.mubr.f32.gmra.mrb[0].mxu0 %v3466
  %v3609 = vpop.f32.mrb[0].mxu0
  %v3610 = vadd.f32 0.0, %v3609
  %v3611 = vpop.f32.mrb[0].mxu0
  %3612 = vmatprep.mubr.f32.mxu0 0.0
  %3613 = vmatmul.mubr.f32.gmra.mrb[0].mxu0 %v3469
  %v3614 = vpop.f32.mrb[0].mxu0
  %v3615 = vadd.f32 0.0, %v3614
  %v3616 = vpop.f32.mrb[0].mxu0
  %3617 = vmatprep.mubr.f32.mxu0 0.0
  %3618 = vmatmul.mubr.f32.gmra.mrb[0].mxu0 %v3472
  %v3619 = vpop.f32.mrb[0].mxu0
  %v3620 = vadd.f32 0.0, %v3619
  %v3621 = vpop.f32.mrb[0].mxu0
  %3622 = vmatprep.mubr.f32.mxu0 0.0
  %3623 = vmatmul.mubr.f32.gmra.mrb[0].mxu0 %v3475
  %v3624 = vpop.f32.mrb[0].mxu0
  %v3625 = vadd.f32 0.0, %v3624
  %v3626 = vpop.f32.mrb[0].mxu0
  %3627 = vmatprep.mubr.f32.mxu0 0.0
  %3628 = vmatmul.mubr.f32.gmra.mrb[0].mxu0 %v3478
  %v3629 = vpop.f32.mrb[0].mxu0
  %v3630 = vadd.f32 0.0, %v3629
  %v3631 = vpop.f32.mrb[0].mxu0
  %3632 = vmatprep.mubr.f32.mxu0 0.0
  %3633 = vmatmul.mubr.f32.gmra.mrb[0].mxu0 %v3481
  %v3634 = vpop.f32.mrb[0].mxu0
  %v3635 = vadd.f32 0.0, %v3634
  %v3636 = vpop.f32.mrb[0].mxu0
  %3637 = vmatprep.mubr.f32.mxu0 0.0
  %3638 = vmatmul.mubr.f32.gmra.mrb[0].mxu0 %v3484
  %v3639 = vpop.f32.mrb[0].mxu0
  %v3640 = vadd.f32 0.0, %v3639
  %v3641 = vpop.f32.mrb[0].mxu0
  %3642 = vmatprep.mubr.f32.mxu0 0.0
  %3643 = vmatmul.mubr.f32.gmra.mrb[0].mxu0 %v3487
  %v3644 = vpop.f32.mrb[0].mxu0
  %v3645 = vadd.f32 0.0, %v3644
  %v3646 = vpop.f32.mrb[0].mxu0
  %3647 = vmatprep.mubr.f32.mxu0 0.0
  %3648 = vmatmul.mubr.f32.gmra.mrb[0].mxu0 %v3490
  %v3649 = vpop.f32.mrb[0].mxu0
  %v3650 = vadd.f32 0.0, %v3649
  %v3651 = vpop.f32.mrb[0].mxu0
  %3652 = vmatprep.mubr.f32.mxu0 0.0
  %3653 = vmatmul.mubr.f32.gmra.mrb[0].mxu0 %v3493
  %v3654 = vpop.f32.mrb[0].mxu0
  %v3655 = vadd.f32 0.0, %v3654
  %v3656 = vpop.f32.mrb[0].mxu0
  %3657 = vmatprep.mubr.f32.mxu0 0.0
  %3658 = vmatmul.mubr.f32.gmra.mrb[0].mxu0 %v3496
  %v3659 = vpop.f32.mrb[0].mxu0
  %v3660 = vadd.f32 0.0, %v3659
  %v3661 = vpop.f32.mrb[0].mxu0
  %3662 = vdwg.mxu0
  %v3663 = vadd.f32 %v3337, %v3565
  %v3664 = vadd.f32 %v3338, %v3570
  %v3665 = vadd.f32 %v3339, %v3575
  %v3666 = vadd.f32 %v3340, %v3580
  %v3667 = vadd.f32 %v3341, %v3585
  %v3668 = vadd.f32 %v3342, %v3590
  %v3669 = vadd.f32 %v3343, %v3595
  %v3670 = vadd.f32 %v3344, %v3600
  %v3671 = vadd.f32 %v3345, %v3605
  %v3672 = vadd.f32 %v3346, %v3610
  %v3673 = vadd.f32 %v3347, %v3615
  %v3674 = vadd.f32 %v3348, %v3620
  %v3675 = vadd.f32 %v3349, %v3625
  %v3676 = vadd.f32 %v3350, %v3630
  %v3677 = vadd.f32 %v3351, %v3635
  %v3678 = vadd.f32 %v3352, %v3640
  %v3679 = vadd.f32 %v3353, %v3645
  %v3680 = vadd.f32 %v3354, %v3650
  %v3681 = vadd.f32 %v3355, %v3655
  %v3682 = vadd.f32 %v3356, %v3660
  %s3683 = scalar_lea.vmem %s5, 320
  %v3684 = vld [vmem:[%s3683] sm:$0xff]
  %v3685 = vld [vmem:[%s3683 + $0x8] sm:$0xff]
  %v3686 = vld [vmem:[%s3683 + $0x10] sm:$0xff]
  %v3687 = vld [vmem:[%s3683 + $0x18] sm:$0xff]
  %v3688 = vld [vmem:[%s3683 + $0x20] sm:$0xff]
  %v3689 = vld [vmem:[%s3683 + $0x28] sm:$0xff]
  %v3690 = vld [vmem:[%s3683 + $0x30] sm:$0xff]
  %v3691 = vld [vmem:[%s3683 + $0x38] sm:$0xff]
  %v3692 = vld [vmem:[%s3683 + $0x40] sm:$0xff]
  %v3693 = vld [vmem:[%s3683 + $0x48] sm:$0xff]
  %v3694 = vld [vmem:[%s3683 + $0x50] sm:$0xff]
  %v3695 = vld [vmem:[%s3683 + $0x58] sm:$0xff]
  %v3696 = vld [vmem:[%s3683 + $0x60] sm:$0xff]
  %v3697 = vld [vmem:[%s3683 + $0x68] sm:$0xff]
  %v3698 = vld [vmem:[%s3683 + $0x70] sm:$0xff]
  %v3699 = vld [vmem:[%s3683 + $0x78] sm:$0xff]
  %v3700 = vld [vmem:[%s3683 + $0x80] sm:$0xff]
  %v3701 = vld [vmem:[%s3683 + $0x88] sm:$0xff]
  %v3702 = vld [vmem:[%s3683 + $0x90] sm:$0xff]
  %v3703 = vld [vmem:[%s3683 + $0x98] sm:$0xff]
  %3704 = vrot.lane.b32.xlu0 %v2898, 126
  %v3705 = vpop.permute.xlu0 %3704
  %3706 = vrot.lane.b32.xlu0 %v2903, 126
  %v3707 = vpop.permute.xlu0 %3706
  %3708 = vrot.lane.b32.xlu0 %v2908, 126
  %v3709 = vpop.permute.xlu0 %3708
  %3710 = vrot.lane.b32.xlu0 %v2913, 126
  %v3711 = vpop.permute.xlu0 %3710
  %3712 = vrot.lane.b32.xlu0 %v2918, 126
  %v3713 = vpop.permute.xlu0 %3712
  %3714 = vrot.lane.b32.xlu0 %v2923, 126
  %v3715 = vpop.permute.xlu0 %3714
  %3716 = vrot.lane.b32.xlu0 %v2928, 126
  %v3717 = vpop.permute.xlu0 %3716
  %3718 = vrot.lane.b32.xlu0 %v2933, 126
  %v3719 = vpop.permute.xlu0 %3718
  %3720 = vrot.lane.b32.xlu0 %v2938, 126
  %v3721 = vpop.permute.xlu0 %3720
  %3722 = vrot.lane.b32.xlu0 %v2943, 126
  %v3723 = vpop.permute.xlu0 %3722
  %3724 = vrot.lane.b32.xlu0 %v2948, 126
  %v3725 = vpop.permute.xlu0 %3724
  %3726 = vrot.lane.b32.xlu0 %v2953, 126
  %v3727 = vpop.permute.xlu0 %3726
  %3728 = vrot.lane.b32.xlu0 %v2958, 126
  %v3729 = vpop.permute.xlu0 %3728
  %3730 = vrot.lane.b32.xlu0 %v2963, 126
  %v3731 = vpop.permute.xlu0 %3730
  %3732 = vrot.lane.b32.xlu0 %v2968, 126
  %v3733 = vpop.permute.xlu0 %3732
  %v3750 = vsel %vm3011, %v3684, 0
  %v3753 = vsel %vm3011, %v3685, 0
  %v3756 = vsel %vm3011, %v3686, 0
  %v3759 = vsel %vm3011, %v3687, 0
  %v3762 = vsel %vm3011, %v3688, 0
  %v3765 = vsel %vm3011, %v3689, 0
  %v3768 = vsel %vm3011, %v3690, 0
  %v3771 = vsel %vm3011, %v3691, 0
  %v3774 = vsel %vm3011, %v3692, 0
  %v3777 = vsel %vm3011, %v3693, 0
  %v3780 = vsel %vm3011, %v3694, 0
  %v3783 = vsel %vm3011, %v3695, 0
  %v3786 = vsel %vm3011, %v3696, 0
  %v3789 = vsel %vm3011, %v3697, 0
  %v3792 = vsel %vm3011, %v3698, 0
  %v3795 = vsel %vm3011, %v3699, 0
  %v3798 = vsel %vm3011, %v3700, 0
  %v3801 = vsel %vm3011, %v3701, 0
  %v3804 = vsel %vm3011, %v3702, 0
  %v3807 = vsel %vm3011, %v3703, 0
  %3809 = vmatprep.subr.mxu0 0.0
  %3810 = vmatpush1.msra.mxu0 %v3705
  %3811 = vmatprep.subr.mxu0 0.0
  %3812 = vmatpush1.msra.mxu0 %v3707
  %3813 = vmatprep.subr.mxu0 0.0
  %3814 = vmatpush1.msra.mxu0 %v3709
  %3815 = vmatprep.subr.mxu0 0.0
  %3816 = vmatpush1.msra.mxu0 %v3711
  %3817 = vmatprep.subr.mxu0 0.0
  %3818 = vmatpush1.msra.mxu0 %v3713
  %3819 = vmatprep.subr.mxu0 0.0
  %3820 = vmatpush1.msra.mxu0 %v3715
  %3821 = vmatprep.subr.mxu0 0.0
  %3822 = vmatpush1.msra.mxu0 %v3717
  %3823 = vmatprep.subr.mxu0 0.0
  %3824 = vmatpush1.msra.mxu0 %v3719
  %3825 = vmatprep.subr.mxu0 0.0
  %3826 = vmatpush1.msra.mxu0 %v3721
  %3827 = vmatprep.subr.mxu0 0.0
  %3828 = vmatpush1.msra.mxu0 %v3723
  %3829 = vmatprep.subr.mxu0 0.0
  %3830 = vmatpush1.msra.mxu0 %v3725
  %3831 = vmatprep.subr.mxu0 0.0
  %3832 = vmatpush1.msra.mxu0 %v3727
  %3833 = vmatprep.subr.mxu0 0.0
  %3834 = vmatpush1.msra.mxu0 %v3729
  %3835 = vmatprep.subr.mxu0 0.0
  %3836 = vmatpush1.msra.mxu0 %v3731
  %3837 = vmatprep.subr.mxu0 0.0
  %3838 = vmatpush1.msra.mxu0 %v3733
  %3839 = vmatprep.subr.mxu0 0.0
  %3840 = vmatpush1.msra.mxu0 0.0
  %3841 = vmatprep.subr.mxu0 0.0
  %3842 = vmatpush1.msra.mxu0 0.0
  %3843 = vmatprep.subr.mxu0 0.0
  %3844 = vmatpush1.msra.mxu0 0.0
  %3845 = vmatprep.subr.mxu0 0.0
  %3846 = vmatpush1.msra.mxu0 0.0
  %3847 = vmatprep.subr.mxu0 0.0
  %3848 = vmatpush1.msra.mxu0 0.0
  %3849 = vmatprep.subr.mxu0 0.0
  %3850 = vmatpush1.msra.mxu0 0.0
  %3851 = vmatprep.subr.mxu0 0.0
  %3852 = vmatpush1.msra.mxu0 0.0
  %3853 = vmatprep.subr.mxu0 0.0
  %3854 = vmatpush1.msra.mxu0 0.0
  %3855 = vmatprep.subr.mxu0 0.0
  %3856 = vmatpush1.msra.mxu0 0.0
  %3857 = vmatprep.subr.mxu0 0.0
  %3858 = vmatpush1.msra.mxu0 0.0
  %3859 = vmatprep.subr.mxu0 0.0
  %3860 = vmatpush1.msra.mxu0 0.0
  %3861 = vmatprep.subr.mxu0 0.0
  %3862 = vmatpush1.msra.mxu0 0.0
  %3863 = vmatprep.subr.mxu0 0.0
  %3864 = vmatpush1.msra.mxu0 0.0
  %3865 = vmatprep.subr.mxu0 0.0
  %3866 = vmatpush1.msra.mxu0 0.0
  %3867 = vmatprep.subr.mxu0 0.0
  %3868 = vmatpush1.msra.mxu0 0.0
  %3869 = vmatprep.subr.mxu0 0.0
  %3870 = vmatpush1.msra.mxu0 0.0
  %3871 = vmatprep.subr.mxu0 0.0
  %3872 = vmatpush1.msra.mxu0 0.0
  %3873 = vmatprep.mubr.f32.mxu0 0.0
  %3874 = vmatmul.mubr.f32.gmra.mrb[0].mxu0 %v3750
  %v3875 = vpop.f32.mrb[0].mxu0
  %v3876 = vadd.f32 0.0, %v3875
  %v3877 = vpop.f32.mrb[0].mxu0
  %3878 = vmatprep.mubr.f32.mxu0 0.0
  %3879 = vmatmul.mubr.f32.gmra.mrb[0].mxu0 %v3753
  %v3880 = vpop.f32.mrb[0].mxu0
  %v3881 = vadd.f32 0.0, %v3880
  %v3882 = vpop.f32.mrb[0].mxu0
  %3883 = vmatprep.mubr.f32.mxu0 0.0
  %3884 = vmatmul.mubr.f32.gmra.mrb[0].mxu0 %v3756
  %v3885 = vpop.f32.mrb[0].mxu0
  %v3886 = vadd.f32 0.0, %v3885
  %v3887 = vpop.f32.mrb[0].mxu0
  %3888 = vmatprep.mubr.f32.mxu0 0.0
  %3889 = vmatmul.mubr.f32.gmra.mrb[0].mxu0 %v3759
  %v3890 = vpop.f32.mrb[0].mxu0
  %v3891 = vadd.f32 0.0, %v3890
  %v3892 = vpop.f32.mrb[0].mxu0
  %3893 = vmatprep.mubr.f32.mxu0 0.0
  %3894 = vmatmul.mubr.f32.gmra.mrb[0].mxu0 %v3762
  %v3895 = vpop.f32.mrb[0].mxu0
  %v3896 = vadd.f32 0.0, %v3895
  %v3897 = vpop.f32.mrb[0].mxu0
  %3898 = vmatprep.mubr.f32.mxu0 0.0
  %3899 = vmatmul.mubr.f32.gmra.mrb[0].mxu0 %v3765
  %v3900 = vpop.f32.mrb[0].mxu0
  %v3901 = vadd.f32 0.0, %v3900
  %v3902 = vpop.f32.mrb[0].mxu0
  %3903 = vmatprep.mubr.f32.mxu0 0.0
  %3904 = vmatmul.mubr.f32.gmra.mrb[0].mxu0 %v3768
  %v3905 = vpop.f32.mrb[0].mxu0
  %v3906 = vadd.f32 0.0, %v3905
  %v3907 = vpop.f32.mrb[0].mxu0
  %3908 = vmatprep.mubr.f32.mxu0 0.0
  %3909 = vmatmul.mubr.f32.gmra.mrb[0].mxu0 %v3771
  %v3910 = vpop.f32.mrb[0].mxu0
  %v3911 = vadd.f32 0.0, %v3910
  %v3912 = vpop.f32.mrb[0].mxu0
  %3913 = vmatprep.mubr.f32.mxu0 0.0
  %3914 = vmatmul.mubr.f32.gmra.mrb[0].mxu0 %v3774
  %v3915 = vpop.f32.mrb[0].mxu0
  %v3916 = vadd.f32 0.0, %v3915
  %v3917 = vpop.f32.mrb[0].mxu0
  %3918 = vmatprep.mubr.f32.mxu0 0.0
  %3919 = vmatmul.mubr.f32.gmra.mrb[0].mxu0 %v3777
  %v3920 = vpop.f32.mrb[0].mxu0
  %v3921 = vadd.f32 0.0, %v3920
  %v3922 = vpop.f32.mrb[0].mxu0
  %3923 = vmatprep.mubr.f32.mxu0 0.0
  %3924 = vmatmul.mubr.f32.gmra.mrb[0].mxu0 %v3780
  %v3925 = vpop.f32.mrb[0].mxu0
  %v3926 = vadd.f32 0.0, %v3925
  %v3927 = vpop.f32.mrb[0].mxu0
  %3928 = vmatprep.mubr.f32.mxu0 0.0
  %3929 = vmatmul.mubr.f32.gmra.mrb[0].mxu0 %v3783
  %v3930 = vpop.f32.mrb[0].mxu0
  %v3931 = vadd.f32 0.0, %v3930
  %v3932 = vpop.f32.mrb[0].mxu0
  %3933 = vmatprep.mubr.f32.mxu0 0.0
  %3934 = vmatmul.mubr.f32.gmra.mrb[0].mxu0 %v3786
  %v3935 = vpop.f32.mrb[0].mxu0
  %v3936 = vadd.f32 0.0, %v3935
  %v3937 = vpop.f32.mrb[0].mxu0
  %3938 = vmatprep.mubr.f32.mxu0 0.0
  %3939 = vmatmul.mubr.f32.gmra.mrb[0].mxu0 %v3789
  %v3940 = vpop.f32.mrb[0].mxu0
  %v3941 = vadd.f32 0.0, %v3940
  %v3942 = vpop.f32.mrb[0].mxu0
  %3943 = vmatprep.mubr.f32.mxu0 0.0
  %3944 = vmatmul.mubr.f32.gmra.mrb[0].mxu0 %v3792
  %v3945 = vpop.f32.mrb[0].mxu0
  %v3946 = vadd.f32 0.0, %v3945
  %v3947 = vpop.f32.mrb[0].mxu0
  %3948 = vmatprep.mubr.f32.mxu0 0.0
  %3949 = vmatmul.mubr.f32.gmra.mrb[0].mxu0 %v3795
  %v3950 = vpop.f32.mrb[0].mxu0
  %v3951 = vadd.f32 0.0, %v3950
  %v3952 = vpop.f32.mrb[0].mxu0
  %3953 = vmatprep.mubr.f32.mxu0 0.0
  %3954 = vmatmul.mubr.f32.gmra.mrb[0].mxu0 %v3798
  %v3955 = vpop.f32.mrb[0].mxu0
  %v3956 = vadd.f32 0.0, %v3955
  %v3957 = vpop.f32.mrb[0].mxu0
  %3958 = vmatprep.mubr.f32.mxu0 0.0
  %3959 = vmatmul.mubr.f32.gmra.mrb[0].mxu0 %v3801
  %v3960 = vpop.f32.mrb[0].mxu0
  %v3961 = vadd.f32 0.0, %v3960
  %v3962 = vpop.f32.mrb[0].mxu0
  %3963 = vmatprep.mubr.f32.mxu0 0.0
  %3964 = vmatmul.mubr.f32.gmra.mrb[0].mxu0 %v3804
  %v3965 = vpop.f32.mrb[0].mxu0
  %v3966 = vadd.f32 0.0, %v3965
  %v3967 = vpop.f32.mrb[0].mxu0
  %3968 = vmatprep.mubr.f32.mxu0 0.0
  %3969 = vmatmul.mubr.f32.gmra.mrb[0].mxu0 %v3807
  %v3970 = vpop.f32.mrb[0].mxu0
  %v3971 = vadd.f32 0.0, %v3970
  %v3972 = vpop.f32.mrb[0].mxu0
  %3973 = vdwg.mxu0
  %v3974 = vadd.f32 %v3663, %v3876
  %v3975 = vadd.f32 %v3664, %v3881
  %v3976 = vadd.f32 %v3665, %v3886
  %v3977 = vadd.f32 %v3666, %v3891
  %v3978 = vadd.f32 %v3667, %v3896
  %v3979 = vadd.f32 %v3668, %v3901
  %v3980 = vadd.f32 %v3669, %v3906
  %v3981 = vadd.f32 %v3670, %v3911
  %v3982 = vadd.f32 %v3671, %v3916
  %v3983 = vadd.f32 %v3672, %v3921
  %v3984 = vadd.f32 %v3673, %v3926
  %v3985 = vadd.f32 %v3674, %v3931
  %v3986 = vadd.f32 %v3675, %v3936
  %v3987 = vadd.f32 %v3676, %v3941
  %v3988 = vadd.f32 %v3677, %v3946
  %v3989 = vadd.f32 %v3678, %v3951
  %v3990 = vadd.f32 %v3679, %v3956
  %v3991 = vadd.f32 %v3680, %v3961
  %v3992 = vadd.f32 %v3681, %v3966
  %v3993 = vadd.f32 %v3682, %v3971
  %s3994 = scalar_lea.vmem %s5, 480
  %v3995 = vld [vmem:[%s3994] sm:$0xff]
  %v3996 = vld [vmem:[%s3994 + $0x8] sm:$0xff]
  %v3997 = vld [vmem:[%s3994 + $0x10] sm:$0xff]
  %v3998 = vld [vmem:[%s3994 + $0x18] sm:$0xff]
  %v3999 = vld [vmem:[%s3994 + $0x20] sm:$0xff]
  %v4000 = vld [vmem:[%s3994 + $0x28] sm:$0xff]
  %v4001 = vld [vmem:[%s3994 + $0x30] sm:$0xff]
  %v4002 = vld [vmem:[%s3994 + $0x38] sm:$0xff]
  %v4003 = vld [vmem:[%s3994 + $0x40] sm:$0xff]
  %v4004 = vld [vmem:[%s3994 + $0x48] sm:$0xff]
  %v4005 = vld [vmem:[%s3994 + $0x50] sm:$0xff]
  %v4006 = vld [vmem:[%s3994 + $0x58] sm:$0xff]
  %v4007 = vld [vmem:[%s3994 + $0x60] sm:$0xff]
  %v4008 = vld [vmem:[%s3994 + $0x68] sm:$0xff]
  %v4009 = vld [vmem:[%s3994 + $0x70] sm:$0xff]
  %v4010 = vld [vmem:[%s3994 + $0x78] sm:$0xff]
  %v4011 = vld [vmem:[%s3994 + $0x80] sm:$0xff]
  %v4012 = vld [vmem:[%s3994 + $0x88] sm:$0xff]
  %v4013 = vld [vmem:[%s3994 + $0x90] sm:$0xff]
  %v4014 = vld [vmem:[%s3994 + $0x98] sm:$0xff]
  %4015 = vrot.lane.b32.xlu0 %v2898, 125
  %v4016 = vpop.permute.xlu0 %4015
  %4017 = vrot.lane.b32.xlu0 %v2903, 125
  %v4018 = vpop.permute.xlu0 %4017
  %4019 = vrot.lane.b32.xlu0 %v2908, 125
  %v4020 = vpop.permute.xlu0 %4019
  %4021 = vrot.lane.b32.xlu0 %v2913, 125
  %v4022 = vpop.permute.xlu0 %4021
  %4023 = vrot.lane.b32.xlu0 %v2918, 125
  %v4024 = vpop.permute.xlu0 %4023
  %4025 = vrot.lane.b32.xlu0 %v2923, 125
  %v4026 = vpop.permute.xlu0 %4025
  %4027 = vrot.lane.b32.xlu0 %v2928, 125
  %v4028 = vpop.permute.xlu0 %4027
  %4029 = vrot.lane.b32.xlu0 %v2933, 125
  %v4030 = vpop.permute.xlu0 %4029
  %4031 = vrot.lane.b32.xlu0 %v2938, 125
  %v4032 = vpop.permute.xlu0 %4031
  %4033 = vrot.lane.b32.xlu0 %v2943, 125
  %v4034 = vpop.permute.xlu0 %4033
  %4035 = vrot.lane.b32.xlu0 %v2948, 125
  %v4036 = vpop.permute.xlu0 %4035
  %4037 = vrot.lane.b32.xlu0 %v2953, 125
  %v4038 = vpop.permute.xlu0 %4037
  %4039 = vrot.lane.b32.xlu0 %v2958, 125
  %v4040 = vpop.permute.xlu0 %4039
  %4041 = vrot.lane.b32.xlu0 %v2963, 125
  %v4042 = vpop.permute.xlu0 %4041
  %4043 = vrot.lane.b32.xlu0 %v2968, 125
  %v4044 = vpop.permute.xlu0 %4043
  %v4061 = vsel %vm3011, %v3995, 0
  %v4064 = vsel %vm3011, %v3996, 0
  %v4067 = vsel %vm3011, %v3997, 0
  %v4070 = vsel %vm3011, %v3998, 0
  %v4073 = vsel %vm3011, %v3999, 0
  %v4076 = vsel %vm3011, %v4000, 0
  %v4079 = vsel %vm3011, %v4001, 0
  %v4082 = vsel %vm3011, %v4002, 0
  %v4085 = vsel %vm3011, %v4003, 0
  %v4088 = vsel %vm3011, %v4004, 0
  %v4091 = vsel %vm3011, %v4005, 0
  %v4094 = vsel %vm3011, %v4006, 0
  %v4097 = vsel %vm3011, %v4007, 0
  %v4100 = vsel %vm3011, %v4008, 0
  %v4103 = vsel %vm3011, %v4009, 0
  %v4106 = vsel %vm3011, %v4010, 0
  %v4109 = vsel %vm3011, %v4011, 0
  %v4112 = vsel %vm3011, %v4012, 0
  %v4115 = vsel %vm3011, %v4013, 0
  %v4118 = vsel %vm3011, %v4014, 0
  %4120 = vmatprep.subr.mxu0 0.0
  %4121 = vmatpush1.msra.mxu0 %v4016
  %4122 = vmatprep.subr.mxu0 0.0
  %4123 = vmatpush1.msra.mxu0 %v4018
  %4124 = vmatprep.subr.mxu0 0.0
  %4125 = vmatpush1.msra.mxu0 %v4020
  %4126 = vmatprep.subr.mxu0 0.0
  %4127 = vmatpush1.msra.mxu0 %v4022
  %4128 = vmatprep.subr.mxu0 0.0
  %4129 = vmatpush1.msra.mxu0 %v4024
  %4130 = vmatprep.subr.mxu0 0.0
  %4131 = vmatpush1.msra.mxu0 %v4026
  %4132 = vmatprep.subr.mxu0 0.0
  %4133 = vmatpush1.msra.mxu0 %v4028
  %4134 = vmatprep.subr.mxu0 0.0
  %4135 = vmatpush1.msra.mxu0 %v4030
  %4136 = vmatprep.subr.mxu0 0.0
  %4137 = vmatpush1.msra.mxu0 %v4032
  %4138 = vmatprep.subr.mxu0 0.0
  %4139 = vmatpush1.msra.mxu0 %v4034
  %4140 = vmatprep.subr.mxu0 0.0
  %4141 = vmatpush1.msra.mxu0 %v4036
  %4142 = vmatprep.subr.mxu0 0.0
  %4143 = vmatpush1.msra.mxu0 %v4038
  %4144 = vmatprep.subr.mxu0 0.0
  %4145 = vmatpush1.msra.mxu0 %v4040
  %4146 = vmatprep.subr.mxu0 0.0
  %4147 = vmatpush1.msra.mxu0 %v4042
  %4148 = vmatprep.subr.mxu0 0.0
  %4149 = vmatpush1.msra.mxu0 %v4044
  %4150 = vmatprep.subr.mxu0 0.0
  %4151 = vmatpush1.msra.mxu0 0.0
  %4152 = vmatprep.subr.mxu0 0.0
  %4153 = vmatpush1.msra.mxu0 0.0
  %4154 = vmatprep.subr.mxu0 0.0
  %4155 = vmatpush1.msra.mxu0 0.0
  %4156 = vmatprep.subr.mxu0 0.0
  %4157 = vmatpush1.msra.mxu0 0.0
  %4158 = vmatprep.subr.mxu0 0.0
  %4159 = vmatpush1.msra.mxu0 0.0
  %4160 = vmatprep.subr.mxu0 0.0
  %4161 = vmatpush1.msra.mxu0 0.0
  %4162 = vmatprep.subr.mxu0 0.0
  %4163 = vmatpush1.msra.mxu0 0.0
  %4164 = vmatprep.subr.mxu0 0.0
  %4165 = vmatpush1.msra.mxu0 0.0
  %4166 = vmatprep.subr.mxu0 0.0
  %4167 = vmatpush1.msra.mxu0 0.0
  %4168 = vmatprep.subr.mxu0 0.0
  %4169 = vmatpush1.msra.mxu0 0.0
  %4170 = vmatprep.subr.mxu0 0.0
  %4171 = vmatpush1.msra.mxu0 0.0
  %4172 = vmatprep.subr.mxu0 0.0
  %4173 = vmatpush1.msra.mxu0 0.0
  %4174 = vmatprep.subr.mxu0 0.0
  %4175 = vmatpush1.msra.mxu0 0.0
  %4176 = vmatprep.subr.mxu0 0.0
  %4177 = vmatpush1.msra.mxu0 0.0
  %4178 = vmatprep.subr.mxu0 0.0
  %4179 = vmatpush1.msra.mxu0 0.0
  %4180 = vmatprep.subr.mxu0 0.0
  %4181 = vmatpush1.msra.mxu0 0.0
  %4182 = vmatprep.subr.mxu0 0.0
  %4183 = vmatpush1.msra.mxu0 0.0
  %4184 = vmatprep.mubr.f32.mxu0 0.0
  %4185 = vmatmul.mubr.f32.gmra.mrb[0].mxu0 %v4061
  %v4186 = vpop.f32.mrb[0].mxu0
  %v4187 = vadd.f32 0.0, %v4186
  %v4188 = vpop.f32.mrb[0].mxu0
  %4189 = vmatprep.mubr.f32.mxu0 0.0
  %4190 = vmatmul.mubr.f32.gmra.mrb[0].mxu0 %v4064
  %v4191 = vpop.f32.mrb[0].mxu0
  %v4192 = vadd.f32 0.0, %v4191
  %v4193 = vpop.f32.mrb[0].mxu0
  %4194 = vmatprep.mubr.f32.mxu0 0.0
  %4195 = vmatmul.mubr.f32.gmra.mrb[0].mxu0 %v4067
  %v4196 = vpop.f32.mrb[0].mxu0
  %v4197 = vadd.f32 0.0, %v4196
  %v4198 = vpop.f32.mrb[0].mxu0
  %4199 = vmatprep.mubr.f32.mxu0 0.0
  %4200 = vmatmul.mubr.f32.gmra.mrb[0].mxu0 %v4070
  %v4201 = vpop.f32.mrb[0].mxu0
  %v4202 = vadd.f32 0.0, %v4201
  %v4203 = vpop.f32.mrb[0].mxu0
  %4204 = vmatprep.mubr.f32.mxu0 0.0
  %4205 = vmatmul.mubr.f32.gmra.mrb[0].mxu0 %v4073
  %v4206 = vpop.f32.mrb[0].mxu0
  %v4207 = vadd.f32 0.0, %v4206
  %v4208 = vpop.f32.mrb[0].mxu0
  %4209 = vmatprep.mubr.f32.mxu0 0.0
  %4210 = vmatmul.mubr.f32.gmra.mrb[0].mxu0 %v4076
  %v4211 = vpop.f32.mrb[0].mxu0
  %v4212 = vadd.f32 0.0, %v4211
  %v4213 = vpop.f32.mrb[0].mxu0
  %4214 = vmatprep.mubr.f32.mxu0 0.0
  %4215 = vmatmul.mubr.f32.gmra.mrb[0].mxu0 %v4079
  %v4216 = vpop.f32.mrb[0].mxu0
  %v4217 = vadd.f32 0.0, %v4216
  %v4218 = vpop.f32.mrb[0].mxu0
  %4219 = vmatprep.mubr.f32.mxu0 0.0
  %4220 = vmatmul.mubr.f32.gmra.mrb[0].mxu0 %v4082
  %v4221 = vpop.f32.mrb[0].mxu0
  %v4222 = vadd.f32 0.0, %v4221
  %v4223 = vpop.f32.mrb[0].mxu0
  %4224 = vmatprep.mubr.f32.mxu0 0.0
  %4225 = vmatmul.mubr.f32.gmra.mrb[0].mxu0 %v4085
  %v4226 = vpop.f32.mrb[0].mxu0
  %v4227 = vadd.f32 0.0, %v4226
  %v4228 = vpop.f32.mrb[0].mxu0
  %4229 = vmatprep.mubr.f32.mxu0 0.0
  %4230 = vmatmul.mubr.f32.gmra.mrb[0].mxu0 %v4088
  %v4231 = vpop.f32.mrb[0].mxu0
  %v4232 = vadd.f32 0.0, %v4231
  %v4233 = vpop.f32.mrb[0].mxu0
  %4234 = vmatprep.mubr.f32.mxu0 0.0
  %4235 = vmatmul.mubr.f32.gmra.mrb[0].mxu0 %v4091
  %v4236 = vpop.f32.mrb[0].mxu0
  %v4237 = vadd.f32 0.0, %v4236
  %v4238 = vpop.f32.mrb[0].mxu0
  %4239 = vmatprep.mubr.f32.mxu0 0.0
  %4240 = vmatmul.mubr.f32.gmra.mrb[0].mxu0 %v4094
  %v4241 = vpop.f32.mrb[0].mxu0
  %v4242 = vadd.f32 0.0, %v4241
  %v4243 = vpop.f32.mrb[0].mxu0
  %4244 = vmatprep.mubr.f32.mxu0 0.0
  %4245 = vmatmul.mubr.f32.gmra.mrb[0].mxu0 %v4097
  %v4246 = vpop.f32.mrb[0].mxu0
  %v4247 = vadd.f32 0.0, %v4246
  %v4248 = vpop.f32.mrb[0].mxu0
  %4249 = vmatprep.mubr.f32.mxu0 0.0
  %4250 = vmatmul.mubr.f32.gmra.mrb[0].mxu0 %v4100
  %v4251 = vpop.f32.mrb[0].mxu0
  %v4252 = vadd.f32 0.0, %v4251
  %v4253 = vpop.f32.mrb[0].mxu0
  %4254 = vmatprep.mubr.f32.mxu0 0.0
  %4255 = vmatmul.mubr.f32.gmra.mrb[0].mxu0 %v4103
  %v4256 = vpop.f32.mrb[0].mxu0
  %v4257 = vadd.f32 0.0, %v4256
  %v4258 = vpop.f32.mrb[0].mxu0
  %4259 = vmatprep.mubr.f32.mxu0 0.0
  %4260 = vmatmul.mubr.f32.gmra.mrb[0].mxu0 %v4106
  %v4261 = vpop.f32.mrb[0].mxu0
  %v4262 = vadd.f32 0.0, %v4261
  %v4263 = vpop.f32.mrb[0].mxu0
  %4264 = vmatprep.mubr.f32.mxu0 0.0
  %4265 = vmatmul.mubr.f32.gmra.mrb[0].mxu0 %v4109
  %v4266 = vpop.f32.mrb[0].mxu0
  %v4267 = vadd.f32 0.0, %v4266
  %v4268 = vpop.f32.mrb[0].mxu0
  %4269 = vmatprep.mubr.f32.mxu0 0.0
  %4270 = vmatmul.mubr.f32.gmra.mrb[0].mxu0 %v4112
  %v4271 = vpop.f32.mrb[0].mxu0
  %v4272 = vadd.f32 0.0, %v4271
  %v4273 = vpop.f32.mrb[0].mxu0
  %4274 = vmatprep.mubr.f32.mxu0 0.0
  %4275 = vmatmul.mubr.f32.gmra.mrb[0].mxu0 %v4115
  %v4276 = vpop.f32.mrb[0].mxu0
  %v4277 = vadd.f32 0.0, %v4276
  %v4278 = vpop.f32.mrb[0].mxu0
  %4279 = vmatprep.mubr.f32.mxu0 0.0
  %4280 = vmatmul.mubr.f32.gmra.mrb[0].mxu0 %v4118
  %v4281 = vpop.f32.mrb[0].mxu0
  %v4282 = vadd.f32 0.0, %v4281
  %v4283 = vpop.f32.mrb[0].mxu0
  %4284 = vdwg.mxu0
  %v4285 = vadd.f32 %v3974, %v4187
  %v4286 = vadd.f32 %v3975, %v4192
  %v4287 = vadd.f32 %v3976, %v4197
  %v4288 = vadd.f32 %v3977, %v4202
  %v4289 = vadd.f32 %v3978, %v4207
  %v4290 = vadd.f32 %v3979, %v4212
  %v4291 = vadd.f32 %v3980, %v4217
  %v4292 = vadd.f32 %v3981, %v4222
  %v4293 = vadd.f32 %v3982, %v4227
  %v4294 = vadd.f32 %v3983, %v4232
  %v4295 = vadd.f32 %v3984, %v4237
  %v4296 = vadd.f32 %v3985, %v4242
  %v4297 = vadd.f32 %v3986, %v4247
  %v4298 = vadd.f32 %v3987, %v4252
  %v4299 = vadd.f32 %v3988, %v4257
  %v4300 = vadd.f32 %v3989, %v4262
  %v4301 = vadd.f32 %v3990, %v4267
  %v4302 = vadd.f32 %v3991, %v4272
  %v4303 = vadd.f32 %v3992, %v4277
  %v4304 = vadd.f32 %v3993, %v4282
  %s4305 = scalar_lea.vmem %s5, 640
  %v4306 = vld [vmem:[%s4305] sm:$0xff]
  %v4307 = vld [vmem:[%s4305 + $0x8] sm:$0xff]
  %v4308 = vld [vmem:[%s4305 + $0x10] sm:$0xff]
  %v4309 = vld [vmem:[%s4305 + $0x18] sm:$0xff]
  %v4310 = vld [vmem:[%s4305 + $0x20] sm:$0xff]
  %v4311 = vld [vmem:[%s4305 + $0x28] sm:$0xff]
  %v4312 = vld [vmem:[%s4305 + $0x30] sm:$0xff]
  %v4313 = vld [vmem:[%s4305 + $0x38] sm:$0xff]
  %v4314 = vld [vmem:[%s4305 + $0x40] sm:$0xff]
  %v4315 = vld [vmem:[%s4305 + $0x48] sm:$0xff]
  %v4316 = vld [vmem:[%s4305 + $0x50] sm:$0xff]
  %v4317 = vld [vmem:[%s4305 + $0x58] sm:$0xff]
  %v4318 = vld [vmem:[%s4305 + $0x60] sm:$0xff]
  %v4319 = vld [vmem:[%s4305 + $0x68] sm:$0xff]
  %v4320 = vld [vmem:[%s4305 + $0x70] sm:$0xff]
  %v4321 = vld [vmem:[%s4305 + $0x78] sm:$0xff]
  %v4322 = vld [vmem:[%s4305 + $0x80] sm:$0xff]
  %v4323 = vld [vmem:[%s4305 + $0x88] sm:$0xff]
  %v4324 = vld [vmem:[%s4305 + $0x90] sm:$0xff]
  %v4325 = vld [vmem:[%s4305 + $0x98] sm:$0xff]
  %4326 = vrot.lane.b32.xlu0 %v2898, 124
  %v4327 = vpop.permute.xlu0 %4326
  %4328 = vrot.lane.b32.xlu0 %v2903, 124
  %v4329 = vpop.permute.xlu0 %4328
  %4330 = vrot.lane.b32.xlu0 %v2908, 124
  %v4331 = vpop.permute.xlu0 %4330
  %4332 = vrot.lane.b32.xlu0 %v2913, 124
  %v4333 = vpop.permute.xlu0 %4332
  %4334 = vrot.lane.b32.xlu0 %v2918, 124
  %v4335 = vpop.permute.xlu0 %4334
  %4336 = vrot.lane.b32.xlu0 %v2923, 124
  %v4337 = vpop.permute.xlu0 %4336
  %4338 = vrot.lane.b32.xlu0 %v2928, 124
  %v4339 = vpop.permute.xlu0 %4338
  %4340 = vrot.lane.b32.xlu0 %v2933, 124
  %v4341 = vpop.permute.xlu0 %4340
  %4342 = vrot.lane.b32.xlu0 %v2938, 124
  %v4343 = vpop.permute.xlu0 %4342
  %4344 = vrot.lane.b32.xlu0 %v2943, 124
  %v4345 = vpop.permute.xlu0 %4344
  %4346 = vrot.lane.b32.xlu0 %v2948, 124
  %v4347 = vpop.permute.xlu0 %4346
  %4348 = vrot.lane.b32.xlu0 %v2953, 124
  %v4349 = vpop.permute.xlu0 %4348
  %4350 = vrot.lane.b32.xlu0 %v2958, 124
  %v4351 = vpop.permute.xlu0 %4350
  %4352 = vrot.lane.b32.xlu0 %v2963, 124
  %v4353 = vpop.permute.xlu0 %4352
  %4354 = vrot.lane.b32.xlu0 %v2968, 124
  %v4355 = vpop.permute.xlu0 %4354
  %v4372 = vsel %vm3011, %v4306, 0
  %v4375 = vsel %vm3011, %v4307, 0
  %v4378 = vsel %vm3011, %v4308, 0
  %v4381 = vsel %vm3011, %v4309, 0
  %v4384 = vsel %vm3011, %v4310, 0
  %v4387 = vsel %vm3011, %v4311, 0
  %v4390 = vsel %vm3011, %v4312, 0
  %v4393 = vsel %vm3011, %v4313, 0
  %v4396 = vsel %vm3011, %v4314, 0
  %v4399 = vsel %vm3011, %v4315, 0
  %v4402 = vsel %vm3011, %v4316, 0
  %v4405 = vsel %vm3011, %v4317, 0
  %v4408 = vsel %vm3011, %v4318, 0
  %v4411 = vsel %vm3011, %v4319, 0
  %v4414 = vsel %vm3011, %v4320, 0
  %v4417 = vsel %vm3011, %v4321, 0
  %v4420 = vsel %vm3011, %v4322, 0
  %v4423 = vsel %vm3011, %v4323, 0
  %v4426 = vsel %vm3011, %v4324, 0
  %v4429 = vsel %vm3011, %v4325, 0
  %4431 = vmatprep.subr.mxu0 0.0
  %4432 = vmatpush1.msra.mxu0 %v4327
  %4433 = vmatprep.subr.mxu0 0.0
  %4434 = vmatpush1.msra.mxu0 %v4329
  %4435 = vmatprep.subr.mxu0 0.0
  %4436 = vmatpush1.msra.mxu0 %v4331
  %4437 = vmatprep.subr.mxu0 0.0
  %4438 = vmatpush1.msra.mxu0 %v4333
  %4439 = vmatprep.subr.mxu0 0.0
  %4440 = vmatpush1.msra.mxu0 %v4335
  %4441 = vmatprep.subr.mxu0 0.0
  %4442 = vmatpush1.msra.mxu0 %v4337
  %4443 = vmatprep.subr.mxu0 0.0
  %4444 = vmatpush1.msra.mxu0 %v4339
  %4445 = vmatprep.subr.mxu0 0.0
  %4446 = vmatpush1.msra.mxu0 %v4341
  %4447 = vmatprep.subr.mxu0 0.0
  %4448 = vmatpush1.msra.mxu0 %v4343
  %4449 = vmatprep.subr.mxu0 0.0
  %4450 = vmatpush1.msra.mxu0 %v4345
  %4451 = vmatprep.subr.mxu0 0.0
  %4452 = vmatpush1.msra.mxu0 %v4347
  %4453 = vmatprep.subr.mxu0 0.0
  %4454 = vmatpush1.msra.mxu0 %v4349
  %4455 = vmatprep.subr.mxu0 0.0
  %4456 = vmatpush1.msra.mxu0 %v4351
  %4457 = vmatprep.subr.mxu0 0.0
  %4458 = vmatpush1.msra.mxu0 %v4353
  %4459 = vmatprep.subr.mxu0 0.0
  %4460 = vmatpush1.msra.mxu0 %v4355
  %4461 = vmatprep.subr.mxu0 0.0
  %4462 = vmatpush1.msra.mxu0 0.0
  %4463 = vmatprep.subr.mxu0 0.0
  %4464 = vmatpush1.msra.mxu0 0.0
  %4465 = vmatprep.subr.mxu0 0.0
  %4466 = vmatpush1.msra.mxu0 0.0
  %4467 = vmatprep.subr.mxu0 0.0
  %4468 = vmatpush1.msra.mxu0 0.0
  %4469 = vmatprep.subr.mxu0 0.0
  %4470 = vmatpush1.msra.mxu0 0.0
  %4471 = vmatprep.subr.mxu0 0.0
  %4472 = vmatpush1.msra.mxu0 0.0
  %4473 = vmatprep.subr.mxu0 0.0
  %4474 = vmatpush1.msra.mxu0 0.0
  %4475 = vmatprep.subr.mxu0 0.0
  %4476 = vmatpush1.msra.mxu0 0.0
  %4477 = vmatprep.subr.mxu0 0.0
  %4478 = vmatpush1.msra.mxu0 0.0
  %4479 = vmatprep.subr.mxu0 0.0
  %4480 = vmatpush1.msra.mxu0 0.0
  %4481 = vmatprep.subr.mxu0 0.0
  %4482 = vmatpush1.msra.mxu0 0.0
  %4483 = vmatprep.subr.mxu0 0.0
  %4484 = vmatpush1.msra.mxu0 0.0
  %4485 = vmatprep.subr.mxu0 0.0
  %4486 = vmatpush1.msra.mxu0 0.0
  %4487 = vmatprep.subr.mxu0 0.0
  %4488 = vmatpush1.msra.mxu0 0.0
  %4489 = vmatprep.subr.mxu0 0.0
  %4490 = vmatpush1.msra.mxu0 0.0
  %4491 = vmatprep.subr.mxu0 0.0
  %4492 = vmatpush1.msra.mxu0 0.0
  %4493 = vmatprep.subr.mxu0 0.0
  %4494 = vmatpush1.msra.mxu0 0.0
  %4495 = vmatprep.mubr.f32.mxu0 0.0
  %4496 = vmatmul.mubr.f32.gmra.mrb[0].mxu0 %v4372
  %v4497 = vpop.f32.mrb[0].mxu0
  %v4498 = vadd.f32 0.0, %v4497
  %v4499 = vpop.f32.mrb[0].mxu0
  %4500 = vmatprep.mubr.f32.mxu0 0.0
  %4501 = vmatmul.mubr.f32.gmra.mrb[0].mxu0 %v4375
  %v4502 = vpop.f32.mrb[0].mxu0
  %v4503 = vadd.f32 0.0, %v4502
  %v4504 = vpop.f32.mrb[0].mxu0
  %4505 = vmatprep.mubr.f32.mxu0 0.0
  %4506 = vmatmul.mubr.f32.gmra.mrb[0].mxu0 %v4378
  %v4507 = vpop.f32.mrb[0].mxu0
  %v4508 = vadd.f32 0.0, %v4507
  %v4509 = vpop.f32.mrb[0].mxu0
  %4510 = vmatprep.mubr.f32.mxu0 0.0
  %4511 = vmatmul.mubr.f32.gmra.mrb[0].mxu0 %v4381
  %v4512 = vpop.f32.mrb[0].mxu0
  %v4513 = vadd.f32 0.0, %v4512
  %v4514 = vpop.f32.mrb[0].mxu0
  %4515 = vmatprep.mubr.f32.mxu0 0.0
  %4516 = vmatmul.mubr.f32.gmra.mrb[0].mxu0 %v4384
  %v4517 = vpop.f32.mrb[0].mxu0
  %v4518 = vadd.f32 0.0, %v4517
  %v4519 = vpop.f32.mrb[0].mxu0
  %4520 = vmatprep.mubr.f32.mxu0 0.0
  %4521 = vmatmul.mubr.f32.gmra.mrb[0].mxu0 %v4387
  %v4522 = vpop.f32.mrb[0].mxu0
  %v4523 = vadd.f32 0.0, %v4522
  %v4524 = vpop.f32.mrb[0].mxu0
  %4525 = vmatprep.mubr.f32.mxu0 0.0
  %4526 = vmatmul.mubr.f32.gmra.mrb[0].mxu0 %v4390
  %v4527 = vpop.f32.mrb[0].mxu0
  %v4528 = vadd.f32 0.0, %v4527
  %v4529 = vpop.f32.mrb[0].mxu0
  %4530 = vmatprep.mubr.f32.mxu0 0.0
  %4531 = vmatmul.mubr.f32.gmra.mrb[0].mxu0 %v4393
  %v4532 = vpop.f32.mrb[0].mxu0
  %v4533 = vadd.f32 0.0, %v4532
  %v4534 = vpop.f32.mrb[0].mxu0
  %4535 = vmatprep.mubr.f32.mxu0 0.0
  %4536 = vmatmul.mubr.f32.gmra.mrb[0].mxu0 %v4396
  %v4537 = vpop.f32.mrb[0].mxu0
  %v4538 = vadd.f32 0.0, %v4537
  %v4539 = vpop.f32.mrb[0].mxu0
  %4540 = vmatprep.mubr.f32.mxu0 0.0
  %4541 = vmatmul.mubr.f32.gmra.mrb[0].mxu0 %v4399
  %v4542 = vpop.f32.mrb[0].mxu0
  %v4543 = vadd.f32 0.0, %v4542
  %v4544 = vpop.f32.mrb[0].mxu0
  %4545 = vmatprep.mubr.f32.mxu0 0.0
  %4546 = vmatmul.mubr.f32.gmra.mrb[0].mxu0 %v4402
  %v4547 = vpop.f32.mrb[0].mxu0
  %v4548 = vadd.f32 0.0, %v4547
  %v4549 = vpop.f32.mrb[0].mxu0
  %4550 = vmatprep.mubr.f32.mxu0 0.0
  %4551 = vmatmul.mubr.f32.gmra.mrb[0].mxu0 %v4405
  %v4552 = vpop.f32.mrb[0].mxu0
  %v4553 = vadd.f32 0.0, %v4552
  %v4554 = vpop.f32.mrb[0].mxu0
  %4555 = vmatprep.mubr.f32.mxu0 0.0
  %4556 = vmatmul.mubr.f32.gmra.mrb[0].mxu0 %v4408
  %v4557 = vpop.f32.mrb[0].mxu0
  %v4558 = vadd.f32 0.0, %v4557
  %v4559 = vpop.f32.mrb[0].mxu0
  %4560 = vmatprep.mubr.f32.mxu0 0.0
  %4561 = vmatmul.mubr.f32.gmra.mrb[0].mxu0 %v4411
  %v4562 = vpop.f32.mrb[0].mxu0
  %v4563 = vadd.f32 0.0, %v4562
  %v4564 = vpop.f32.mrb[0].mxu0
  %4565 = vmatprep.mubr.f32.mxu0 0.0
  %4566 = vmatmul.mubr.f32.gmra.mrb[0].mxu0 %v4414
  %v4567 = vpop.f32.mrb[0].mxu0
  %v4568 = vadd.f32 0.0, %v4567
  %v4569 = vpop.f32.mrb[0].mxu0
  %4570 = vmatprep.mubr.f32.mxu0 0.0
  %4571 = vmatmul.mubr.f32.gmra.mrb[0].mxu0 %v4417
  %v4572 = vpop.f32.mrb[0].mxu0
  %v4573 = vadd.f32 0.0, %v4572
  %v4574 = vpop.f32.mrb[0].mxu0
  %4575 = vmatprep.mubr.f32.mxu0 0.0
  %4576 = vmatmul.mubr.f32.gmra.mrb[0].mxu0 %v4420
  %v4577 = vpop.f32.mrb[0].mxu0
  %v4578 = vadd.f32 0.0, %v4577
  %v4579 = vpop.f32.mrb[0].mxu0
  %4580 = vmatprep.mubr.f32.mxu0 0.0
  %4581 = vmatmul.mubr.f32.gmra.mrb[0].mxu0 %v4423
  %v4582 = vpop.f32.mrb[0].mxu0
  %v4583 = vadd.f32 0.0, %v4582
  %v4584 = vpop.f32.mrb[0].mxu0
  %4585 = vmatprep.mubr.f32.mxu0 0.0
  %4586 = vmatmul.mubr.f32.gmra.mrb[0].mxu0 %v4426
  %v4587 = vpop.f32.mrb[0].mxu0
  %v4588 = vadd.f32 0.0, %v4587
  %v4589 = vpop.f32.mrb[0].mxu0
  %4590 = vmatprep.mubr.f32.mxu0 0.0
  %4591 = vmatmul.mubr.f32.gmra.mrb[0].mxu0 %v4429
  %v4592 = vpop.f32.mrb[0].mxu0
  %v4593 = vadd.f32 0.0, %v4592
  %v4594 = vpop.f32.mrb[0].mxu0
  %4595 = vdwg.mxu0
  %v4596 = vadd.f32 %v4285, %v4498
  %v4597 = vadd.f32 %v4286, %v4503
  %v4598 = vadd.f32 %v4287, %v4508
  %v4599 = vadd.f32 %v4288, %v4513
  %v4600 = vadd.f32 %v4289, %v4518
  %v4601 = vadd.f32 %v4290, %v4523
  %v4602 = vadd.f32 %v4291, %v4528
  %v4603 = vadd.f32 %v4292, %v4533
  %v4604 = vadd.f32 %v4293, %v4538
  %v4605 = vadd.f32 %v4294, %v4543
  %v4606 = vadd.f32 %v4295, %v4548
  %v4607 = vadd.f32 %v4296, %v4553
  %v4608 = vadd.f32 %v4297, %v4558
  %v4609 = vadd.f32 %v4298, %v4563
  %v4610 = vadd.f32 %v4299, %v4568
  %v4611 = vadd.f32 %v4300, %v4573
  %v4612 = vadd.f32 %v4301, %v4578
  %v4613 = vadd.f32 %v4302, %v4583
  %v4614 = vadd.f32 %v4303, %v4588
  %v4615 = vadd.f32 %v4304, %v4593
  %v4616 = vmax.f32 %v4596, 0.0
  %v4617 = vmax.f32 %v4597, 0.0
  %v4618 = vmax.f32 %v4598, 0.0
  %v4619 = vmax.f32 %v4599, 0.0
  %v4620 = vmax.f32 %v4600, 0.0
  %v4621 = vmax.f32 %v4601, 0.0
  %v4622 = vmax.f32 %v4602, 0.0
  %v4623 = vmax.f32 %v4603, 0.0
  %v4624 = vmax.f32 %v4604, 0.0
  %v4625 = vmax.f32 %v4605, 0.0
  %v4626 = vmax.f32 %v4606, 0.0
  %v4627 = vmax.f32 %v4607, 0.0
  %v4628 = vmax.f32 %v4608, 0.0
  %v4629 = vmax.f32 %v4609, 0.0
  %v4630 = vmax.f32 %v4610, 0.0
  %v4631 = vmax.f32 %v4611, 0.0
  %v4632 = vmax.f32 %v4612, 0.0
  %v4633 = vmax.f32 %v4613, 0.0
  %v4634 = vmax.f32 %v4614, 0.0
  %v4635 = vmax.f32 %v4615, 0.0
  %4656 = vrot.lane.b32.xlu0 %v4616, 127
  %v4657 = vpop.permute.xlu0 %4656
  %4658 = vrot.lane.b32.xlu0 %v4617, 127
  %v4659 = vpop.permute.xlu0 %4658
  %4660 = vrot.lane.b32.xlu0 %v4618, 127
  %v4661 = vpop.permute.xlu0 %4660
  %4662 = vrot.lane.b32.xlu0 %v4619, 127
  %v4663 = vpop.permute.xlu0 %4662
  %4664 = vrot.lane.b32.xlu0 %v4620, 127
  %v4665 = vpop.permute.xlu0 %4664
  %4666 = vrot.lane.b32.xlu0 %v4621, 127
  %v4667 = vpop.permute.xlu0 %4666
  %4668 = vrot.lane.b32.xlu0 %v4622, 127
  %v4669 = vpop.permute.xlu0 %4668
  %4670 = vrot.lane.b32.xlu0 %v4623, 127
  %v4671 = vpop.permute.xlu0 %4670
  %4672 = vrot.lane.b32.xlu0 %v4624, 127
  %v4673 = vpop.permute.xlu0 %4672
  %4674 = vrot.lane.b32.xlu0 %v4625, 127
  %v4675 = vpop.permute.xlu0 %4674
  %4676 = vrot.lane.b32.xlu0 %v4626, 127
  %v4677 = vpop.permute.xlu0 %4676
  %4678 = vrot.lane.b32.xlu0 %v4627, 127
  %v4679 = vpop.permute.xlu0 %4678
  %4680 = vrot.lane.b32.xlu0 %v4628, 127
  %v4681 = vpop.permute.xlu0 %4680
  %4682 = vrot.lane.b32.xlu0 %v4629, 127
  %v4683 = vpop.permute.xlu0 %4682
  %4684 = vrot.lane.b32.xlu0 %v4630, 127
  %v4685 = vpop.permute.xlu0 %4684
  %4686 = vrot.lane.b32.xlu0 %v4631, 127
  %v4687 = vpop.permute.xlu0 %4686
  %4688 = vrot.lane.b32.xlu0 %v4632, 127
  %v4689 = vpop.permute.xlu0 %4688
  %4690 = vrot.lane.b32.xlu0 %v4633, 127
  %v4691 = vpop.permute.xlu0 %4690
  %4692 = vrot.lane.b32.xlu0 %v4634, 127
  %v4693 = vpop.permute.xlu0 %4692
  %4694 = vrot.lane.b32.xlu0 %v4635, 127
  %v4695 = vpop.permute.xlu0 %4694
  %v4716 = vmax.f32 %v4616, %v4657
  %v4717 = vmax.f32 %v4617, %v4659
  %v4718 = vmax.f32 %v4618, %v4661
  %v4719 = vmax.f32 %v4619, %v4663
  %v4720 = vmax.f32 %v4620, %v4665
  %v4721 = vmax.f32 %v4621, %v4667
  %v4722 = vmax.f32 %v4622, %v4669
  %v4723 = vmax.f32 %v4623, %v4671
  %v4724 = vmax.f32 %v4624, %v4673
  %v4725 = vmax.f32 %v4625, %v4675
  %v4726 = vmax.f32 %v4626, %v4677
  %v4727 = vmax.f32 %v4627, %v4679
  %v4728 = vmax.f32 %v4628, %v4681
  %v4729 = vmax.f32 %v4629, %v4683
  %v4730 = vmax.f32 %v4630, %v4685
  %v4731 = vmax.f32 %v4631, %v4687
  %v4732 = vmax.f32 %v4632, %v4689
  %v4733 = vmax.f32 %v4633, %v4691
  %v4734 = vmax.f32 %v4634, %v4693
  %v4735 = vmax.f32 %v4635, %v4695
  %v4736 = vld [vmem:[%s7] sm:$0x7f]
  %vm4737 = vcmask 56320
  %v4739 = vsel %vm4737, %v4716, 0
  %v4742 = vsel %vm4737, %v4717, 0
  %v4745 = vsel %vm4737, %v4718, 0
  %v4748 = vsel %vm4737, %v4719, 0
  %v4751 = vsel %vm4737, %v4720, 0
  %v4754 = vsel %vm4737, %v4721, 0
  %v4757 = vsel %vm4737, %v4722, 0
  %v4760 = vsel %vm4737, %v4723, 0
  %v4763 = vsel %vm4737, %v4724, 0
  %v4766 = vsel %vm4737, %v4725, 0
  %v4769 = vsel %vm4737, %v4726, 0
  %v4772 = vsel %vm4737, %v4727, 0
  %v4775 = vsel %vm4737, %v4728, 0
  %v4778 = vsel %vm4737, %v4729, 0
  %v4781 = vsel %vm4737, %v4730, 0
  %v4784 = vsel %vm4737, %v4731, 0
  %v4787 = vsel %vm4737, %v4732, 0
  %v4790 = vsel %vm4737, %v4733, 0
  %v4793 = vsel %vm4737, %v4734, 0
  %v4796 = vsel %vm4737, %v4735, 0
  %v4799 = vsel %vm2384, %v4736, 0
  %4801 = vmatprep.subr.mxu0 0.0
  %4802 = vmatpush1.msra.mxu0 %v4799
  %4803 = vmatprep.subr.mxu0 0.0
  %4804 = vmatpush1.msra.mxu0 0.0
  %4805 = vmatprep.subr.mxu0 0.0
  %4806 = vmatpush1.msra.mxu0 0.0
  %4807 = vmatprep.subr.mxu0 0.0
  %4808 = vmatpush1.msra.mxu0 0.0
  %4809 = vmatprep.subr.mxu0 0.0
  %4810 = vmatpush1.msra.mxu0 0.0
  %4811 = vmatprep.subr.mxu0 0.0
  %4812 = vmatpush1.msra.mxu0 0.0
  %4813 = vmatprep.subr.mxu0 0.0
  %4814 = vmatpush1.msra.mxu0 0.0
  %4815 = vmatprep.subr.mxu0 0.0
  %4816 = vmatpush1.msra.mxu0 0.0
  %4817 = vmatprep.subr.mxu0 0.0
  %4818 = vmatpush1.msra.mxu0 0.0
  %4819 = vmatprep.subr.mxu0 0.0
  %4820 = vmatpush1.msra.mxu0 0.0
  %4821 = vmatprep.subr.mxu0 0.0
  %4822 = vmatpush1.msra.mxu0 0.0
  %4823 = vmatprep.subr.mxu0 0.0
  %4824 = vmatpush1.msra.mxu0 0.0
  %4825 = vmatprep.subr.mxu0 0.0
  %4826 = vmatpush1.msra.mxu0 0.0
  %4827 = vmatprep.subr.mxu0 0.0
  %4828 = vmatpush1.msra.mxu0 0.0
  %4829 = vmatprep.subr.mxu0 0.0
  %4830 = vmatpush1.msra.mxu0 0.0
  %4831 = vmatprep.subr.mxu0 0.0
  %4832 = vmatpush1.msra.mxu0 0.0
  %4833 = vmatprep.subr.mxu0 0.0
  %4834 = vmatpush1.msra.mxu0 0.0
  %4835 = vmatprep.subr.mxu0 0.0
  %4836 = vmatpush1.msra.mxu0 0.0
  %4837 = vmatprep.subr.mxu0 0.0
  %4838 = vmatpush1.msra.mxu0 0.0
  %4839 = vmatprep.subr.mxu0 0.0
  %4840 = vmatpush1.msra.mxu0 0.0
  %4841 = vmatprep.subr.mxu0 0.0
  %4842 = vmatpush1.msra.mxu0 0.0
  %4843 = vmatprep.subr.mxu0 0.0
  %4844 = vmatpush1.msra.mxu0 0.0
  %4845 = vmatprep.subr.mxu0 0.0
  %4846 = vmatpush1.msra.mxu0 0.0
  %4847 = vmatprep.subr.mxu0 0.0
  %4848 = vmatpush1.msra.mxu0 0.0
  %4849 = vmatprep.subr.mxu0 0.0
  %4850 = vmatpush1.msra.mxu0 0.0
  %4851 = vmatprep.subr.mxu0 0.0
  %4852 = vmatpush1.msra.mxu0 0.0
  %4853 = vmatprep.subr.mxu0 0.0
  %4854 = vmatpush1.msra.mxu0 0.0
  %4855 = vmatprep.subr.mxu0 0.0
  %4856 = vmatpush1.msra.mxu0 0.0
  %4857 = vmatprep.subr.mxu0 0.0
  %4858 = vmatpush1.msra.mxu0 0.0
  %4859 = vmatprep.subr.mxu0 0.0
  %4860 = vmatpush1.msra.mxu0 0.0
  %4861 = vmatprep.subr.mxu0 0.0
  %4862 = vmatpush1.msra.mxu0 0.0
  %4863 = vmatprep.subr.mxu0 0.0
  %4864 = vmatpush1.msra.mxu0 0.0
  %4865 = vmatprep.mubr.f32.mxu0 0.0
  %4866 = vmatmul.mubr.f32.gmra.mrb[0].mxu0 %v4739
  %v4867 = vpop.f32.mrb[0].mxu0
  %v4868 = vadd.f32 0.0, %v4867
  %v4869 = vpop.f32.mrb[0].mxu0
  %4870 = vmatprep.mubr.f32.mxu0 0.0
  %4871 = vmatmul.mubr.f32.gmra.mrb[0].mxu0 %v4742
  %v4872 = vpop.f32.mrb[0].mxu0
  %v4873 = vadd.f32 0.0, %v4872
  %v4874 = vpop.f32.mrb[0].mxu0
  %4875 = vmatprep.mubr.f32.mxu0 0.0
  %4876 = vmatmul.mubr.f32.gmra.mrb[0].mxu0 %v4745
  %v4877 = vpop.f32.mrb[0].mxu0
  %v4878 = vadd.f32 0.0, %v4877
  %v4879 = vpop.f32.mrb[0].mxu0
  %4880 = vmatprep.mubr.f32.mxu0 0.0
  %4881 = vmatmul.mubr.f32.gmra.mrb[0].mxu0 %v4748
  %v4882 = vpop.f32.mrb[0].mxu0
  %v4883 = vadd.f32 0.0, %v4882
  %v4884 = vpop.f32.mrb[0].mxu0
  %4885 = vmatprep.mubr.f32.mxu0 0.0
  %4886 = vmatmul.mubr.f32.gmra.mrb[0].mxu0 %v4751
  %v4887 = vpop.f32.mrb[0].mxu0
  %v4888 = vadd.f32 0.0, %v4887
  %v4889 = vpop.f32.mrb[0].mxu0
  %4890 = vmatprep.mubr.f32.mxu0 0.0
  %4891 = vmatmul.mubr.f32.gmra.mrb[0].mxu0 %v4754
  %v4892 = vpop.f32.mrb[0].mxu0
  %v4893 = vadd.f32 0.0, %v4892
  %v4894 = vpop.f32.mrb[0].mxu0
  %4895 = vmatprep.mubr.f32.mxu0 0.0
  %4896 = vmatmul.mubr.f32.gmra.mrb[0].mxu0 %v4757
  %v4897 = vpop.f32.mrb[0].mxu0
  %v4898 = vadd.f32 0.0, %v4897
  %v4899 = vpop.f32.mrb[0].mxu0
  %4900 = vmatprep.mubr.f32.mxu0 0.0
  %4901 = vmatmul.mubr.f32.gmra.mrb[0].mxu0 %v4760
  %v4902 = vpop.f32.mrb[0].mxu0
  %v4903 = vadd.f32 0.0, %v4902
  %v4904 = vpop.f32.mrb[0].mxu0
  %4905 = vmatprep.mubr.f32.mxu0 0.0
  %4906 = vmatmul.mubr.f32.gmra.mrb[0].mxu0 %v4763
  %v4907 = vpop.f32.mrb[0].mxu0
  %v4908 = vadd.f32 0.0, %v4907
  %v4909 = vpop.f32.mrb[0].mxu0
  %4910 = vmatprep.mubr.f32.mxu0 0.0
  %4911 = vmatmul.mubr.f32.gmra.mrb[0].mxu0 %v4766
  %v4912 = vpop.f32.mrb[0].mxu0
  %v4913 = vadd.f32 0.0, %v4912
  %v4914 = vpop.f32.mrb[0].mxu0
  %4915 = vmatprep.mubr.f32.mxu0 0.0
  %4916 = vmatmul.mubr.f32.gmra.mrb[0].mxu0 %v4769
  %v4917 = vpop.f32.mrb[0].mxu0
  %v4918 = vadd.f32 0.0, %v4917
  %v4919 = vpop.f32.mrb[0].mxu0
  %4920 = vmatprep.mubr.f32.mxu0 0.0
  %4921 = vmatmul.mubr.f32.gmra.mrb[0].mxu0 %v4772
  %v4922 = vpop.f32.mrb[0].mxu0
  %v4923 = vadd.f32 0.0, %v4922
  %v4924 = vpop.f32.mrb[0].mxu0
  %4925 = vmatprep.mubr.f32.mxu0 0.0
  %4926 = vmatmul.mubr.f32.gmra.mrb[0].mxu0 %v4775
  %v4927 = vpop.f32.mrb[0].mxu0
  %v4928 = vadd.f32 0.0, %v4927
  %v4929 = vpop.f32.mrb[0].mxu0
  %4930 = vmatprep.mubr.f32.mxu0 0.0
  %4931 = vmatmul.mubr.f32.gmra.mrb[0].mxu0 %v4778
  %v4932 = vpop.f32.mrb[0].mxu0
  %v4933 = vadd.f32 0.0, %v4932
  %v4934 = vpop.f32.mrb[0].mxu0
  %4935 = vmatprep.mubr.f32.mxu0 0.0
  %4936 = vmatmul.mubr.f32.gmra.mrb[0].mxu0 %v4781
  %v4937 = vpop.f32.mrb[0].mxu0
  %v4938 = vadd.f32 0.0, %v4937
  %v4939 = vpop.f32.mrb[0].mxu0
  %4940 = vmatprep.mubr.f32.mxu0 0.0
  %4941 = vmatmul.mubr.f32.gmra.mrb[0].mxu0 %v4784
  %v4942 = vpop.f32.mrb[0].mxu0
  %v4943 = vadd.f32 0.0, %v4942
  %v4944 = vpop.f32.mrb[0].mxu0
  %4945 = vmatprep.mubr.f32.mxu0 0.0
  %4946 = vmatmul.mubr.f32.gmra.mrb[0].mxu0 %v4787
  %v4947 = vpop.f32.mrb[0].mxu0
  %v4948 = vadd.f32 0.0, %v4947
  %v4949 = vpop.f32.mrb[0].mxu0
  %4950 = vmatprep.mubr.f32.mxu0 0.0
  %4951 = vmatmul.mubr.f32.gmra.mrb[0].mxu0 %v4790
  %v4952 = vpop.f32.mrb[0].mxu0
  %v4953 = vadd.f32 0.0, %v4952
  %v4954 = vpop.f32.mrb[0].mxu0
  %4955 = vmatprep.mubr.f32.mxu0 0.0
  %4956 = vmatmul.mubr.f32.gmra.mrb[0].mxu0 %v4793
  %v4957 = vpop.f32.mrb[0].mxu0
  %v4958 = vadd.f32 0.0, %v4957
  %v4959 = vpop.f32.mrb[0].mxu0
  %4960 = vmatprep.mubr.f32.mxu0 0.0
  %4961 = vmatmul.mubr.f32.gmra.mrb[0].mxu0 %v4796
  %v4962 = vpop.f32.mrb[0].mxu0
  %v4963 = vadd.f32 0.0, %v4962
  %v4964 = vpop.f32.mrb[0].mxu0
  %4965 = vdwg.mxu0
  %v4986 = vrot.slane %v4868, 1
  %v4987 = vrot.slane %v4873, 1
  %v4988 = vsel %vm2384, %v4986, %v4987
  %v4989 = vrot.slane %v4878, 1
  %v4990 = vsel %vm2384, %v4987, %v4989
  %v4991 = vrot.slane %v4883, 1
  %v4992 = vsel %vm2384, %v4989, %v4991
  %v4993 = vrot.slane %v4888, 1
  %v4994 = vsel %vm2384, %v4991, %v4993
  %v4995 = vrot.slane %v4893, 1
  %v4996 = vsel %vm2384, %v4993, %v4995
  %v4997 = vrot.slane %v4898, 1
  %v4998 = vsel %vm2384, %v4995, %v4997
  %v4999 = vrot.slane %v4903, 1
  %v5000 = vsel %vm2384, %v4997, %v4999
  %v5001 = vrot.slane %v4908, 1
  %v5002 = vsel %vm2384, %v4999, %v5001
  %v5003 = vrot.slane %v4913, 1
  %v5004 = vsel %vm2384, %v5001, %v5003
  %v5005 = vrot.slane %v4918, 1
  %v5006 = vsel %vm2384, %v5003, %v5005
  %v5007 = vrot.slane %v4923, 1
  %v5008 = vsel %vm2384, %v5005, %v5007
  %v5009 = vrot.slane %v4928, 1
  %v5010 = vsel %vm2384, %v5007, %v5009
  %v5011 = vrot.slane %v4933, 1
  %v5012 = vsel %vm2384, %v5009, %v5011
  %v5013 = vrot.slane %v4938, 1
  %v5014 = vsel %vm2384, %v5011, %v5013
  %v5015 = vrot.slane %v4943, 1
  %v5016 = vsel %vm2384, %v5013, %v5015
  %v5017 = vrot.slane %v4948, 1
  %v5018 = vsel %vm2384, %v5015, %v5017
  %v5019 = vrot.slane %v4953, 1
  %v5020 = vsel %vm2384, %v5017, %v5019
  %v5021 = vrot.slane %v4958, 1
  %v5022 = vsel %vm2384, %v5019, %v5021
  %v5023 = vrot.slane %v4963, 1
  %v5024 = vsel %vm2384, %v5021, %v5023
  %v5045 = vmax.f32 %v4868, %v4988
  %v5046 = vmax.f32 %v4873, %v4990
  %v5047 = vmax.f32 %v4878, %v4992
  %v5048 = vmax.f32 %v4883, %v4994
  %v5049 = vmax.f32 %v4888, %v4996
  %v5050 = vmax.f32 %v4893, %v4998
  %v5051 = vmax.f32 %v4898, %v5000
  %v5052 = vmax.f32 %v4903, %v5002
  %v5053 = vmax.f32 %v4908, %v5004
  %v5054 = vmax.f32 %v4913, %v5006
  %v5055 = vmax.f32 %v4918, %v5008
  %v5056 = vmax.f32 %v4923, %v5010
  %v5057 = vmax.f32 %v4928, %v5012
  %v5058 = vmax.f32 %v4933, %v5014
  %v5059 = vmax.f32 %v4938, %v5016
  %v5060 = vmax.f32 %v4943, %v5018
  %v5061 = vmax.f32 %v4948, %v5020
  %v5062 = vmax.f32 %v4953, %v5022
  %v5063 = vmax.f32 %v4958, %v5024
  %v5064 = vmax.f32 %v4963, %v5023
  %v5065 = vld [vmem:[%s8] sm:$0xff]
  %v5066 = vld [vmem:[%s8 + $0x8] sm:$0xff]
  %v5067 = vld [vmem:[%s8 + $0x10] sm:$0xff]
  %v5068 = vld [vmem:[%s8 + $0x18] sm:$0xff]
  %v5069 = vld [vmem:[%s8 + $0x20] sm:$0xff]
  %v5070 = vld [vmem:[%s8 + $0x28] sm:$0xff]
  %v5071 = vld [vmem:[%s8 + $0x30] sm:$0xff]
  %v5072 = vld [vmem:[%s8 + $0x38] sm:$0xff]
  %v5073 = vld [vmem:[%s8 + $0x40] sm:$0xff]
  %v5074 = vld [vmem:[%s8 + $0x48] sm:$0xff]
  %v5075 = vld [vmem:[%s8 + $0x50] sm:$0xff]
  %v5076 = vld [vmem:[%s8 + $0x58] sm:$0xff]
  %v5077 = vld [vmem:[%s8 + $0x60] sm:$0xff]
  %v5078 = vld [vmem:[%s8 + $0x68] sm:$0xff]
  %v5079 = vld [vmem:[%s8 + $0x70] sm:$0xff]
  %v5080 = vld [vmem:[%s8 + $0x78] sm:$0xff]
  %v5081 = vld [vmem:[%s8 + $0x80] sm:$0xff]
  %v5082 = vld [vmem:[%s8 + $0x88] sm:$0xff]
  %v5083 = vld [vmem:[%s8 + $0x90] sm:$0xff]
  %v5084 = vld [vmem:[%s8 + $0x98] sm:$0xff]
  %vm5085 = vcmask 252928
  %v5087 = vsel %vm5085, %v5066, 0
  %v5090 = vsel %vm5085, %v5068, 0
  %v5093 = vsel %vm5085, %v5070, 0
  %v5096 = vsel %vm5085, %v5072, 0
  %v5099 = vsel %vm5085, %v5074, 0
  %v5102 = vsel %vm5085, %v5076, 0
  %v5105 = vsel %vm5085, %v5078, 0
  %v5108 = vsel %vm5085, %v5080, 0
  %v5111 = vsel %vm5085, %v5082, 0
  %v5114 = vsel %vm5085, %v5084, 0
  %v5117 = vsel %vm2384, %v5064, 0
  %5119 = vmatprep.subr.mxu0 0.0
  %5120 = vmatpush1.msra.mxu0 %v5045
  %5121 = vmatprep.subr.mxu0 0.0
  %5122 = vmatpush1.msra.mxu0 %v5046
  %5123 = vmatprep.subr.mxu0 0.0
  %5124 = vmatpush1.msra.mxu0 %v5047
  %5125 = vmatprep.subr.mxu0 0.0
  %5126 = vmatpush1.msra.mxu0 %v5048
  %5127 = vmatprep.subr.mxu0 0.0
  %5128 = vmatpush1.msra.mxu0 %v5049
  %5129 = vmatprep.subr.mxu0 0.0
  %5130 = vmatpush1.msra.mxu0 %v5050
  %5131 = vmatprep.subr.mxu0 0.0
  %5132 = vmatpush1.msra.mxu0 %v5051
  %5133 = vmatprep.subr.mxu0 0.0
  %5134 = vmatpush1.msra.mxu0 %v5052
  %5135 = vmatprep.subr.mxu0 0.0
  %5136 = vmatpush1.msra.mxu0 %v5053
  %5137 = vmatprep.subr.mxu0 0.0
  %5138 = vmatpush1.msra.mxu0 %v5054
  %5139 = vmatprep.subr.mxu0 0.0
  %5140 = vmatpush1.msra.mxu0 %v5055
  %5141 = vmatprep.subr.mxu0 0.0
  %5142 = vmatpush1.msra.mxu0 %v5056
  %5143 = vmatprep.subr.mxu0 0.0
  %5144 = vmatpush1.msra.mxu0 %v5057
  %5145 = vmatprep.subr.mxu0 0.0
  %5146 = vmatpush1.msra.mxu0 %v5058
  %5147 = vmatprep.subr.mxu0 0.0
  %5148 = vmatpush1.msra.mxu0 %v5059
  %5149 = vmatprep.subr.mxu0 0.0
  %5150 = vmatpush1.msra.mxu0 %v5060
  %5151 = vmatprep.subr.mxu0 0.0
  %5152 = vmatpush1.msra.mxu0 %v5061
  %5153 = vmatprep.subr.mxu0 0.0
  %5154 = vmatpush1.msra.mxu0 %v5062
  %5155 = vmatprep.subr.mxu0 0.0
  %5156 = vmatpush1.msra.mxu0 %v5063
  %5157 = vmatprep.subr.mxu0 0.0
  %5158 = vmatpush1.msra.mxu0 %v5117
  %5159 = vmatprep.subr.mxu0 0.0
  %5160 = vmatpush1.msra.mxu0 0.0
  %5161 = vmatprep.subr.mxu0 0.0
  %5162 = vmatpush1.msra.mxu0 0.0
  %5163 = vmatprep.subr.mxu0 0.0
  %5164 = vmatpush1.msra.mxu0 0.0
  %5165 = vmatprep.subr.mxu0 0.0
  %5166 = vmatpush1.msra.mxu0 0.0
  %5167 = vmatprep.subr.mxu0 0.0
  %5168 = vmatpush1.msra.mxu0 0.0
  %5169 = vmatprep.subr.mxu0 0.0
  %5170 = vmatpush1.msra.mxu0 0.0
  %5171 = vmatprep.subr.mxu0 0.0
  %5172 = vmatpush1.msra.mxu0 0.0
  %5173 = vmatprep.subr.mxu0 0.0
  %5174 = vmatpush1.msra.mxu0 0.0
  %5175 = vmatprep.subr.mxu0 0.0
  %5176 = vmatpush1.msra.mxu0 0.0
  %5177 = vmatprep.subr.mxu0 0.0
  %5178 = vmatpush1.msra.mxu0 0.0
  %5179 = vmatprep.subr.mxu0 0.0
  %5180 = vmatpush1.msra.mxu0 0.0
  %5181 = vmatprep.subr.mxu0 0.0
  %5182 = vmatpush1.msra.mxu0 0.0
  %5183 = vmatprep.mubr.f32.mxu0 %v5087
  %5184 = vmatmul.mubr.f32.gmra.mrb[0].mxu0 %v5065
  %v5185 = vpop.f32.mrb[0].mxu0
  %v5186 = vadd.f32 0.0, %v5185
  %v5187 = vpop.f32.mrb[0].mxu0
  %5188 = vmatprep.mubr.f32.mxu0 %v5090
  %5189 = vmatmul.mubr.f32.gmra.mrb[0].mxu0 %v5067
  %v5190 = vpop.f32.mrb[0].mxu0
  %v5191 = vadd.f32 0.0, %v5190
  %v5192 = vpop.f32.mrb[0].mxu0
  %5193 = vmatprep.mubr.f32.mxu0 %v5093
  %5194 = vmatmul.mubr.f32.gmra.mrb[0].mxu0 %v5069
  %v5195 = vpop.f32.mrb[0].mxu0
  %v5196 = vadd.f32 0.0, %v5195
  %v5197 = vpop.f32.mrb[0].mxu0
  %5198 = vmatprep.mubr.f32.mxu0 %v5096
  %5199 = vmatmul.mubr.f32.gmra.mrb[0].mxu0 %v5071
  %v5200 = vpop.f32.mrb[0].mxu0
  %v5201 = vadd.f32 0.0, %v5200
  %v5202 = vpop.f32.mrb[0].mxu0
  %5203 = vmatprep.mubr.f32.mxu0 %v5099
  %5204 = vmatmul.mubr.f32.gmra.mrb[0].mxu0 %v5073
  %v5205 = vpop.f32.mrb[0].mxu0
  %v5206 = vadd.f32 0.0, %v5205
  %v5207 = vpop.f32.mrb[0].mxu0
  %5208 = vmatprep.mubr.f32.mxu0 %v5102
  %5209 = vmatmul.mubr.f32.gmra.mrb[0].mxu0 %v5075
  %v5210 = vpop.f32.mrb[0].mxu0
  %v5211 = vadd.f32 0.0, %v5210
  %v5212 = vpop.f32.mrb[0].mxu0
  %5213 = vmatprep.mubr.f32.mxu0 %v5105
  %5214 = vmatmul.mubr.f32.gmra.mrb[0].mxu0 %v5077
  %v5215 = vpop.f32.mrb[0].mxu0
  %v5216 = vadd.f32 0.0, %v5215
  %v5217 = vpop.f32.mrb[0].mxu0
  %5218 = vmatprep.mubr.f32.mxu0 %v5108
  %5219 = vmatmul.mubr.f32.gmra.mrb[0].mxu0 %v5079
  %v5220 = vpop.f32.mrb[0].mxu0
  %v5221 = vadd.f32 0.0, %v5220
  %v5222 = vpop.f32.mrb[0].mxu0
  %5223 = vmatprep.mubr.f32.mxu0 %v5111
  %5224 = vmatmul.mubr.f32.gmra.mrb[0].mxu0 %v5081
  %v5225 = vpop.f32.mrb[0].mxu0
  %v5226 = vadd.f32 0.0, %v5225
  %v5227 = vpop.f32.mrb[0].mxu0
  %5228 = vmatprep.mubr.f32.mxu0 %v5114
  %5229 = vmatmul.mubr.f32.gmra.mrb[0].mxu0 %v5083
  %v5230 = vpop.f32.mrb[0].mxu0
  %v5231 = vadd.f32 0.0, %v5230
  %v5232 = vpop.f32.mrb[0].mxu0
  %5233 = vdwg.mxu0
  %v5234 = vld [vmem:[%s10] sm:$0xff]
  %v5235 = vld [vmem:[%s10 + $0x8] sm:$0xff]
  %v5236 = vld [vmem:[%s10 + $0x10] sm:$0xff]
  %v5237 = vld [vmem:[%s10 + $0x18] sm:$0xff]
  %v5238 = vld [vmem:[%s10 + $0x20] sm:$0xff]
  %v5239 = vld [vmem:[%s10 + $0x28] sm:$0xff]
  %v5240 = vld [vmem:[%s10 + $0x30] sm:$0x3]
  %v5241 = vld [vmem:[%s9] sm:$0xff]
  %v5242 = vld [vmem:[%s9 + $0x8] sm:$0xff]
  %v5243 = vld [vmem:[%s9 + $0x10] sm:$0xff]
  %v5244 = vld [vmem:[%s9 + $0x18] sm:$0xff]
  %v5245 = vld [vmem:[%s9 + $0x20] sm:$0xff]
  %v5246 = vld [vmem:[%s9 + $0x28] sm:$0xff]
  %v5247 = vld [vmem:[%s9 + $0x30] sm:$0x3]
  %vm5248 = vcmask 654336
  %v5250 = vsel %vm5248, %v5241, 0
  %v5253 = vsel %vm5248, %v5242, 0
  %v5256 = vsel %vm5248, %v5243, 0
  %v5259 = vsel %vm5248, %v5244, 0
  %v5262 = vsel %vm5248, %v5245, 0
  %v5265 = vsel %vm5248, %v5246, 0
  %v5268 = vsel %vm5248, %v5247, 0
  %5270 = vmatprep.subr.mxu0 0.0
  %5271 = vmatpush1.msra.mxu0 %v5186
  %5272 = vmatprep.subr.mxu0 0.0
  %5273 = vmatpush1.msra.mxu0 %v5191
  %5274 = vmatprep.subr.mxu0 0.0
  %5275 = vmatpush1.msra.mxu0 %v5196
  %5276 = vmatprep.subr.mxu0 0.0
  %5277 = vmatpush1.msra.mxu0 %v5201
  %5278 = vmatprep.subr.mxu0 0.0
  %5279 = vmatpush1.msra.mxu0 %v5206
  %5280 = vmatprep.subr.mxu0 0.0
  %5281 = vmatpush1.msra.mxu0 %v5211
  %5282 = vmatprep.subr.mxu0 0.0
  %5283 = vmatpush1.msra.mxu0 %v5216
  %5284 = vmatprep.subr.mxu0 0.0
  %5285 = vmatpush1.msra.mxu0 %v5221
  %5286 = vmatprep.subr.mxu0 0.0
  %5287 = vmatpush1.msra.mxu0 %v5226
  %5288 = vmatprep.subr.mxu0 0.0
  %5289 = vmatpush1.msra.mxu0 %v5231
  %5290 = vmatprep.subr.mxu0 0.0
  %5291 = vmatpush1.msra.mxu0 0.0
  %5292 = vmatprep.subr.mxu0 0.0
  %5293 = vmatpush1.msra.mxu0 0.0
  %5294 = vmatprep.subr.mxu0 0.0
  %5295 = vmatpush1.msra.mxu0 0.0
  %5296 = vmatprep.subr.mxu0 0.0
  %5297 = vmatpush1.msra.mxu0 0.0
  %5298 = vmatprep.subr.mxu0 0.0
  %5299 = vmatpush1.msra.mxu0 0.0
  %5300 = vmatprep.subr.mxu0 0.0
  %5301 = vmatpush1.msra.mxu0 0.0
  %5302 = vmatprep.subr.mxu0 0.0
  %5303 = vmatpush1.msra.mxu0 0.0
  %5304 = vmatprep.subr.mxu0 0.0
  %5305 = vmatpush1.msra.mxu0 0.0
  %5306 = vmatprep.subr.mxu0 0.0
  %5307 = vmatpush1.msra.mxu0 0.0
  %5308 = vmatprep.subr.mxu0 0.0
  %5309 = vmatpush1.msra.mxu0 0.0
  %5310 = vmatprep.subr.mxu0 0.0
  %5311 = vmatpush1.msra.mxu0 0.0
  %5312 = vmatprep.subr.mxu0 0.0
  %5313 = vmatpush1.msra.mxu0 0.0
  %5314 = vmatprep.subr.mxu0 0.0
  %5315 = vmatpush1.msra.mxu0 0.0
  %5316 = vmatprep.subr.mxu0 0.0
  %5317 = vmatpush1.msra.mxu0 0.0
  %5318 = vmatprep.subr.mxu0 0.0
  %5319 = vmatpush1.msra.mxu0 0.0
  %5320 = vmatprep.subr.mxu0 0.0
  %5321 = vmatpush1.msra.mxu0 0.0
  %5322 = vmatprep.subr.mxu0 0.0
  %5323 = vmatpush1.msra.mxu0 0.0
  %5324 = vmatprep.subr.mxu0 0.0
  %5325 = vmatpush1.msra.mxu0 0.0
  %5326 = vmatprep.subr.mxu0 0.0
  %5327 = vmatpush1.msra.mxu0 0.0
  %5328 = vmatprep.subr.mxu0 0.0
  %5329 = vmatpush1.msra.mxu0 0.0
  %5330 = vmatprep.subr.mxu0 0.0
  %5331 = vmatpush1.msra.mxu0 0.0
  %5332 = vmatprep.subr.mxu0 0.0
  %5333 = vmatpush1.msra.mxu0 0.0
  %5334 = vmatprep.mubr.f32.mxu0 0.0
  %5335 = vmatmul.mubr.f32.gmra.mrb[0].mxu0 %v5250
  %v5336 = vpop.f32.mrb[0].mxu0
  %v5337 = vadd.f32 0.0, %v5336
  %v5338 = vpop.f32.mrb[0].mxu0
  %5339 = vmatprep.mubr.f32.mxu0 0.0
  %5340 = vmatmul.mubr.f32.gmra.mrb[0].mxu0 %v5253
  %v5341 = vpop.f32.mrb[0].mxu0
  %v5342 = vadd.f32 0.0, %v5341
  %v5343 = vpop.f32.mrb[0].mxu0
  %5344 = vmatprep.mubr.f32.mxu0 0.0
  %5345 = vmatmul.mubr.f32.gmra.mrb[0].mxu0 %v5256
  %v5346 = vpop.f32.mrb[0].mxu0
  %v5347 = vadd.f32 0.0, %v5346
  %v5348 = vpop.f32.mrb[0].mxu0
  %5349 = vmatprep.mubr.f32.mxu0 0.0
  %5350 = vmatmul.mubr.f32.gmra.mrb[0].mxu0 %v5259
  %v5351 = vpop.f32.mrb[0].mxu0
  %v5352 = vadd.f32 0.0, %v5351
  %v5353 = vpop.f32.mrb[0].mxu0
  %5354 = vmatprep.mubr.f32.mxu0 0.0
  %5355 = vmatmul.mubr.f32.gmra.mrb[0].mxu0 %v5262
  %v5356 = vpop.f32.mrb[0].mxu0
  %v5357 = vadd.f32 0.0, %v5356
  %v5358 = vpop.f32.mrb[0].mxu0
  %5359 = vmatprep.mubr.f32.mxu0 0.0
  %5360 = vmatmul.mubr.f32.gmra.mrb[0].mxu0 %v5265
  %v5361 = vpop.f32.mrb[0].mxu0
  %v5362 = vadd.f32 0.0, %v5361
  %v5363 = vpop.f32.mrb[0].mxu0
  %5364 = vmatprep.mubr.f32.mxu0 0.0
  %5365 = vmatmul.mubr.f32.gmra.mrb[0].mxu0 %v5268
  %v5366 = vpop.f32.mrb[0].mxu0
  %v5367 = vadd.f32 0.0, %v5366
  %v5368 = vpop.f32.mrb[0].mxu0
  %5369 = vdwg.mxu0
  %v5370 = vadd.f32 %v5234, %v5337
  %v5371 = vadd.f32 %v5235, %v5342
  %v5372 = vadd.f32 %v5236, %v5347
  %v5373 = vadd.f32 %v5237, %v5352
  %v5374 = vadd.f32 %v5238, %v5357
  %v5375 = vadd.f32 %v5239, %v5362
  %v5376 = vadd.f32 %v5240, %v5367
  %s5377 = scalar_lea.vmem %s9, 56
  %v5378 = vld [vmem:[%s5377] sm:$0xff]
  %v5379 = vld [vmem:[%s5377 + $0x8] sm:$0xff]
  %v5380 = vld [vmem:[%s5377 + $0x10] sm:$0xff]
  %v5381 = vld [vmem:[%s5377 + $0x18] sm:$0xff]
  %v5382 = vld [vmem:[%s5377 + $0x20] sm:$0xff]
  %v5383 = vld [vmem:[%s5377 + $0x28] sm:$0xff]
  %v5384 = vld [vmem:[%s5377 + $0x30] sm:$0x3]
  %5395 = vrot.lane.b32.xlu0 %v5186, 127
  %v5396 = vpop.permute.xlu0 %5395
  %5397 = vrot.lane.b32.xlu0 %v5191, 127
  %v5398 = vpop.permute.xlu0 %5397
  %5399 = vrot.lane.b32.xlu0 %v5196, 127
  %v5400 = vpop.permute.xlu0 %5399
  %5401 = vrot.lane.b32.xlu0 %v5201, 127
  %v5402 = vpop.permute.xlu0 %5401
  %5403 = vrot.lane.b32.xlu0 %v5206, 127
  %v5404 = vpop.permute.xlu0 %5403
  %5405 = vrot.lane.b32.xlu0 %v5211, 127
  %v5406 = vpop.permute.xlu0 %5405
  %5407 = vrot.lane.b32.xlu0 %v5216, 127
  %v5408 = vpop.permute.xlu0 %5407
  %5409 = vrot.lane.b32.xlu0 %v5221, 127
  %v5410 = vpop.permute.xlu0 %5409
  %5411 = vrot.lane.b32.xlu0 %v5226, 127
  %v5412 = vpop.permute.xlu0 %5411
  %5413 = vrot.lane.b32.xlu0 %v5231, 127
  %v5414 = vpop.permute.xlu0 %5413
  %v5426 = vsel %vm5248, %v5378, 0
  %v5429 = vsel %vm5248, %v5379, 0
  %v5432 = vsel %vm5248, %v5380, 0
  %v5435 = vsel %vm5248, %v5381, 0
  %v5438 = vsel %vm5248, %v5382, 0
  %v5441 = vsel %vm5248, %v5383, 0
  %v5444 = vsel %vm5248, %v5384, 0
  %5446 = vmatprep.subr.mxu0 0.0
  %5447 = vmatpush1.msra.mxu0 %v5396
  %5448 = vmatprep.subr.mxu0 0.0
  %5449 = vmatpush1.msra.mxu0 %v5398
  %5450 = vmatprep.subr.mxu0 0.0
  %5451 = vmatpush1.msra.mxu0 %v5400
  %5452 = vmatprep.subr.mxu0 0.0
  %5453 = vmatpush1.msra.mxu0 %v5402
  %5454 = vmatprep.subr.mxu0 0.0
  %5455 = vmatpush1.msra.mxu0 %v5404
  %5456 = vmatprep.subr.mxu0 0.0
  %5457 = vmatpush1.msra.mxu0 %v5406
  %5458 = vmatprep.subr.mxu0 0.0
  %5459 = vmatpush1.msra.mxu0 %v5408
  %5460 = vmatprep.subr.mxu0 0.0
  %5461 = vmatpush1.msra.mxu0 %v5410
  %5462 = vmatprep.subr.mxu0 0.0
  %5463 = vmatpush1.msra.mxu0 %v5412
  %5464 = vmatprep.subr.mxu0 0.0
  %5465 = vmatpush1.msra.mxu0 %v5414
  %5466 = vmatprep.subr.mxu0 0.0
  %5467 = vmatpush1.msra.mxu0 0.0
  %5468 = vmatprep.subr.mxu0 0.0
  %5469 = vmatpush1.msra.mxu0 0.0
  %5470 = vmatprep.subr.mxu0 0.0
  %5471 = vmatpush1.msra.mxu0 0.0
  %5472 = vmatprep.subr.mxu0 0.0
  %5473 = vmatpush1.msra.mxu0 0.0
  %5474 = vmatprep.subr.mxu0 0.0
  %5475 = vmatpush1.msra.mxu0 0.0
  %5476 = vmatprep.subr.mxu0 0.0
  %5477 = vmatpush1.msra.mxu0 0.0
  %5478 = vmatprep.subr.mxu0 0.0
  %5479 = vmatpush1.msra.mxu0 0.0
  %5480 = vmatprep.subr.mxu0 0.0
  %5481 = vmatpush1.msra.mxu0 0.0
  %5482 = vmatprep.subr.mxu0 0.0
  %5483 = vmatpush1.msra.mxu0 0.0
  %5484 = vmatprep.subr.mxu0 0.0
  %5485 = vmatpush1.msra.mxu0 0.0
  %5486 = vmatprep.subr.mxu0 0.0
  %5487 = vmatpush1.msra.mxu0 0.0
  %5488 = vmatprep.subr.mxu0 0.0
  %5489 = vmatpush1.msra.mxu0 0.0
  %5490 = vmatprep.subr.mxu0 0.0
  %5491 = vmatpush1.msra.mxu0 0.0
  %5492 = vmatprep.subr.mxu0 0.0
  %5493 = vmatpush1.msra.mxu0 0.0
  %5494 = vmatprep.subr.mxu0 0.0
  %5495 = vmatpush1.msra.mxu0 0.0
  %5496 = vmatprep.subr.mxu0 0.0
  %5497 = vmatpush1.msra.mxu0 0.0
  %5498 = vmatprep.subr.mxu0 0.0
  %5499 = vmatpush1.msra.mxu0 0.0
  %5500 = vmatprep.subr.mxu0 0.0
  %5501 = vmatpush1.msra.mxu0 0.0
  %5502 = vmatprep.subr.mxu0 0.0
  %5503 = vmatpush1.msra.mxu0 0.0
  %5504 = vmatprep.subr.mxu0 0.0
  %5505 = vmatpush1.msra.mxu0 0.0
  %5506 = vmatprep.subr.mxu0 0.0
  %5507 = vmatpush1.msra.mxu0 0.0
  %5508 = vmatprep.subr.mxu0 0.0
  %5509 = vmatpush1.msra.mxu0 0.0
  %5510 = vmatprep.mubr.f32.mxu0 0.0
  %5511 = vmatmul.mubr.f32.gmra.mrb[0].mxu0 %v5426
  %v5512 = vpop.f32.mrb[0].mxu0
  %v5513 = vadd.f32 0.0, %v5512
  %v5514 = vpop.f32.mrb[0].mxu0
  %5515 = vmatprep.mubr.f32.mxu0 0.0
  %5516 = vmatmul.mubr.f32.gmra.mrb[0].mxu0 %v5429
  %v5517 = vpop.f32.mrb[0].mxu0
  %v5518 = vadd.f32 0.0, %v5517
  %v5519 = vpop.f32.mrb[0].mxu0
  %5520 = vmatprep.mubr.f32.mxu0 0.0
  %5521 = vmatmul.mubr.f32.gmra.mrb[0].mxu0 %v5432
  %v5522 = vpop.f32.mrb[0].mxu0
  %v5523 = vadd.f32 0.0, %v5522
  %v5524 = vpop.f32.mrb[0].mxu0
  %5525 = vmatprep.mubr.f32.mxu0 0.0
  %5526 = vmatmul.mubr.f32.gmra.mrb[0].mxu0 %v5435
  %v5527 = vpop.f32.mrb[0].mxu0
  %v5528 = vadd.f32 0.0, %v5527
  %v5529 = vpop.f32.mrb[0].mxu0
  %5530 = vmatprep.mubr.f32.mxu0 0.0
  %5531 = vmatmul.mubr.f32.gmra.mrb[0].mxu0 %v5438
  %v5532 = vpop.f32.mrb[0].mxu0
  %v5533 = vadd.f32 0.0, %v5532
  %v5534 = vpop.f32.mrb[0].mxu0
  %5535 = vmatprep.mubr.f32.mxu0 0.0
  %5536 = vmatmul.mubr.f32.gmra.mrb[0].mxu0 %v5441
  %v5537 = vpop.f32.mrb[0].mxu0
  %v5538 = vadd.f32 0.0, %v5537
  %v5539 = vpop.f32.mrb[0].mxu0
  %5540 = vmatprep.mubr.f32.mxu0 0.0
  %5541 = vmatmul.mubr.f32.gmra.mrb[0].mxu0 %v5444
  %v5542 = vpop.f32.mrb[0].mxu0
  %v5543 = vadd.f32 0.0, %v5542
  %v5544 = vpop.f32.mrb[0].mxu0
  %5545 = vdwg.mxu0
  %v5546 = vadd.f32 %v5370, %v5513
  %v5547 = vadd.f32 %v5371, %v5518
  %v5548 = vadd.f32 %v5372, %v5523
  %v5549 = vadd.f32 %v5373, %v5528
  %v5550 = vadd.f32 %v5374, %v5533
  %v5551 = vadd.f32 %v5375, %v5538
  %v5552 = vadd.f32 %v5376, %v5543
  %s5553 = scalar_lea.vmem %s9, 112
  %v5554 = vld [vmem:[%s5553] sm:$0xff]
  %v5555 = vld [vmem:[%s5553 + $0x8] sm:$0xff]
  %v5556 = vld [vmem:[%s5553 + $0x10] sm:$0xff]
  %v5557 = vld [vmem:[%s5553 + $0x18] sm:$0xff]
  %v5558 = vld [vmem:[%s5553 + $0x20] sm:$0xff]
  %v5559 = vld [vmem:[%s5553 + $0x28] sm:$0xff]
  %v5560 = vld [vmem:[%s5553 + $0x30] sm:$0x3]
  %5561 = vrot.lane.b32.xlu0 %v5186, 126
  %v5562 = vpop.permute.xlu0 %5561
  %5563 = vrot.lane.b32.xlu0 %v5191, 126
  %v5564 = vpop.permute.xlu0 %5563
  %5565 = vrot.lane.b32.xlu0 %v5196, 126
  %v5566 = vpop.permute.xlu0 %5565
  %5567 = vrot.lane.b32.xlu0 %v5201, 126
  %v5568 = vpop.permute.xlu0 %5567
  %5569 = vrot.lane.b32.xlu0 %v5206, 126
  %v5570 = vpop.permute.xlu0 %5569
  %5571 = vrot.lane.b32.xlu0 %v5211, 126
  %v5572 = vpop.permute.xlu0 %5571
  %5573 = vrot.lane.b32.xlu0 %v5216, 126
  %v5574 = vpop.permute.xlu0 %5573
  %5575 = vrot.lane.b32.xlu0 %v5221, 126
  %v5576 = vpop.permute.xlu0 %5575
  %5577 = vrot.lane.b32.xlu0 %v5226, 126
  %v5578 = vpop.permute.xlu0 %5577
  %5579 = vrot.lane.b32.xlu0 %v5231, 126
  %v5580 = vpop.permute.xlu0 %5579
  %v5592 = vsel %vm5248, %v5554, 0
  %v5595 = vsel %vm5248, %v5555, 0
  %v5598 = vsel %vm5248, %v5556, 0
  %v5601 = vsel %vm5248, %v5557, 0
  %v5604 = vsel %vm5248, %v5558, 0
  %v5607 = vsel %vm5248, %v5559, 0
  %v5610 = vsel %vm5248, %v5560, 0
  %5612 = vmatprep.subr.mxu0 0.0
  %5613 = vmatpush1.msra.mxu0 %v5562
  %5614 = vmatprep.subr.mxu0 0.0
  %5615 = vmatpush1.msra.mxu0 %v5564
  %5616 = vmatprep.subr.mxu0 0.0
  %5617 = vmatpush1.msra.mxu0 %v5566
  %5618 = vmatprep.subr.mxu0 0.0
  %5619 = vmatpush1.msra.mxu0 %v5568
  %5620 = vmatprep.subr.mxu0 0.0
  %5621 = vmatpush1.msra.mxu0 %v5570
  %5622 = vmatprep.subr.mxu0 0.0
  %5623 = vmatpush1.msra.mxu0 %v5572
  %5624 = vmatprep.subr.mxu0 0.0
  %5625 = vmatpush1.msra.mxu0 %v5574
  %5626 = vmatprep.subr.mxu0 0.0
  %5627 = vmatpush1.msra.mxu0 %v5576
  %5628 = vmatprep.subr.mxu0 0.0
  %5629 = vmatpush1.msra.mxu0 %v5578
  %5630 = vmatprep.subr.mxu0 0.0
  %5631 = vmatpush1.msra.mxu0 %v5580
  %5632 = vmatprep.subr.mxu0 0.0
  %5633 = vmatpush1.msra.mxu0 0.0
  %5634 = vmatprep.subr.mxu0 0.0
  %5635 = vmatpush1.msra.mxu0 0.0
  %5636 = vmatprep.subr.mxu0 0.0
  %5637 = vmatpush1.msra.mxu0 0.0
  %5638 = vmatprep.subr.mxu0 0.0
  %5639 = vmatpush1.msra.mxu0 0.0
  %5640 = vmatprep.subr.mxu0 0.0
  %5641 = vmatpush1.msra.mxu0 0.0
  %5642 = vmatprep.subr.mxu0 0.0
  %5643 = vmatpush1.msra.mxu0 0.0
  %5644 = vmatprep.subr.mxu0 0.0
  %5645 = vmatpush1.msra.mxu0 0.0
  %5646 = vmatprep.subr.mxu0 0.0
  %5647 = vmatpush1.msra.mxu0 0.0
  %5648 = vmatprep.subr.mxu0 0.0
  %5649 = vmatpush1.msra.mxu0 0.0
  %5650 = vmatprep.subr.mxu0 0.0
  %5651 = vmatpush1.msra.mxu0 0.0
  %5652 = vmatprep.subr.mxu0 0.0
  %5653 = vmatpush1.msra.mxu0 0.0
  %5654 = vmatprep.subr.mxu0 0.0
  %5655 = vmatpush1.msra.mxu0 0.0
  %5656 = vmatprep.subr.mxu0 0.0
  %5657 = vmatpush1.msra.mxu0 0.0
  %5658 = vmatprep.subr.mxu0 0.0
  %5659 = vmatpush1.msra.mxu0 0.0
  %5660 = vmatprep.subr.mxu0 0.0
  %5661 = vmatpush1.msra.mxu0 0.0
  %5662 = vmatprep.subr.mxu0 0.0
  %5663 = vmatpush1.msra.mxu0 0.0
  %5664 = vmatprep.subr.mxu0 0.0
  %5665 = vmatpush1.msra.mxu0 0.0
  %5666 = vmatprep.subr.mxu0 0.0
  %5667 = vmatpush1.msra.mxu0 0.0
  %5668 = vmatprep.subr.mxu0 0.0
  %5669 = vmatpush1.msra.mxu0 0.0
  %5670 = vmatprep.subr.mxu0 0.0
  %5671 = vmatpush1.msra.mxu0 0.0
  %5672 = vmatprep.subr.mxu0 0.0
  %5673 = vmatpush1.msra.mxu0 0.0
  %5674 = vmatprep.subr.mxu0 0.0
  %5675 = vmatpush1.msra.mxu0 0.0
  %5676 = vmatprep.mubr.f32.mxu0 0.0
  %5677 = vmatmul.mubr.f32.gmra.mrb[0].mxu0 %v5592
  %v5678 = vpop.f32.mrb[0].mxu0
  %v5679 = vadd.f32 0.0, %v5678
  %v5680 = vpop.f32.mrb[0].mxu0
  %5681 = vmatprep.mubr.f32.mxu0 0.0
  %5682 = vmatmul.mubr.f32.gmra.mrb[0].mxu0 %v5595
  %v5683 = vpop.f32.mrb[0].mxu0
  %v5684 = vadd.f32 0.0, %v5683
  %v5685 = vpop.f32.mrb[0].mxu0
  %5686 = vmatprep.mubr.f32.mxu0 0.0
  %5687 = vmatmul.mubr.f32.gmra.mrb[0].mxu0 %v5598
  %v5688 = vpop.f32.mrb[0].mxu0
  %v5689 = vadd.f32 0.0, %v5688
  %v5690 = vpop.f32.mrb[0].mxu0
  %5691 = vmatprep.mubr.f32.mxu0 0.0
  %5692 = vmatmul.mubr.f32.gmra.mrb[0].mxu0 %v5601
  %v5693 = vpop.f32.mrb[0].mxu0
  %v5694 = vadd.f32 0.0, %v5693
  %v5695 = vpop.f32.mrb[0].mxu0
  %5696 = vmatprep.mubr.f32.mxu0 0.0
  %5697 = vmatmul.mubr.f32.gmra.mrb[0].mxu0 %v5604
  %v5698 = vpop.f32.mrb[0].mxu0
  %v5699 = vadd.f32 0.0, %v5698
  %v5700 = vpop.f32.mrb[0].mxu0
  %5701 = vmatprep.mubr.f32.mxu0 0.0
  %5702 = vmatmul.mubr.f32.gmra.mrb[0].mxu0 %v5607
  %v5703 = vpop.f32.mrb[0].mxu0
  %v5704 = vadd.f32 0.0, %v5703
  %v5705 = vpop.f32.mrb[0].mxu0
  %5706 = vmatprep.mubr.f32.mxu0 0.0
  %5707 = vmatmul.mubr.f32.gmra.mrb[0].mxu0 %v5610
  %v5708 = vpop.f32.mrb[0].mxu0
  %v5709 = vadd.f32 0.0, %v5708
  %v5710 = vpop.f32.mrb[0].mxu0
  %5711 = vdwg.mxu0
  %v5712 = vadd.f32 %v5546, %v5679
  %v5713 = vadd.f32 %v5547, %v5684
  %v5714 = vadd.f32 %v5548, %v5689
  %v5715 = vadd.f32 %v5549, %v5694
  %v5716 = vadd.f32 %v5550, %v5699
  %v5717 = vadd.f32 %v5551, %v5704
  %v5718 = vadd.f32 %v5552, %v5709
  %s5719 = scalar_lea.vmem %s9, 168
  %v5720 = vld [vmem:[%s5719] sm:$0xff]
  %v5721 = vld [vmem:[%s5719 + $0x8] sm:$0xff]
  %v5722 = vld [vmem:[%s5719 + $0x10] sm:$0xff]
  %v5723 = vld [vmem:[%s5719 + $0x18] sm:$0xff]
  %v5724 = vld [vmem:[%s5719 + $0x20] sm:$0xff]
  %v5725 = vld [vmem:[%s5719 + $0x28] sm:$0xff]
  %v5726 = vld [vmem:[%s5719 + $0x30] sm:$0x3]
  %5727 = vrot.lane.b32.xlu0 %v5186, 125
  %v5728 = vpop.permute.xlu0 %5727
  %5729 = vrot.lane.b32.xlu0 %v5191, 125
  %v5730 = vpop.permute.xlu0 %5729
  %5731 = vrot.lane.b32.xlu0 %v5196, 125
  %v5732 = vpop.permute.xlu0 %5731
  %5733 = vrot.lane.b32.xlu0 %v5201, 125
  %v5734 = vpop.permute.xlu0 %5733
  %5735 = vrot.lane.b32.xlu0 %v5206, 125
  %v5736 = vpop.permute.xlu0 %5735
  %5737 = vrot.lane.b32.xlu0 %v5211, 125
  %v5738 = vpop.permute.xlu0 %5737
  %5739 = vrot.lane.b32.xlu0 %v5216, 125
  %v5740 = vpop.permute.xlu0 %5739
  %5741 = vrot.lane.b32.xlu0 %v5221, 125
  %v5742 = vpop.permute.xlu0 %5741
  %5743 = vrot.lane.b32.xlu0 %v5226, 125
  %v5744 = vpop.permute.xlu0 %5743
  %5745 = vrot.lane.b32.xlu0 %v5231, 125
  %v5746 = vpop.permute.xlu0 %5745
  %v5758 = vsel %vm5248, %v5720, 0
  %v5761 = vsel %vm5248, %v5721, 0
  %v5764 = vsel %vm5248, %v5722, 0
  %v5767 = vsel %vm5248, %v5723, 0
  %v5770 = vsel %vm5248, %v5724, 0
  %v5773 = vsel %vm5248, %v5725, 0
  %v5776 = vsel %vm5248, %v5726, 0
  %5778 = vmatprep.subr.mxu0 0.0
  %5779 = vmatpush1.msra.mxu0 %v5728
  %5780 = vmatprep.subr.mxu0 0.0
  %5781 = vmatpush1.msra.mxu0 %v5730
  %5782 = vmatprep.subr.mxu0 0.0
  %5783 = vmatpush1.msra.mxu0 %v5732
  %5784 = vmatprep.subr.mxu0 0.0
  %5785 = vmatpush1.msra.mxu0 %v5734
  %5786 = vmatprep.subr.mxu0 0.0
  %5787 = vmatpush1.msra.mxu0 %v5736
  %5788 = vmatprep.subr.mxu0 0.0
  %5789 = vmatpush1.msra.mxu0 %v5738
  %5790 = vmatprep.subr.mxu0 0.0
  %5791 = vmatpush1.msra.mxu0 %v5740
  %5792 = vmatprep.subr.mxu0 0.0
  %5793 = vmatpush1.msra.mxu0 %v5742
  %5794 = vmatprep.subr.mxu0 0.0
  %5795 = vmatpush1.msra.mxu0 %v5744
  %5796 = vmatprep.subr.mxu0 0.0
  %5797 = vmatpush1.msra.mxu0 %v5746
  %5798 = vmatprep.subr.mxu0 0.0
  %5799 = vmatpush1.msra.mxu0 0.0
  %5800 = vmatprep.subr.mxu0 0.0
  %5801 = vmatpush1.msra.mxu0 0.0
  %5802 = vmatprep.subr.mxu0 0.0
  %5803 = vmatpush1.msra.mxu0 0.0
  %5804 = vmatprep.subr.mxu0 0.0
  %5805 = vmatpush1.msra.mxu0 0.0
  %5806 = vmatprep.subr.mxu0 0.0
  %5807 = vmatpush1.msra.mxu0 0.0
  %5808 = vmatprep.subr.mxu0 0.0
  %5809 = vmatpush1.msra.mxu0 0.0
  %5810 = vmatprep.subr.mxu0 0.0
  %5811 = vmatpush1.msra.mxu0 0.0
  %5812 = vmatprep.subr.mxu0 0.0
  %5813 = vmatpush1.msra.mxu0 0.0
  %5814 = vmatprep.subr.mxu0 0.0
  %5815 = vmatpush1.msra.mxu0 0.0
  %5816 = vmatprep.subr.mxu0 0.0
  %5817 = vmatpush1.msra.mxu0 0.0
  %5818 = vmatprep.subr.mxu0 0.0
  %5819 = vmatpush1.msra.mxu0 0.0
  %5820 = vmatprep.subr.mxu0 0.0
  %5821 = vmatpush1.msra.mxu0 0.0
  %5822 = vmatprep.subr.mxu0 0.0
  %5823 = vmatpush1.msra.mxu0 0.0
  %5824 = vmatprep.subr.mxu0 0.0
  %5825 = vmatpush1.msra.mxu0 0.0
  %5826 = vmatprep.subr.mxu0 0.0
  %5827 = vmatpush1.msra.mxu0 0.0
  %5828 = vmatprep.subr.mxu0 0.0
  %5829 = vmatpush1.msra.mxu0 0.0
  %5830 = vmatprep.subr.mxu0 0.0
  %5831 = vmatpush1.msra.mxu0 0.0
  %5832 = vmatprep.subr.mxu0 0.0
  %5833 = vmatpush1.msra.mxu0 0.0
  %5834 = vmatprep.subr.mxu0 0.0
  %5835 = vmatpush1.msra.mxu0 0.0
  %5836 = vmatprep.subr.mxu0 0.0
  %5837 = vmatpush1.msra.mxu0 0.0
  %5838 = vmatprep.subr.mxu0 0.0
  %5839 = vmatpush1.msra.mxu0 0.0
  %5840 = vmatprep.subr.mxu0 0.0
  %5841 = vmatpush1.msra.mxu0 0.0
  %5842 = vmatprep.mubr.f32.mxu0 0.0
  %5843 = vmatmul.mubr.f32.gmra.mrb[0].mxu0 %v5758
  %v5844 = vpop.f32.mrb[0].mxu0
  %v5845 = vadd.f32 0.0, %v5844
  %v5846 = vpop.f32.mrb[0].mxu0
  %5847 = vmatprep.mubr.f32.mxu0 0.0
  %5848 = vmatmul.mubr.f32.gmra.mrb[0].mxu0 %v5761
  %v5849 = vpop.f32.mrb[0].mxu0
  %v5850 = vadd.f32 0.0, %v5849
  %v5851 = vpop.f32.mrb[0].mxu0
  %5852 = vmatprep.mubr.f32.mxu0 0.0
  %5853 = vmatmul.mubr.f32.gmra.mrb[0].mxu0 %v5764
  %v5854 = vpop.f32.mrb[0].mxu0
  %v5855 = vadd.f32 0.0, %v5854
  %v5856 = vpop.f32.mrb[0].mxu0
  %5857 = vmatprep.mubr.f32.mxu0 0.0
  %5858 = vmatmul.mubr.f32.gmra.mrb[0].mxu0 %v5767
  %v5859 = vpop.f32.mrb[0].mxu0
  %v5860 = vadd.f32 0.0, %v5859
  %v5861 = vpop.f32.mrb[0].mxu0
  %5862 = vmatprep.mubr.f32.mxu0 0.0
  %5863 = vmatmul.mubr.f32.gmra.mrb[0].mxu0 %v5770
  %v5864 = vpop.f32.mrb[0].mxu0
  %v5865 = vadd.f32 0.0, %v5864
  %v5866 = vpop.f32.mrb[0].mxu0
  %5867 = vmatprep.mubr.f32.mxu0 0.0
  %5868 = vmatmul.mubr.f32.gmra.mrb[0].mxu0 %v5773
  %v5869 = vpop.f32.mrb[0].mxu0
  %v5870 = vadd.f32 0.0, %v5869
  %v5871 = vpop.f32.mrb[0].mxu0
  %5872 = vmatprep.mubr.f32.mxu0 0.0
  %5873 = vmatmul.mubr.f32.gmra.mrb[0].mxu0 %v5776
  %v5874 = vpop.f32.mrb[0].mxu0
  %v5875 = vadd.f32 0.0, %v5874
  %v5876 = vpop.f32.mrb[0].mxu0
  %5877 = vdwg.mxu0
  %v5878 = vadd.f32 %v5712, %v5845
  %v5879 = vadd.f32 %v5713, %v5850
  %v5880 = vadd.f32 %v5714, %v5855
  %v5881 = vadd.f32 %v5715, %v5860
  %v5882 = vadd.f32 %v5716, %v5865
  %v5883 = vadd.f32 %v5717, %v5870
  %v5884 = vadd.f32 %v5718, %v5875
  %v5885 = vmax.f32 %v5878, 0.0
  %v5886 = vmax.f32 %v5879, 0.0
  %v5887 = vmax.f32 %v5880, 0.0
  %v5888 = vmax.f32 %v5881, 0.0
  %v5889 = vmax.f32 %v5882, 0.0
  %v5890 = vmax.f32 %v5883, 0.0
  %v5891 = vmax.f32 %v5884, 0.0
  %v5892 = vld [vmem:[%s11] sm:$0xff]
  %v5893 = vld [vmem:[%s11 + $0x8] sm:$0x3]
  %v5894 = vld [vmem:[%s12] sm:$0xff]
  %v5895 = vld [vmem:[%s12 + $0x8] sm:$0x3]
  %vm5896 = vcmask 408576
  %v5898 = vsel %vm5896, %v5892, 0
  %v5901 = vsel %vm5896, %v5893, 0
  %vm5903 = vcmask 1041408
  %v5905 = vsel %vm5903, %v5891, 0
  %5907 = vmatprep.subr.mxu0 0.0
  %5908 = vmatpush1.msra.mxu0 %v5885
  %5909 = vmatprep.subr.mxu0 0.0
  %5910 = vmatpush1.msra.mxu0 %v5886
  %5911 = vmatprep.subr.mxu0 0.0
  %5912 = vmatpush1.msra.mxu0 %v5887
  %5913 = vmatprep.subr.mxu0 0.0
  %5914 = vmatpush1.msra.mxu0 %v5888
  %5915 = vmatprep.subr.mxu0 0.0
  %5916 = vmatpush1.msra.mxu0 %v5889
  %5917 = vmatprep.subr.mxu0 0.0
  %5918 = vmatpush1.msra.mxu0 %v5890
  %5919 = vmatprep.subr.mxu0 0.0
  %5920 = vmatpush1.msra.mxu0 %v5905
  %5921 = vmatprep.subr.mxu0 0.0
  %5922 = vmatpush1.msra.mxu0 0.0
  %5923 = vmatprep.subr.mxu0 0.0
  %5924 = vmatpush1.msra.mxu0 0.0
  %5925 = vmatprep.subr.mxu0 0.0
  %5926 = vmatpush1.msra.mxu0 0.0
  %5927 = vmatprep.subr.mxu0 0.0
  %5928 = vmatpush1.msra.mxu0 0.0
  %5929 = vmatprep.subr.mxu0 0.0
  %5930 = vmatpush1.msra.mxu0 0.0
  %5931 = vmatprep.subr.mxu0 0.0
  %5932 = vmatpush1.msra.mxu0 0.0
  %5933 = vmatprep.subr.mxu0 0.0
  %5934 = vmatpush1.msra.mxu0 0.0
  %5935 = vmatprep.subr.mxu0 0.0
  %5936 = vmatpush1.msra.mxu0 0.0
  %5937 = vmatprep.subr.mxu0 0.0
  %5938 = vmatpush1.msra.mxu0 0.0
  %5939 = vmatprep.subr.mxu0 0.0
  %5940 = vmatpush1.msra.mxu0 0.0
  %5941 = vmatprep.subr.mxu0 0.0
  %5942 = vmatpush1.msra.mxu0 0.0
  %5943 = vmatprep.subr.mxu0 0.0
  %5944 = vmatpush1.msra.mxu0 0.0
  %5945 = vmatprep.subr.mxu0 0.0
  %5946 = vmatpush1.msra.mxu0 0.0
  %5947 = vmatprep.subr.mxu0 0.0
  %5948 = vmatpush1.msra.mxu0 0.0
  %5949 = vmatprep.subr.mxu0 0.0
  %5950 = vmatpush1.msra.mxu0 0.0
  %5951 = vmatprep.subr.mxu0 0.0
  %5952 = vmatpush1.msra.mxu0 0.0
  %5953 = vmatprep.subr.mxu0 0.0
  %5954 = vmatpush1.msra.mxu0 0.0
  %5955 = vmatprep.subr.mxu0 0.0
  %5956 = vmatpush1.msra.mxu0 0.0
  %5957 = vmatprep.subr.mxu0 0.0
  %5958 = vmatpush1.msra.mxu0 0.0
  %5959 = vmatprep.subr.mxu0 0.0
  %5960 = vmatpush1.msra.mxu0 0.0
  %5961 = vmatprep.subr.mxu0 0.0
  %5962 = vmatpush1.msra.mxu0 0.0
  %5963 = vmatprep.subr.mxu0 0.0
  %5964 = vmatpush1.msra.mxu0 0.0
  %5965 = vmatprep.subr.mxu0 0.0
  %5966 = vmatpush1.msra.mxu0 0.0
  %5967 = vmatprep.subr.mxu0 0.0
  %5968 = vmatpush1.msra.mxu0 0.0
  %5969 = vmatprep.subr.mxu0 0.0
  %5970 = vmatpush1.msra.mxu0 0.0
  %5971 = vmatprep.mubr.f32.mxu0 0.0
  %5972 = vmatmul.mubr.f32.gmra.mrb[0].mxu0 %v5898
  %v5973 = vpop.f32.mrb[0].mxu0
  %v5974 = vadd.f32 %v5894, %v5973
  %v5975 = vpop.f32.mrb[0].mxu0
  %5976 = vmatprep.mubr.f32.mxu0 0.0
  %5977 = vmatmul.mubr.f32.gmra.mrb[0].mxu0 %v5901
  %v5978 = vpop.f32.mrb[0].mxu0
  %v5979 = vadd.f32 %v5895, %v5978
  %v5980 = vpop.f32.mrb[0].mxu0
  %5981 = vdwg.mxu0
  %v5982 = vmax.f32 %v5974, 0.0
  %v5983 = vmax.f32 %v5979, 0.0
  %vm5984 = vcmask 7168
  %5985 = vst.msk [vmem:[%s13] sm:$0xff] %vm5984, %v5982
  %vm5986 = vcmask 1024
  %5987 = vst.msk [vmem:[%s13 + $0x8] sm:$0x3] %vm5986, %v5983
  %s5988 = scalar_lea.vmem %s0, 32
  %v5989 = vld [vmem:[%s5988] sm:$0xff]
  %v5990 = vld [vmem:[%s5988 + $0x8] sm:$0xff]
  %v5991 = vld [vmem:[%s5988 + $0x10] sm:$0xff]
  %v5992 = vld [vmem:[%s5988 + $0x18] sm:$0xff]
  %v5993 = vld [vmem:[%s2] sm:$0xff]
  %v5994 = vld [vmem:[%s2 + $0x8] sm:$0xff]
  %v5995 = vld [vmem:[%s2 + $0x10] sm:$0xff]
  %v5996 = vld [vmem:[%s2 + $0x18] sm:$0xff]
  %v5997 = vld [vmem:[%s2 + $0x20] sm:$0xff]
  %v5998 = vld [vmem:[%s2 + $0x28] sm:$0xff]
  %v5999 = vld [vmem:[%s2 + $0x30] sm:$0xff]
  %v6000 = vld [vmem:[%s2 + $0x38] sm:$0xff]
  %v6001 = vld [vmem:[%s2 + $0x40] sm:$0xff]
  %v6002 = vld [vmem:[%s2 + $0x48] sm:$0xff]
  %v6003 = vld [vmem:[%s2 + $0x50] sm:$0xff]
  %v6004 = vld [vmem:[%s2 + $0x58] sm:$0xff]
  %v6005 = vld [vmem:[%s2 + $0x60] sm:$0xff]
  %v6006 = vld [vmem:[%s2 + $0x68] sm:$0xff]
  %v6007 = vld [vmem:[%s2 + $0x70] sm:$0xff]
  %v6008 = vld [vmem:[%s2 + $0x78] sm:$0xff]
  %v6009 = vld [vmem:[%s2 + $0x80] sm:$0xff]
  %v6010 = vld [vmem:[%s2 + $0x88] sm:$0xff]
  %v6011 = vld [vmem:[%s2 + $0x90] sm:$0xff]
  %v6012 = vld [vmem:[%s2 + $0x98] sm:$0xff]
  %v6013 = vld [vmem:[%s2 + $0xa0] sm:$0xff]
  %v6014 = vld [vmem:[%s2 + $0xa8] sm:$0xff]
  %v6015 = vld [vmem:[%s2 + $0xb0] sm:$0xff]
  %v6016 = vld [vmem:[%s2 + $0xb8] sm:$0xff]
  %v6017 = vld [vmem:[%s2 + $0xc0] sm:$0xff]
  %v6018 = vld [vmem:[%s2 + $0xc8] sm:$0xff]
  %v6019 = vld [vmem:[%s2 + $0xd0] sm:$0xff]
  %v6020 = vld [vmem:[%s2 + $0xd8] sm:$0xff]
  %v6021 = vld [vmem:[%s2 + $0xe0] sm:$0xff]
  %v6022 = vld [vmem:[%s2 + $0xe8] sm:$0xff]
  %v6023 = vld [vmem:[%s1] sm:$0xff]
  %v6024 = vld [vmem:[%s1 + $0x8] sm:$0xff]
  %v6025 = vld [vmem:[%s1 + $0x10] sm:$0xff]
  %v6026 = vld [vmem:[%s1 + $0x18] sm:$0xff]
  %v6027 = vld [vmem:[%s1 + $0x20] sm:$0xff]
  %v6028 = vld [vmem:[%s1 + $0x28] sm:$0xff]
  %v6029 = vld [vmem:[%s1 + $0x30] sm:$0xff]
  %v6030 = vld [vmem:[%s1 + $0x38] sm:$0xff]
  %v6031 = vld [vmem:[%s1 + $0x40] sm:$0xff]
  %v6032 = vld [vmem:[%s1 + $0x48] sm:$0xff]
  %v6033 = vld [vmem:[%s1 + $0x50] sm:$0xff]
  %v6034 = vld [vmem:[%s1 + $0x58] sm:$0xff]
  %v6035 = vld [vmem:[%s1 + $0x60] sm:$0xff]
  %v6036 = vld [vmem:[%s1 + $0x68] sm:$0xff]
  %v6037 = vld [vmem:[%s1 + $0x70] sm:$0xff]
  %v6038 = vld [vmem:[%s1 + $0x78] sm:$0xff]
  %v6039 = vld [vmem:[%s1 + $0x80] sm:$0xff]
  %v6040 = vld [vmem:[%s1 + $0x88] sm:$0xff]
  %v6041 = vld [vmem:[%s1 + $0x90] sm:$0xff]
  %v6042 = vld [vmem:[%s1 + $0x98] sm:$0xff]
  %v6043 = vld [vmem:[%s1 + $0xa0] sm:$0xff]
  %v6044 = vld [vmem:[%s1 + $0xa8] sm:$0xff]
  %v6045 = vld [vmem:[%s1 + $0xb0] sm:$0xff]
  %v6046 = vld [vmem:[%s1 + $0xb8] sm:$0xff]
  %v6047 = vld [vmem:[%s1 + $0xc0] sm:$0xff]
  %v6048 = vld [vmem:[%s1 + $0xc8] sm:$0xff]
  %v6049 = vld [vmem:[%s1 + $0xd0] sm:$0xff]
  %v6050 = vld [vmem:[%s1 + $0xd8] sm:$0xff]
  %v6051 = vld [vmem:[%s1 + $0xe0] sm:$0xff]
  %v6052 = vld [vmem:[%s1 + $0xe8] sm:$0xff]
  %v6054 = vsel %vm108, %v6023, 0
  %v6057 = vsel %vm108, %v6024, 0
  %v6060 = vsel %vm108, %v6025, 0
  %v6063 = vsel %vm108, %v6026, 0
  %v6066 = vsel %vm108, %v6027, 0
  %v6069 = vsel %vm108, %v6028, 0
  %v6072 = vsel %vm108, %v6029, 0
  %v6075 = vsel %vm108, %v6030, 0
  %v6078 = vsel %vm108, %v6031, 0
  %v6081 = vsel %vm108, %v6032, 0
  %v6084 = vsel %vm108, %v6033, 0
  %v6087 = vsel %vm108, %v6034, 0
  %v6090 = vsel %vm108, %v6035, 0
  %v6093 = vsel %vm108, %v6036, 0
  %v6096 = vsel %vm108, %v6037, 0
  %v6099 = vsel %vm108, %v6038, 0
  %v6102 = vsel %vm108, %v6039, 0
  %v6105 = vsel %vm108, %v6040, 0
  %v6108 = vsel %vm108, %v6041, 0
  %v6111 = vsel %vm108, %v6042, 0
  %v6114 = vsel %vm108, %v6043, 0
  %v6117 = vsel %vm108, %v6044, 0
  %v6120 = vsel %vm108, %v6045, 0
  %v6123 = vsel %vm108, %v6046, 0
  %v6126 = vsel %vm108, %v6047, 0
  %v6129 = vsel %vm108, %v6048, 0
  %v6132 = vsel %vm108, %v6049, 0
  %v6135 = vsel %vm108, %v6050, 0
  %v6138 = vsel %vm108, %v6051, 0
  %v6141 = vsel %vm108, %v6052, 0
  %6143 = vmatprep.subr.mxu0 0.0
  %6144 = vmatpush1.msra.mxu0 %v5989
  %6145 = vmatprep.subr.mxu0 0.0
  %6146 = vmatpush1.msra.mxu0 %v5990
  %6147 = vmatprep.subr.mxu0 0.0
  %6148 = vmatpush1.msra.mxu0 %v5991
  %6149 = vmatprep.subr.mxu0 0.0
  %6150 = vmatpush1.msra.mxu0 %v5992
  %6151 = vmatprep.subr.mxu0 0.0
  %6152 = vmatpush1.msra.mxu0 0.0
  %6153 = vmatprep.subr.mxu0 0.0
  %6154 = vmatpush1.msra.mxu0 0.0
  %6155 = vmatprep.subr.mxu0 0.0
  %6156 = vmatpush1.msra.mxu0 0.0
  %6157 = vmatprep.subr.mxu0 0.0
  %6158 = vmatpush1.msra.mxu0 0.0
  %6159 = vmatprep.subr.mxu0 0.0
  %6160 = vmatpush1.msra.mxu0 0.0
  %6161 = vmatprep.subr.mxu0 0.0
  %6162 = vmatpush1.msra.mxu0 0.0
  %6163 = vmatprep.subr.mxu0 0.0
  %6164 = vmatpush1.msra.mxu0 0.0
  %6165 = vmatprep.subr.mxu0 0.0
  %6166 = vmatpush1.msra.mxu0 0.0
  %6167 = vmatprep.subr.mxu0 0.0
  %6168 = vmatpush1.msra.mxu0 0.0
  %6169 = vmatprep.subr.mxu0 0.0
  %6170 = vmatpush1.msra.mxu0 0.0
  %6171 = vmatprep.subr.mxu0 0.0
  %6172 = vmatpush1.msra.mxu0 0.0
  %6173 = vmatprep.subr.mxu0 0.0
  %6174 = vmatpush1.msra.mxu0 0.0
  %6175 = vmatprep.subr.mxu0 0.0
  %6176 = vmatpush1.msra.mxu0 0.0
  %6177 = vmatprep.subr.mxu0 0.0
  %6178 = vmatpush1.msra.mxu0 0.0
  %6179 = vmatprep.subr.mxu0 0.0
  %6180 = vmatpush1.msra.mxu0 0.0
  %6181 = vmatprep.subr.mxu0 0.0
  %6182 = vmatpush1.msra.mxu0 0.0
  %6183 = vmatprep.subr.mxu0 0.0
  %6184 = vmatpush1.msra.mxu0 0.0
  %6185 = vmatprep.subr.mxu0 0.0
  %6186 = vmatpush1.msra.mxu0 0.0
  %6187 = vmatprep.subr.mxu0 0.0
  %6188 = vmatpush1.msra.mxu0 0.0
  %6189 = vmatprep.subr.mxu0 0.0
  %6190 = vmatpush1.msra.mxu0 0.0
  %6191 = vmatprep.subr.mxu0 0.0
  %6192 = vmatpush1.msra.mxu0 0.0
  %6193 = vmatprep.subr.mxu0 0.0
  %6194 = vmatpush1.msra.mxu0 0.0
  %6195 = vmatprep.subr.mxu0 0.0
  %6196 = vmatpush1.msra.mxu0 0.0
  %6197 = vmatprep.subr.mxu0 0.0
  %6198 = vmatpush1.msra.mxu0 0.0
  %6199 = vmatprep.subr.mxu0 0.0
  %6200 = vmatpush1.msra.mxu0 0.0
  %6201 = vmatprep.subr.mxu0 0.0
  %6202 = vmatpush1.msra.mxu0 0.0
  %6203 = vmatprep.subr.mxu0 0.0
  %6204 = vmatpush1.msra.mxu0 0.0
  %6205 = vmatprep.subr.mxu0 0.0
  %6206 = vmatpush1.msra.mxu0 0.0
  %6207 = vmatprep.mubr.f32.mxu0 0.0
  %6208 = vmatmul.mubr.f32.gmra.mrb[0].mxu0 %v6054
  %v6209 = vpop.f32.mrb[0].mxu0
  %v6210 = vadd.f32 0.0, %v6209
  %v6211 = vpop.f32.mrb[0].mxu0
  %6212 = vmatprep.mubr.f32.mxu0 0.0
  %6213 = vmatmul.mubr.f32.gmra.mrb[0].mxu0 %v6057
  %v6214 = vpop.f32.mrb[0].mxu0
  %v6215 = vadd.f32 0.0, %v6214
  %v6216 = vpop.f32.mrb[0].mxu0
  %6217 = vmatprep.mubr.f32.mxu0 0.0
  %6218 = vmatmul.mubr.f32.gmra.mrb[0].mxu0 %v6060
  %v6219 = vpop.f32.mrb[0].mxu0
  %v6220 = vadd.f32 0.0, %v6219
  %v6221 = vpop.f32.mrb[0].mxu0
  %6222 = vmatprep.mubr.f32.mxu0 0.0
  %6223 = vmatmul.mubr.f32.gmra.mrb[0].mxu0 %v6063
  %v6224 = vpop.f32.mrb[0].mxu0
  %v6225 = vadd.f32 0.0, %v6224
  %v6226 = vpop.f32.mrb[0].mxu0
  %6227 = vmatprep.mubr.f32.mxu0 0.0
  %6228 = vmatmul.mubr.f32.gmra.mrb[0].mxu0 %v6066
  %v6229 = vpop.f32.mrb[0].mxu0
  %v6230 = vadd.f32 0.0, %v6229
  %v6231 = vpop.f32.mrb[0].mxu0
  %6232 = vmatprep.mubr.f32.mxu0 0.0
  %6233 = vmatmul.mubr.f32.gmra.mrb[0].mxu0 %v6069
  %v6234 = vpop.f32.mrb[0].mxu0
  %v6235 = vadd.f32 0.0, %v6234
  %v6236 = vpop.f32.mrb[0].mxu0
  %6237 = vmatprep.mubr.f32.mxu0 0.0
  %6238 = vmatmul.mubr.f32.gmra.mrb[0].mxu0 %v6072
  %v6239 = vpop.f32.mrb[0].mxu0
  %v6240 = vadd.f32 0.0, %v6239
  %v6241 = vpop.f32.mrb[0].mxu0
  %6242 = vmatprep.mubr.f32.mxu0 0.0
  %6243 = vmatmul.mubr.f32.gmra.mrb[0].mxu0 %v6075
  %v6244 = vpop.f32.mrb[0].mxu0
  %v6245 = vadd.f32 0.0, %v6244
  %v6246 = vpop.f32.mrb[0].mxu0
  %6247 = vmatprep.mubr.f32.mxu0 0.0
  %6248 = vmatmul.mubr.f32.gmra.mrb[0].mxu0 %v6078
  %v6249 = vpop.f32.mrb[0].mxu0
  %v6250 = vadd.f32 0.0, %v6249
  %v6251 = vpop.f32.mrb[0].mxu0
  %6252 = vmatprep.mubr.f32.mxu0 0.0
  %6253 = vmatmul.mubr.f32.gmra.mrb[0].mxu0 %v6081
  %v6254 = vpop.f32.mrb[0].mxu0
  %v6255 = vadd.f32 0.0, %v6254
  %v6256 = vpop.f32.mrb[0].mxu0
  %6257 = vmatprep.mubr.f32.mxu0 0.0
  %6258 = vmatmul.mubr.f32.gmra.mrb[0].mxu0 %v6084
  %v6259 = vpop.f32.mrb[0].mxu0
  %v6260 = vadd.f32 0.0, %v6259
  %v6261 = vpop.f32.mrb[0].mxu0
  %6262 = vmatprep.mubr.f32.mxu0 0.0
  %6263 = vmatmul.mubr.f32.gmra.mrb[0].mxu0 %v6087
  %v6264 = vpop.f32.mrb[0].mxu0
  %v6265 = vadd.f32 0.0, %v6264
  %v6266 = vpop.f32.mrb[0].mxu0
  %6267 = vmatprep.mubr.f32.mxu0 0.0
  %6268 = vmatmul.mubr.f32.gmra.mrb[0].mxu0 %v6090
  %v6269 = vpop.f32.mrb[0].mxu0
  %v6270 = vadd.f32 0.0, %v6269
  %v6271 = vpop.f32.mrb[0].mxu0
  %6272 = vmatprep.mubr.f32.mxu0 0.0
  %6273 = vmatmul.mubr.f32.gmra.mrb[0].mxu0 %v6093
  %v6274 = vpop.f32.mrb[0].mxu0
  %v6275 = vadd.f32 0.0, %v6274
  %v6276 = vpop.f32.mrb[0].mxu0
  %6277 = vmatprep.mubr.f32.mxu0 0.0
  %6278 = vmatmul.mubr.f32.gmra.mrb[0].mxu0 %v6096
  %v6279 = vpop.f32.mrb[0].mxu0
  %v6280 = vadd.f32 0.0, %v6279
  %v6281 = vpop.f32.mrb[0].mxu0
  %6282 = vmatprep.mubr.f32.mxu0 0.0
  %6283 = vmatmul.mubr.f32.gmra.mrb[0].mxu0 %v6099
  %v6284 = vpop.f32.mrb[0].mxu0
  %v6285 = vadd.f32 0.0, %v6284
  %v6286 = vpop.f32.mrb[0].mxu0
  %6287 = vmatprep.mubr.f32.mxu0 0.0
  %6288 = vmatmul.mubr.f32.gmra.mrb[0].mxu0 %v6102
  %v6289 = vpop.f32.mrb[0].mxu0
  %v6290 = vadd.f32 0.0, %v6289
  %v6291 = vpop.f32.mrb[0].mxu0
  %6292 = vmatprep.mubr.f32.mxu0 0.0
  %6293 = vmatmul.mubr.f32.gmra.mrb[0].mxu0 %v6105
  %v6294 = vpop.f32.mrb[0].mxu0
  %v6295 = vadd.f32 0.0, %v6294
  %v6296 = vpop.f32.mrb[0].mxu0
  %6297 = vmatprep.mubr.f32.mxu0 0.0
  %6298 = vmatmul.mubr.f32.gmra.mrb[0].mxu0 %v6108
  %v6299 = vpop.f32.mrb[0].mxu0
  %v6300 = vadd.f32 0.0, %v6299
  %v6301 = vpop.f32.mrb[0].mxu0
  %6302 = vmatprep.mubr.f32.mxu0 0.0
  %6303 = vmatmul.mubr.f32.gmra.mrb[0].mxu0 %v6111
  %v6304 = vpop.f32.mrb[0].mxu0
  %v6305 = vadd.f32 0.0, %v6304
  %v6306 = vpop.f32.mrb[0].mxu0
  %6307 = vmatprep.mubr.f32.mxu0 0.0
  %6308 = vmatmul.mubr.f32.gmra.mrb[0].mxu0 %v6114
  %v6309 = vpop.f32.mrb[0].mxu0
  %v6310 = vadd.f32 0.0, %v6309
  %v6311 = vpop.f32.mrb[0].mxu0
  %6312 = vmatprep.mubr.f32.mxu0 0.0
  %6313 = vmatmul.mubr.f32.gmra.mrb[0].mxu0 %v6117
  %v6314 = vpop.f32.mrb[0].mxu0
  %v6315 = vadd.f32 0.0, %v6314
  %v6316 = vpop.f32.mrb[0].mxu0
  %6317 = vmatprep.mubr.f32.mxu0 0.0
  %6318 = vmatmul.mubr.f32.gmra.mrb[0].mxu0 %v6120
  %v6319 = vpop.f32.mrb[0].mxu0
  %v6320 = vadd.f32 0.0, %v6319
  %v6321 = vpop.f32.mrb[0].mxu0
  %6322 = vmatprep.mubr.f32.mxu0 0.0
  %6323 = vmatmul.mubr.f32.gmra.mrb[0].mxu0 %v6123
  %v6324 = vpop.f32.mrb[0].mxu0
  %v6325 = vadd.f32 0.0, %v6324
  %v6326 = vpop.f32.mrb[0].mxu0
  %6327 = vmatprep.mubr.f32.mxu0 0.0
  %6328 = vmatmul.mubr.f32.gmra.mrb[0].mxu0 %v6126
  %v6329 = vpop.f32.mrb[0].mxu0
  %v6330 = vadd.f32 0.0, %v6329
  %v6331 = vpop.f32.mrb[0].mxu0
  %6332 = vmatprep.mubr.f32.mxu0 0.0
  %6333 = vmatmul.mubr.f32.gmra.mrb[0].mxu0 %v6129
  %v6334 = vpop.f32.mrb[0].mxu0
  %v6335 = vadd.f32 0.0, %v6334
  %v6336 = vpop.f32.mrb[0].mxu0
  %6337 = vmatprep.mubr.f32.mxu0 0.0
  %6338 = vmatmul.mubr.f32.gmra.mrb[0].mxu0 %v6132
  %v6339 = vpop.f32.mrb[0].mxu0
  %v6340 = vadd.f32 0.0, %v6339
  %v6341 = vpop.f32.mrb[0].mxu0
  %6342 = vmatprep.mubr.f32.mxu0 0.0
  %6343 = vmatmul.mubr.f32.gmra.mrb[0].mxu0 %v6135
  %v6344 = vpop.f32.mrb[0].mxu0
  %v6345 = vadd.f32 0.0, %v6344
  %v6346 = vpop.f32.mrb[0].mxu0
  %6347 = vmatprep.mubr.f32.mxu0 0.0
  %6348 = vmatmul.mubr.f32.gmra.mrb[0].mxu0 %v6138
  %v6349 = vpop.f32.mrb[0].mxu0
  %v6350 = vadd.f32 0.0, %v6349
  %v6351 = vpop.f32.mrb[0].mxu0
  %6352 = vmatprep.mubr.f32.mxu0 0.0
  %6353 = vmatmul.mubr.f32.gmra.mrb[0].mxu0 %v6141
  %v6354 = vpop.f32.mrb[0].mxu0
  %v6355 = vadd.f32 0.0, %v6354
  %v6356 = vpop.f32.mrb[0].mxu0
  %6357 = vdwg.mxu0
  %6359 = vset.pattern.permute.xlu0 0
  %6360 = vperm.xlu0 %6359, %v5993
  %v6361 = vpop.permute.xlu0 %6360
  %6364 = vset.pattern.permute.xlu0 0
  %6365 = vperm.xlu0 %6364, %v5994
  %v6366 = vpop.permute.xlu0 %6365
  %6369 = vset.pattern.permute.xlu0 0
  %6370 = vperm.xlu0 %6369, %v5995
  %v6371 = vpop.permute.xlu0 %6370
  %6374 = vset.pattern.permute.xlu0 0
  %6375 = vperm.xlu0 %6374, %v5996
  %v6376 = vpop.permute.xlu0 %6375
  %6379 = vset.pattern.permute.xlu0 0
  %6380 = vperm.xlu0 %6379, %v5997
  %v6381 = vpop.permute.xlu0 %6380
  %6384 = vset.pattern.permute.xlu0 0
  %6385 = vperm.xlu0 %6384, %v5998
  %v6386 = vpop.permute.xlu0 %6385
  %6389 = vset.pattern.permute.xlu0 0
  %6390 = vperm.xlu0 %6389, %v5999
  %v6391 = vpop.permute.xlu0 %6390
  %6394 = vset.pattern.permute.xlu0 0
  %6395 = vperm.xlu0 %6394, %v6000
  %v6396 = vpop.permute.xlu0 %6395
  %6399 = vset.pattern.permute.xlu0 0
  %6400 = vperm.xlu0 %6399, %v6001
  %v6401 = vpop.permute.xlu0 %6400
  %6404 = vset.pattern.permute.xlu0 0
  %6405 = vperm.xlu0 %6404, %v6002
  %v6406 = vpop.permute.xlu0 %6405
  %6409 = vset.pattern.permute.xlu0 0
  %6410 = vperm.xlu0 %6409, %v6003
  %v6411 = vpop.permute.xlu0 %6410
  %6414 = vset.pattern.permute.xlu0 0
  %6415 = vperm.xlu0 %6414, %v6004
  %v6416 = vpop.permute.xlu0 %6415
  %6419 = vset.pattern.permute.xlu0 0
  %6420 = vperm.xlu0 %6419, %v6005
  %v6421 = vpop.permute.xlu0 %6420
  %6424 = vset.pattern.permute.xlu0 0
  %6425 = vperm.xlu0 %6424, %v6006
  %v6426 = vpop.permute.xlu0 %6425
  %6429 = vset.pattern.permute.xlu0 0
  %6430 = vperm.xlu0 %6429, %v6007
  %v6431 = vpop.permute.xlu0 %6430
  %6434 = vset.pattern.permute.xlu0 0
  %6435 = vperm.xlu0 %6434, %v6008
  %v6436 = vpop.permute.xlu0 %6435
  %6439 = vset.pattern.permute.xlu0 0
  %6440 = vperm.xlu0 %6439, %v6009
  %v6441 = vpop.permute.xlu0 %6440
  %6444 = vset.pattern.permute.xlu0 0
  %6445 = vperm.xlu0 %6444, %v6010
  %v6446 = vpop.permute.xlu0 %6445
  %6449 = vset.pattern.permute.xlu0 0
  %6450 = vperm.xlu0 %6449, %v6011
  %v6451 = vpop.permute.xlu0 %6450
  %6454 = vset.pattern.permute.xlu0 0
  %6455 = vperm.xlu0 %6454, %v6012
  %v6456 = vpop.permute.xlu0 %6455
  %6459 = vset.pattern.permute.xlu0 0
  %6460 = vperm.xlu0 %6459, %v6013
  %v6461 = vpop.permute.xlu0 %6460
  %6464 = vset.pattern.permute.xlu0 0
  %6465 = vperm.xlu0 %6464, %v6014
  %v6466 = vpop.permute.xlu0 %6465
  %6469 = vset.pattern.permute.xlu0 0
  %6470 = vperm.xlu0 %6469, %v6015
  %v6471 = vpop.permute.xlu0 %6470
  %6474 = vset.pattern.permute.xlu0 0
  %6475 = vperm.xlu0 %6474, %v6016
  %v6476 = vpop.permute.xlu0 %6475
  %6479 = vset.pattern.permute.xlu0 0
  %6480 = vperm.xlu0 %6479, %v6017
  %v6481 = vpop.permute.xlu0 %6480
  %6484 = vset.pattern.permute.xlu0 0
  %6485 = vperm.xlu0 %6484, %v6018
  %v6486 = vpop.permute.xlu0 %6485
  %6489 = vset.pattern.permute.xlu0 0
  %6490 = vperm.xlu0 %6489, %v6019
  %v6491 = vpop.permute.xlu0 %6490
  %6494 = vset.pattern.permute.xlu0 0
  %6495 = vperm.xlu0 %6494, %v6020
  %v6496 = vpop.permute.xlu0 %6495
  %6499 = vset.pattern.permute.xlu0 0
  %6500 = vperm.xlu0 %6499, %v6021
  %v6501 = vpop.permute.xlu0 %6500
  %6504 = vset.pattern.permute.xlu0 0
  %6505 = vperm.xlu0 %6504, %v6022
  %v6506 = vpop.permute.xlu0 %6505
  %v6508 = vadd.f32 %v6361, %v6210
  %v6509 = vadd.f32 %v6366, %v6215
  %v6510 = vadd.f32 %v6371, %v6220
  %v6511 = vadd.f32 %v6376, %v6225
  %v6512 = vadd.f32 %v6381, %v6230
  %v6513 = vadd.f32 %v6386, %v6235
  %v6514 = vadd.f32 %v6391, %v6240
  %v6515 = vadd.f32 %v6396, %v6245
  %v6516 = vadd.f32 %v6401, %v6250
  %v6517 = vadd.f32 %v6406, %v6255
  %v6518 = vadd.f32 %v6411, %v6260
  %v6519 = vadd.f32 %v6416, %v6265
  %v6520 = vadd.f32 %v6421, %v6270
  %v6521 = vadd.f32 %v6426, %v6275
  %v6522 = vadd.f32 %v6431, %v6280
  %v6523 = vadd.f32 %v6436, %v6285
  %v6524 = vadd.f32 %v6441, %v6290
  %v6525 = vadd.f32 %v6446, %v6295
  %v6526 = vadd.f32 %v6451, %v6300
  %v6527 = vadd.f32 %v6456, %v6305
  %v6528 = vadd.f32 %v6461, %v6310
  %v6529 = vadd.f32 %v6466, %v6315
  %v6530 = vadd.f32 %v6471, %v6320
  %v6531 = vadd.f32 %v6476, %v6325
  %v6532 = vadd.f32 %v6481, %v6330
  %v6533 = vadd.f32 %v6486, %v6335
  %v6534 = vadd.f32 %v6491, %v6340
  %v6535 = vadd.f32 %v6496, %v6345
  %v6536 = vadd.f32 %v6501, %v6350
  %v6537 = vadd.f32 %v6506, %v6355
  %v6538 = vld [vmem:[%s594] sm:$0xff]
  %v6539 = vld [vmem:[%s594 + $0x8] sm:$0xff]
  %v6540 = vld [vmem:[%s594 + $0x10] sm:$0xff]
  %v6541 = vld [vmem:[%s594 + $0x18] sm:$0xff]
  %v6542 = vld [vmem:[%s594 + $0x20] sm:$0xff]
  %v6543 = vld [vmem:[%s594 + $0x28] sm:$0xff]
  %v6544 = vld [vmem:[%s594 + $0x30] sm:$0xff]
  %v6545 = vld [vmem:[%s594 + $0x38] sm:$0xff]
  %v6546 = vld [vmem:[%s594 + $0x40] sm:$0xff]
  %v6547 = vld [vmem:[%s594 + $0x48] sm:$0xff]
  %v6548 = vld [vmem:[%s594 + $0x50] sm:$0xff]
  %v6549 = vld [vmem:[%s594 + $0x58] sm:$0xff]
  %v6550 = vld [vmem:[%s594 + $0x60] sm:$0xff]
  %v6551 = vld [vmem:[%s594 + $0x68] sm:$0xff]
  %v6552 = vld [vmem:[%s594 + $0x70] sm:$0xff]
  %v6553 = vld [vmem:[%s594 + $0x78] sm:$0xff]
  %v6554 = vld [vmem:[%s594 + $0x80] sm:$0xff]
  %v6555 = vld [vmem:[%s594 + $0x88] sm:$0xff]
  %v6556 = vld [vmem:[%s594 + $0x90] sm:$0xff]
  %v6557 = vld [vmem:[%s594 + $0x98] sm:$0xff]
  %v6558 = vld [vmem:[%s594 + $0xa0] sm:$0xff]
  %v6559 = vld [vmem:[%s594 + $0xa8] sm:$0xff]
  %v6560 = vld [vmem:[%s594 + $0xb0] sm:$0xff]
  %v6561 = vld [vmem:[%s594 + $0xb8] sm:$0xff]
  %v6562 = vld [vmem:[%s594 + $0xc0] sm:$0xff]
  %v6563 = vld [vmem:[%s594 + $0xc8] sm:$0xff]
  %v6564 = vld [vmem:[%s594 + $0xd0] sm:$0xff]
  %v6565 = vld [vmem:[%s594 + $0xd8] sm:$0xff]
  %v6566 = vld [vmem:[%s594 + $0xe0] sm:$0xff]
  %v6567 = vld [vmem:[%s594 + $0xe8] sm:$0xff]
  %6572 = vrot.lane.b32.xlu0 %v5989, 127
  %v6573 = vpop.permute.xlu0 %6572
  %6574 = vrot.lane.b32.xlu0 %v5990, 127
  %v6575 = vpop.permute.xlu0 %6574
  %6576 = vrot.lane.b32.xlu0 %v5991, 127
  %v6577 = vpop.permute.xlu0 %6576
  %6578 = vrot.lane.b32.xlu0 %v5992, 127
  %v6579 = vpop.permute.xlu0 %6578
  %v6585 = vsel %vm108, %v6538, 0
  %v6588 = vsel %vm108, %v6539, 0
  %v6591 = vsel %vm108, %v6540, 0
  %v6594 = vsel %vm108, %v6541, 0
  %v6597 = vsel %vm108, %v6542, 0
  %v6600 = vsel %vm108, %v6543, 0
  %v6603 = vsel %vm108, %v6544, 0
  %v6606 = vsel %vm108, %v6545, 0
  %v6609 = vsel %vm108, %v6546, 0
  %v6612 = vsel %vm108, %v6547, 0
  %v6615 = vsel %vm108, %v6548, 0
  %v6618 = vsel %vm108, %v6549, 0
  %v6621 = vsel %vm108, %v6550, 0
  %v6624 = vsel %vm108, %v6551, 0
  %v6627 = vsel %vm108, %v6552, 0
  %v6630 = vsel %vm108, %v6553, 0
  %v6633 = vsel %vm108, %v6554, 0
  %v6636 = vsel %vm108, %v6555, 0
  %v6639 = vsel %vm108, %v6556, 0
  %v6642 = vsel %vm108, %v6557, 0
  %v6645 = vsel %vm108, %v6558, 0
  %v6648 = vsel %vm108, %v6559, 0
  %v6651 = vsel %vm108, %v6560, 0
  %v6654 = vsel %vm108, %v6561, 0
  %v6657 = vsel %vm108, %v6562, 0
  %v6660 = vsel %vm108, %v6563, 0
  %v6663 = vsel %vm108, %v6564, 0
  %v6666 = vsel %vm108, %v6565, 0
  %v6669 = vsel %vm108, %v6566, 0
  %v6672 = vsel %vm108, %v6567, 0
  %6674 = vmatprep.subr.mxu0 0.0
  %6675 = vmatpush1.msra.mxu0 %v6573
  %6676 = vmatprep.subr.mxu0 0.0
  %6677 = vmatpush1.msra.mxu0 %v6575
  %6678 = vmatprep.subr.mxu0 0.0
  %6679 = vmatpush1.msra.mxu0 %v6577
  %6680 = vmatprep.subr.mxu0 0.0
  %6681 = vmatpush1.msra.mxu0 %v6579
  %6682 = vmatprep.subr.mxu0 0.0
  %6683 = vmatpush1.msra.mxu0 0.0
  %6684 = vmatprep.subr.mxu0 0.0
  %6685 = vmatpush1.msra.mxu0 0.0
  %6686 = vmatprep.subr.mxu0 0.0
  %6687 = vmatpush1.msra.mxu0 0.0
  %6688 = vmatprep.subr.mxu0 0.0
  %6689 = vmatpush1.msra.mxu0 0.0
  %6690 = vmatprep.subr.mxu0 0.0
  %6691 = vmatpush1.msra.mxu0 0.0
  %6692 = vmatprep.subr.mxu0 0.0
  %6693 = vmatpush1.msra.mxu0 0.0
  %6694 = vmatprep.subr.mxu0 0.0
  %6695 = vmatpush1.msra.mxu0 0.0
  %6696 = vmatprep.subr.mxu0 0.0
  %6697 = vmatpush1.msra.mxu0 0.0
  %6698 = vmatprep.subr.mxu0 0.0
  %6699 = vmatpush1.msra.mxu0 0.0
  %6700 = vmatprep.subr.mxu0 0.0
  %6701 = vmatpush1.msra.mxu0 0.0
  %6702 = vmatprep.subr.mxu0 0.0
  %6703 = vmatpush1.msra.mxu0 0.0
  %6704 = vmatprep.subr.mxu0 0.0
  %6705 = vmatpush1.msra.mxu0 0.0
  %6706 = vmatprep.subr.mxu0 0.0
  %6707 = vmatpush1.msra.mxu0 0.0
  %6708 = vmatprep.subr.mxu0 0.0
  %6709 = vmatpush1.msra.mxu0 0.0
  %6710 = vmatprep.subr.mxu0 0.0
  %6711 = vmatpush1.msra.mxu0 0.0
  %6712 = vmatprep.subr.mxu0 0.0
  %6713 = vmatpush1.msra.mxu0 0.0
  %6714 = vmatprep.subr.mxu0 0.0
  %6715 = vmatpush1.msra.mxu0 0.0
  %6716 = vmatprep.subr.mxu0 0.0
  %6717 = vmatpush1.msra.mxu0 0.0
  %6718 = vmatprep.subr.mxu0 0.0
  %6719 = vmatpush1.msra.mxu0 0.0
  %6720 = vmatprep.subr.mxu0 0.0
  %6721 = vmatpush1.msra.mxu0 0.0
  %6722 = vmatprep.subr.mxu0 0.0
  %6723 = vmatpush1.msra.mxu0 0.0
  %6724 = vmatprep.subr.mxu0 0.0
  %6725 = vmatpush1.msra.mxu0 0.0
  %6726 = vmatprep.subr.mxu0 0.0
  %6727 = vmatpush1.msra.mxu0 0.0
  %6728 = vmatprep.subr.mxu0 0.0
  %6729 = vmatpush1.msra.mxu0 0.0
  %6730 = vmatprep.subr.mxu0 0.0
  %6731 = vmatpush1.msra.mxu0 0.0
  %6732 = vmatprep.subr.mxu0 0.0
  %6733 = vmatpush1.msra.mxu0 0.0
  %6734 = vmatprep.subr.mxu0 0.0
  %6735 = vmatpush1.msra.mxu0 0.0
  %6736 = vmatprep.subr.mxu0 0.0
  %6737 = vmatpush1.msra.mxu0 0.0
  %6738 = vmatprep.mubr.f32.mxu0 0.0
  %6739 = vmatmul.mubr.f32.gmra.mrb[0].mxu0 %v6585
  %v6740 = vpop.f32.mrb[0].mxu0
  %v6741 = vadd.f32 0.0, %v6740
  %v6742 = vpop.f32.mrb[0].mxu0
  %6743 = vmatprep.mubr.f32.mxu0 0.0
  %6744 = vmatmul.mubr.f32.gmra.mrb[0].mxu0 %v6588
  %v6745 = vpop.f32.mrb[0].mxu0
  %v6746 = vadd.f32 0.0, %v6745
  %v6747 = vpop.f32.mrb[0].mxu0
  %6748 = vmatprep.mubr.f32.mxu0 0.0
  %6749 = vmatmul.mubr.f32.gmra.mrb[0].mxu0 %v6591
  %v6750 = vpop.f32.mrb[0].mxu0
  %v6751 = vadd.f32 0.0, %v6750
  %v6752 = vpop.f32.mrb[0].mxu0
  %6753 = vmatprep.mubr.f32.mxu0 0.0
  %6754 = vmatmul.mubr.f32.gmra.mrb[0].mxu0 %v6594
  %v6755 = vpop.f32.mrb[0].mxu0
  %v6756 = vadd.f32 0.0, %v6755
  %v6757 = vpop.f32.mrb[0].mxu0
  %6758 = vmatprep.mubr.f32.mxu0 0.0
  %6759 = vmatmul.mubr.f32.gmra.mrb[0].mxu0 %v6597
  %v6760 = vpop.f32.mrb[0].mxu0
  %v6761 = vadd.f32 0.0, %v6760
  %v6762 = vpop.f32.mrb[0].mxu0
  %6763 = vmatprep.mubr.f32.mxu0 0.0
  %6764 = vmatmul.mubr.f32.gmra.mrb[0].mxu0 %v6600
  %v6765 = vpop.f32.mrb[0].mxu0
  %v6766 = vadd.f32 0.0, %v6765
  %v6767 = vpop.f32.mrb[0].mxu0
  %6768 = vmatprep.mubr.f32.mxu0 0.0
  %6769 = vmatmul.mubr.f32.gmra.mrb[0].mxu0 %v6603
  %v6770 = vpop.f32.mrb[0].mxu0
  %v6771 = vadd.f32 0.0, %v6770
  %v6772 = vpop.f32.mrb[0].mxu0
  %6773 = vmatprep.mubr.f32.mxu0 0.0
  %6774 = vmatmul.mubr.f32.gmra.mrb[0].mxu0 %v6606
  %v6775 = vpop.f32.mrb[0].mxu0
  %v6776 = vadd.f32 0.0, %v6775
  %v6777 = vpop.f32.mrb[0].mxu0
  %6778 = vmatprep.mubr.f32.mxu0 0.0
  %6779 = vmatmul.mubr.f32.gmra.mrb[0].mxu0 %v6609
  %v6780 = vpop.f32.mrb[0].mxu0
  %v6781 = vadd.f32 0.0, %v6780
  %v6782 = vpop.f32.mrb[0].mxu0
  %6783 = vmatprep.mubr.f32.mxu0 0.0
  %6784 = vmatmul.mubr.f32.gmra.mrb[0].mxu0 %v6612
  %v6785 = vpop.f32.mrb[0].mxu0
  %v6786 = vadd.f32 0.0, %v6785
  %v6787 = vpop.f32.mrb[0].mxu0
  %6788 = vmatprep.mubr.f32.mxu0 0.0
  %6789 = vmatmul.mubr.f32.gmra.mrb[0].mxu0 %v6615
  %v6790 = vpop.f32.mrb[0].mxu0
  %v6791 = vadd.f32 0.0, %v6790
  %v6792 = vpop.f32.mrb[0].mxu0
  %6793 = vmatprep.mubr.f32.mxu0 0.0
  %6794 = vmatmul.mubr.f32.gmra.mrb[0].mxu0 %v6618
  %v6795 = vpop.f32.mrb[0].mxu0
  %v6796 = vadd.f32 0.0, %v6795
  %v6797 = vpop.f32.mrb[0].mxu0
  %6798 = vmatprep.mubr.f32.mxu0 0.0
  %6799 = vmatmul.mubr.f32.gmra.mrb[0].mxu0 %v6621
  %v6800 = vpop.f32.mrb[0].mxu0
  %v6801 = vadd.f32 0.0, %v6800
  %v6802 = vpop.f32.mrb[0].mxu0
  %6803 = vmatprep.mubr.f32.mxu0 0.0
  %6804 = vmatmul.mubr.f32.gmra.mrb[0].mxu0 %v6624
  %v6805 = vpop.f32.mrb[0].mxu0
  %v6806 = vadd.f32 0.0, %v6805
  %v6807 = vpop.f32.mrb[0].mxu0
  %6808 = vmatprep.mubr.f32.mxu0 0.0
  %6809 = vmatmul.mubr.f32.gmra.mrb[0].mxu0 %v6627
  %v6810 = vpop.f32.mrb[0].mxu0
  %v6811 = vadd.f32 0.0, %v6810
  %v6812 = vpop.f32.mrb[0].mxu0
  %6813 = vmatprep.mubr.f32.mxu0 0.0
  %6814 = vmatmul.mubr.f32.gmra.mrb[0].mxu0 %v6630
  %v6815 = vpop.f32.mrb[0].mxu0
  %v6816 = vadd.f32 0.0, %v6815
  %v6817 = vpop.f32.mrb[0].mxu0
  %6818 = vmatprep.mubr.f32.mxu0 0.0
  %6819 = vmatmul.mubr.f32.gmra.mrb[0].mxu0 %v6633
  %v6820 = vpop.f32.mrb[0].mxu0
  %v6821 = vadd.f32 0.0, %v6820
  %v6822 = vpop.f32.mrb[0].mxu0
  %6823 = vmatprep.mubr.f32.mxu0 0.0
  %6824 = vmatmul.mubr.f32.gmra.mrb[0].mxu0 %v6636
  %v6825 = vpop.f32.mrb[0].mxu0
  %v6826 = vadd.f32 0.0, %v6825
  %v6827 = vpop.f32.mrb[0].mxu0
  %6828 = vmatprep.mubr.f32.mxu0 0.0
  %6829 = vmatmul.mubr.f32.gmra.mrb[0].mxu0 %v6639
  %v6830 = vpop.f32.mrb[0].mxu0
  %v6831 = vadd.f32 0.0, %v6830
  %v6832 = vpop.f32.mrb[0].mxu0
  %6833 = vmatprep.mubr.f32.mxu0 0.0
  %6834 = vmatmul.mubr.f32.gmra.mrb[0].mxu0 %v6642
  %v6835 = vpop.f32.mrb[0].mxu0
  %v6836 = vadd.f32 0.0, %v6835
  %v6837 = vpop.f32.mrb[0].mxu0
  %6838 = vmatprep.mubr.f32.mxu0 0.0
  %6839 = vmatmul.mubr.f32.gmra.mrb[0].mxu0 %v6645
  %v6840 = vpop.f32.mrb[0].mxu0
  %v6841 = vadd.f32 0.0, %v6840
  %v6842 = vpop.f32.mrb[0].mxu0
  %6843 = vmatprep.mubr.f32.mxu0 0.0
  %6844 = vmatmul.mubr.f32.gmra.mrb[0].mxu0 %v6648
  %v6845 = vpop.f32.mrb[0].mxu0
  %v6846 = vadd.f32 0.0, %v6845
  %v6847 = vpop.f32.mrb[0].mxu0
  %6848 = vmatprep.mubr.f32.mxu0 0.0
  %6849 = vmatmul.mubr.f32.gmra.mrb[0].mxu0 %v6651
  %v6850 = vpop.f32.mrb[0].mxu0
  %v6851 = vadd.f32 0.0, %v6850
  %v6852 = vpop.f32.mrb[0].mxu0
  %6853 = vmatprep.mubr.f32.mxu0 0.0
  %6854 = vmatmul.mubr.f32.gmra.mrb[0].mxu0 %v6654
  %v6855 = vpop.f32.mrb[0].mxu0
  %v6856 = vadd.f32 0.0, %v6855
  %v6857 = vpop.f32.mrb[0].mxu0
  %6858 = vmatprep.mubr.f32.mxu0 0.0
  %6859 = vmatmul.mubr.f32.gmra.mrb[0].mxu0 %v6657
  %v6860 = vpop.f32.mrb[0].mxu0
  %v6861 = vadd.f32 0.0, %v6860
  %v6862 = vpop.f32.mrb[0].mxu0
  %6863 = vmatprep.mubr.f32.mxu0 0.0
  %6864 = vmatmul.mubr.f32.gmra.mrb[0].mxu0 %v6660
  %v6865 = vpop.f32.mrb[0].mxu0
  %v6866 = vadd.f32 0.0, %v6865
  %v6867 = vpop.f32.mrb[0].mxu0
  %6868 = vmatprep.mubr.f32.mxu0 0.0
  %6869 = vmatmul.mubr.f32.gmra.mrb[0].mxu0 %v6663
  %v6870 = vpop.f32.mrb[0].mxu0
  %v6871 = vadd.f32 0.0, %v6870
  %v6872 = vpop.f32.mrb[0].mxu0
  %6873 = vmatprep.mubr.f32.mxu0 0.0
  %6874 = vmatmul.mubr.f32.gmra.mrb[0].mxu0 %v6666
  %v6875 = vpop.f32.mrb[0].mxu0
  %v6876 = vadd.f32 0.0, %v6875
  %v6877 = vpop.f32.mrb[0].mxu0
  %6878 = vmatprep.mubr.f32.mxu0 0.0
  %6879 = vmatmul.mubr.f32.gmra.mrb[0].mxu0 %v6669
  %v6880 = vpop.f32.mrb[0].mxu0
  %v6881 = vadd.f32 0.0, %v6880
  %v6882 = vpop.f32.mrb[0].mxu0
  %6883 = vmatprep.mubr.f32.mxu0 0.0
  %6884 = vmatmul.mubr.f32.gmra.mrb[0].mxu0 %v6672
  %v6885 = vpop.f32.mrb[0].mxu0
  %v6886 = vadd.f32 0.0, %v6885
  %v6887 = vpop.f32.mrb[0].mxu0
  %6888 = vdwg.mxu0
  %v6889 = vadd.f32 %v6508, %v6741
  %v6890 = vadd.f32 %v6509, %v6746
  %v6891 = vadd.f32 %v6510, %v6751
  %v6892 = vadd.f32 %v6511, %v6756
  %v6893 = vadd.f32 %v6512, %v6761
  %v6894 = vadd.f32 %v6513, %v6766
  %v6895 = vadd.f32 %v6514, %v6771
  %v6896 = vadd.f32 %v6515, %v6776
  %v6897 = vadd.f32 %v6516, %v6781
  %v6898 = vadd.f32 %v6517, %v6786
  %v6899 = vadd.f32 %v6518, %v6791
  %v6900 = vadd.f32 %v6519, %v6796
  %v6901 = vadd.f32 %v6520, %v6801
  %v6902 = vadd.f32 %v6521, %v6806
  %v6903 = vadd.f32 %v6522, %v6811
  %v6904 = vadd.f32 %v6523, %v6816
  %v6905 = vadd.f32 %v6524, %v6821
  %v6906 = vadd.f32 %v6525, %v6826
  %v6907 = vadd.f32 %v6526, %v6831
  %v6908 = vadd.f32 %v6527, %v6836
  %v6909 = vadd.f32 %v6528, %v6841
  %v6910 = vadd.f32 %v6529, %v6846
  %v6911 = vadd.f32 %v6530, %v6851
  %v6912 = vadd.f32 %v6531, %v6856
  %v6913 = vadd.f32 %v6532, %v6861
  %v6914 = vadd.f32 %v6533, %v6866
  %v6915 = vadd.f32 %v6534, %v6871
  %v6916 = vadd.f32 %v6535, %v6876
  %v6917 = vadd.f32 %v6536, %v6881
  %v6918 = vadd.f32 %v6537, %v6886
  %v6919 = vld [vmem:[%s976] sm:$0xff]
  %v6920 = vld [vmem:[%s976 + $0x8] sm:$0xff]
  %v6921 = vld [vmem:[%s976 + $0x10] sm:$0xff]
  %v6922 = vld [vmem:[%s976 + $0x18] sm:$0xff]
  %v6923 = vld [vmem:[%s976 + $0x20] sm:$0xff]
  %v6924 = vld [vmem:[%s976 + $0x28] sm:$0xff]
  %v6925 = vld [vmem:[%s976 + $0x30] sm:$0xff]
  %v6926 = vld [vmem:[%s976 + $0x38] sm:$0xff]
  %v6927 = vld [vmem:[%s976 + $0x40] sm:$0xff]
  %v6928 = vld [vmem:[%s976 + $0x48] sm:$0xff]
  %v6929 = vld [vmem:[%s976 + $0x50] sm:$0xff]
  %v6930 = vld [vmem:[%s976 + $0x58] sm:$0xff]
  %v6931 = vld [vmem:[%s976 + $0x60] sm:$0xff]
  %v6932 = vld [vmem:[%s976 + $0x68] sm:$0xff]
  %v6933 = vld [vmem:[%s976 + $0x70] sm:$0xff]
  %v6934 = vld [vmem:[%s976 + $0x78] sm:$0xff]
  %v6935 = vld [vmem:[%s976 + $0x80] sm:$0xff]
  %v6936 = vld [vmem:[%s976 + $0x88] sm:$0xff]
  %v6937 = vld [vmem:[%s976 + $0x90] sm:$0xff]
  %v6938 = vld [vmem:[%s976 + $0x98] sm:$0xff]
  %v6939 = vld [vmem:[%s976 + $0xa0] sm:$0xff]
  %v6940 = vld [vmem:[%s976 + $0xa8] sm:$0xff]
  %v6941 = vld [vmem:[%s976 + $0xb0] sm:$0xff]
  %v6942 = vld [vmem:[%s976 + $0xb8] sm:$0xff]
  %v6943 = vld [vmem:[%s976 + $0xc0] sm:$0xff]
  %v6944 = vld [vmem:[%s976 + $0xc8] sm:$0xff]
  %v6945 = vld [vmem:[%s976 + $0xd0] sm:$0xff]
  %v6946 = vld [vmem:[%s976 + $0xd8] sm:$0xff]
  %v6947 = vld [vmem:[%s976 + $0xe0] sm:$0xff]
  %v6948 = vld [vmem:[%s976 + $0xe8] sm:$0xff]
  %6949 = vrot.lane.b32.xlu0 %v5989, 126
  %v6950 = vpop.permute.xlu0 %6949
  %6951 = vrot.lane.b32.xlu0 %v5990, 126
  %v6952 = vpop.permute.xlu0 %6951
  %6953 = vrot.lane.b32.xlu0 %v5991, 126
  %v6954 = vpop.permute.xlu0 %6953
  %6955 = vrot.lane.b32.xlu0 %v5992, 126
  %v6956 = vpop.permute.xlu0 %6955
  %v6962 = vsel %vm108, %v6919, 0
  %v6965 = vsel %vm108, %v6920, 0
  %v6968 = vsel %vm108, %v6921, 0
  %v6971 = vsel %vm108, %v6922, 0
  %v6974 = vsel %vm108, %v6923, 0
  %v6977 = vsel %vm108, %v6924, 0
  %v6980 = vsel %vm108, %v6925, 0
  %v6983 = vsel %vm108, %v6926, 0
  %v6986 = vsel %vm108, %v6927, 0
  %v6989 = vsel %vm108, %v6928, 0
  %v6992 = vsel %vm108, %v6929, 0
  %v6995 = vsel %vm108, %v6930, 0
  %v6998 = vsel %vm108, %v6931, 0
  %v7001 = vsel %vm108, %v6932, 0
  %v7004 = vsel %vm108, %v6933, 0
  %v7007 = vsel %vm108, %v6934, 0
  %v7010 = vsel %vm108, %v6935, 0
  %v7013 = vsel %vm108, %v6936, 0
  %v7016 = vsel %vm108, %v6937, 0
  %v7019 = vsel %vm108, %v6938, 0
  %v7022 = vsel %vm108, %v6939, 0
  %v7025 = vsel %vm108, %v6940, 0
  %v7028 = vsel %vm108, %v6941, 0
  %v7031 = vsel %vm108, %v6942, 0
  %v7034 = vsel %vm108, %v6943, 0
  %v7037 = vsel %vm108, %v6944, 0
  %v7040 = vsel %vm108, %v6945, 0
  %v7043 = vsel %vm108, %v6946, 0
  %v7046 = vsel %vm108, %v6947, 0
  %v7049 = vsel %vm108, %v6948, 0
  %7051 = vmatprep.subr.mxu0 0.0
  %7052 = vmatpush1.msra.mxu0 %v6950
  %7053 = vmatprep.subr.mxu0 0.0
  %7054 = vmatpush1.msra.mxu0 %v6952
  %7055 = vmatprep.subr.mxu0 0.0
  %7056 = vmatpush1.msra.mxu0 %v6954
  %7057 = vmatprep.subr.mxu0 0.0
  %7058 = vmatpush1.msra.mxu0 %v6956
  %7059 = vmatprep.subr.mxu0 0.0
  %7060 = vmatpush1.msra.mxu0 0.0
  %7061 = vmatprep.subr.mxu0 0.0
  %7062 = vmatpush1.msra.mxu0 0.0
  %7063 = vmatprep.subr.mxu0 0.0
  %7064 = vmatpush1.msra.mxu0 0.0
  %7065 = vmatprep.subr.mxu0 0.0
  %7066 = vmatpush1.msra.mxu0 0.0
  %7067 = vmatprep.subr.mxu0 0.0
  %7068 = vmatpush1.msra.mxu0 0.0
  %7069 = vmatprep.subr.mxu0 0.0
  %7070 = vmatpush1.msra.mxu0 0.0
  %7071 = vmatprep.subr.mxu0 0.0
  %7072 = vmatpush1.msra.mxu0 0.0
  %7073 = vmatprep.subr.mxu0 0.0
  %7074 = vmatpush1.msra.mxu0 0.0
  %7075 = vmatprep.subr.mxu0 0.0
  %7076 = vmatpush1.msra.mxu0 0.0
  %7077 = vmatprep.subr.mxu0 0.0
  %7078 = vmatpush1.msra.mxu0 0.0
  %7079 = vmatprep.subr.mxu0 0.0
  %7080 = vmatpush1.msra.mxu0 0.0
  %7081 = vmatprep.subr.mxu0 0.0
  %7082 = vmatpush1.msra.mxu0 0.0
  %7083 = vmatprep.subr.mxu0 0.0
  %7084 = vmatpush1.msra.mxu0 0.0
  %7085 = vmatprep.subr.mxu0 0.0
  %7086 = vmatpush1.msra.mxu0 0.0
  %7087 = vmatprep.subr.mxu0 0.0
  %7088 = vmatpush1.msra.mxu0 0.0
  %7089 = vmatprep.subr.mxu0 0.0
  %7090 = vmatpush1.msra.mxu0 0.0
  %7091 = vmatprep.subr.mxu0 0.0
  %7092 = vmatpush1.msra.mxu0 0.0
  %7093 = vmatprep.subr.mxu0 0.0
  %7094 = vmatpush1.msra.mxu0 0.0
  %7095 = vmatprep.subr.mxu0 0.0
  %7096 = vmatpush1.msra.mxu0 0.0
  %7097 = vmatprep.subr.mxu0 0.0
  %7098 = vmatpush1.msra.mxu0 0.0
  %7099 = vmatprep.subr.mxu0 0.0
  %7100 = vmatpush1.msra.mxu0 0.0
  %7101 = vmatprep.subr.mxu0 0.0
  %7102 = vmatpush1.msra.mxu0 0.0
  %7103 = vmatprep.subr.mxu0 0.0
  %7104 = vmatpush1.msra.mxu0 0.0
  %7105 = vmatprep.subr.mxu0 0.0
  %7106 = vmatpush1.msra.mxu0 0.0
  %7107 = vmatprep.subr.mxu0 0.0
  %7108 = vmatpush1.msra.mxu0 0.0
  %7109 = vmatprep.subr.mxu0 0.0
  %7110 = vmatpush1.msra.mxu0 0.0
  %7111 = vmatprep.subr.mxu0 0.0
  %7112 = vmatpush1.msra.mxu0 0.0
  %7113 = vmatprep.subr.mxu0 0.0
  %7114 = vmatpush1.msra.mxu0 0.0
  %7115 = vmatprep.mubr.f32.mxu0 0.0
  %7116 = vmatmul.mubr.f32.gmra.mrb[0].mxu0 %v6962
  %v7117 = vpop.f32.mrb[0].mxu0
  %v7118 = vadd.f32 0.0, %v7117
  %v7119 = vpop.f32.mrb[0].mxu0
  %7120 = vmatprep.mubr.f32.mxu0 0.0
  %7121 = vmatmul.mubr.f32.gmra.mrb[0].mxu0 %v6965
  %v7122 = vpop.f32.mrb[0].mxu0
  %v7123 = vadd.f32 0.0, %v7122
  %v7124 = vpop.f32.mrb[0].mxu0
  %7125 = vmatprep.mubr.f32.mxu0 0.0
  %7126 = vmatmul.mubr.f32.gmra.mrb[0].mxu0 %v6968
  %v7127 = vpop.f32.mrb[0].mxu0
  %v7128 = vadd.f32 0.0, %v7127
  %v7129 = vpop.f32.mrb[0].mxu0
  %7130 = vmatprep.mubr.f32.mxu0 0.0
  %7131 = vmatmul.mubr.f32.gmra.mrb[0].mxu0 %v6971
  %v7132 = vpop.f32.mrb[0].mxu0
  %v7133 = vadd.f32 0.0, %v7132
  %v7134 = vpop.f32.mrb[0].mxu0
  %7135 = vmatprep.mubr.f32.mxu0 0.0
  %7136 = vmatmul.mubr.f32.gmra.mrb[0].mxu0 %v6974
  %v7137 = vpop.f32.mrb[0].mxu0
  %v7138 = vadd.f32 0.0, %v7137
  %v7139 = vpop.f32.mrb[0].mxu0
  %7140 = vmatprep.mubr.f32.mxu0 0.0
  %7141 = vmatmul.mubr.f32.gmra.mrb[0].mxu0 %v6977
  %v7142 = vpop.f32.mrb[0].mxu0
  %v7143 = vadd.f32 0.0, %v7142
  %v7144 = vpop.f32.mrb[0].mxu0
  %7145 = vmatprep.mubr.f32.mxu0 0.0
  %7146 = vmatmul.mubr.f32.gmra.mrb[0].mxu0 %v6980
  %v7147 = vpop.f32.mrb[0].mxu0
  %v7148 = vadd.f32 0.0, %v7147
  %v7149 = vpop.f32.mrb[0].mxu0
  %7150 = vmatprep.mubr.f32.mxu0 0.0
  %7151 = vmatmul.mubr.f32.gmra.mrb[0].mxu0 %v6983
  %v7152 = vpop.f32.mrb[0].mxu0
  %v7153 = vadd.f32 0.0, %v7152
  %v7154 = vpop.f32.mrb[0].mxu0
  %7155 = vmatprep.mubr.f32.mxu0 0.0
  %7156 = vmatmul.mubr.f32.gmra.mrb[0].mxu0 %v6986
  %v7157 = vpop.f32.mrb[0].mxu0
  %v7158 = vadd.f32 0.0, %v7157
  %v7159 = vpop.f32.mrb[0].mxu0
  %7160 = vmatprep.mubr.f32.mxu0 0.0
  %7161 = vmatmul.mubr.f32.gmra.mrb[0].mxu0 %v6989
  %v7162 = vpop.f32.mrb[0].mxu0
  %v7163 = vadd.f32 0.0, %v7162
  %v7164 = vpop.f32.mrb[0].mxu0
  %7165 = vmatprep.mubr.f32.mxu0 0.0
  %7166 = vmatmul.mubr.f32.gmra.mrb[0].mxu0 %v6992
  %v7167 = vpop.f32.mrb[0].mxu0
  %v7168 = vadd.f32 0.0, %v7167
  %v7169 = vpop.f32.mrb[0].mxu0
  %7170 = vmatprep.mubr.f32.mxu0 0.0
  %7171 = vmatmul.mubr.f32.gmra.mrb[0].mxu0 %v6995
  %v7172 = vpop.f32.mrb[0].mxu0
  %v7173 = vadd.f32 0.0, %v7172
  %v7174 = vpop.f32.mrb[0].mxu0
  %7175 = vmatprep.mubr.f32.mxu0 0.0
  %7176 = vmatmul.mubr.f32.gmra.mrb[0].mxu0 %v6998
  %v7177 = vpop.f32.mrb[0].mxu0
  %v7178 = vadd.f32 0.0, %v7177
  %v7179 = vpop.f32.mrb[0].mxu0
  %7180 = vmatprep.mubr.f32.mxu0 0.0
  %7181 = vmatmul.mubr.f32.gmra.mrb[0].mxu0 %v7001
  %v7182 = vpop.f32.mrb[0].mxu0
  %v7183 = vadd.f32 0.0, %v7182
  %v7184 = vpop.f32.mrb[0].mxu0
  %7185 = vmatprep.mubr.f32.mxu0 0.0
  %7186 = vmatmul.mubr.f32.gmra.mrb[0].mxu0 %v7004
  %v7187 = vpop.f32.mrb[0].mxu0
  %v7188 = vadd.f32 0.0, %v7187
  %v7189 = vpop.f32.mrb[0].mxu0
  %7190 = vmatprep.mubr.f32.mxu0 0.0
  %7191 = vmatmul.mubr.f32.gmra.mrb[0].mxu0 %v7007
  %v7192 = vpop.f32.mrb[0].mxu0
  %v7193 = vadd.f32 0.0, %v7192
  %v7194 = vpop.f32.mrb[0].mxu0
  %7195 = vmatprep.mubr.f32.mxu0 0.0
  %7196 = vmatmul.mubr.f32.gmra.mrb[0].mxu0 %v7010
  %v7197 = vpop.f32.mrb[0].mxu0
  %v7198 = vadd.f32 0.0, %v7197
  %v7199 = vpop.f32.mrb[0].mxu0
  %7200 = vmatprep.mubr.f32.mxu0 0.0
  %7201 = vmatmul.mubr.f32.gmra.mrb[0].mxu0 %v7013
  %v7202 = vpop.f32.mrb[0].mxu0
  %v7203 = vadd.f32 0.0, %v7202
  %v7204 = vpop.f32.mrb[0].mxu0
  %7205 = vmatprep.mubr.f32.mxu0 0.0
  %7206 = vmatmul.mubr.f32.gmra.mrb[0].mxu0 %v7016
  %v7207 = vpop.f32.mrb[0].mxu0
  %v7208 = vadd.f32 0.0, %v7207
  %v7209 = vpop.f32.mrb[0].mxu0
  %7210 = vmatprep.mubr.f32.mxu0 0.0
  %7211 = vmatmul.mubr.f32.gmra.mrb[0].mxu0 %v7019
  %v7212 = vpop.f32.mrb[0].mxu0
  %v7213 = vadd.f32 0.0, %v7212
  %v7214 = vpop.f32.mrb[0].mxu0
  %7215 = vmatprep.mubr.f32.mxu0 0.0
  %7216 = vmatmul.mubr.f32.gmra.mrb[0].mxu0 %v7022
  %v7217 = vpop.f32.mrb[0].mxu0
  %v7218 = vadd.f32 0.0, %v7217
  %v7219 = vpop.f32.mrb[0].mxu0
  %7220 = vmatprep.mubr.f32.mxu0 0.0
  %7221 = vmatmul.mubr.f32.gmra.mrb[0].mxu0 %v7025
  %v7222 = vpop.f32.mrb[0].mxu0
  %v7223 = vadd.f32 0.0, %v7222
  %v7224 = vpop.f32.mrb[0].mxu0
  %7225 = vmatprep.mubr.f32.mxu0 0.0
  %7226 = vmatmul.mubr.f32.gmra.mrb[0].mxu0 %v7028
  %v7227 = vpop.f32.mrb[0].mxu0
  %v7228 = vadd.f32 0.0, %v7227
  %v7229 = vpop.f32.mrb[0].mxu0
  %7230 = vmatprep.mubr.f32.mxu0 0.0
  %7231 = vmatmul.mubr.f32.gmra.mrb[0].mxu0 %v7031
  %v7232 = vpop.f32.mrb[0].mxu0
  %v7233 = vadd.f32 0.0, %v7232
  %v7234 = vpop.f32.mrb[0].mxu0
  %7235 = vmatprep.mubr.f32.mxu0 0.0
  %7236 = vmatmul.mubr.f32.gmra.mrb[0].mxu0 %v7034
  %v7237 = vpop.f32.mrb[0].mxu0
  %v7238 = vadd.f32 0.0, %v7237
  %v7239 = vpop.f32.mrb[0].mxu0
  %7240 = vmatprep.mubr.f32.mxu0 0.0
  %7241 = vmatmul.mubr.f32.gmra.mrb[0].mxu0 %v7037
  %v7242 = vpop.f32.mrb[0].mxu0
  %v7243 = vadd.f32 0.0, %v7242
  %v7244 = vpop.f32.mrb[0].mxu0
  %7245 = vmatprep.mubr.f32.mxu0 0.0
  %7246 = vmatmul.mubr.f32.gmra.mrb[0].mxu0 %v7040
  %v7247 = vpop.f32.mrb[0].mxu0
  %v7248 = vadd.f32 0.0, %v7247
  %v7249 = vpop.f32.mrb[0].mxu0
  %7250 = vmatprep.mubr.f32.mxu0 0.0
  %7251 = vmatmul.mubr.f32.gmra.mrb[0].mxu0 %v7043
  %v7252 = vpop.f32.mrb[0].mxu0
  %v7253 = vadd.f32 0.0, %v7252
  %v7254 = vpop.f32.mrb[0].mxu0
  %7255 = vmatprep.mubr.f32.mxu0 0.0
  %7256 = vmatmul.mubr.f32.gmra.mrb[0].mxu0 %v7046
  %v7257 = vpop.f32.mrb[0].mxu0
  %v7258 = vadd.f32 0.0, %v7257
  %v7259 = vpop.f32.mrb[0].mxu0
  %7260 = vmatprep.mubr.f32.mxu0 0.0
  %7261 = vmatmul.mubr.f32.gmra.mrb[0].mxu0 %v7049
  %v7262 = vpop.f32.mrb[0].mxu0
  %v7263 = vadd.f32 0.0, %v7262
  %v7264 = vpop.f32.mrb[0].mxu0
  %7265 = vdwg.mxu0
  %v7266 = vadd.f32 %v6889, %v7118
  %v7267 = vadd.f32 %v6890, %v7123
  %v7268 = vadd.f32 %v6891, %v7128
  %v7269 = vadd.f32 %v6892, %v7133
  %v7270 = vadd.f32 %v6893, %v7138
  %v7271 = vadd.f32 %v6894, %v7143
  %v7272 = vadd.f32 %v6895, %v7148
  %v7273 = vadd.f32 %v6896, %v7153
  %v7274 = vadd.f32 %v6897, %v7158
  %v7275 = vadd.f32 %v6898, %v7163
  %v7276 = vadd.f32 %v6899, %v7168
  %v7277 = vadd.f32 %v6900, %v7173
  %v7278 = vadd.f32 %v6901, %v7178
  %v7279 = vadd.f32 %v6902, %v7183
  %v7280 = vadd.f32 %v6903, %v7188
  %v7281 = vadd.f32 %v6904, %v7193
  %v7282 = vadd.f32 %v6905, %v7198
  %v7283 = vadd.f32 %v6906, %v7203
  %v7284 = vadd.f32 %v6907, %v7208
  %v7285 = vadd.f32 %v6908, %v7213
  %v7286 = vadd.f32 %v6909, %v7218
  %v7287 = vadd.f32 %v6910, %v7223
  %v7288 = vadd.f32 %v6911, %v7228
  %v7289 = vadd.f32 %v6912, %v7233
  %v7290 = vadd.f32 %v6913, %v7238
  %v7291 = vadd.f32 %v6914, %v7243
  %v7292 = vadd.f32 %v6915, %v7248
  %v7293 = vadd.f32 %v6916, %v7253
  %v7294 = vadd.f32 %v6917, %v7258
  %v7295 = vadd.f32 %v6918, %v7263
  %v7296 = vld [vmem:[%s1354] sm:$0xff]
  %v7297 = vld [vmem:[%s1354 + $0x8] sm:$0xff]
  %v7298 = vld [vmem:[%s1354 + $0x10] sm:$0xff]
  %v7299 = vld [vmem:[%s1354 + $0x18] sm:$0xff]
  %v7300 = vld [vmem:[%s1354 + $0x20] sm:$0xff]
  %v7301 = vld [vmem:[%s1354 + $0x28] sm:$0xff]
  %v7302 = vld [vmem:[%s1354 + $0x30] sm:$0xff]
  %v7303 = vld [vmem:[%s1354 + $0x38] sm:$0xff]
  %v7304 = vld [vmem:[%s1354 + $0x40] sm:$0xff]
  %v7305 = vld [vmem:[%s1354 + $0x48] sm:$0xff]
  %v7306 = vld [vmem:[%s1354 + $0x50] sm:$0xff]
  %v7307 = vld [vmem:[%s1354 + $0x58] sm:$0xff]
  %v7308 = vld [vmem:[%s1354 + $0x60] sm:$0xff]
  %v7309 = vld [vmem:[%s1354 + $0x68] sm:$0xff]
  %v7310 = vld [vmem:[%s1354 + $0x70] sm:$0xff]
  %v7311 = vld [vmem:[%s1354 + $0x78] sm:$0xff]
  %v7312 = vld [vmem:[%s1354 + $0x80] sm:$0xff]
  %v7313 = vld [vmem:[%s1354 + $0x88] sm:$0xff]
  %v7314 = vld [vmem:[%s1354 + $0x90] sm:$0xff]
  %v7315 = vld [vmem:[%s1354 + $0x98] sm:$0xff]
  %v7316 = vld [vmem:[%s1354 + $0xa0] sm:$0xff]
  %v7317 = vld [vmem:[%s1354 + $0xa8] sm:$0xff]
  %v7318 = vld [vmem:[%s1354 + $0xb0] sm:$0xff]
  %v7319 = vld [vmem:[%s1354 + $0xb8] sm:$0xff]
  %v7320 = vld [vmem:[%s1354 + $0xc0] sm:$0xff]
  %v7321 = vld [vmem:[%s1354 + $0xc8] sm:$0xff]
  %v7322 = vld [vmem:[%s1354 + $0xd0] sm:$0xff]
  %v7323 = vld [vmem:[%s1354 + $0xd8] sm:$0xff]
  %v7324 = vld [vmem:[%s1354 + $0xe0] sm:$0xff]
  %v7325 = vld [vmem:[%s1354 + $0xe8] sm:$0xff]
  %7326 = vrot.lane.b32.xlu0 %v5989, 125
  %v7327 = vpop.permute.xlu0 %7326
  %7328 = vrot.lane.b32.xlu0 %v5990, 125
  %v7329 = vpop.permute.xlu0 %7328
  %7330 = vrot.lane.b32.xlu0 %v5991, 125
  %v7331 = vpop.permute.xlu0 %7330
  %7332 = vrot.lane.b32.xlu0 %v5992, 125
  %v7333 = vpop.permute.xlu0 %7332
  %v7339 = vsel %vm108, %v7296, 0
  %v7342 = vsel %vm108, %v7297, 0
  %v7345 = vsel %vm108, %v7298, 0
  %v7348 = vsel %vm108, %v7299, 0
  %v7351 = vsel %vm108, %v7300, 0
  %v7354 = vsel %vm108, %v7301, 0
  %v7357 = vsel %vm108, %v7302, 0
  %v7360 = vsel %vm108, %v7303, 0
  %v7363 = vsel %vm108, %v7304, 0
  %v7366 = vsel %vm108, %v7305, 0
  %v7369 = vsel %vm108, %v7306, 0
  %v7372 = vsel %vm108, %v7307, 0
  %v7375 = vsel %vm108, %v7308, 0
  %v7378 = vsel %vm108, %v7309, 0
  %v7381 = vsel %vm108, %v7310, 0
  %v7384 = vsel %vm108, %v7311, 0
  %v7387 = vsel %vm108, %v7312, 0
  %v7390 = vsel %vm108, %v7313, 0
  %v7393 = vsel %vm108, %v7314, 0
  %v7396 = vsel %vm108, %v7315, 0
  %v7399 = vsel %vm108, %v7316, 0
  %v7402 = vsel %vm108, %v7317, 0
  %v7405 = vsel %vm108, %v7318, 0
  %v7408 = vsel %vm108, %v7319, 0
  %v7411 = vsel %vm108, %v7320, 0
  %v7414 = vsel %vm108, %v7321, 0
  %v7417 = vsel %vm108, %v7322, 0
  %v7420 = vsel %vm108, %v7323, 0
  %v7423 = vsel %vm108, %v7324, 0
  %v7426 = vsel %vm108, %v7325, 0
  %7428 = vmatprep.subr.mxu0 0.0
  %7429 = vmatpush1.msra.mxu0 %v7327
  %7430 = vmatprep.subr.mxu0 0.0
  %7431 = vmatpush1.msra.mxu0 %v7329
  %7432 = vmatprep.subr.mxu0 0.0
  %7433 = vmatpush1.msra.mxu0 %v7331
  %7434 = vmatprep.subr.mxu0 0.0
  %7435 = vmatpush1.msra.mxu0 %v7333
  %7436 = vmatprep.subr.mxu0 0.0
  %7437 = vmatpush1.msra.mxu0 0.0
  %7438 = vmatprep.subr.mxu0 0.0
  %7439 = vmatpush1.msra.mxu0 0.0
  %7440 = vmatprep.subr.mxu0 0.0
  %7441 = vmatpush1.msra.mxu0 0.0
  %7442 = vmatprep.subr.mxu0 0.0
  %7443 = vmatpush1.msra.mxu0 0.0
  %7444 = vmatprep.subr.mxu0 0.0
  %7445 = vmatpush1.msra.mxu0 0.0
  %7446 = vmatprep.subr.mxu0 0.0
  %7447 = vmatpush1.msra.mxu0 0.0
  %7448 = vmatprep.subr.mxu0 0.0
  %7449 = vmatpush1.msra.mxu0 0.0
  %7450 = vmatprep.subr.mxu0 0.0
  %7451 = vmatpush1.msra.mxu0 0.0
  %7452 = vmatprep.subr.mxu0 0.0
  %7453 = vmatpush1.msra.mxu0 0.0
  %7454 = vmatprep.subr.mxu0 0.0
  %7455 = vmatpush1.msra.mxu0 0.0
  %7456 = vmatprep.subr.mxu0 0.0
  %7457 = vmatpush1.msra.mxu0 0.0
  %7458 = vmatprep.subr.mxu0 0.0
  %7459 = vmatpush1.msra.mxu0 0.0
  %7460 = vmatprep.subr.mxu0 0.0
  %7461 = vmatpush1.msra.mxu0 0.0
  %7462 = vmatprep.subr.mxu0 0.0
  %7463 = vmatpush1.msra.mxu0 0.0
  %7464 = vmatprep.subr.mxu0 0.0
  %7465 = vmatpush1.msra.mxu0 0.0
  %7466 = vmatprep.subr.mxu0 0.0
  %7467 = vmatpush1.msra.mxu0 0.0
  %7468 = vmatprep.subr.mxu0 0.0
  %7469 = vmatpush1.msra.mxu0 0.0
  %7470 = vmatprep.subr.mxu0 0.0
  %7471 = vmatpush1.msra.mxu0 0.0
  %7472 = vmatprep.subr.mxu0 0.0
  %7473 = vmatpush1.msra.mxu0 0.0
  %7474 = vmatprep.subr.mxu0 0.0
  %7475 = vmatpush1.msra.mxu0 0.0
  %7476 = vmatprep.subr.mxu0 0.0
  %7477 = vmatpush1.msra.mxu0 0.0
  %7478 = vmatprep.subr.mxu0 0.0
  %7479 = vmatpush1.msra.mxu0 0.0
  %7480 = vmatprep.subr.mxu0 0.0
  %7481 = vmatpush1.msra.mxu0 0.0
  %7482 = vmatprep.subr.mxu0 0.0
  %7483 = vmatpush1.msra.mxu0 0.0
  %7484 = vmatprep.subr.mxu0 0.0
  %7485 = vmatpush1.msra.mxu0 0.0
  %7486 = vmatprep.subr.mxu0 0.0
  %7487 = vmatpush1.msra.mxu0 0.0
  %7488 = vmatprep.subr.mxu0 0.0
  %7489 = vmatpush1.msra.mxu0 0.0
  %7490 = vmatprep.subr.mxu0 0.0
  %7491 = vmatpush1.msra.mxu0 0.0
  %7492 = vmatprep.mubr.f32.mxu0 0.0
  %7493 = vmatmul.mubr.f32.gmra.mrb[0].mxu0 %v7339
  %v7494 = vpop.f32.mrb[0].mxu0
  %v7495 = vadd.f32 0.0, %v7494
  %v7496 = vpop.f32.mrb[0].mxu0
  %7497 = vmatprep.mubr.f32.mxu0 0.0
  %7498 = vmatmul.mubr.f32.gmra.mrb[0].mxu0 %v7342
  %v7499 = vpop.f32.mrb[0].mxu0
  %v7500 = vadd.f32 0.0, %v7499
  %v7501 = vpop.f32.mrb[0].mxu0
  %7502 = vmatprep.mubr.f32.mxu0 0.0
  %7503 = vmatmul.mubr.f32.gmra.mrb[0].mxu0 %v7345
  %v7504 = vpop.f32.mrb[0].mxu0
  %v7505 = vadd.f32 0.0, %v7504
  %v7506 = vpop.f32.mrb[0].mxu0
  %7507 = vmatprep.mubr.f32.mxu0 0.0
  %7508 = vmatmul.mubr.f32.gmra.mrb[0].mxu0 %v7348
  %v7509 = vpop.f32.mrb[0].mxu0
  %v7510 = vadd.f32 0.0, %v7509
  %v7511 = vpop.f32.mrb[0].mxu0
  %7512 = vmatprep.mubr.f32.mxu0 0.0
  %7513 = vmatmul.mubr.f32.gmra.mrb[0].mxu0 %v7351
  %v7514 = vpop.f32.mrb[0].mxu0
  %v7515 = vadd.f32 0.0, %v7514
  %v7516 = vpop.f32.mrb[0].mxu0
  %7517 = vmatprep.mubr.f32.mxu0 0.0
  %7518 = vmatmul.mubr.f32.gmra.mrb[0].mxu0 %v7354
  %v7519 = vpop.f32.mrb[0].mxu0
  %v7520 = vadd.f32 0.0, %v7519
  %v7521 = vpop.f32.mrb[0].mxu0
  %7522 = vmatprep.mubr.f32.mxu0 0.0
  %7523 = vmatmul.mubr.f32.gmra.mrb[0].mxu0 %v7357
  %v7524 = vpop.f32.mrb[0].mxu0
  %v7525 = vadd.f32 0.0, %v7524
  %v7526 = vpop.f32.mrb[0].mxu0
  %7527 = vmatprep.mubr.f32.mxu0 0.0
  %7528 = vmatmul.mubr.f32.gmra.mrb[0].mxu0 %v7360
  %v7529 = vpop.f32.mrb[0].mxu0
  %v7530 = vadd.f32 0.0, %v7529
  %v7531 = vpop.f32.mrb[0].mxu0
  %7532 = vmatprep.mubr.f32.mxu0 0.0
  %7533 = vmatmul.mubr.f32.gmra.mrb[0].mxu0 %v7363
  %v7534 = vpop.f32.mrb[0].mxu0
  %v7535 = vadd.f32 0.0, %v7534
  %v7536 = vpop.f32.mrb[0].mxu0
  %7537 = vmatprep.mubr.f32.mxu0 0.0
  %7538 = vmatmul.mubr.f32.gmra.mrb[0].mxu0 %v7366
  %v7539 = vpop.f32.mrb[0].mxu0
  %v7540 = vadd.f32 0.0, %v7539
  %v7541 = vpop.f32.mrb[0].mxu0
  %7542 = vmatprep.mubr.f32.mxu0 0.0
  %7543 = vmatmul.mubr.f32.gmra.mrb[0].mxu0 %v7369
  %v7544 = vpop.f32.mrb[0].mxu0
  %v7545 = vadd.f32 0.0, %v7544
  %v7546 = vpop.f32.mrb[0].mxu0
  %7547 = vmatprep.mubr.f32.mxu0 0.0
  %7548 = vmatmul.mubr.f32.gmra.mrb[0].mxu0 %v7372
  %v7549 = vpop.f32.mrb[0].mxu0
  %v7550 = vadd.f32 0.0, %v7549
  %v7551 = vpop.f32.mrb[0].mxu0
  %7552 = vmatprep.mubr.f32.mxu0 0.0
  %7553 = vmatmul.mubr.f32.gmra.mrb[0].mxu0 %v7375
  %v7554 = vpop.f32.mrb[0].mxu0
  %v7555 = vadd.f32 0.0, %v7554
  %v7556 = vpop.f32.mrb[0].mxu0
  %7557 = vmatprep.mubr.f32.mxu0 0.0
  %7558 = vmatmul.mubr.f32.gmra.mrb[0].mxu0 %v7378
  %v7559 = vpop.f32.mrb[0].mxu0
  %v7560 = vadd.f32 0.0, %v7559
  %v7561 = vpop.f32.mrb[0].mxu0
  %7562 = vmatprep.mubr.f32.mxu0 0.0
  %7563 = vmatmul.mubr.f32.gmra.mrb[0].mxu0 %v7381
  %v7564 = vpop.f32.mrb[0].mxu0
  %v7565 = vadd.f32 0.0, %v7564
  %v7566 = vpop.f32.mrb[0].mxu0
  %7567 = vmatprep.mubr.f32.mxu0 0.0
  %7568 = vmatmul.mubr.f32.gmra.mrb[0].mxu0 %v7384
  %v7569 = vpop.f32.mrb[0].mxu0
  %v7570 = vadd.f32 0.0, %v7569
  %v7571 = vpop.f32.mrb[0].mxu0
  %7572 = vmatprep.mubr.f32.mxu0 0.0
  %7573 = vmatmul.mubr.f32.gmra.mrb[0].mxu0 %v7387
  %v7574 = vpop.f32.mrb[0].mxu0
  %v7575 = vadd.f32 0.0, %v7574
  %v7576 = vpop.f32.mrb[0].mxu0
  %7577 = vmatprep.mubr.f32.mxu0 0.0
  %7578 = vmatmul.mubr.f32.gmra.mrb[0].mxu0 %v7390
  %v7579 = vpop.f32.mrb[0].mxu0
  %v7580 = vadd.f32 0.0, %v7579
  %v7581 = vpop.f32.mrb[0].mxu0
  %7582 = vmatprep.mubr.f32.mxu0 0.0
  %7583 = vmatmul.mubr.f32.gmra.mrb[0].mxu0 %v7393
  %v7584 = vpop.f32.mrb[0].mxu0
  %v7585 = vadd.f32 0.0, %v7584
  %v7586 = vpop.f32.mrb[0].mxu0
  %7587 = vmatprep.mubr.f32.mxu0 0.0
  %7588 = vmatmul.mubr.f32.gmra.mrb[0].mxu0 %v7396
  %v7589 = vpop.f32.mrb[0].mxu0
  %v7590 = vadd.f32 0.0, %v7589
  %v7591 = vpop.f32.mrb[0].mxu0
  %7592 = vmatprep.mubr.f32.mxu0 0.0
  %7593 = vmatmul.mubr.f32.gmra.mrb[0].mxu0 %v7399
  %v7594 = vpop.f32.mrb[0].mxu0
  %v7595 = vadd.f32 0.0, %v7594
  %v7596 = vpop.f32.mrb[0].mxu0
  %7597 = vmatprep.mubr.f32.mxu0 0.0
  %7598 = vmatmul.mubr.f32.gmra.mrb[0].mxu0 %v7402
  %v7599 = vpop.f32.mrb[0].mxu0
  %v7600 = vadd.f32 0.0, %v7599
  %v7601 = vpop.f32.mrb[0].mxu0
  %7602 = vmatprep.mubr.f32.mxu0 0.0
  %7603 = vmatmul.mubr.f32.gmra.mrb[0].mxu0 %v7405
  %v7604 = vpop.f32.mrb[0].mxu0
  %v7605 = vadd.f32 0.0, %v7604
  %v7606 = vpop.f32.mrb[0].mxu0
  %7607 = vmatprep.mubr.f32.mxu0 0.0
  %7608 = vmatmul.mubr.f32.gmra.mrb[0].mxu0 %v7408
  %v7609 = vpop.f32.mrb[0].mxu0
  %v7610 = vadd.f32 0.0, %v7609
  %v7611 = vpop.f32.mrb[0].mxu0
  %7612 = vmatprep.mubr.f32.mxu0 0.0
  %7613 = vmatmul.mubr.f32.gmra.mrb[0].mxu0 %v7411
  %v7614 = vpop.f32.mrb[0].mxu0
  %v7615 = vadd.f32 0.0, %v7614
  %v7616 = vpop.f32.mrb[0].mxu0
  %7617 = vmatprep.mubr.f32.mxu0 0.0
  %7618 = vmatmul.mubr.f32.gmra.mrb[0].mxu0 %v7414
  %v7619 = vpop.f32.mrb[0].mxu0
  %v7620 = vadd.f32 0.0, %v7619
  %v7621 = vpop.f32.mrb[0].mxu0
  %7622 = vmatprep.mubr.f32.mxu0 0.0
  %7623 = vmatmul.mubr.f32.gmra.mrb[0].mxu0 %v7417
  %v7624 = vpop.f32.mrb[0].mxu0
  %v7625 = vadd.f32 0.0, %v7624
  %v7626 = vpop.f32.mrb[0].mxu0
  %7627 = vmatprep.mubr.f32.mxu0 0.0
  %7628 = vmatmul.mubr.f32.gmra.mrb[0].mxu0 %v7420
  %v7629 = vpop.f32.mrb[0].mxu0
  %v7630 = vadd.f32 0.0, %v7629
  %v7631 = vpop.f32.mrb[0].mxu0
  %7632 = vmatprep.mubr.f32.mxu0 0.0
  %7633 = vmatmul.mubr.f32.gmra.mrb[0].mxu0 %v7423
  %v7634 = vpop.f32.mrb[0].mxu0
  %v7635 = vadd.f32 0.0, %v7634
  %v7636 = vpop.f32.mrb[0].mxu0
  %7637 = vmatprep.mubr.f32.mxu0 0.0
  %7638 = vmatmul.mubr.f32.gmra.mrb[0].mxu0 %v7426
  %v7639 = vpop.f32.mrb[0].mxu0
  %v7640 = vadd.f32 0.0, %v7639
  %v7641 = vpop.f32.mrb[0].mxu0
  %7642 = vdwg.mxu0
  %v7643 = vadd.f32 %v7266, %v7495
  %v7644 = vadd.f32 %v7267, %v7500
  %v7645 = vadd.f32 %v7268, %v7505
  %v7646 = vadd.f32 %v7269, %v7510
  %v7647 = vadd.f32 %v7270, %v7515
  %v7648 = vadd.f32 %v7271, %v7520
  %v7649 = vadd.f32 %v7272, %v7525
  %v7650 = vadd.f32 %v7273, %v7530
  %v7651 = vadd.f32 %v7274, %v7535
  %v7652 = vadd.f32 %v7275, %v7540
  %v7653 = vadd.f32 %v7276, %v7545
  %v7654 = vadd.f32 %v7277, %v7550
  %v7655 = vadd.f32 %v7278, %v7555
  %v7656 = vadd.f32 %v7279, %v7560
  %v7657 = vadd.f32 %v7280, %v7565
  %v7658 = vadd.f32 %v7281, %v7570
  %v7659 = vadd.f32 %v7282, %v7575
  %v7660 = vadd.f32 %v7283, %v7580
  %v7661 = vadd.f32 %v7284, %v7585
  %v7662 = vadd.f32 %v7285, %v7590
  %v7663 = vadd.f32 %v7286, %v7595
  %v7664 = vadd.f32 %v7287, %v7600
  %v7665 = vadd.f32 %v7288, %v7605
  %v7666 = vadd.f32 %v7289, %v7610
  %v7667 = vadd.f32 %v7290, %v7615
  %v7668 = vadd.f32 %v7291, %v7620
  %v7669 = vadd.f32 %v7292, %v7625
  %v7670 = vadd.f32 %v7293, %v7630
  %v7671 = vadd.f32 %v7294, %v7635
  %v7672 = vadd.f32 %v7295, %v7640
  %v7673 = vld [vmem:[%s1732] sm:$0xff]
  %v7674 = vld [vmem:[%s1732 + $0x8] sm:$0xff]
  %v7675 = vld [vmem:[%s1732 + $0x10] sm:$0xff]
  %v7676 = vld [vmem:[%s1732 + $0x18] sm:$0xff]
  %v7677 = vld [vmem:[%s1732 + $0x20] sm:$0xff]
  %v7678 = vld [vmem:[%s1732 + $0x28] sm:$0xff]
  %v7679 = vld [vmem:[%s1732 + $0x30] sm:$0xff]
  %v7680 = vld [vmem:[%s1732 + $0x38] sm:$0xff]
  %v7681 = vld [vmem:[%s1732 + $0x40] sm:$0xff]
  %v7682 = vld [vmem:[%s1732 + $0x48] sm:$0xff]
  %v7683 = vld [vmem:[%s1732 + $0x50] sm:$0xff]
  %v7684 = vld [vmem:[%s1732 + $0x58] sm:$0xff]
  %v7685 = vld [vmem:[%s1732 + $0x60] sm:$0xff]
  %v7686 = vld [vmem:[%s1732 + $0x68] sm:$0xff]
  %v7687 = vld [vmem:[%s1732 + $0x70] sm:$0xff]
  %v7688 = vld [vmem:[%s1732 + $0x78] sm:$0xff]
  %v7689 = vld [vmem:[%s1732 + $0x80] sm:$0xff]
  %v7690 = vld [vmem:[%s1732 + $0x88] sm:$0xff]
  %v7691 = vld [vmem:[%s1732 + $0x90] sm:$0xff]
  %v7692 = vld [vmem:[%s1732 + $0x98] sm:$0xff]
  %v7693 = vld [vmem:[%s1732 + $0xa0] sm:$0xff]
  %v7694 = vld [vmem:[%s1732 + $0xa8] sm:$0xff]
  %v7695 = vld [vmem:[%s1732 + $0xb0] sm:$0xff]
  %v7696 = vld [vmem:[%s1732 + $0xb8] sm:$0xff]
  %v7697 = vld [vmem:[%s1732 + $0xc0] sm:$0xff]
  %v7698 = vld [vmem:[%s1732 + $0xc8] sm:$0xff]
  %v7699 = vld [vmem:[%s1732 + $0xd0] sm:$0xff]
  %v7700 = vld [vmem:[%s1732 + $0xd8] sm:$0xff]
  %v7701 = vld [vmem:[%s1732 + $0xe0] sm:$0xff]
  %v7702 = vld [vmem:[%s1732 + $0xe8] sm:$0xff]
  %7703 = vrot.lane.b32.xlu0 %v5989, 124
  %v7704 = vpop.permute.xlu0 %7703
  %7705 = vrot.lane.b32.xlu0 %v5990, 124
  %v7706 = vpop.permute.xlu0 %7705
  %7707 = vrot.lane.b32.xlu0 %v5991, 124
  %v7708 = vpop.permute.xlu0 %7707
  %7709 = vrot.lane.b32.xlu0 %v5992, 124
  %v7710 = vpop.permute.xlu0 %7709
  %v7716 = vsel %vm108, %v7673, 0
  %v7719 = vsel %vm108, %v7674, 0
  %v7722 = vsel %vm108, %v7675, 0
  %v7725 = vsel %vm108, %v7676, 0
  %v7728 = vsel %vm108, %v7677, 0
  %v7731 = vsel %vm108, %v7678, 0
  %v7734 = vsel %vm108, %v7679, 0
  %v7737 = vsel %vm108, %v7680, 0
  %v7740 = vsel %vm108, %v7681, 0
  %v7743 = vsel %vm108, %v7682, 0
  %v7746 = vsel %vm108, %v7683, 0
  %v7749 = vsel %vm108, %v7684, 0
  %v7752 = vsel %vm108, %v7685, 0
  %v7755 = vsel %vm108, %v7686, 0
  %v7758 = vsel %vm108, %v7687, 0
  %v7761 = vsel %vm108, %v7688, 0
  %v7764 = vsel %vm108, %v7689, 0
  %v7767 = vsel %vm108, %v7690, 0
  %v7770 = vsel %vm108, %v7691, 0
  %v7773 = vsel %vm108, %v7692, 0
  %v7776 = vsel %vm108, %v7693, 0
  %v7779 = vsel %vm108, %v7694, 0
  %v7782 = vsel %vm108, %v7695, 0
  %v7785 = vsel %vm108, %v7696, 0
  %v7788 = vsel %vm108, %v7697, 0
  %v7791 = vsel %vm108, %v7698, 0
  %v7794 = vsel %vm108, %v7699, 0
  %v7797 = vsel %vm108, %v7700, 0
  %v7800 = vsel %vm108, %v7701, 0
  %v7803 = vsel %vm108, %v7702, 0
  %7805 = vmatprep.subr.mxu0 0.0
  %7806 = vmatpush1.msra.mxu0 %v7704
  %7807 = vmatprep.subr.mxu0 0.0
  %7808 = vmatpush1.msra.mxu0 %v7706
  %7809 = vmatprep.subr.mxu0 0.0
  %7810 = vmatpush1.msra.mxu0 %v7708
  %7811 = vmatprep.subr.mxu0 0.0
  %7812 = vmatpush1.msra.mxu0 %v7710
  %7813 = vmatprep.subr.mxu0 0.0
  %7814 = vmatpush1.msra.mxu0 0.0
  %7815 = vmatprep.subr.mxu0 0.0
  %7816 = vmatpush1.msra.mxu0 0.0
  %7817 = vmatprep.subr.mxu0 0.0
  %7818 = vmatpush1.msra.mxu0 0.0
  %7819 = vmatprep.subr.mxu0 0.0
  %7820 = vmatpush1.msra.mxu0 0.0
  %7821 = vmatprep.subr.mxu0 0.0
  %7822 = vmatpush1.msra.mxu0 0.0
  %7823 = vmatprep.subr.mxu0 0.0
  %7824 = vmatpush1.msra.mxu0 0.0
  %7825 = vmatprep.subr.mxu0 0.0
  %7826 = vmatpush1.msra.mxu0 0.0
  %7827 = vmatprep.subr.mxu0 0.0
  %7828 = vmatpush1.msra.mxu0 0.0
  %7829 = vmatprep.subr.mxu0 0.0
  %7830 = vmatpush1.msra.mxu0 0.0
  %7831 = vmatprep.subr.mxu0 0.0
  %7832 = vmatpush1.msra.mxu0 0.0
  %7833 = vmatprep.subr.mxu0 0.0
  %7834 = vmatpush1.msra.mxu0 0.0
  %7835 = vmatprep.subr.mxu0 0.0
  %7836 = vmatpush1.msra.mxu0 0.0
  %7837 = vmatprep.subr.mxu0 0.0
  %7838 = vmatpush1.msra.mxu0 0.0
  %7839 = vmatprep.subr.mxu0 0.0
  %7840 = vmatpush1.msra.mxu0 0.0
  %7841 = vmatprep.subr.mxu0 0.0
  %7842 = vmatpush1.msra.mxu0 0.0
  %7843 = vmatprep.subr.mxu0 0.0
  %7844 = vmatpush1.msra.mxu0 0.0
  %7845 = vmatprep.subr.mxu0 0.0
  %7846 = vmatpush1.msra.mxu0 0.0
  %7847 = vmatprep.subr.mxu0 0.0
  %7848 = vmatpush1.msra.mxu0 0.0
  %7849 = vmatprep.subr.mxu0 0.0
  %7850 = vmatpush1.msra.mxu0 0.0
  %7851 = vmatprep.subr.mxu0 0.0
  %7852 = vmatpush1.msra.mxu0 0.0
  %7853 = vmatprep.subr.mxu0 0.0
  %7854 = vmatpush1.msra.mxu0 0.0
  %7855 = vmatprep.subr.mxu0 0.0
  %7856 = vmatpush1.msra.mxu0 0.0
  %7857 = vmatprep.subr.mxu0 0.0
  %7858 = vmatpush1.msra.mxu0 0.0
  %7859 = vmatprep.subr.mxu0 0.0
  %7860 = vmatpush1.msra.mxu0 0.0
  %7861 = vmatprep.subr.mxu0 0.0
  %7862 = vmatpush1.msra.mxu0 0.0
  %7863 = vmatprep.subr.mxu0 0.0
  %7864 = vmatpush1.msra.mxu0 0.0
  %7865 = vmatprep.subr.mxu0 0.0
  %7866 = vmatpush1.msra.mxu0 0.0
  %7867 = vmatprep.subr.mxu0 0.0
  %7868 = vmatpush1.msra.mxu0 0.0
  %7869 = vmatprep.mubr.f32.mxu0 0.0
  %7870 = vmatmul.mubr.f32.gmra.mrb[0].mxu0 %v7716
  %v7871 = vpop.f32.mrb[0].mxu0
  %v7872 = vadd.f32 0.0, %v7871
  %v7873 = vpop.f32.mrb[0].mxu0
  %7874 = vmatprep.mubr.f32.mxu0 0.0
  %7875 = vmatmul.mubr.f32.gmra.mrb[0].mxu0 %v7719
  %v7876 = vpop.f32.mrb[0].mxu0
  %v7877 = vadd.f32 0.0, %v7876
  %v7878 = vpop.f32.mrb[0].mxu0
  %7879 = vmatprep.mubr.f32.mxu0 0.0
  %7880 = vmatmul.mubr.f32.gmra.mrb[0].mxu0 %v7722
  %v7881 = vpop.f32.mrb[0].mxu0
  %v7882 = vadd.f32 0.0, %v7881
  %v7883 = vpop.f32.mrb[0].mxu0
  %7884 = vmatprep.mubr.f32.mxu0 0.0
  %7885 = vmatmul.mubr.f32.gmra.mrb[0].mxu0 %v7725
  %v7886 = vpop.f32.mrb[0].mxu0
  %v7887 = vadd.f32 0.0, %v7886
  %v7888 = vpop.f32.mrb[0].mxu0
  %7889 = vmatprep.mubr.f32.mxu0 0.0
  %7890 = vmatmul.mubr.f32.gmra.mrb[0].mxu0 %v7728
  %v7891 = vpop.f32.mrb[0].mxu0
  %v7892 = vadd.f32 0.0, %v7891
  %v7893 = vpop.f32.mrb[0].mxu0
  %7894 = vmatprep.mubr.f32.mxu0 0.0
  %7895 = vmatmul.mubr.f32.gmra.mrb[0].mxu0 %v7731
  %v7896 = vpop.f32.mrb[0].mxu0
  %v7897 = vadd.f32 0.0, %v7896
  %v7898 = vpop.f32.mrb[0].mxu0
  %7899 = vmatprep.mubr.f32.mxu0 0.0
  %7900 = vmatmul.mubr.f32.gmra.mrb[0].mxu0 %v7734
  %v7901 = vpop.f32.mrb[0].mxu0
  %v7902 = vadd.f32 0.0, %v7901
  %v7903 = vpop.f32.mrb[0].mxu0
  %7904 = vmatprep.mubr.f32.mxu0 0.0
  %7905 = vmatmul.mubr.f32.gmra.mrb[0].mxu0 %v7737
  %v7906 = vpop.f32.mrb[0].mxu0
  %v7907 = vadd.f32 0.0, %v7906
  %v7908 = vpop.f32.mrb[0].mxu0
  %7909 = vmatprep.mubr.f32.mxu0 0.0
  %7910 = vmatmul.mubr.f32.gmra.mrb[0].mxu0 %v7740
  %v7911 = vpop.f32.mrb[0].mxu0
  %v7912 = vadd.f32 0.0, %v7911
  %v7913 = vpop.f32.mrb[0].mxu0
  %7914 = vmatprep.mubr.f32.mxu0 0.0
  %7915 = vmatmul.mubr.f32.gmra.mrb[0].mxu0 %v7743
  %v7916 = vpop.f32.mrb[0].mxu0
  %v7917 = vadd.f32 0.0, %v7916
  %v7918 = vpop.f32.mrb[0].mxu0
  %7919 = vmatprep.mubr.f32.mxu0 0.0
  %7920 = vmatmul.mubr.f32.gmra.mrb[0].mxu0 %v7746
  %v7921 = vpop.f32.mrb[0].mxu0
  %v7922 = vadd.f32 0.0, %v7921
  %v7923 = vpop.f32.mrb[0].mxu0
  %7924 = vmatprep.mubr.f32.mxu0 0.0
  %7925 = vmatmul.mubr.f32.gmra.mrb[0].mxu0 %v7749
  %v7926 = vpop.f32.mrb[0].mxu0
  %v7927 = vadd.f32 0.0, %v7926
  %v7928 = vpop.f32.mrb[0].mxu0
  %7929 = vmatprep.mubr.f32.mxu0 0.0
  %7930 = vmatmul.mubr.f32.gmra.mrb[0].mxu0 %v7752
  %v7931 = vpop.f32.mrb[0].mxu0
  %v7932 = vadd.f32 0.0, %v7931
  %v7933 = vpop.f32.mrb[0].mxu0
  %7934 = vmatprep.mubr.f32.mxu0 0.0
  %7935 = vmatmul.mubr.f32.gmra.mrb[0].mxu0 %v7755
  %v7936 = vpop.f32.mrb[0].mxu0
  %v7937 = vadd.f32 0.0, %v7936
  %v7938 = vpop.f32.mrb[0].mxu0
  %7939 = vmatprep.mubr.f32.mxu0 0.0
  %7940 = vmatmul.mubr.f32.gmra.mrb[0].mxu0 %v7758
  %v7941 = vpop.f32.mrb[0].mxu0
  %v7942 = vadd.f32 0.0, %v7941
  %v7943 = vpop.f32.mrb[0].mxu0
  %7944 = vmatprep.mubr.f32.mxu0 0.0
  %7945 = vmatmul.mubr.f32.gmra.mrb[0].mxu0 %v7761
  %v7946 = vpop.f32.mrb[0].mxu0
  %v7947 = vadd.f32 0.0, %v7946
  %v7948 = vpop.f32.mrb[0].mxu0
  %7949 = vmatprep.mubr.f32.mxu0 0.0
  %7950 = vmatmul.mubr.f32.gmra.mrb[0].mxu0 %v7764
  %v7951 = vpop.f32.mrb[0].mxu0
  %v7952 = vadd.f32 0.0, %v7951
  %v7953 = vpop.f32.mrb[0].mxu0
  %7954 = vmatprep.mubr.f32.mxu0 0.0
  %7955 = vmatmul.mubr.f32.gmra.mrb[0].mxu0 %v7767
  %v7956 = vpop.f32.mrb[0].mxu0
  %v7957 = vadd.f32 0.0, %v7956
  %v7958 = vpop.f32.mrb[0].mxu0
  %7959 = vmatprep.mubr.f32.mxu0 0.0
  %7960 = vmatmul.mubr.f32.gmra.mrb[0].mxu0 %v7770
  %v7961 = vpop.f32.mrb[0].mxu0
  %v7962 = vadd.f32 0.0, %v7961
  %v7963 = vpop.f32.mrb[0].mxu0
  %7964 = vmatprep.mubr.f32.mxu0 0.0
  %7965 = vmatmul.mubr.f32.gmra.mrb[0].mxu0 %v7773
  %v7966 = vpop.f32.mrb[0].mxu0
  %v7967 = vadd.f32 0.0, %v7966
  %v7968 = vpop.f32.mrb[0].mxu0
  %7969 = vmatprep.mubr.f32.mxu0 0.0
  %7970 = vmatmul.mubr.f32.gmra.mrb[0].mxu0 %v7776
  %v7971 = vpop.f32.mrb[0].mxu0
  %v7972 = vadd.f32 0.0, %v7971
  %v7973 = vpop.f32.mrb[0].mxu0
  %7974 = vmatprep.mubr.f32.mxu0 0.0
  %7975 = vmatmul.mubr.f32.gmra.mrb[0].mxu0 %v7779
  %v7976 = vpop.f32.mrb[0].mxu0
  %v7977 = vadd.f32 0.0, %v7976
  %v7978 = vpop.f32.mrb[0].mxu0
  %7979 = vmatprep.mubr.f32.mxu0 0.0
  %7980 = vmatmul.mubr.f32.gmra.mrb[0].mxu0 %v7782
  %v7981 = vpop.f32.mrb[0].mxu0
  %v7982 = vadd.f32 0.0, %v7981
  %v7983 = vpop.f32.mrb[0].mxu0
  %7984 = vmatprep.mubr.f32.mxu0 0.0
  %7985 = vmatmul.mubr.f32.gmra.mrb[0].mxu0 %v7785
  %v7986 = vpop.f32.mrb[0].mxu0
  %v7987 = vadd.f32 0.0, %v7986
  %v7988 = vpop.f32.mrb[0].mxu0
  %7989 = vmatprep.mubr.f32.mxu0 0.0
  %7990 = vmatmul.mubr.f32.gmra.mrb[0].mxu0 %v7788
  %v7991 = vpop.f32.mrb[0].mxu0
  %v7992 = vadd.f32 0.0, %v7991
  %v7993 = vpop.f32.mrb[0].mxu0
  %7994 = vmatprep.mubr.f32.mxu0 0.0
  %7995 = vmatmul.mubr.f32.gmra.mrb[0].mxu0 %v7791
  %v7996 = vpop.f32.mrb[0].mxu0
  %v7997 = vadd.f32 0.0, %v7996
  %v7998 = vpop.f32.mrb[0].mxu0
  %7999 = vmatprep.mubr.f32.mxu0 0.0
  %8000 = vmatmul.mubr.f32.gmra.mrb[0].mxu0 %v7794
  %v8001 = vpop.f32.mrb[0].mxu0
  %v8002 = vadd.f32 0.0, %v8001
  %v8003 = vpop.f32.mrb[0].mxu0
  %8004 = vmatprep.mubr.f32.mxu0 0.0
  %8005 = vmatmul.mubr.f32.gmra.mrb[0].mxu0 %v7797
  %v8006 = vpop.f32.mrb[0].mxu0
  %v8007 = vadd.f32 0.0, %v8006
  %v8008 = vpop.f32.mrb[0].mxu0
  %8009 = vmatprep.mubr.f32.mxu0 0.0
  %8010 = vmatmul.mubr.f32.gmra.mrb[0].mxu0 %v7800
  %v8011 = vpop.f32.mrb[0].mxu0
  %v8012 = vadd.f32 0.0, %v8011
  %v8013 = vpop.f32.mrb[0].mxu0
  %8014 = vmatprep.mubr.f32.mxu0 0.0
  %8015 = vmatmul.mubr.f32.gmra.mrb[0].mxu0 %v7803
  %v8016 = vpop.f32.mrb[0].mxu0
  %v8017 = vadd.f32 0.0, %v8016
  %v8018 = vpop.f32.mrb[0].mxu0
  %8019 = vdwg.mxu0
  %v8020 = vadd.f32 %v7643, %v7872
  %v8021 = vadd.f32 %v7644, %v7877
  %v8022 = vadd.f32 %v7645, %v7882
  %v8023 = vadd.f32 %v7646, %v7887
  %v8024 = vadd.f32 %v7647, %v7892
  %v8025 = vadd.f32 %v7648, %v7897
  %v8026 = vadd.f32 %v7649, %v7902
  %v8027 = vadd.f32 %v7650, %v7907
  %v8028 = vadd.f32 %v7651, %v7912
  %v8029 = vadd.f32 %v7652, %v7917
  %v8030 = vadd.f32 %v7653, %v7922
  %v8031 = vadd.f32 %v7654, %v7927
  %v8032 = vadd.f32 %v7655, %v7932
  %v8033 = vadd.f32 %v7656, %v7937
  %v8034 = vadd.f32 %v7657, %v7942
  %v8035 = vadd.f32 %v7658, %v7947
  %v8036 = vadd.f32 %v7659, %v7952
  %v8037 = vadd.f32 %v7660, %v7957
  %v8038 = vadd.f32 %v7661, %v7962
  %v8039 = vadd.f32 %v7662, %v7967
  %v8040 = vadd.f32 %v7663, %v7972
  %v8041 = vadd.f32 %v7664, %v7977
  %v8042 = vadd.f32 %v7665, %v7982
  %v8043 = vadd.f32 %v7666, %v7987
  %v8044 = vadd.f32 %v7667, %v7992
  %v8045 = vadd.f32 %v7668, %v7997
  %v8046 = vadd.f32 %v7669, %v8002
  %v8047 = vadd.f32 %v7670, %v8007
  %v8048 = vadd.f32 %v7671, %v8012
  %v8049 = vadd.f32 %v7672, %v8017
  %v8050 = vmax.f32 %v8020, 0.0
  %v8051 = vmax.f32 %v8021, 0.0
  %v8052 = vmax.f32 %v8022, 0.0
  %v8053 = vmax.f32 %v8023, 0.0
  %v8054 = vmax.f32 %v8024, 0.0
  %v8055 = vmax.f32 %v8025, 0.0
  %v8056 = vmax.f32 %v8026, 0.0
  %v8057 = vmax.f32 %v8027, 0.0
  %v8058 = vmax.f32 %v8028, 0.0
  %v8059 = vmax.f32 %v8029, 0.0
  %v8060 = vmax.f32 %v8030, 0.0
  %v8061 = vmax.f32 %v8031, 0.0
  %v8062 = vmax.f32 %v8032, 0.0
  %v8063 = vmax.f32 %v8033, 0.0
  %v8064 = vmax.f32 %v8034, 0.0
  %v8065 = vmax.f32 %v8035, 0.0
  %v8066 = vmax.f32 %v8036, 0.0
  %v8067 = vmax.f32 %v8037, 0.0
  %v8068 = vmax.f32 %v8038, 0.0
  %v8069 = vmax.f32 %v8039, 0.0
  %v8070 = vmax.f32 %v8040, 0.0
  %v8071 = vmax.f32 %v8041, 0.0
  %v8072 = vmax.f32 %v8042, 0.0
  %v8073 = vmax.f32 %v8043, 0.0
  %v8074 = vmax.f32 %v8044, 0.0
  %v8075 = vmax.f32 %v8045, 0.0
  %v8076 = vmax.f32 %v8046, 0.0
  %v8077 = vmax.f32 %v8047, 0.0
  %v8078 = vmax.f32 %v8048, 0.0
  %v8079 = vmax.f32 %v8049, 0.0
  %8110 = vrot.lane.b32.xlu0 %v8050, 127
  %v8111 = vpop.permute.xlu0 %8110
  %8112 = vrot.lane.b32.xlu0 %v8051, 127
  %v8113 = vpop.permute.xlu0 %8112
  %8114 = vrot.lane.b32.xlu0 %v8052, 127
  %v8115 = vpop.permute.xlu0 %8114
  %8116 = vrot.lane.b32.xlu0 %v8053, 127
  %v8117 = vpop.permute.xlu0 %8116
  %8118 = vrot.lane.b32.xlu0 %v8054, 127
  %v8119 = vpop.permute.xlu0 %8118
  %8120 = vrot.lane.b32.xlu0 %v8055, 127
  %v8121 = vpop.permute.xlu0 %8120
  %8122 = vrot.lane.b32.xlu0 %v8056, 127
  %v8123 = vpop.permute.xlu0 %8122
  %8124 = vrot.lane.b32.xlu0 %v8057, 127
  %v8125 = vpop.permute.xlu0 %8124
  %8126 = vrot.lane.b32.xlu0 %v8058, 127
  %v8127 = vpop.permute.xlu0 %8126
  %8128 = vrot.lane.b32.xlu0 %v8059, 127
  %v8129 = vpop.permute.xlu0 %8128
  %8130 = vrot.lane.b32.xlu0 %v8060, 127
  %v8131 = vpop.permute.xlu0 %8130
  %8132 = vrot.lane.b32.xlu0 %v8061, 127
  %v8133 = vpop.permute.xlu0 %8132
  %8134 = vrot.lane.b32.xlu0 %v8062, 127
  %v8135 = vpop.permute.xlu0 %8134
  %8136 = vrot.lane.b32.xlu0 %v8063, 127
  %v8137 = vpop.permute.xlu0 %8136
  %8138 = vrot.lane.b32.xlu0 %v8064, 127
  %v8139 = vpop.permute.xlu0 %8138
  %8140 = vrot.lane.b32.xlu0 %v8065, 127
  %v8141 = vpop.permute.xlu0 %8140
  %8142 = vrot.lane.b32.xlu0 %v8066, 127
  %v8143 = vpop.permute.xlu0 %8142
  %8144 = vrot.lane.b32.xlu0 %v8067, 127
  %v8145 = vpop.permute.xlu0 %8144
  %8146 = vrot.lane.b32.xlu0 %v8068, 127
  %v8147 = vpop.permute.xlu0 %8146
  %8148 = vrot.lane.b32.xlu0 %v8069, 127
  %v8149 = vpop.permute.xlu0 %8148
  %8150 = vrot.lane.b32.xlu0 %v8070, 127
  %v8151 = vpop.permute.xlu0 %8150
  %8152 = vrot.lane.b32.xlu0 %v8071, 127
  %v8153 = vpop.permute.xlu0 %8152
  %8154 = vrot.lane.b32.xlu0 %v8072, 127
  %v8155 = vpop.permute.xlu0 %8154
  %8156 = vrot.lane.b32.xlu0 %v8073, 127
  %v8157 = vpop.permute.xlu0 %8156
  %8158 = vrot.lane.b32.xlu0 %v8074, 127
  %v8159 = vpop.permute.xlu0 %8158
  %8160 = vrot.lane.b32.xlu0 %v8075, 127
  %v8161 = vpop.permute.xlu0 %8160
  %8162 = vrot.lane.b32.xlu0 %v8076, 127
  %v8163 = vpop.permute.xlu0 %8162
  %8164 = vrot.lane.b32.xlu0 %v8077, 127
  %v8165 = vpop.permute.xlu0 %8164
  %8166 = vrot.lane.b32.xlu0 %v8078, 127
  %v8167 = vpop.permute.xlu0 %8166
  %8168 = vrot.lane.b32.xlu0 %v8079, 127
  %v8169 = vpop.permute.xlu0 %8168
  %v8200 = vmax.f32 %v8050, %v8111
  %v8201 = vmax.f32 %v8051, %v8113
  %v8202 = vmax.f32 %v8052, %v8115
  %v8203 = vmax.f32 %v8053, %v8117
  %v8204 = vmax.f32 %v8054, %v8119
  %v8205 = vmax.f32 %v8055, %v8121
  %v8206 = vmax.f32 %v8056, %v8123
  %v8207 = vmax.f32 %v8057, %v8125
  %v8208 = vmax.f32 %v8058, %v8127
  %v8209 = vmax.f32 %v8059, %v8129
  %v8210 = vmax.f32 %v8060, %v8131
  %v8211 = vmax.f32 %v8061, %v8133
  %v8212 = vmax.f32 %v8062, %v8135
  %v8213 = vmax.f32 %v8063, %v8137
  %v8214 = vmax.f32 %v8064, %v8139
  %v8215 = vmax.f32 %v8065, %v8141
  %v8216 = vmax.f32 %v8066, %v8143
  %v8217 = vmax.f32 %v8067, %v8145
  %v8218 = vmax.f32 %v8068, %v8147
  %v8219 = vmax.f32 %v8069, %v8149
  %v8220 = vmax.f32 %v8070, %v8151
  %v8221 = vmax.f32 %v8071, %v8153
  %v8222 = vmax.f32 %v8072, %v8155
  %v8223 = vmax.f32 %v8073, %v8157
  %v8224 = vmax.f32 %v8074, %v8159
  %v8225 = vmax.f32 %v8075, %v8161
  %v8226 = vmax.f32 %v8076, %v8163
  %v8227 = vmax.f32 %v8077, %v8165
  %v8228 = vmax.f32 %v8078, %v8167
  %v8229 = vmax.f32 %v8079, %v8169
  %v8230 = vld [vmem:[%s3] sm:$0xff]
  %v8231 = vld [vmem:[%s3 + $0x8] sm:$0xff]
  %v8232 = vld [vmem:[%s3 + $0x10] sm:$0x7f]
  %v8234 = vsel %vm2293, %v8200, 0
  %v8237 = vsel %vm2293, %v8201, 0
  %v8240 = vsel %vm2293, %v8202, 0
  %v8243 = vsel %vm2293, %v8203, 0
  %v8246 = vsel %vm2293, %v8204, 0
  %v8249 = vsel %vm2293, %v8205, 0
  %v8252 = vsel %vm2293, %v8206, 0
  %v8255 = vsel %vm2293, %v8207, 0
  %v8258 = vsel %vm2293, %v8208, 0
  %v8261 = vsel %vm2293, %v8209, 0
  %v8264 = vsel %vm2293, %v8210, 0
  %v8267 = vsel %vm2293, %v8211, 0
  %v8270 = vsel %vm2293, %v8212, 0
  %v8273 = vsel %vm2293, %v8213, 0
  %v8276 = vsel %vm2293, %v8214, 0
  %v8279 = vsel %vm2293, %v8215, 0
  %v8282 = vsel %vm2293, %v8216, 0
  %v8285 = vsel %vm2293, %v8217, 0
  %v8288 = vsel %vm2293, %v8218, 0
  %v8291 = vsel %vm2293, %v8219, 0
  %v8294 = vsel %vm2293, %v8220, 0
  %v8297 = vsel %vm2293, %v8221, 0
  %v8300 = vsel %vm2293, %v8222, 0
  %v8303 = vsel %vm2293, %v8223, 0
  %v8306 = vsel %vm2293, %v8224, 0
  %v8309 = vsel %vm2293, %v8225, 0
  %v8312 = vsel %vm2293, %v8226, 0
  %v8315 = vsel %vm2293, %v8227, 0
  %v8318 = vsel %vm2293, %v8228, 0
  %v8321 = vsel %vm2293, %v8229, 0
  %v8324 = vsel %vm2384, %v8232, 0
  %8326 = vmatprep.subr.mxu0 0.0
  %8327 = vmatpush1.msra.mxu0 %v8230
  %8328 = vmatprep.subr.mxu0 0.0
  %8329 = vmatpush1.msra.mxu0 %v8231
  %8330 = vmatprep.subr.mxu0 0.0
  %8331 = vmatpush1.msra.mxu0 %v8324
  %8332 = vmatprep.subr.mxu0 0.0
  %8333 = vmatpush1.msra.mxu0 0.0
  %8334 = vmatprep.subr.mxu0 0.0
  %8335 = vmatpush1.msra.mxu0 0.0
  %8336 = vmatprep.subr.mxu0 0.0
  %8337 = vmatpush1.msra.mxu0 0.0
  %8338 = vmatprep.subr.mxu0 0.0
  %8339 = vmatpush1.msra.mxu0 0.0
  %8340 = vmatprep.subr.mxu0 0.0
  %8341 = vmatpush1.msra.mxu0 0.0
  %8342 = vmatprep.subr.mxu0 0.0
  %8343 = vmatpush1.msra.mxu0 0.0
  %8344 = vmatprep.subr.mxu0 0.0
  %8345 = vmatpush1.msra.mxu0 0.0
  %8346 = vmatprep.subr.mxu0 0.0
  %8347 = vmatpush1.msra.mxu0 0.0
  %8348 = vmatprep.subr.mxu0 0.0
  %8349 = vmatpush1.msra.mxu0 0.0
  %8350 = vmatprep.subr.mxu0 0.0
  %8351 = vmatpush1.msra.mxu0 0.0
  %8352 = vmatprep.subr.mxu0 0.0
  %8353 = vmatpush1.msra.mxu0 0.0
  %8354 = vmatprep.subr.mxu0 0.0
  %8355 = vmatpush1.msra.mxu0 0.0
  %8356 = vmatprep.subr.mxu0 0.0
  %8357 = vmatpush1.msra.mxu0 0.0
  %8358 = vmatprep.subr.mxu0 0.0
  %8359 = vmatpush1.msra.mxu0 0.0
  %8360 = vmatprep.subr.mxu0 0.0
  %8361 = vmatpush1.msra.mxu0 0.0
  %8362 = vmatprep.subr.mxu0 0.0
  %8363 = vmatpush1.msra.mxu0 0.0
  %8364 = vmatprep.subr.mxu0 0.0
  %8365 = vmatpush1.msra.mxu0 0.0
  %8366 = vmatprep.subr.mxu0 0.0
  %8367 = vmatpush1.msra.mxu0 0.0
  %8368 = vmatprep.subr.mxu0 0.0
  %8369 = vmatpush1.msra.mxu0 0.0
  %8370 = vmatprep.subr.mxu0 0.0
  %8371 = vmatpush1.msra.mxu0 0.0
  %8372 = vmatprep.subr.mxu0 0.0
  %8373 = vmatpush1.msra.mxu0 0.0
  %8374 = vmatprep.subr.mxu0 0.0
  %8375 = vmatpush1.msra.mxu0 0.0
  %8376 = vmatprep.subr.mxu0 0.0
  %8377 = vmatpush1.msra.mxu0 0.0
  %8378 = vmatprep.subr.mxu0 0.0
  %8379 = vmatpush1.msra.mxu0 0.0
  %8380 = vmatprep.subr.mxu0 0.0
  %8381 = vmatpush1.msra.mxu0 0.0
  %8382 = vmatprep.subr.mxu0 0.0
  %8383 = vmatpush1.msra.mxu0 0.0
  %8384 = vmatprep.subr.mxu0 0.0
  %8385 = vmatpush1.msra.mxu0 0.0
  %8386 = vmatprep.subr.mxu0 0.0
  %8387 = vmatpush1.msra.mxu0 0.0
  %8388 = vmatprep.subr.mxu0 0.0
  %8389 = vmatpush1.msra.mxu0 0.0
  %8390 = vmatprep.mubr.f32.mxu0 0.0
  %8391 = vmatmul.mubr.f32.gmra.mrb[0].mxu0 %v8234
  %v8392 = vpop.f32.mrb[0].mxu0
  %v8393 = vadd.f32 0.0, %v8392
  %v8394 = vpop.f32.mrb[0].mxu0
  %8395 = vmatprep.mubr.f32.mxu0 0.0
  %8396 = vmatmul.mubr.f32.gmra.mrb[0].mxu0 %v8237
  %v8397 = vpop.f32.mrb[0].mxu0
  %v8398 = vadd.f32 0.0, %v8397
  %v8399 = vpop.f32.mrb[0].mxu0
  %8400 = vmatprep.mubr.f32.mxu0 0.0
  %8401 = vmatmul.mubr.f32.gmra.mrb[0].mxu0 %v8240
  %v8402 = vpop.f32.mrb[0].mxu0
  %v8403 = vadd.f32 0.0, %v8402
  %v8404 = vpop.f32.mrb[0].mxu0
  %8405 = vmatprep.mubr.f32.mxu0 0.0
  %8406 = vmatmul.mubr.f32.gmra.mrb[0].mxu0 %v8243
  %v8407 = vpop.f32.mrb[0].mxu0
  %v8408 = vadd.f32 0.0, %v8407
  %v8409 = vpop.f32.mrb[0].mxu0
  %8410 = vmatprep.mubr.f32.mxu0 0.0
  %8411 = vmatmul.mubr.f32.gmra.mrb[0].mxu0 %v8246
  %v8412 = vpop.f32.mrb[0].mxu0
  %v8413 = vadd.f32 0.0, %v8412
  %v8414 = vpop.f32.mrb[0].mxu0
  %8415 = vmatprep.mubr.f32.mxu0 0.0
  %8416 = vmatmul.mubr.f32.gmra.mrb[0].mxu0 %v8249
  %v8417 = vpop.f32.mrb[0].mxu0
  %v8418 = vadd.f32 0.0, %v8417
  %v8419 = vpop.f32.mrb[0].mxu0
  %8420 = vmatprep.mubr.f32.mxu0 0.0
  %8421 = vmatmul.mubr.f32.gmra.mrb[0].mxu0 %v8252
  %v8422 = vpop.f32.mrb[0].mxu0
  %v8423 = vadd.f32 0.0, %v8422
  %v8424 = vpop.f32.mrb[0].mxu0
  %8425 = vmatprep.mubr.f32.mxu0 0.0
  %8426 = vmatmul.mubr.f32.gmra.mrb[0].mxu0 %v8255
  %v8427 = vpop.f32.mrb[0].mxu0
  %v8428 = vadd.f32 0.0, %v8427
  %v8429 = vpop.f32.mrb[0].mxu0
  %8430 = vmatprep.mubr.f32.mxu0 0.0
  %8431 = vmatmul.mubr.f32.gmra.mrb[0].mxu0 %v8258
  %v8432 = vpop.f32.mrb[0].mxu0
  %v8433 = vadd.f32 0.0, %v8432
  %v8434 = vpop.f32.mrb[0].mxu0
  %8435 = vmatprep.mubr.f32.mxu0 0.0
  %8436 = vmatmul.mubr.f32.gmra.mrb[0].mxu0 %v8261
  %v8437 = vpop.f32.mrb[0].mxu0
  %v8438 = vadd.f32 0.0, %v8437
  %v8439 = vpop.f32.mrb[0].mxu0
  %8440 = vmatprep.mubr.f32.mxu0 0.0
  %8441 = vmatmul.mubr.f32.gmra.mrb[0].mxu0 %v8264
  %v8442 = vpop.f32.mrb[0].mxu0
  %v8443 = vadd.f32 0.0, %v8442
  %v8444 = vpop.f32.mrb[0].mxu0
  %8445 = vmatprep.mubr.f32.mxu0 0.0
  %8446 = vmatmul.mubr.f32.gmra.mrb[0].mxu0 %v8267
  %v8447 = vpop.f32.mrb[0].mxu0
  %v8448 = vadd.f32 0.0, %v8447
  %v8449 = vpop.f32.mrb[0].mxu0
  %8450 = vmatprep.mubr.f32.mxu0 0.0
  %8451 = vmatmul.mubr.f32.gmra.mrb[0].mxu0 %v8270
  %v8452 = vpop.f32.mrb[0].mxu0
  %v8453 = vadd.f32 0.0, %v8452
  %v8454 = vpop.f32.mrb[0].mxu0
  %8455 = vmatprep.mubr.f32.mxu0 0.0
  %8456 = vmatmul.mubr.f32.gmra.mrb[0].mxu0 %v8273
  %v8457 = vpop.f32.mrb[0].mxu0
  %v8458 = vadd.f32 0.0, %v8457
  %v8459 = vpop.f32.mrb[0].mxu0
  %8460 = vmatprep.mubr.f32.mxu0 0.0
  %8461 = vmatmul.mubr.f32.gmra.mrb[0].mxu0 %v8276
  %v8462 = vpop.f32.mrb[0].mxu0
  %v8463 = vadd.f32 0.0, %v8462
  %v8464 = vpop.f32.mrb[0].mxu0
  %8465 = vmatprep.mubr.f32.mxu0 0.0
  %8466 = vmatmul.mubr.f32.gmra.mrb[0].mxu0 %v8279
  %v8467 = vpop.f32.mrb[0].mxu0
  %v8468 = vadd.f32 0.0, %v8467
  %v8469 = vpop.f32.mrb[0].mxu0
  %8470 = vmatprep.mubr.f32.mxu0 0.0
  %8471 = vmatmul.mubr.f32.gmra.mrb[0].mxu0 %v8282
  %v8472 = vpop.f32.mrb[0].mxu0
  %v8473 = vadd.f32 0.0, %v8472
  %v8474 = vpop.f32.mrb[0].mxu0
  %8475 = vmatprep.mubr.f32.mxu0 0.0
  %8476 = vmatmul.mubr.f32.gmra.mrb[0].mxu0 %v8285
  %v8477 = vpop.f32.mrb[0].mxu0
  %v8478 = vadd.f32 0.0, %v8477
  %v8479 = vpop.f32.mrb[0].mxu0
  %8480 = vmatprep.mubr.f32.mxu0 0.0
  %8481 = vmatmul.mubr.f32.gmra.mrb[0].mxu0 %v8288
  %v8482 = vpop.f32.mrb[0].mxu0
  %v8483 = vadd.f32 0.0, %v8482
  %v8484 = vpop.f32.mrb[0].mxu0
  %8485 = vmatprep.mubr.f32.mxu0 0.0
  %8486 = vmatmul.mubr.f32.gmra.mrb[0].mxu0 %v8291
  %v8487 = vpop.f32.mrb[0].mxu0
  %v8488 = vadd.f32 0.0, %v8487
  %v8489 = vpop.f32.mrb[0].mxu0
  %8490 = vmatprep.mubr.f32.mxu0 0.0
  %8491 = vmatmul.mubr.f32.gmra.mrb[0].mxu0 %v8294
  %v8492 = vpop.f32.mrb[0].mxu0
  %v8493 = vadd.f32 0.0, %v8492
  %v8494 = vpop.f32.mrb[0].mxu0
  %8495 = vmatprep.mubr.f32.mxu0 0.0
  %8496 = vmatmul.mubr.f32.gmra.mrb[0].mxu0 %v8297
  %v8497 = vpop.f32.mrb[0].mxu0
  %v8498 = vadd.f32 0.0, %v8497
  %v8499 = vpop.f32.mrb[0].mxu0
  %8500 = vmatprep.mubr.f32.mxu0 0.0
  %8501 = vmatmul.mubr.f32.gmra.mrb[0].mxu0 %v8300
  %v8502 = vpop.f32.mrb[0].mxu0
  %v8503 = vadd.f32 0.0, %v8502
  %v8504 = vpop.f32.mrb[0].mxu0
  %8505 = vmatprep.mubr.f32.mxu0 0.0
  %8506 = vmatmul.mubr.f32.gmra.mrb[0].mxu0 %v8303
  %v8507 = vpop.f32.mrb[0].mxu0
  %v8508 = vadd.f32 0.0, %v8507
  %v8509 = vpop.f32.mrb[0].mxu0
  %8510 = vmatprep.mubr.f32.mxu0 0.0
  %8511 = vmatmul.mubr.f32.gmra.mrb[0].mxu0 %v8306
  %v8512 = vpop.f32.mrb[0].mxu0
  %v8513 = vadd.f32 0.0, %v8512
  %v8514 = vpop.f32.mrb[0].mxu0
  %8515 = vmatprep.mubr.f32.mxu0 0.0
  %8516 = vmatmul.mubr.f32.gmra.mrb[0].mxu0 %v8309
  %v8517 = vpop.f32.mrb[0].mxu0
  %v8518 = vadd.f32 0.0, %v8517
  %v8519 = vpop.f32.mrb[0].mxu0
  %8520 = vmatprep.mubr.f32.mxu0 0.0
  %8521 = vmatmul.mubr.f32.gmra.mrb[0].mxu0 %v8312
  %v8522 = vpop.f32.mrb[0].mxu0
  %v8523 = vadd.f32 0.0, %v8522
  %v8524 = vpop.f32.mrb[0].mxu0
  %8525 = vmatprep.mubr.f32.mxu0 0.0
  %8526 = vmatmul.mubr.f32.gmra.mrb[0].mxu0 %v8315
  %v8527 = vpop.f32.mrb[0].mxu0
  %v8528 = vadd.f32 0.0, %v8527
  %v8529 = vpop.f32.mrb[0].mxu0
  %8530 = vmatprep.mubr.f32.mxu0 0.0
  %8531 = vmatmul.mubr.f32.gmra.mrb[0].mxu0 %v8318
  %v8532 = vpop.f32.mrb[0].mxu0
  %v8533 = vadd.f32 0.0, %v8532
  %v8534 = vpop.f32.mrb[0].mxu0
  %8535 = vmatprep.mubr.f32.mxu0 0.0
  %8536 = vmatmul.mubr.f32.gmra.mrb[0].mxu0 %v8321
  %v8537 = vpop.f32.mrb[0].mxu0
  %v8538 = vadd.f32 0.0, %v8537
  %v8539 = vpop.f32.mrb[0].mxu0
  %8540 = vdwg.mxu0
  %v8571 = vrot.slane %v8393, 1
  %v8572 = vrot.slane %v8398, 1
  %v8573 = vsel %vm2384, %v8571, %v8572
  %v8574 = vrot.slane %v8403, 1
  %v8575 = vsel %vm2384, %v8572, %v8574
  %v8576 = vrot.slane %v8408, 1
  %v8577 = vsel %vm2384, %v8574, %v8576
  %v8578 = vrot.slane %v8413, 1
  %v8579 = vsel %vm2384, %v8576, %v8578
  %v8580 = vrot.slane %v8418, 1
  %v8581 = vsel %vm2384, %v8578, %v8580
  %v8582 = vrot.slane %v8423, 1
  %v8583 = vsel %vm2384, %v8580, %v8582
  %v8584 = vrot.slane %v8428, 1
  %v8585 = vsel %vm2384, %v8582, %v8584
  %v8586 = vrot.slane %v8433, 1
  %v8587 = vsel %vm2384, %v8584, %v8586
  %v8588 = vrot.slane %v8438, 1
  %v8589 = vsel %vm2384, %v8586, %v8588
  %v8590 = vrot.slane %v8443, 1
  %v8591 = vsel %vm2384, %v8588, %v8590
  %v8592 = vrot.slane %v8448, 1
  %v8593 = vsel %vm2384, %v8590, %v8592
  %v8594 = vrot.slane %v8453, 1
  %v8595 = vsel %vm2384, %v8592, %v8594
  %v8596 = vrot.slane %v8458, 1
  %v8597 = vsel %vm2384, %v8594, %v8596
  %v8598 = vrot.slane %v8463, 1
  %v8599 = vsel %vm2384, %v8596, %v8598
  %v8600 = vrot.slane %v8468, 1
  %v8601 = vsel %vm2384, %v8598, %v8600
  %v8602 = vrot.slane %v8473, 1
  %v8603 = vsel %vm2384, %v8600, %v8602
  %v8604 = vrot.slane %v8478, 1
  %v8605 = vsel %vm2384, %v8602, %v8604
  %v8606 = vrot.slane %v8483, 1
  %v8607 = vsel %vm2384, %v8604, %v8606
  %v8608 = vrot.slane %v8488, 1
  %v8609 = vsel %vm2384, %v8606, %v8608
  %v8610 = vrot.slane %v8493, 1
  %v8611 = vsel %vm2384, %v8608, %v8610
  %v8612 = vrot.slane %v8498, 1
  %v8613 = vsel %vm2384, %v8610, %v8612
  %v8614 = vrot.slane %v8503, 1
  %v8615 = vsel %vm2384, %v8612, %v8614
  %v8616 = vrot.slane %v8508, 1
  %v8617 = vsel %vm2384, %v8614, %v8616
  %v8618 = vrot.slane %v8513, 1
  %v8619 = vsel %vm2384, %v8616, %v8618
  %v8620 = vrot.slane %v8518, 1
  %v8621 = vsel %vm2384, %v8618, %v8620
  %v8622 = vrot.slane %v8523, 1
  %v8623 = vsel %vm2384, %v8620, %v8622
  %v8624 = vrot.slane %v8528, 1
  %v8625 = vsel %vm2384, %v8622, %v8624
  %v8626 = vrot.slane %v8533, 1
  %v8627 = vsel %vm2384, %v8624, %v8626
  %v8628 = vrot.slane %v8538, 1
  %v8629 = vsel %vm2384, %v8626, %v8628
  %v8660 = vmax.f32 %v8393, %v8573
  %v8661 = vmax.f32 %v8398, %v8575
  %v8662 = vmax.f32 %v8403, %v8577
  %v8663 = vmax.f32 %v8408, %v8579
  %v8664 = vmax.f32 %v8413, %v8581
  %v8665 = vmax.f32 %v8418, %v8583
  %v8666 = vmax.f32 %v8423, %v8585
  %v8667 = vmax.f32 %v8428, %v8587
  %v8668 = vmax.f32 %v8433, %v8589
  %v8669 = vmax.f32 %v8438, %v8591
  %v8670 = vmax.f32 %v8443, %v8593
  %v8671 = vmax.f32 %v8448, %v8595
  %v8672 = vmax.f32 %v8453, %v8597
  %v8673 = vmax.f32 %v8458, %v8599
  %v8674 = vmax.f32 %v8463, %v8601
  %v8675 = vmax.f32 %v8468, %v8603
  %v8676 = vmax.f32 %v8473, %v8605
  %v8677 = vmax.f32 %v8478, %v8607
  %v8678 = vmax.f32 %v8483, %v8609
  %v8679 = vmax.f32 %v8488, %v8611
  %v8680 = vmax.f32 %v8493, %v8613
  %v8681 = vmax.f32 %v8498, %v8615
  %v8682 = vmax.f32 %v8503, %v8617
  %v8683 = vmax.f32 %v8508, %v8619
  %v8684 = vmax.f32 %v8513, %v8621
  %v8685 = vmax.f32 %v8518, %v8623
  %v8686 = vmax.f32 %v8523, %v8625
  %v8687 = vmax.f32 %v8528, %v8627
  %v8688 = vmax.f32 %v8533, %v8629
  %v8689 = vmax.f32 %v8538, %v8628
  %v8690 = vld [vmem:[%s4] sm:$0xff]
  %v8691 = vld [vmem:[%s4 + $0x8] sm:$0xff]
  %v8692 = vld [vmem:[%s4 + $0x10] sm:$0xff]
  %v8693 = vld [vmem:[%s4 + $0x18] sm:$0xff]
  %v8694 = vld [vmem:[%s4 + $0x20] sm:$0xff]
  %v8695 = vld [vmem:[%s4 + $0x28] sm:$0xff]
  %v8696 = vld [vmem:[%s4 + $0x30] sm:$0xff]
  %v8697 = vld [vmem:[%s4 + $0x38] sm:$0xff]
  %v8698 = vld [vmem:[%s4 + $0x40] sm:$0xff]
  %v8699 = vld [vmem:[%s4 + $0x48] sm:$0xff]
  %v8700 = vld [vmem:[%s4 + $0x50] sm:$0xff]
  %v8701 = vld [vmem:[%s4 + $0x58] sm:$0xff]
  %v8702 = vld [vmem:[%s4 + $0x60] sm:$0xff]
  %v8703 = vld [vmem:[%s4 + $0x68] sm:$0xff]
  %v8704 = vld [vmem:[%s4 + $0x70] sm:$0xff]
  %v8705 = vld [vmem:[%s4 + $0x78] sm:$0xff]
  %v8706 = vld [vmem:[%s4 + $0x80] sm:$0xff]
  %v8707 = vld [vmem:[%s4 + $0x88] sm:$0xff]
  %v8708 = vld [vmem:[%s4 + $0x90] sm:$0xff]
  %v8709 = vld [vmem:[%s4 + $0x98] sm:$0xff]
  %v8710 = vld [vmem:[%s4 + $0xa0] sm:$0xff]
  %v8711 = vld [vmem:[%s4 + $0xa8] sm:$0xff]
  %v8712 = vld [vmem:[%s4 + $0xb0] sm:$0xff]
  %v8713 = vld [vmem:[%s4 + $0xb8] sm:$0xff]
  %v8714 = vld [vmem:[%s4 + $0xc0] sm:$0xff]
  %v8715 = vld [vmem:[%s4 + $0xc8] sm:$0xff]
  %v8716 = vld [vmem:[%s4 + $0xd0] sm:$0xff]
  %v8717 = vld [vmem:[%s4 + $0xd8] sm:$0xff]
  %v8718 = vld [vmem:[%s4 + $0xe0] sm:$0xff]
  %v8719 = vld [vmem:[%s4 + $0xe8] sm:$0xff]
  %v8721 = vsel %vm2782, %v8691, 0
  %v8724 = vsel %vm2782, %v8693, 0
  %v8727 = vsel %vm2782, %v8695, 0
  %v8730 = vsel %vm2782, %v8697, 0
  %v8733 = vsel %vm2782, %v8699, 0
  %v8736 = vsel %vm2782, %v8701, 0
  %v8739 = vsel %vm2782, %v8703, 0
  %v8742 = vsel %vm2782, %v8705, 0
  %v8745 = vsel %vm2782, %v8707, 0
  %v8748 = vsel %vm2782, %v8709, 0
  %v8751 = vsel %vm2782, %v8711, 0
  %v8754 = vsel %vm2782, %v8713, 0
  %v8757 = vsel %vm2782, %v8715, 0
  %v8760 = vsel %vm2782, %v8717, 0
  %v8763 = vsel %vm2782, %v8719, 0
  %v8766 = vsel %vm2384, %v8689, 0
  %8768 = vmatprep.subr.mxu0 0.0
  %8769 = vmatpush1.msra.mxu0 %v8660
  %8770 = vmatprep.subr.mxu0 0.0
  %8771 = vmatpush1.msra.mxu0 %v8661
  %8772 = vmatprep.subr.mxu0 0.0
  %8773 = vmatpush1.msra.mxu0 %v8662
  %8774 = vmatprep.subr.mxu0 0.0
  %8775 = vmatpush1.msra.mxu0 %v8663
  %8776 = vmatprep.subr.mxu0 0.0
  %8777 = vmatpush1.msra.mxu0 %v8664
  %8778 = vmatprep.subr.mxu0 0.0
  %8779 = vmatpush1.msra.mxu0 %v8665
  %8780 = vmatprep.subr.mxu0 0.0
  %8781 = vmatpush1.msra.mxu0 %v8666
  %8782 = vmatprep.subr.mxu0 0.0
  %8783 = vmatpush1.msra.mxu0 %v8667
  %8784 = vmatprep.subr.mxu0 0.0
  %8785 = vmatpush1.msra.mxu0 %v8668
  %8786 = vmatprep.subr.mxu0 0.0
  %8787 = vmatpush1.msra.mxu0 %v8669
  %8788 = vmatprep.subr.mxu0 0.0
  %8789 = vmatpush1.msra.mxu0 %v8670
  %8790 = vmatprep.subr.mxu0 0.0
  %8791 = vmatpush1.msra.mxu0 %v8671
  %8792 = vmatprep.subr.mxu0 0.0
  %8793 = vmatpush1.msra.mxu0 %v8672
  %8794 = vmatprep.subr.mxu0 0.0
  %8795 = vmatpush1.msra.mxu0 %v8673
  %8796 = vmatprep.subr.mxu0 0.0
  %8797 = vmatpush1.msra.mxu0 %v8674
  %8798 = vmatprep.subr.mxu0 0.0
  %8799 = vmatpush1.msra.mxu0 %v8675
  %8800 = vmatprep.subr.mxu0 0.0
  %8801 = vmatpush1.msra.mxu0 %v8676
  %8802 = vmatprep.subr.mxu0 0.0
  %8803 = vmatpush1.msra.mxu0 %v8677
  %8804 = vmatprep.subr.mxu0 0.0
  %8805 = vmatpush1.msra.mxu0 %v8678
  %8806 = vmatprep.subr.mxu0 0.0
  %8807 = vmatpush1.msra.mxu0 %v8679
  %8808 = vmatprep.subr.mxu0 0.0
  %8809 = vmatpush1.msra.mxu0 %v8680
  %8810 = vmatprep.subr.mxu0 0.0
  %8811 = vmatpush1.msra.mxu0 %v8681
  %8812 = vmatprep.subr.mxu0 0.0
  %8813 = vmatpush1.msra.mxu0 %v8682
  %8814 = vmatprep.subr.mxu0 0.0
  %8815 = vmatpush1.msra.mxu0 %v8683
  %8816 = vmatprep.subr.mxu0 0.0
  %8817 = vmatpush1.msra.mxu0 %v8684
  %8818 = vmatprep.subr.mxu0 0.0
  %8819 = vmatpush1.msra.mxu0 %v8685
  %8820 = vmatprep.subr.mxu0 0.0
  %8821 = vmatpush1.msra.mxu0 %v8686
  %8822 = vmatprep.subr.mxu0 0.0
  %8823 = vmatpush1.msra.mxu0 %v8687
  %8824 = vmatprep.subr.mxu0 0.0
  %8825 = vmatpush1.msra.mxu0 %v8688
  %8826 = vmatprep.subr.mxu0 0.0
  %8827 = vmatpush1.msra.mxu0 %v8766
  %8828 = vmatprep.subr.mxu0 0.0
  %8829 = vmatpush1.msra.mxu0 0.0
  %8830 = vmatprep.subr.mxu0 0.0
  %8831 = vmatpush1.msra.mxu0 0.0
  %8832 = vmatprep.mubr.f32.mxu0 %v8721
  %8833 = vmatmul.mubr.f32.gmra.mrb[0].mxu0 %v8690
  %v8834 = vpop.f32.mrb[0].mxu0
  %v8835 = vadd.f32 0.0, %v8834
  %v8836 = vpop.f32.mrb[0].mxu0
  %8837 = vmatprep.mubr.f32.mxu0 %v8724
  %8838 = vmatmul.mubr.f32.gmra.mrb[0].mxu0 %v8692
  %v8839 = vpop.f32.mrb[0].mxu0
  %v8840 = vadd.f32 0.0, %v8839
  %v8841 = vpop.f32.mrb[0].mxu0
  %8842 = vmatprep.mubr.f32.mxu0 %v8727
  %8843 = vmatmul.mubr.f32.gmra.mrb[0].mxu0 %v8694
  %v8844 = vpop.f32.mrb[0].mxu0
  %v8845 = vadd.f32 0.0, %v8844
  %v8846 = vpop.f32.mrb[0].mxu0
  %8847 = vmatprep.mubr.f32.mxu0 %v8730
  %8848 = vmatmul.mubr.f32.gmra.mrb[0].mxu0 %v8696
  %v8849 = vpop.f32.mrb[0].mxu0
  %v8850 = vadd.f32 0.0, %v8849
  %v8851 = vpop.f32.mrb[0].mxu0
  %8852 = vmatprep.mubr.f32.mxu0 %v8733
  %8853 = vmatmul.mubr.f32.gmra.mrb[0].mxu0 %v8698
  %v8854 = vpop.f32.mrb[0].mxu0
  %v8855 = vadd.f32 0.0, %v8854
  %v8856 = vpop.f32.mrb[0].mxu0
  %8857 = vmatprep.mubr.f32.mxu0 %v8736
  %8858 = vmatmul.mubr.f32.gmra.mrb[0].mxu0 %v8700
  %v8859 = vpop.f32.mrb[0].mxu0
  %v8860 = vadd.f32 0.0, %v8859
  %v8861 = vpop.f32.mrb[0].mxu0
  %8862 = vmatprep.mubr.f32.mxu0 %v8739
  %8863 = vmatmul.mubr.f32.gmra.mrb[0].mxu0 %v8702
  %v8864 = vpop.f32.mrb[0].mxu0
  %v8865 = vadd.f32 0.0, %v8864
  %v8866 = vpop.f32.mrb[0].mxu0
  %8867 = vmatprep.mubr.f32.mxu0 %v8742
  %8868 = vmatmul.mubr.f32.gmra.mrb[0].mxu0 %v8704
  %v8869 = vpop.f32.mrb[0].mxu0
  %v8870 = vadd.f32 0.0, %v8869
  %v8871 = vpop.f32.mrb[0].mxu0
  %8872 = vmatprep.mubr.f32.mxu0 %v8745
  %8873 = vmatmul.mubr.f32.gmra.mrb[0].mxu0 %v8706
  %v8874 = vpop.f32.mrb[0].mxu0
  %v8875 = vadd.f32 0.0, %v8874
  %v8876 = vpop.f32.mrb[0].mxu0
  %8877 = vmatprep.mubr.f32.mxu0 %v8748
  %8878 = vmatmul.mubr.f32.gmra.mrb[0].mxu0 %v8708
  %v8879 = vpop.f32.mrb[0].mxu0
  %v8880 = vadd.f32 0.0, %v8879
  %v8881 = vpop.f32.mrb[0].mxu0
  %8882 = vmatprep.mubr.f32.mxu0 %v8751
  %8883 = vmatmul.mubr.f32.gmra.mrb[0].mxu0 %v8710
  %v8884 = vpop.f32.mrb[0].mxu0
  %v8885 = vadd.f32 0.0, %v8884
  %v8886 = vpop.f32.mrb[0].mxu0
  %8887 = vmatprep.mubr.f32.mxu0 %v8754
  %8888 = vmatmul.mubr.f32.gmra.mrb[0].mxu0 %v8712
  %v8889 = vpop.f32.mrb[0].mxu0
  %v8890 = vadd.f32 0.0, %v8889
  %v8891 = vpop.f32.mrb[0].mxu0
  %8892 = vmatprep.mubr.f32.mxu0 %v8757
  %8893 = vmatmul.mubr.f32.gmra.mrb[0].mxu0 %v8714
  %v8894 = vpop.f32.mrb[0].mxu0
  %v8895 = vadd.f32 0.0, %v8894
  %v8896 = vpop.f32.mrb[0].mxu0
  %8897 = vmatprep.mubr.f32.mxu0 %v8760
  %8898 = vmatmul.mubr.f32.gmra.mrb[0].mxu0 %v8716
  %v8899 = vpop.f32.mrb[0].mxu0
  %v8900 = vadd.f32 0.0, %v8899
  %v8901 = vpop.f32.mrb[0].mxu0
  %8902 = vmatprep.mubr.f32.mxu0 %v8763
  %8903 = vmatmul.mubr.f32.gmra.mrb[0].mxu0 %v8718
  %v8904 = vpop.f32.mrb[0].mxu0
  %v8905 = vadd.f32 0.0, %v8904
  %v8906 = vpop.f32.mrb[0].mxu0
  %8907 = vdwg.mxu0
  %v8908 = vld [vmem:[%s6] sm:$0xff]
  %v8909 = vld [vmem:[%s6 + $0x8] sm:$0xff]
  %v8910 = vld [vmem:[%s6 + $0x10] sm:$0xff]
  %v8911 = vld [vmem:[%s6 + $0x18] sm:$0xff]
  %v8912 = vld [vmem:[%s6 + $0x20] sm:$0xff]
  %v8913 = vld [vmem:[%s6 + $0x28] sm:$0xff]
  %v8914 = vld [vmem:[%s6 + $0x30] sm:$0xff]
  %v8915 = vld [vmem:[%s6 + $0x38] sm:$0xff]
  %v8916 = vld [vmem:[%s6 + $0x40] sm:$0xff]
  %v8917 = vld [vmem:[%s6 + $0x48] sm:$0xff]
  %v8918 = vld [vmem:[%s6 + $0x50] sm:$0xff]
  %v8919 = vld [vmem:[%s6 + $0x58] sm:$0xff]
  %v8920 = vld [vmem:[%s6 + $0x60] sm:$0xff]
  %v8921 = vld [vmem:[%s6 + $0x68] sm:$0xff]
  %v8922 = vld [vmem:[%s6 + $0x70] sm:$0xff]
  %v8923 = vld [vmem:[%s6 + $0x78] sm:$0xff]
  %v8924 = vld [vmem:[%s6 + $0x80] sm:$0xff]
  %v8925 = vld [vmem:[%s6 + $0x88] sm:$0xff]
  %v8926 = vld [vmem:[%s6 + $0x90] sm:$0xff]
  %v8927 = vld [vmem:[%s6 + $0x98] sm:$0xff]
  %v8928 = vld [vmem:[%s5] sm:$0xff]
  %v8929 = vld [vmem:[%s5 + $0x8] sm:$0xff]
  %v8930 = vld [vmem:[%s5 + $0x10] sm:$0xff]
  %v8931 = vld [vmem:[%s5 + $0x18] sm:$0xff]
  %v8932 = vld [vmem:[%s5 + $0x20] sm:$0xff]
  %v8933 = vld [vmem:[%s5 + $0x28] sm:$0xff]
  %v8934 = vld [vmem:[%s5 + $0x30] sm:$0xff]
  %v8935 = vld [vmem:[%s5 + $0x38] sm:$0xff]
  %v8936 = vld [vmem:[%s5 + $0x40] sm:$0xff]
  %v8937 = vld [vmem:[%s5 + $0x48] sm:$0xff]
  %v8938 = vld [vmem:[%s5 + $0x50] sm:$0xff]
  %v8939 = vld [vmem:[%s5 + $0x58] sm:$0xff]
  %v8940 = vld [vmem:[%s5 + $0x60] sm:$0xff]
  %v8941 = vld [vmem:[%s5 + $0x68] sm:$0xff]
  %v8942 = vld [vmem:[%s5 + $0x70] sm:$0xff]
  %v8943 = vld [vmem:[%s5 + $0x78] sm:$0xff]
  %v8944 = vld [vmem:[%s5 + $0x80] sm:$0xff]
  %v8945 = vld [vmem:[%s5 + $0x88] sm:$0xff]
  %v8946 = vld [vmem:[%s5 + $0x90] sm:$0xff]
  %v8947 = vld [vmem:[%s5 + $0x98] sm:$0xff]
  %v8949 = vsel %vm3011, %v8928, 0
  %v8952 = vsel %vm3011, %v8929, 0
  %v8955 = vsel %vm3011, %v8930, 0
  %v8958 = vsel %vm3011, %v8931, 0
  %v8961 = vsel %vm3011, %v8932, 0
  %v8964 = vsel %vm3011, %v8933, 0
  %v8967 = vsel %vm3011, %v8934, 0
  %v8970 = vsel %vm3011, %v8935, 0
  %v8973 = vsel %vm3011, %v8936, 0
  %v8976 = vsel %vm3011, %v8937, 0
  %v8979 = vsel %vm3011, %v8938, 0
  %v8982 = vsel %vm3011, %v8939, 0
  %v8985 = vsel %vm3011, %v8940, 0
  %v8988 = vsel %vm3011, %v8941, 0
  %v8991 = vsel %vm3011, %v8942, 0
  %v8994 = vsel %vm3011, %v8943, 0
  %v8997 = vsel %vm3011, %v8944, 0
  %v9000 = vsel %vm3011, %v8945, 0
  %v9003 = vsel %vm3011, %v8946, 0
  %v9006 = vsel %vm3011, %v8947, 0
  %9008 = vmatprep.subr.mxu0 0.0
  %9009 = vmatpush1.msra.mxu0 %v8835
  %9010 = vmatprep.subr.mxu0 0.0
  %9011 = vmatpush1.msra.mxu0 %v8840
  %9012 = vmatprep.subr.mxu0 0.0
  %9013 = vmatpush1.msra.mxu0 %v8845
  %9014 = vmatprep.subr.mxu0 0.0
  %9015 = vmatpush1.msra.mxu0 %v8850
  %9016 = vmatprep.subr.mxu0 0.0
  %9017 = vmatpush1.msra.mxu0 %v8855
  %9018 = vmatprep.subr.mxu0 0.0
  %9019 = vmatpush1.msra.mxu0 %v8860
  %9020 = vmatprep.subr.mxu0 0.0
  %9021 = vmatpush1.msra.mxu0 %v8865
  %9022 = vmatprep.subr.mxu0 0.0
  %9023 = vmatpush1.msra.mxu0 %v8870
  %9024 = vmatprep.subr.mxu0 0.0
  %9025 = vmatpush1.msra.mxu0 %v8875
  %9026 = vmatprep.subr.mxu0 0.0
  %9027 = vmatpush1.msra.mxu0 %v8880
  %9028 = vmatprep.subr.mxu0 0.0
  %9029 = vmatpush1.msra.mxu0 %v8885
  %9030 = vmatprep.subr.mxu0 0.0
  %9031 = vmatpush1.msra.mxu0 %v8890
  %9032 = vmatprep.subr.mxu0 0.0
  %9033 = vmatpush1.msra.mxu0 %v8895
  %9034 = vmatprep.subr.mxu0 0.0
  %9035 = vmatpush1.msra.mxu0 %v8900
  %9036 = vmatprep.subr.mxu0 0.0
  %9037 = vmatpush1.msra.mxu0 %v8905
  %9038 = vmatprep.subr.mxu0 0.0
  %9039 = vmatpush1.msra.mxu0 0.0
  %9040 = vmatprep.subr.mxu0 0.0
  %9041 = vmatpush1.msra.mxu0 0.0
  %9042 = vmatprep.subr.mxu0 0.0
  %9043 = vmatpush1.msra.mxu0 0.0
  %9044 = vmatprep.subr.mxu0 0.0
  %9045 = vmatpush1.msra.mxu0 0.0
  %9046 = vmatprep.subr.mxu0 0.0
  %9047 = vmatpush1.msra.mxu0 0.0
  %9048 = vmatprep.subr.mxu0 0.0
  %9049 = vmatpush1.msra.mxu0 0.0
  %9050 = vmatprep.subr.mxu0 0.0
  %9051 = vmatpush1.msra.mxu0 0.0
  %9052 = vmatprep.subr.mxu0 0.0
  %9053 = vmatpush1.msra.mxu0 0.0
  %9054 = vmatprep.subr.mxu0 0.0
  %9055 = vmatpush1.msra.mxu0 0.0
  %9056 = vmatprep.subr.mxu0 0.0
  %9057 = vmatpush1.msra.mxu0 0.0
  %9058 = vmatprep.subr.mxu0 0.0
  %9059 = vmatpush1.msra.mxu0 0.0
  %9060 = vmatprep.subr.mxu0 0.0
  %9061 = vmatpush1.msra.mxu0 0.0
  %9062 = vmatprep.subr.mxu0 0.0
  %9063 = vmatpush1.msra.mxu0 0.0
  %9064 = vmatprep.subr.mxu0 0.0
  %9065 = vmatpush1.msra.mxu0 0.0
  %9066 = vmatprep.subr.mxu0 0.0
  %9067 = vmatpush1.msra.mxu0 0.0
  %9068 = vmatprep.subr.mxu0 0.0
  %9069 = vmatpush1.msra.mxu0 0.0
  %9070 = vmatprep.subr.mxu0 0.0
  %9071 = vmatpush1.msra.mxu0 0.0
  %9072 = vmatprep.mubr.f32.mxu0 0.0
  %9073 = vmatmul.mubr.f32.gmra.mrb[0].mxu0 %v8949
  %v9074 = vpop.f32.mrb[0].mxu0
  %v9075 = vadd.f32 0.0, %v9074
  %v9076 = vpop.f32.mrb[0].mxu0
  %9077 = vmatprep.mubr.f32.mxu0 0.0
  %9078 = vmatmul.mubr.f32.gmra.mrb[0].mxu0 %v8952
  %v9079 = vpop.f32.mrb[0].mxu0
  %v9080 = vadd.f32 0.0, %v9079
  %v9081 = vpop.f32.mrb[0].mxu0
  %9082 = vmatprep.mubr.f32.mxu0 0.0
  %9083 = vmatmul.mubr.f32.gmra.mrb[0].mxu0 %v8955
  %v9084 = vpop.f32.mrb[0].mxu0
  %v9085 = vadd.f32 0.0, %v9084
  %v9086 = vpop.f32.mrb[0].mxu0
  %9087 = vmatprep.mubr.f32.mxu0 0.0
  %9088 = vmatmul.mubr.f32.gmra.mrb[0].mxu0 %v8958
  %v9089 = vpop.f32.mrb[0].mxu0
  %v9090 = vadd.f32 0.0, %v9089
  %v9091 = vpop.f32.mrb[0].mxu0
  %9092 = vmatprep.mubr.f32.mxu0 0.0
  %9093 = vmatmul.mubr.f32.gmra.mrb[0].mxu0 %v8961
  %v9094 = vpop.f32.mrb[0].mxu0
  %v9095 = vadd.f32 0.0, %v9094
  %v9096 = vpop.f32.mrb[0].mxu0
  %9097 = vmatprep.mubr.f32.mxu0 0.0
  %9098 = vmatmul.mubr.f32.gmra.mrb[0].mxu0 %v8964
  %v9099 = vpop.f32.mrb[0].mxu0
  %v9100 = vadd.f32 0.0, %v9099
  %v9101 = vpop.f32.mrb[0].mxu0
  %9102 = vmatprep.mubr.f32.mxu0 0.0
  %9103 = vmatmul.mubr.f32.gmra.mrb[0].mxu0 %v8967
  %v9104 = vpop.f32.mrb[0].mxu0
  %v9105 = vadd.f32 0.0, %v9104
  %v9106 = vpop.f32.mrb[0].mxu0
  %9107 = vmatprep.mubr.f32.mxu0 0.0
  %9108 = vmatmul.mubr.f32.gmra.mrb[0].mxu0 %v8970
  %v9109 = vpop.f32.mrb[0].mxu0
  %v9110 = vadd.f32 0.0, %v9109
  %v9111 = vpop.f32.mrb[0].mxu0
  %9112 = vmatprep.mubr.f32.mxu0 0.0
  %9113 = vmatmul.mubr.f32.gmra.mrb[0].mxu0 %v8973
  %v9114 = vpop.f32.mrb[0].mxu0
  %v9115 = vadd.f32 0.0, %v9114
  %v9116 = vpop.f32.mrb[0].mxu0
  %9117 = vmatprep.mubr.f32.mxu0 0.0
  %9118 = vmatmul.mubr.f32.gmra.mrb[0].mxu0 %v8976
  %v9119 = vpop.f32.mrb[0].mxu0
  %v9120 = vadd.f32 0.0, %v9119
  %v9121 = vpop.f32.mrb[0].mxu0
  %9122 = vmatprep.mubr.f32.mxu0 0.0
  %9123 = vmatmul.mubr.f32.gmra.mrb[0].mxu0 %v8979
  %v9124 = vpop.f32.mrb[0].mxu0
  %v9125 = vadd.f32 0.0, %v9124
  %v9126 = vpop.f32.mrb[0].mxu0
  %9127 = vmatprep.mubr.f32.mxu0 0.0
  %9128 = vmatmul.mubr.f32.gmra.mrb[0].mxu0 %v8982
  %v9129 = vpop.f32.mrb[0].mxu0
  %v9130 = vadd.f32 0.0, %v9129
  %v9131 = vpop.f32.mrb[0].mxu0
  %9132 = vmatprep.mubr.f32.mxu0 0.0
  %9133 = vmatmul.mubr.f32.gmra.mrb[0].mxu0 %v8985
  %v9134 = vpop.f32.mrb[0].mxu0
  %v9135 = vadd.f32 0.0, %v9134
  %v9136 = vpop.f32.mrb[0].mxu0
  %9137 = vmatprep.mubr.f32.mxu0 0.0
  %9138 = vmatmul.mubr.f32.gmra.mrb[0].mxu0 %v8988
  %v9139 = vpop.f32.mrb[0].mxu0
  %v9140 = vadd.f32 0.0, %v9139
  %v9141 = vpop.f32.mrb[0].mxu0
  %9142 = vmatprep.mubr.f32.mxu0 0.0
  %9143 = vmatmul.mubr.f32.gmra.mrb[0].mxu0 %v8991
  %v9144 = vpop.f32.mrb[0].mxu0
  %v9145 = vadd.f32 0.0, %v9144
  %v9146 = vpop.f32.mrb[0].mxu0
  %9147 = vmatprep.mubr.f32.mxu0 0.0
  %9148 = vmatmul.mubr.f32.gmra.mrb[0].mxu0 %v8994
  %v9149 = vpop.f32.mrb[0].mxu0
  %v9150 = vadd.f32 0.0, %v9149
  %v9151 = vpop.f32.mrb[0].mxu0
  %9152 = vmatprep.mubr.f32.mxu0 0.0
  %9153 = vmatmul.mubr.f32.gmra.mrb[0].mxu0 %v8997
  %v9154 = vpop.f32.mrb[0].mxu0
  %v9155 = vadd.f32 0.0, %v9154
  %v9156 = vpop.f32.mrb[0].mxu0
  %9157 = vmatprep.mubr.f32.mxu0 0.0
  %9158 = vmatmul.mubr.f32.gmra.mrb[0].mxu0 %v9000
  %v9159 = vpop.f32.mrb[0].mxu0
  %v9160 = vadd.f32 0.0, %v9159
  %v9161 = vpop.f32.mrb[0].mxu0
  %9162 = vmatprep.mubr.f32.mxu0 0.0
  %9163 = vmatmul.mubr.f32.gmra.mrb[0].mxu0 %v9003
  %v9164 = vpop.f32.mrb[0].mxu0
  %v9165 = vadd.f32 0.0, %v9164
  %v9166 = vpop.f32.mrb[0].mxu0
  %9167 = vmatprep.mubr.f32.mxu0 0.0
  %9168 = vmatmul.mubr.f32.gmra.mrb[0].mxu0 %v9006
  %v9169 = vpop.f32.mrb[0].mxu0
  %v9170 = vadd.f32 0.0, %v9169
  %v9171 = vpop.f32.mrb[0].mxu0
  %9172 = vdwg.mxu0
  %9174 = vset.pattern.permute.xlu0 0
  %9175 = vperm.xlu0 %9174, %v8908
  %v9176 = vpop.permute.xlu0 %9175
  %9179 = vset.pattern.permute.xlu0 0
  %9180 = vperm.xlu0 %9179, %v8909
  %v9181 = vpop.permute.xlu0 %9180
  %9184 = vset.pattern.permute.xlu0 0
  %9185 = vperm.xlu0 %9184, %v8910
  %v9186 = vpop.permute.xlu0 %9185
  %9189 = vset.pattern.permute.xlu0 0
  %9190 = vperm.xlu0 %9189, %v8911
  %v9191 = vpop.permute.xlu0 %9190
  %9194 = vset.pattern.permute.xlu0 0
  %9195 = vperm.xlu0 %9194, %v8912
  %v9196 = vpop.permute.xlu0 %9195
  %9199 = vset.pattern.permute.xlu0 0
  %9200 = vperm.xlu0 %9199, %v8913
  %v9201 = vpop.permute.xlu0 %9200
  %9204 = vset.pattern.permute.xlu0 0
  %9205 = vperm.xlu0 %9204, %v8914
  %v9206 = vpop.permute.xlu0 %9205
  %9209 = vset.pattern.permute.xlu0 0
  %9210 = vperm.xlu0 %9209, %v8915
  %v9211 = vpop.permute.xlu0 %9210
  %9214 = vset.pattern.permute.xlu0 0
  %9215 = vperm.xlu0 %9214, %v8916
  %v9216 = vpop.permute.xlu0 %9215
  %9219 = vset.pattern.permute.xlu0 0
  %9220 = vperm.xlu0 %9219, %v8917
  %v9221 = vpop.permute.xlu0 %9220
  %9224 = vset.pattern.permute.xlu0 0
  %9225 = vperm.xlu0 %9224, %v8918
  %v9226 = vpop.permute.xlu0 %9225
  %9229 = vset.pattern.permute.xlu0 0
  %9230 = vperm.xlu0 %9229, %v8919
  %v9231 = vpop.permute.xlu0 %9230
  %9234 = vset.pattern.permute.xlu0 0
  %9235 = vperm.xlu0 %9234, %v8920
  %v9236 = vpop.permute.xlu0 %9235
  %9239 = vset.pattern.permute.xlu0 0
  %9240 = vperm.xlu0 %9239, %v8921
  %v9241 = vpop.permute.xlu0 %9240
  %9244 = vset.pattern.permute.xlu0 0
  %9245 = vperm.xlu0 %9244, %v8922
  %v9246 = vpop.permute.xlu0 %9245
  %9249 = vset.pattern.permute.xlu0 0
  %9250 = vperm.xlu0 %9249, %v8923
  %v9251 = vpop.permute.xlu0 %9250
  %9254 = vset.pattern.permute.xlu0 0
  %9255 = vperm.xlu0 %9254, %v8924
  %v9256 = vpop.permute.xlu0 %9255
  %9259 = vset.pattern.permute.xlu0 0
  %9260 = vperm.xlu0 %9259, %v8925
  %v9261 = vpop.permute.xlu0 %9260
  %9264 = vset.pattern.permute.xlu0 0
  %9265 = vperm.xlu0 %9264, %v8926
  %v9266 = vpop.permute.xlu0 %9265
  %9269 = vset.pattern.permute.xlu0 0
  %9270 = vperm.xlu0 %9269, %v8927
  %v9271 = vpop.permute.xlu0 %9270
  %v9273 = vadd.f32 %v9176, %v9075
  %v9274 = vadd.f32 %v9181, %v9080
  %v9275 = vadd.f32 %v9186, %v9085
  %v9276 = vadd.f32 %v9191, %v9090
  %v9277 = vadd.f32 %v9196, %v9095
  %v9278 = vadd.f32 %v9201, %v9100
  %v9279 = vadd.f32 %v9206, %v9105
  %v9280 = vadd.f32 %v9211, %v9110
  %v9281 = vadd.f32 %v9216, %v9115
  %v9282 = vadd.f32 %v9221, %v9120
  %v9283 = vadd.f32 %v9226, %v9125
  %v9284 = vadd.f32 %v9231, %v9130
  %v9285 = vadd.f32 %v9236, %v9135
  %v9286 = vadd.f32 %v9241, %v9140
  %v9287 = vadd.f32 %v9246, %v9145
  %v9288 = vadd.f32 %v9251, %v9150
  %v9289 = vadd.f32 %v9256, %v9155
  %v9290 = vadd.f32 %v9261, %v9160
  %v9291 = vadd.f32 %v9266, %v9165
  %v9292 = vadd.f32 %v9271, %v9170
  %v9293 = vld [vmem:[%s3357] sm:$0xff]
  %v9294 = vld [vmem:[%s3357 + $0x8] sm:$0xff]
  %v9295 = vld [vmem:[%s3357 + $0x10] sm:$0xff]
  %v9296 = vld [vmem:[%s3357 + $0x18] sm:$0xff]
  %v9297 = vld [vmem:[%s3357 + $0x20] sm:$0xff]
  %v9298 = vld [vmem:[%s3357 + $0x28] sm:$0xff]
  %v9299 = vld [vmem:[%s3357 + $0x30] sm:$0xff]
  %v9300 = vld [vmem:[%s3357 + $0x38] sm:$0xff]
  %v9301 = vld [vmem:[%s3357 + $0x40] sm:$0xff]
  %v9302 = vld [vmem:[%s3357 + $0x48] sm:$0xff]
  %v9303 = vld [vmem:[%s3357 + $0x50] sm:$0xff]
  %v9304 = vld [vmem:[%s3357 + $0x58] sm:$0xff]
  %v9305 = vld [vmem:[%s3357 + $0x60] sm:$0xff]
  %v9306 = vld [vmem:[%s3357 + $0x68] sm:$0xff]
  %v9307 = vld [vmem:[%s3357 + $0x70] sm:$0xff]
  %v9308 = vld [vmem:[%s3357 + $0x78] sm:$0xff]
  %v9309 = vld [vmem:[%s3357 + $0x80] sm:$0xff]
  %v9310 = vld [vmem:[%s3357 + $0x88] sm:$0xff]
  %v9311 = vld [vmem:[%s3357 + $0x90] sm:$0xff]
  %v9312 = vld [vmem:[%s3357 + $0x98] sm:$0xff]
  %9328 = vrot.lane.b32.xlu0 %v8835, 127
  %v9329 = vpop.permute.xlu0 %9328
  %9330 = vrot.lane.b32.xlu0 %v8840, 127
  %v9331 = vpop.permute.xlu0 %9330
  %9332 = vrot.lane.b32.xlu0 %v8845, 127
  %v9333 = vpop.permute.xlu0 %9332
  %9334 = vrot.lane.b32.xlu0 %v8850, 127
  %v9335 = vpop.permute.xlu0 %9334
  %9336 = vrot.lane.b32.xlu0 %v8855, 127
  %v9337 = vpop.permute.xlu0 %9336
  %9338 = vrot.lane.b32.xlu0 %v8860, 127
  %v9339 = vpop.permute.xlu0 %9338
  %9340 = vrot.lane.b32.xlu0 %v8865, 127
  %v9341 = vpop.permute.xlu0 %9340
  %9342 = vrot.lane.b32.xlu0 %v8870, 127
  %v9343 = vpop.permute.xlu0 %9342
  %9344 = vrot.lane.b32.xlu0 %v8875, 127
  %v9345 = vpop.permute.xlu0 %9344
  %9346 = vrot.lane.b32.xlu0 %v8880, 127
  %v9347 = vpop.permute.xlu0 %9346
  %9348 = vrot.lane.b32.xlu0 %v8885, 127
  %v9349 = vpop.permute.xlu0 %9348
  %9350 = vrot.lane.b32.xlu0 %v8890, 127
  %v9351 = vpop.permute.xlu0 %9350
  %9352 = vrot.lane.b32.xlu0 %v8895, 127
  %v9353 = vpop.permute.xlu0 %9352
  %9354 = vrot.lane.b32.xlu0 %v8900, 127
  %v9355 = vpop.permute.xlu0 %9354
  %9356 = vrot.lane.b32.xlu0 %v8905, 127
  %v9357 = vpop.permute.xlu0 %9356
  %v9374 = vsel %vm3011, %v9293, 0
  %v9377 = vsel %vm3011, %v9294, 0
  %v9380 = vsel %vm3011, %v9295, 0
  %v9383 = vsel %vm3011, %v9296, 0
  %v9386 = vsel %vm3011, %v9297, 0
  %v9389 = vsel %vm3011, %v9298, 0
  %v9392 = vsel %vm3011, %v9299, 0
  %v9395 = vsel %vm3011, %v9300, 0
  %v9398 = vsel %vm3011, %v9301, 0
  %v9401 = vsel %vm3011, %v9302, 0
  %v9404 = vsel %vm3011, %v9303, 0
  %v9407 = vsel %vm3011, %v9304, 0
  %v9410 = vsel %vm3011, %v9305, 0
  %v9413 = vsel %vm3011, %v9306, 0
  %v9416 = vsel %vm3011, %v9307, 0
  %v9419 = vsel %vm3011, %v9308, 0
  %v9422 = vsel %vm3011, %v9309, 0
  %v9425 = vsel %vm3011, %v9310, 0
  %v9428 = vsel %vm3011, %v9311, 0
  %v9431 = vsel %vm3011, %v9312, 0
  %9433 = vmatprep.subr.mxu0 0.0
  %9434 = vmatpush1.msra.mxu0 %v9329
  %9435 = vmatprep.subr.mxu0 0.0
  %9436 = vmatpush1.msra.mxu0 %v9331
  %9437 = vmatprep.subr.mxu0 0.0
  %9438 = vmatpush1.msra.mxu0 %v9333
  %9439 = vmatprep.subr.mxu0 0.0
  %9440 = vmatpush1.msra.mxu0 %v9335
  %9441 = vmatprep.subr.mxu0 0.0
  %9442 = vmatpush1.msra.mxu0 %v9337
  %9443 = vmatprep.subr.mxu0 0.0
  %9444 = vmatpush1.msra.mxu0 %v9339
  %9445 = vmatprep.subr.mxu0 0.0
  %9446 = vmatpush1.msra.mxu0 %v9341
  %9447 = vmatprep.subr.mxu0 0.0
  %9448 = vmatpush1.msra.mxu0 %v9343
  %9449 = vmatprep.subr.mxu0 0.0
  %9450 = vmatpush1.msra.mxu0 %v9345
  %9451 = vmatprep.subr.mxu0 0.0
  %9452 = vmatpush1.msra.mxu0 %v9347
  %9453 = vmatprep.subr.mxu0 0.0
  %9454 = vmatpush1.msra.mxu0 %v9349
  %9455 = vmatprep.subr.mxu0 0.0
  %9456 = vmatpush1.msra.mxu0 %v9351
  %9457 = vmatprep.subr.mxu0 0.0
  %9458 = vmatpush1.msra.mxu0 %v9353
  %9459 = vmatprep.subr.mxu0 0.0
  %9460 = vmatpush1.msra.mxu0 %v9355
  %9461 = vmatprep.subr.mxu0 0.0
  %9462 = vmatpush1.msra.mxu0 %v9357
  %9463 = vmatprep.subr.mxu0 0.0
  %9464 = vmatpush1.msra.mxu0 0.0
  %9465 = vmatprep.subr.mxu0 0.0
  %9466 = vmatpush1.msra.mxu0 0.0
  %9467 = vmatprep.subr.mxu0 0.0
  %9468 = vmatpush1.msra.mxu0 0.0
  %9469 = vmatprep.subr.mxu0 0.0
  %9470 = vmatpush1.msra.mxu0 0.0
  %9471 = vmatprep.subr.mxu0 0.0
  %9472 = vmatpush1.msra.mxu0 0.0
  %9473 = vmatprep.subr.mxu0 0.0
  %9474 = vmatpush1.msra.mxu0 0.0
  %9475 = vmatprep.subr.mxu0 0.0
  %9476 = vmatpush1.msra.mxu0 0.0
  %9477 = vmatprep.subr.mxu0 0.0
  %9478 = vmatpush1.msra.mxu0 0.0
  %9479 = vmatprep.subr.mxu0 0.0
  %9480 = vmatpush1.msra.mxu0 0.0
  %9481 = vmatprep.subr.mxu0 0.0
  %9482 = vmatpush1.msra.mxu0 0.0
  %9483 = vmatprep.subr.mxu0 0.0
  %9484 = vmatpush1.msra.mxu0 0.0
  %9485 = vmatprep.subr.mxu0 0.0
  %9486 = vmatpush1.msra.mxu0 0.0
  %9487 = vmatprep.subr.mxu0 0.0
  %9488 = vmatpush1.msra.mxu0 0.0
  %9489 = vmatprep.subr.mxu0 0.0
  %9490 = vmatpush1.msra.mxu0 0.0
  %9491 = vmatprep.subr.mxu0 0.0
  %9492 = vmatpush1.msra.mxu0 0.0
  %9493 = vmatprep.subr.mxu0 0.0
  %9494 = vmatpush1.msra.mxu0 0.0
  %9495 = vmatprep.subr.mxu0 0.0
  %9496 = vmatpush1.msra.mxu0 0.0
  %9497 = vmatprep.mubr.f32.mxu0 0.0
  %9498 = vmatmul.mubr.f32.gmra.mrb[0].mxu0 %v9374
  %v9499 = vpop.f32.mrb[0].mxu0
  %v9500 = vadd.f32 0.0, %v9499
  %v9501 = vpop.f32.mrb[0].mxu0
  %9502 = vmatprep.mubr.f32.mxu0 0.0
  %9503 = vmatmul.mubr.f32.gmra.mrb[0].mxu0 %v9377
  %v9504 = vpop.f32.mrb[0].mxu0
  %v9505 = vadd.f32 0.0, %v9504
  %v9506 = vpop.f32.mrb[0].mxu0
  %9507 = vmatprep.mubr.f32.mxu0 0.0
  %9508 = vmatmul.mubr.f32.gmra.mrb[0].mxu0 %v9380
  %v9509 = vpop.f32.mrb[0].mxu0
  %v9510 = vadd.f32 0.0, %v9509
  %v9511 = vpop.f32.mrb[0].mxu0
  %9512 = vmatprep.mubr.f32.mxu0 0.0
  %9513 = vmatmul.mubr.f32.gmra.mrb[0].mxu0 %v9383
  %v9514 = vpop.f32.mrb[0].mxu0
  %v9515 = vadd.f32 0.0, %v9514
  %v9516 = vpop.f32.mrb[0].mxu0
  %9517 = vmatprep.mubr.f32.mxu0 0.0
  %9518 = vmatmul.mubr.f32.gmra.mrb[0].mxu0 %v9386
  %v9519 = vpop.f32.mrb[0].mxu0
  %v9520 = vadd.f32 0.0, %v9519
  %v9521 = vpop.f32.mrb[0].mxu0
  %9522 = vmatprep.mubr.f32.mxu0 0.0
  %9523 = vmatmul.mubr.f32.gmra.mrb[0].mxu0 %v9389
  %v9524 = vpop.f32.mrb[0].mxu0
  %v9525 = vadd.f32 0.0, %v9524
  %v9526 = vpop.f32.mrb[0].mxu0
  %9527 = vmatprep.mubr.f32.mxu0 0.0
  %9528 = vmatmul.mubr.f32.gmra.mrb[0].mxu0 %v9392
  %v9529 = vpop.f32.mrb[0].mxu0
  %v9530 = vadd.f32 0.0, %v9529
  %v9531 = vpop.f32.mrb[0].mxu0
  %9532 = vmatprep.mubr.f32.mxu0 0.0
  %9533 = vmatmul.mubr.f32.gmra.mrb[0].mxu0 %v9395
  %v9534 = vpop.f32.mrb[0].mxu0
  %v9535 = vadd.f32 0.0, %v9534
  %v9536 = vpop.f32.mrb[0].mxu0
  %9537 = vmatprep.mubr.f32.mxu0 0.0
  %9538 = vmatmul.mubr.f32.gmra.mrb[0].mxu0 %v9398
  %v9539 = vpop.f32.mrb[0].mxu0
  %v9540 = vadd.f32 0.0, %v9539
  %v9541 = vpop.f32.mrb[0].mxu0
  %9542 = vmatprep.mubr.f32.mxu0 0.0
  %9543 = vmatmul.mubr.f32.gmra.mrb[0].mxu0 %v9401
  %v9544 = vpop.f32.mrb[0].mxu0
  %v9545 = vadd.f32 0.0, %v9544
  %v9546 = vpop.f32.mrb[0].mxu0
  %9547 = vmatprep.mubr.f32.mxu0 0.0
  %9548 = vmatmul.mubr.f32.gmra.mrb[0].mxu0 %v9404
  %v9549 = vpop.f32.mrb[0].mxu0
  %v9550 = vadd.f32 0.0, %v9549
  %v9551 = vpop.f32.mrb[0].mxu0
  %9552 = vmatprep.mubr.f32.mxu0 0.0
  %9553 = vmatmul.mubr.f32.gmra.mrb[0].mxu0 %v9407
  %v9554 = vpop.f32.mrb[0].mxu0
  %v9555 = vadd.f32 0.0, %v9554
  %v9556 = vpop.f32.mrb[0].mxu0
  %9557 = vmatprep.mubr.f32.mxu0 0.0
  %9558 = vmatmul.mubr.f32.gmra.mrb[0].mxu0 %v9410
  %v9559 = vpop.f32.mrb[0].mxu0
  %v9560 = vadd.f32 0.0, %v9559
  %v9561 = vpop.f32.mrb[0].mxu0
  %9562 = vmatprep.mubr.f32.mxu0 0.0
  %9563 = vmatmul.mubr.f32.gmra.mrb[0].mxu0 %v9413
  %v9564 = vpop.f32.mrb[0].mxu0
  %v9565 = vadd.f32 0.0, %v9564
  %v9566 = vpop.f32.mrb[0].mxu0
  %9567 = vmatprep.mubr.f32.mxu0 0.0
  %9568 = vmatmul.mubr.f32.gmra.mrb[0].mxu0 %v9416
  %v9569 = vpop.f32.mrb[0].mxu0
  %v9570 = vadd.f32 0.0, %v9569
  %v9571 = vpop.f32.mrb[0].mxu0
  %9572 = vmatprep.mubr.f32.mxu0 0.0
  %9573 = vmatmul.mubr.f32.gmra.mrb[0].mxu0 %v9419
  %v9574 = vpop.f32.mrb[0].mxu0
  %v9575 = vadd.f32 0.0, %v9574
  %v9576 = vpop.f32.mrb[0].mxu0
  %9577 = vmatprep.mubr.f32.mxu0 0.0
  %9578 = vmatmul.mubr.f32.gmra.mrb[0].mxu0 %v9422
  %v9579 = vpop.f32.mrb[0].mxu0
  %v9580 = vadd.f32 0.0, %v9579
  %v9581 = vpop.f32.mrb[0].mxu0
  %9582 = vmatprep.mubr.f32.mxu0 0.0
  %9583 = vmatmul.mubr.f32.gmra.mrb[0].mxu0 %v9425
  %v9584 = vpop.f32.mrb[0].mxu0
  %v9585 = vadd.f32 0.0, %v9584
  %v9586 = vpop.f32.mrb[0].mxu0
  %9587 = vmatprep.mubr.f32.mxu0 0.0
  %9588 = vmatmul.mubr.f32.gmra.mrb[0].mxu0 %v9428
  %v9589 = vpop.f32.mrb[0].mxu0
  %v9590 = vadd.f32 0.0, %v9589
  %v9591 = vpop.f32.mrb[0].mxu0
  %9592 = vmatprep.mubr.f32.mxu0 0.0
  %9593 = vmatmul.mubr.f32.gmra.mrb[0].mxu0 %v9431
  %v9594 = vpop.f32.mrb[0].mxu0
  %v9595 = vadd.f32 0.0, %v9594
  %v9596 = vpop.f32.mrb[0].mxu0
  %9597 = vdwg.mxu0
  %v9598 = vadd.f32 %v9273, %v9500
  %v9599 = vadd.f32 %v9274, %v9505
  %v9600 = vadd.f32 %v9275, %v9510
  %v9601 = vadd.f32 %v9276, %v9515
  %v9602 = vadd.f32 %v9277, %v9520
  %v9603 = vadd.f32 %v9278, %v9525
  %v9604 = vadd.f32 %v9279, %v9530
  %v9605 = vadd.f32 %v9280, %v9535
  %v9606 = vadd.f32 %v9281, %v9540
  %v9607 = vadd.f32 %v9282, %v9545
  %v9608 = vadd.f32 %v9283, %v9550
  %v9609 = vadd.f32 %v9284, %v9555
  %v9610 = vadd.f32 %v9285, %v9560
  %v9611 = vadd.f32 %v9286, %v9565
  %v9612 = vadd.f32 %v9287, %v9570
  %v9613 = vadd.f32 %v9288, %v9575
  %v9614 = vadd.f32 %v9289, %v9580
  %v9615 = vadd.f32 %v9290, %v9585
  %v9616 = vadd.f32 %v9291, %v9590
  %v9617 = vadd.f32 %v9292, %v9595
  %v9618 = vld [vmem:[%s3683] sm:$0xff]
  %v9619 = vld [vmem:[%s3683 + $0x8] sm:$0xff]
  %v9620 = vld [vmem:[%s3683 + $0x10] sm:$0xff]
  %v9621 = vld [vmem:[%s3683 + $0x18] sm:$0xff]
  %v9622 = vld [vmem:[%s3683 + $0x20] sm:$0xff]
  %v9623 = vld [vmem:[%s3683 + $0x28] sm:$0xff]
  %v9624 = vld [vmem:[%s3683 + $0x30] sm:$0xff]
  %v9625 = vld [vmem:[%s3683 + $0x38] sm:$0xff]
  %v9626 = vld [vmem:[%s3683 + $0x40] sm:$0xff]
  %v9627 = vld [vmem:[%s3683 + $0x48] sm:$0xff]
  %v9628 = vld [vmem:[%s3683 + $0x50] sm:$0xff]
  %v9629 = vld [vmem:[%s3683 + $0x58] sm:$0xff]
  %v9630 = vld [vmem:[%s3683 + $0x60] sm:$0xff]
  %v9631 = vld [vmem:[%s3683 + $0x68] sm:$0xff]
  %v9632 = vld [vmem:[%s3683 + $0x70] sm:$0xff]
  %v9633 = vld [vmem:[%s3683 + $0x78] sm:$0xff]
  %v9634 = vld [vmem:[%s3683 + $0x80] sm:$0xff]
  %v9635 = vld [vmem:[%s3683 + $0x88] sm:$0xff]
  %v9636 = vld [vmem:[%s3683 + $0x90] sm:$0xff]
  %v9637 = vld [vmem:[%s3683 + $0x98] sm:$0xff]
  %9638 = vrot.lane.b32.xlu0 %v8835, 126
  %v9639 = vpop.permute.xlu0 %9638
  %9640 = vrot.lane.b32.xlu0 %v8840, 126
  %v9641 = vpop.permute.xlu0 %9640
  %9642 = vrot.lane.b32.xlu0 %v8845, 126
  %v9643 = vpop.permute.xlu0 %9642
  %9644 = vrot.lane.b32.xlu0 %v8850, 126
  %v9645 = vpop.permute.xlu0 %9644
  %9646 = vrot.lane.b32.xlu0 %v8855, 126
  %v9647 = vpop.permute.xlu0 %9646
  %9648 = vrot.lane.b32.xlu0 %v8860, 126
  %v9649 = vpop.permute.xlu0 %9648
  %9650 = vrot.lane.b32.xlu0 %v8865, 126
  %v9651 = vpop.permute.xlu0 %9650
  %9652 = vrot.lane.b32.xlu0 %v8870, 126
  %v9653 = vpop.permute.xlu0 %9652
  %9654 = vrot.lane.b32.xlu0 %v8875, 126
  %v9655 = vpop.permute.xlu0 %9654
  %9656 = vrot.lane.b32.xlu0 %v8880, 126
  %v9657 = vpop.permute.xlu0 %9656
  %9658 = vrot.lane.b32.xlu0 %v8885, 126
  %v9659 = vpop.permute.xlu0 %9658
  %9660 = vrot.lane.b32.xlu0 %v8890, 126
  %v9661 = vpop.permute.xlu0 %9660
  %9662 = vrot.lane.b32.xlu0 %v8895, 126
  %v9663 = vpop.permute.xlu0 %9662
  %9664 = vrot.lane.b32.xlu0 %v8900, 126
  %v9665 = vpop.permute.xlu0 %9664
  %9666 = vrot.lane.b32.xlu0 %v8905, 126
  %v9667 = vpop.permute.xlu0 %9666
  %v9684 = vsel %vm3011, %v9618, 0
  %v9687 = vsel %vm3011, %v9619, 0
  %v9690 = vsel %vm3011, %v9620, 0
  %v9693 = vsel %vm3011, %v9621, 0
  %v9696 = vsel %vm3011, %v9622, 0
  %v9699 = vsel %vm3011, %v9623, 0
  %v9702 = vsel %vm3011, %v9624, 0
  %v9705 = vsel %vm3011, %v9625, 0
  %v9708 = vsel %vm3011, %v9626, 0
  %v9711 = vsel %vm3011, %v9627, 0
  %v9714 = vsel %vm3011, %v9628, 0
  %v9717 = vsel %vm3011, %v9629, 0
  %v9720 = vsel %vm3011, %v9630, 0
  %v9723 = vsel %vm3011, %v9631, 0
  %v9726 = vsel %vm3011, %v9632, 0
  %v9729 = vsel %vm3011, %v9633, 0
  %v9732 = vsel %vm3011, %v9634, 0
  %v9735 = vsel %vm3011, %v9635, 0
  %v9738 = vsel %vm3011, %v9636, 0
  %v9741 = vsel %vm3011, %v9637, 0
  %9743 = vmatprep.subr.mxu0 0.0
  %9744 = vmatpush1.msra.mxu0 %v9639
  %9745 = vmatprep.subr.mxu0 0.0
  %9746 = vmatpush1.msra.mxu0 %v9641
  %9747 = vmatprep.subr.mxu0 0.0
  %9748 = vmatpush1.msra.mxu0 %v9643
  %9749 = vmatprep.subr.mxu0 0.0
  %9750 = vmatpush1.msra.mxu0 %v9645
  %9751 = vmatprep.subr.mxu0 0.0
  %9752 = vmatpush1.msra.mxu0 %v9647
  %9753 = vmatprep.subr.mxu0 0.0
  %9754 = vmatpush1.msra.mxu0 %v9649
  %9755 = vmatprep.subr.mxu0 0.0
  %9756 = vmatpush1.msra.mxu0 %v9651
  %9757 = vmatprep.subr.mxu0 0.0
  %9758 = vmatpush1.msra.mxu0 %v9653
  %9759 = vmatprep.subr.mxu0 0.0
  %9760 = vmatpush1.msra.mxu0 %v9655
  %9761 = vmatprep.subr.mxu0 0.0
  %9762 = vmatpush1.msra.mxu0 %v9657
  %9763 = vmatprep.subr.mxu0 0.0
  %9764 = vmatpush1.msra.mxu0 %v9659
  %9765 = vmatprep.subr.mxu0 0.0
  %9766 = vmatpush1.msra.mxu0 %v9661
  %9767 = vmatprep.subr.mxu0 0.0
  %9768 = vmatpush1.msra.mxu0 %v9663
  %9769 = vmatprep.subr.mxu0 0.0
  %9770 = vmatpush1.msra.mxu0 %v9665
  %9771 = vmatprep.subr.mxu0 0.0
  %9772 = vmatpush1.msra.mxu0 %v9667
  %9773 = vmatprep.subr.mxu0 0.0
  %9774 = vmatpush1.msra.mxu0 0.0
  %9775 = vmatprep.subr.mxu0 0.0
  %9776 = vmatpush1.msra.mxu0 0.0
  %9777 = vmatprep.subr.mxu0 0.0
  %9778 = vmatpush1.msra.mxu0 0.0
  %9779 = vmatprep.subr.mxu0 0.0
  %9780 = vmatpush1.msra.mxu0 0.0
  %9781 = vmatprep.subr.mxu0 0.0
  %9782 = vmatpush1.msra.mxu0 0.0
  %9783 = vmatprep.subr.mxu0 0.0
  %9784 = vmatpush1.msra.mxu0 0.0
  %9785 = vmatprep.subr.mxu0 0.0
  %9786 = vmatpush1.msra.mxu0 0.0
  %9787 = vmatprep.subr.mxu0 0.0
  %9788 = vmatpush1.msra.mxu0 0.0
  %9789 = vmatprep.subr.mxu0 0.0
  %9790 = vmatpush1.msra.mxu0 0.0
  %9791 = vmatprep.subr.mxu0 0.0
  %9792 = vmatpush1.msra.mxu0 0.0
  %9793 = vmatprep.subr.mxu0 0.0
  %9794 = vmatpush1.msra.mxu0 0.0
  %9795 = vmatprep.subr.mxu0 0.0
  %9796 = vmatpush1.msra.mxu0 0.0
  %9797 = vmatprep.subr.mxu0 0.0
  %9798 = vmatpush1.msra.mxu0 0.0
  %9799 = vmatprep.subr.mxu0 0.0
  %9800 = vmatpush1.msra.mxu0 0.0
  %9801 = vmatprep.subr.mxu0 0.0
  %9802 = vmatpush1.msra.mxu0 0.0
  %9803 = vmatprep.subr.mxu0 0.0
  %9804 = vmatpush1.msra.mxu0 0.0
  %9805 = vmatprep.subr.mxu0 0.0
  %9806 = vmatpush1.msra.mxu0 0.0
  %9807 = vmatprep.mubr.f32.mxu0 0.0
  %9808 = vmatmul.mubr.f32.gmra.mrb[0].mxu0 %v9684
  %v9809 = vpop.f32.mrb[0].mxu0
  %v9810 = vadd.f32 0.0, %v9809
  %v9811 = vpop.f32.mrb[0].mxu0
  %9812 = vmatprep.mubr.f32.mxu0 0.0
  %9813 = vmatmul.mubr.f32.gmra.mrb[0].mxu0 %v9687
  %v9814 = vpop.f32.mrb[0].mxu0
  %v9815 = vadd.f32 0.0, %v9814
  %v9816 = vpop.f32.mrb[0].mxu0
  %9817 = vmatprep.mubr.f32.mxu0 0.0
  %9818 = vmatmul.mubr.f32.gmra.mrb[0].mxu0 %v9690
  %v9819 = vpop.f32.mrb[0].mxu0
  %v9820 = vadd.f32 0.0, %v9819
  %v9821 = vpop.f32.mrb[0].mxu0
  %9822 = vmatprep.mubr.f32.mxu0 0.0
  %9823 = vmatmul.mubr.f32.gmra.mrb[0].mxu0 %v9693
  %v9824 = vpop.f32.mrb[0].mxu0
  %v9825 = vadd.f32 0.0, %v9824
  %v9826 = vpop.f32.mrb[0].mxu0
  %9827 = vmatprep.mubr.f32.mxu0 0.0
  %9828 = vmatmul.mubr.f32.gmra.mrb[0].mxu0 %v9696
  %v9829 = vpop.f32.mrb[0].mxu0
  %v9830 = vadd.f32 0.0, %v9829
  %v9831 = vpop.f32.mrb[0].mxu0
  %9832 = vmatprep.mubr.f32.mxu0 0.0
  %9833 = vmatmul.mubr.f32.gmra.mrb[0].mxu0 %v9699
  %v9834 = vpop.f32.mrb[0].mxu0
  %v9835 = vadd.f32 0.0, %v9834
  %v9836 = vpop.f32.mrb[0].mxu0
  %9837 = vmatprep.mubr.f32.mxu0 0.0
  %9838 = vmatmul.mubr.f32.gmra.mrb[0].mxu0 %v9702
  %v9839 = vpop.f32.mrb[0].mxu0
  %v9840 = vadd.f32 0.0, %v9839
  %v9841 = vpop.f32.mrb[0].mxu0
  %9842 = vmatprep.mubr.f32.mxu0 0.0
  %9843 = vmatmul.mubr.f32.gmra.mrb[0].mxu0 %v9705
  %v9844 = vpop.f32.mrb[0].mxu0
  %v9845 = vadd.f32 0.0, %v9844
  %v9846 = vpop.f32.mrb[0].mxu0
  %9847 = vmatprep.mubr.f32.mxu0 0.0
  %9848 = vmatmul.mubr.f32.gmra.mrb[0].mxu0 %v9708
  %v9849 = vpop.f32.mrb[0].mxu0
  %v9850 = vadd.f32 0.0, %v9849
  %v9851 = vpop.f32.mrb[0].mxu0
  %9852 = vmatprep.mubr.f32.mxu0 0.0
  %9853 = vmatmul.mubr.f32.gmra.mrb[0].mxu0 %v9711
  %v9854 = vpop.f32.mrb[0].mxu0
  %v9855 = vadd.f32 0.0, %v9854
  %v9856 = vpop.f32.mrb[0].mxu0
  %9857 = vmatprep.mubr.f32.mxu0 0.0
  %9858 = vmatmul.mubr.f32.gmra.mrb[0].mxu0 %v9714
  %v9859 = vpop.f32.mrb[0].mxu0
  %v9860 = vadd.f32 0.0, %v9859
  %v9861 = vpop.f32.mrb[0].mxu0
  %9862 = vmatprep.mubr.f32.mxu0 0.0
  %9863 = vmatmul.mubr.f32.gmra.mrb[0].mxu0 %v9717
  %v9864 = vpop.f32.mrb[0].mxu0
  %v9865 = vadd.f32 0.0, %v9864
  %v9866 = vpop.f32.mrb[0].mxu0
  %9867 = vmatprep.mubr.f32.mxu0 0.0
  %9868 = vmatmul.mubr.f32.gmra.mrb[0].mxu0 %v9720
  %v9869 = vpop.f32.mrb[0].mxu0
  %v9870 = vadd.f32 0.0, %v9869
  %v9871 = vpop.f32.mrb[0].mxu0
  %9872 = vmatprep.mubr.f32.mxu0 0.0
  %9873 = vmatmul.mubr.f32.gmra.mrb[0].mxu0 %v9723
  %v9874 = vpop.f32.mrb[0].mxu0
  %v9875 = vadd.f32 0.0, %v9874
  %v9876 = vpop.f32.mrb[0].mxu0
  %9877 = vmatprep.mubr.f32.mxu0 0.0
  %9878 = vmatmul.mubr.f32.gmra.mrb[0].mxu0 %v9726
  %v9879 = vpop.f32.mrb[0].mxu0
  %v9880 = vadd.f32 0.0, %v9879
  %v9881 = vpop.f32.mrb[0].mxu0
  %9882 = vmatprep.mubr.f32.mxu0 0.0
  %9883 = vmatmul.mubr.f32.gmra.mrb[0].mxu0 %v9729
  %v9884 = vpop.f32.mrb[0].mxu0
  %v9885 = vadd.f32 0.0, %v9884
  %v9886 = vpop.f32.mrb[0].mxu0
  %9887 = vmatprep.mubr.f32.mxu0 0.0
  %9888 = vmatmul.mubr.f32.gmra.mrb[0].mxu0 %v9732
  %v9889 = vpop.f32.mrb[0].mxu0
  %v9890 = vadd.f32 0.0, %v9889
  %v9891 = vpop.f32.mrb[0].mxu0
  %9892 = vmatprep.mubr.f32.mxu0 0.0
  %9893 = vmatmul.mubr.f32.gmra.mrb[0].mxu0 %v9735
  %v9894 = vpop.f32.mrb[0].mxu0
  %v9895 = vadd.f32 0.0, %v9894
  %v9896 = vpop.f32.mrb[0].mxu0
  %9897 = vmatprep.mubr.f32.mxu0 0.0
  %9898 = vmatmul.mubr.f32.gmra.mrb[0].mxu0 %v9738
  %v9899 = vpop.f32.mrb[0].mxu0
  %v9900 = vadd.f32 0.0, %v9899
  %v9901 = vpop.f32.mrb[0].mxu0
  %9902 = vmatprep.mubr.f32.mxu0 0.0
  %9903 = vmatmul.mubr.f32.gmra.mrb[0].mxu0 %v9741
  %v9904 = vpop.f32.mrb[0].mxu0
  %v9905 = vadd.f32 0.0, %v9904
  %v9906 = vpop.f32.mrb[0].mxu0
  %9907 = vdwg.mxu0
  %v9908 = vadd.f32 %v9598, %v9810
  %v9909 = vadd.f32 %v9599, %v9815
  %v9910 = vadd.f32 %v9600, %v9820
  %v9911 = vadd.f32 %v9601, %v9825
  %v9912 = vadd.f32 %v9602, %v9830
  %v9913 = vadd.f32 %v9603, %v9835
  %v9914 = vadd.f32 %v9604, %v9840
  %v9915 = vadd.f32 %v9605, %v9845
  %v9916 = vadd.f32 %v9606, %v9850
  %v9917 = vadd.f32 %v9607, %v9855
  %v9918 = vadd.f32 %v9608, %v9860
  %v9919 = vadd.f32 %v9609, %v9865
  %v9920 = vadd.f32 %v9610, %v9870
  %v9921 = vadd.f32 %v9611, %v9875
  %v9922 = vadd.f32 %v9612, %v9880
  %v9923 = vadd.f32 %v9613, %v9885
  %v9924 = vadd.f32 %v9614, %v9890
  %v9925 = vadd.f32 %v9615, %v9895
  %v9926 = vadd.f32 %v9616, %v9900
  %v9927 = vadd.f32 %v9617, %v9905
  %v9928 = vld [vmem:[%s3994] sm:$0xff]
  %v9929 = vld [vmem:[%s3994 + $0x8] sm:$0xff]
  %v9930 = vld [vmem:[%s3994 + $0x10] sm:$0xff]
  %v9931 = vld [vmem:[%s3994 + $0x18] sm:$0xff]
  %v9932 = vld [vmem:[%s3994 + $0x20] sm:$0xff]
  %v9933 = vld [vmem:[%s3994 + $0x28] sm:$0xff]
  %v9934 = vld [vmem:[%s3994 + $0x30] sm:$0xff]
  %v9935 = vld [vmem:[%s3994 + $0x38] sm:$0xff]
  %v9936 = vld [vmem:[%s3994 + $0x40] sm:$0xff]
  %v9937 = vld [vmem:[%s3994 + $0x48] sm:$0xff]
  %v9938 = vld [vmem:[%s3994 + $0x50] sm:$0xff]
  %v9939 = vld [vmem:[%s3994 + $0x58] sm:$0xff]
  %v9940 = vld [vmem:[%s3994 + $0x60] sm:$0xff]
  %v9941 = vld [vmem:[%s3994 + $0x68] sm:$0xff]
  %v9942 = vld [vmem:[%s3994 + $0x70] sm:$0xff]
  %v9943 = vld [vmem:[%s3994 + $0x78] sm:$0xff]
  %v9944 = vld [vmem:[%s3994 + $0x80] sm:$0xff]
  %v9945 = vld [vmem:[%s3994 + $0x88] sm:$0xff]
  %v9946 = vld [vmem:[%s3994 + $0x90] sm:$0xff]
  %v9947 = vld [vmem:[%s3994 + $0x98] sm:$0xff]
  %9948 = vrot.lane.b32.xlu0 %v8835, 125
  %v9949 = vpop.permute.xlu0 %9948
  %9950 = vrot.lane.b32.xlu0 %v8840, 125
  %v9951 = vpop.permute.xlu0 %9950
  %9952 = vrot.lane.b32.xlu0 %v8845, 125
  %v9953 = vpop.permute.xlu0 %9952
  %9954 = vrot.lane.b32.xlu0 %v8850, 125
  %v9955 = vpop.permute.xlu0 %9954
  %9956 = vrot.lane.b32.xlu0 %v8855, 125
  %v9957 = vpop.permute.xlu0 %9956
  %9958 = vrot.lane.b32.xlu0 %v8860, 125
  %v9959 = vpop.permute.xlu0 %9958
  %9960 = vrot.lane.b32.xlu0 %v8865, 125
  %v9961 = vpop.permute.xlu0 %9960
  %9962 = vrot.lane.b32.xlu0 %v8870, 125
  %v9963 = vpop.permute.xlu0 %9962
  %9964 = vrot.lane.b32.xlu0 %v8875, 125
  %v9965 = vpop.permute.xlu0 %9964
  %9966 = vrot.lane.b32.xlu0 %v8880, 125
  %v9967 = vpop.permute.xlu0 %9966
  %9968 = vrot.lane.b32.xlu0 %v8885, 125
  %v9969 = vpop.permute.xlu0 %9968
  %9970 = vrot.lane.b32.xlu0 %v8890, 125
  %v9971 = vpop.permute.xlu0 %9970
  %9972 = vrot.lane.b32.xlu0 %v8895, 125
  %v9973 = vpop.permute.xlu0 %9972
  %9974 = vrot.lane.b32.xlu0 %v8900, 125
  %v9975 = vpop.permute.xlu0 %9974
  %9976 = vrot.lane.b32.xlu0 %v8905, 125
  %v9977 = vpop.permute.xlu0 %9976
  %v9994 = vsel %vm3011, %v9928, 0
  %v9997 = vsel %vm3011, %v9929, 0
  %v10000 = vsel %vm3011, %v9930, 0
  %v10003 = vsel %vm3011, %v9931, 0
  %v10006 = vsel %vm3011, %v9932, 0
  %v10009 = vsel %vm3011, %v9933, 0
  %v10012 = vsel %vm3011, %v9934, 0
  %v10015 = vsel %vm3011, %v9935, 0
  %v10018 = vsel %vm3011, %v9936, 0
  %v10021 = vsel %vm3011, %v9937, 0
  %v10024 = vsel %vm3011, %v9938, 0
  %v10027 = vsel %vm3011, %v9939, 0
  %v10030 = vsel %vm3011, %v9940, 0
  %v10033 = vsel %vm3011, %v9941, 0
  %v10036 = vsel %vm3011, %v9942, 0
  %v10039 = vsel %vm3011, %v9943, 0
  %v10042 = vsel %vm3011, %v9944, 0
  %v10045 = vsel %vm3011, %v9945, 0
  %v10048 = vsel %vm3011, %v9946, 0
  %v10051 = vsel %vm3011, %v9947, 0
  %10053 = vmatprep.subr.mxu0 0.0
  %10054 = vmatpush1.msra.mxu0 %v9949
  %10055 = vmatprep.subr.mxu0 0.0
  %10056 = vmatpush1.msra.mxu0 %v9951
  %10057 = vmatprep.subr.mxu0 0.0
  %10058 = vmatpush1.msra.mxu0 %v9953
  %10059 = vmatprep.subr.mxu0 0.0
  %10060 = vmatpush1.msra.mxu0 %v9955
  %10061 = vmatprep.subr.mxu0 0.0
  %10062 = vmatpush1.msra.mxu0 %v9957
  %10063 = vmatprep.subr.mxu0 0.0
  %10064 = vmatpush1.msra.mxu0 %v9959
  %10065 = vmatprep.subr.mxu0 0.0
  %10066 = vmatpush1.msra.mxu0 %v9961
  %10067 = vmatprep.subr.mxu0 0.0
  %10068 = vmatpush1.msra.mxu0 %v9963
  %10069 = vmatprep.subr.mxu0 0.0
  %10070 = vmatpush1.msra.mxu0 %v9965
  %10071 = vmatprep.subr.mxu0 0.0
  %10072 = vmatpush1.msra.mxu0 %v9967
  %10073 = vmatprep.subr.mxu0 0.0
  %10074 = vmatpush1.msra.mxu0 %v9969
  %10075 = vmatprep.subr.mxu0 0.0
  %10076 = vmatpush1.msra.mxu0 %v9971
  %10077 = vmatprep.subr.mxu0 0.0
  %10078 = vmatpush1.msra.mxu0 %v9973
  %10079 = vmatprep.subr.mxu0 0.0
  %10080 = vmatpush1.msra.mxu0 %v9975
  %10081 = vmatprep.subr.mxu0 0.0
  %10082 = vmatpush1.msra.mxu0 %v9977
  %10083 = vmatprep.subr.mxu0 0.0
  %10084 = vmatpush1.msra.mxu0 0.0
  %10085 = vmatprep.subr.mxu0 0.0
  %10086 = vmatpush1.msra.mxu0 0.0
  %10087 = vmatprep.subr.mxu0 0.0
  %10088 = vmatpush1.msra.mxu0 0.0
  %10089 = vmatprep.subr.mxu0 0.0
  %10090 = vmatpush1.msra.mxu0 0.0
  %10091 = vmatprep.subr.mxu0 0.0
  %10092 = vmatpush1.msra.mxu0 0.0
  %10093 = vmatprep.subr.mxu0 0.0
  %10094 = vmatpush1.msra.mxu0 0.0
  %10095 = vmatprep.subr.mxu0 0.0
  %10096 = vmatpush1.msra.mxu0 0.0
  %10097 = vmatprep.subr.mxu0 0.0
  %10098 = vmatpush1.msra.mxu0 0.0
  %10099 = vmatprep.subr.mxu0 0.0
  %10100 = vmatpush1.msra.mxu0 0.0
  %10101 = vmatprep.subr.mxu0 0.0
  %10102 = vmatpush1.msra.mxu0 0.0
  %10103 = vmatprep.subr.mxu0 0.0
  %10104 = vmatpush1.msra.mxu0 0.0
  %10105 = vmatprep.subr.mxu0 0.0
  %10106 = vmatpush1.msra.mxu0 0.0
  %10107 = vmatprep.subr.mxu0 0.0
  %10108 = vmatpush1.msra.mxu0 0.0
  %10109 = vmatprep.subr.mxu0 0.0
  %10110 = vmatpush1.msra.mxu0 0.0
  %10111 = vmatprep.subr.mxu0 0.0
  %10112 = vmatpush1.msra.mxu0 0.0
  %10113 = vmatprep.subr.mxu0 0.0
  %10114 = vmatpush1.msra.mxu0 0.0
  %10115 = vmatprep.subr.mxu0 0.0
  %10116 = vmatpush1.msra.mxu0 0.0
  %10117 = vmatprep.mubr.f32.mxu0 0.0
  %10118 = vmatmul.mubr.f32.gmra.mrb[0].mxu0 %v9994
  %v10119 = vpop.f32.mrb[0].mxu0
  %v10120 = vadd.f32 0.0, %v10119
  %v10121 = vpop.f32.mrb[0].mxu0
  %10122 = vmatprep.mubr.f32.mxu0 0.0
  %10123 = vmatmul.mubr.f32.gmra.mrb[0].mxu0 %v9997
  %v10124 = vpop.f32.mrb[0].mxu0
  %v10125 = vadd.f32 0.0, %v10124
  %v10126 = vpop.f32.mrb[0].mxu0
  %10127 = vmatprep.mubr.f32.mxu0 0.0
  %10128 = vmatmul.mubr.f32.gmra.mrb[0].mxu0 %v10000
  %v10129 = vpop.f32.mrb[0].mxu0
  %v10130 = vadd.f32 0.0, %v10129
  %v10131 = vpop.f32.mrb[0].mxu0
  %10132 = vmatprep.mubr.f32.mxu0 0.0
  %10133 = vmatmul.mubr.f32.gmra.mrb[0].mxu0 %v10003
  %v10134 = vpop.f32.mrb[0].mxu0
  %v10135 = vadd.f32 0.0, %v10134
  %v10136 = vpop.f32.mrb[0].mxu0
  %10137 = vmatprep.mubr.f32.mxu0 0.0
  %10138 = vmatmul.mubr.f32.gmra.mrb[0].mxu0 %v10006
  %v10139 = vpop.f32.mrb[0].mxu0
  %v10140 = vadd.f32 0.0, %v10139
  %v10141 = vpop.f32.mrb[0].mxu0
  %10142 = vmatprep.mubr.f32.mxu0 0.0
  %10143 = vmatmul.mubr.f32.gmra.mrb[0].mxu0 %v10009
  %v10144 = vpop.f32.mrb[0].mxu0
  %v10145 = vadd.f32 0.0, %v10144
  %v10146 = vpop.f32.mrb[0].mxu0
  %10147 = vmatprep.mubr.f32.mxu0 0.0
  %10148 = vmatmul.mubr.f32.gmra.mrb[0].mxu0 %v10012
  %v10149 = vpop.f32.mrb[0].mxu0
  %v10150 = vadd.f32 0.0, %v10149
  %v10151 = vpop.f32.mrb[0].mxu0
  %10152 = vmatprep.mubr.f32.mxu0 0.0
  %10153 = vmatmul.mubr.f32.gmra.mrb[0].mxu0 %v10015
  %v10154 = vpop.f32.mrb[0].mxu0
  %v10155 = vadd.f32 0.0, %v10154
  %v10156 = vpop.f32.mrb[0].mxu0
  %10157 = vmatprep.mubr.f32.mxu0 0.0
  %10158 = vmatmul.mubr.f32.gmra.mrb[0].mxu0 %v10018
  %v10159 = vpop.f32.mrb[0].mxu0
  %v10160 = vadd.f32 0.0, %v10159
  %v10161 = vpop.f32.mrb[0].mxu0
  %10162 = vmatprep.mubr.f32.mxu0 0.0
  %10163 = vmatmul.mubr.f32.gmra.mrb[0].mxu0 %v10021
  %v10164 = vpop.f32.mrb[0].mxu0
  %v10165 = vadd.f32 0.0, %v10164
  %v10166 = vpop.f32.mrb[0].mxu0
  %10167 = vmatprep.mubr.f32.mxu0 0.0
  %10168 = vmatmul.mubr.f32.gmra.mrb[0].mxu0 %v10024
  %v10169 = vpop.f32.mrb[0].mxu0
  %v10170 = vadd.f32 0.0, %v10169
  %v10171 = vpop.f32.mrb[0].mxu0
  %10172 = vmatprep.mubr.f32.mxu0 0.0
  %10173 = vmatmul.mubr.f32.gmra.mrb[0].mxu0 %v10027
  %v10174 = vpop.f32.mrb[0].mxu0
  %v10175 = vadd.f32 0.0, %v10174
  %v10176 = vpop.f32.mrb[0].mxu0
  %10177 = vmatprep.mubr.f32.mxu0 0.0
  %10178 = vmatmul.mubr.f32.gmra.mrb[0].mxu0 %v10030
  %v10179 = vpop.f32.mrb[0].mxu0
  %v10180 = vadd.f32 0.0, %v10179
  %v10181 = vpop.f32.mrb[0].mxu0
  %10182 = vmatprep.mubr.f32.mxu0 0.0
  %10183 = vmatmul.mubr.f32.gmra.mrb[0].mxu0 %v10033
  %v10184 = vpop.f32.mrb[0].mxu0
  %v10185 = vadd.f32 0.0, %v10184
  %v10186 = vpop.f32.mrb[0].mxu0
  %10187 = vmatprep.mubr.f32.mxu0 0.0
  %10188 = vmatmul.mubr.f32.gmra.mrb[0].mxu0 %v10036
  %v10189 = vpop.f32.mrb[0].mxu0
  %v10190 = vadd.f32 0.0, %v10189
  %v10191 = vpop.f32.mrb[0].mxu0
  %10192 = vmatprep.mubr.f32.mxu0 0.0
  %10193 = vmatmul.mubr.f32.gmra.mrb[0].mxu0 %v10039
  %v10194 = vpop.f32.mrb[0].mxu0
  %v10195 = vadd.f32 0.0, %v10194
  %v10196 = vpop.f32.mrb[0].mxu0
  %10197 = vmatprep.mubr.f32.mxu0 0.0
  %10198 = vmatmul.mubr.f32.gmra.mrb[0].mxu0 %v10042
  %v10199 = vpop.f32.mrb[0].mxu0
  %v10200 = vadd.f32 0.0, %v10199
  %v10201 = vpop.f32.mrb[0].mxu0
  %10202 = vmatprep.mubr.f32.mxu0 0.0
  %10203 = vmatmul.mubr.f32.gmra.mrb[0].mxu0 %v10045
  %v10204 = vpop.f32.mrb[0].mxu0
  %v10205 = vadd.f32 0.0, %v10204
  %v10206 = vpop.f32.mrb[0].mxu0
  %10207 = vmatprep.mubr.f32.mxu0 0.0
  %10208 = vmatmul.mubr.f32.gmra.mrb[0].mxu0 %v10048
  %v10209 = vpop.f32.mrb[0].mxu0
  %v10210 = vadd.f32 0.0, %v10209
  %v10211 = vpop.f32.mrb[0].mxu0
  %10212 = vmatprep.mubr.f32.mxu0 0.0
  %10213 = vmatmul.mubr.f32.gmra.mrb[0].mxu0 %v10051
  %v10214 = vpop.f32.mrb[0].mxu0
  %v10215 = vadd.f32 0.0, %v10214
  %v10216 = vpop.f32.mrb[0].mxu0
  %10217 = vdwg.mxu0
  %v10218 = vadd.f32 %v9908, %v10120
  %v10219 = vadd.f32 %v9909, %v10125
  %v10220 = vadd.f32 %v9910, %v10130
  %v10221 = vadd.f32 %v9911, %v10135
  %v10222 = vadd.f32 %v9912, %v10140
  %v10223 = vadd.f32 %v9913, %v10145
  %v10224 = vadd.f32 %v9914, %v10150
  %v10225 = vadd.f32 %v9915, %v10155
  %v10226 = vadd.f32 %v9916, %v10160
  %v10227 = vadd.f32 %v9917, %v10165
  %v10228 = vadd.f32 %v9918, %v10170
  %v10229 = vadd.f32 %v9919, %v10175
  %v10230 = vadd.f32 %v9920, %v10180
  %v10231 = vadd.f32 %v9921, %v10185
  %v10232 = vadd.f32 %v9922, %v10190
  %v10233 = vadd.f32 %v9923, %v10195
  %v10234 = vadd.f32 %v9924, %v10200
  %v10235 = vadd.f32 %v9925, %v10205
  %v10236 = vadd.f32 %v9926, %v10210
  %v10237 = vadd.f32 %v9927, %v10215
  %v10238 = vld [vmem:[%s4305] sm:$0xff]
  %v10239 = vld [vmem:[%s4305 + $0x8] sm:$0xff]
  %v10240 = vld [vmem:[%s4305 + $0x10] sm:$0xff]
  %v10241 = vld [vmem:[%s4305 + $0x18] sm:$0xff]
  %v10242 = vld [vmem:[%s4305 + $0x20] sm:$0xff]
  %v10243 = vld [vmem:[%s4305 + $0x28] sm:$0xff]
  %v10244 = vld [vmem:[%s4305 + $0x30] sm:$0xff]
  %v10245 = vld [vmem:[%s4305 + $0x38] sm:$0xff]
  %v10246 = vld [vmem:[%s4305 + $0x40] sm:$0xff]
  %v10247 = vld [vmem:[%s4305 + $0x48] sm:$0xff]
  %v10248 = vld [vmem:[%s4305 + $0x50] sm:$0xff]
  %v10249 = vld [vmem:[%s4305 + $0x58] sm:$0xff]
  %v10250 = vld [vmem:[%s4305 + $0x60] sm:$0xff]
  %v10251 = vld [vmem:[%s4305 + $0x68] sm:$0xff]
  %v10252 = vld [vmem:[%s4305 + $0x70] sm:$0xff]
  %v10253 = vld [vmem:[%s4305 + $0x78] sm:$0xff]
  %v10254 = vld [vmem:[%s4305 + $0x80] sm:$0xff]
  %v10255 = vld [vmem:[%s4305 + $0x88] sm:$0xff]
  %v10256 = vld [vmem:[%s4305 + $0x90] sm:$0xff]
  %v10257 = vld [vmem:[%s4305 + $0x98] sm:$0xff]
  %10258 = vrot.lane.b32.xlu0 %v8835, 124
  %v10259 = vpop.permute.xlu0 %10258
  %10260 = vrot.lane.b32.xlu0 %v8840, 124
  %v10261 = vpop.permute.xlu0 %10260
  %10262 = vrot.lane.b32.xlu0 %v8845, 124
  %v10263 = vpop.permute.xlu0 %10262
  %10264 = vrot.lane.b32.xlu0 %v8850, 124
  %v10265 = vpop.permute.xlu0 %10264
  %10266 = vrot.lane.b32.xlu0 %v8855, 124
  %v10267 = vpop.permute.xlu0 %10266
  %10268 = vrot.lane.b32.xlu0 %v8860, 124
  %v10269 = vpop.permute.xlu0 %10268
  %10270 = vrot.lane.b32.xlu0 %v8865, 124
  %v10271 = vpop.permute.xlu0 %10270
  %10272 = vrot.lane.b32.xlu0 %v8870, 124
  %v10273 = vpop.permute.xlu0 %10272
  %10274 = vrot.lane.b32.xlu0 %v8875, 124
  %v10275 = vpop.permute.xlu0 %10274
  %10276 = vrot.lane.b32.xlu0 %v8880, 124
  %v10277 = vpop.permute.xlu0 %10276
  %10278 = vrot.lane.b32.xlu0 %v8885, 124
  %v10279 = vpop.permute.xlu0 %10278
  %10280 = vrot.lane.b32.xlu0 %v8890, 124
  %v10281 = vpop.permute.xlu0 %10280
  %10282 = vrot.lane.b32.xlu0 %v8895, 124
  %v10283 = vpop.permute.xlu0 %10282
  %10284 = vrot.lane.b32.xlu0 %v8900, 124
  %v10285 = vpop.permute.xlu0 %10284
  %10286 = vrot.lane.b32.xlu0 %v8905, 124
  %v10287 = vpop.permute.xlu0 %10286
  %v10304 = vsel %vm3011, %v10238, 0
  %v10307 = vsel %vm3011, %v10239, 0
  %v10310 = vsel %vm3011, %v10240, 0
  %v10313 = vsel %vm3011, %v10241, 0
  %v10316 = vsel %vm3011, %v10242, 0
  %v10319 = vsel %vm3011, %v10243, 0
  %v10322 = vsel %vm3011, %v10244, 0
  %v10325 = vsel %vm3011, %v10245, 0
  %v10328 = vsel %vm3011, %v10246, 0
  %v10331 = vsel %vm3011, %v10247, 0
  %v10334 = vsel %vm3011, %v10248, 0
  %v10337 = vsel %vm3011, %v10249, 0
  %v10340 = vsel %vm3011, %v10250, 0
  %v10343 = vsel %vm3011, %v10251, 0
  %v10346 = vsel %vm3011, %v10252, 0
  %v10349 = vsel %vm3011, %v10253, 0
  %v10352 = vsel %vm3011, %v10254, 0
  %v10355 = vsel %vm3011, %v10255, 0
  %v10358 = vsel %vm3011, %v10256, 0
  %v10361 = vsel %vm3011, %v10257, 0
  %10363 = vmatprep.subr.mxu0 0.0
  %10364 = vmatpush1.msra.mxu0 %v10259
  %10365 = vmatprep.subr.mxu0 0.0
  %10366 = vmatpush1.msra.mxu0 %v10261
  %10367 = vmatprep.subr.mxu0 0.0
  %10368 = vmatpush1.msra.mxu0 %v10263
  %10369 = vmatprep.subr.mxu0 0.0
  %10370 = vmatpush1.msra.mxu0 %v10265
  %10371 = vmatprep.subr.mxu0 0.0
  %10372 = vmatpush1.msra.mxu0 %v10267
  %10373 = vmatprep.subr.mxu0 0.0
  %10374 = vmatpush1.msra.mxu0 %v10269
  %10375 = vmatprep.subr.mxu0 0.0
  %10376 = vmatpush1.msra.mxu0 %v10271
  %10377 = vmatprep.subr.mxu0 0.0
  %10378 = vmatpush1.msra.mxu0 %v10273
  %10379 = vmatprep.subr.mxu0 0.0
  %10380 = vmatpush1.msra.mxu0 %v10275
  %10381 = vmatprep.subr.mxu0 0.0
  %10382 = vmatpush1.msra.mxu0 %v10277
  %10383 = vmatprep.subr.mxu0 0.0
  %10384 = vmatpush1.msra.mxu0 %v10279
  %10385 = vmatprep.subr.mxu0 0.0
  %10386 = vmatpush1.msra.mxu0 %v10281
  %10387 = vmatprep.subr.mxu0 0.0
  %10388 = vmatpush1.msra.mxu0 %v10283
  %10389 = vmatprep.subr.mxu0 0.0
  %10390 = vmatpush1.msra.mxu0 %v10285
  %10391 = vmatprep.subr.mxu0 0.0
  %10392 = vmatpush1.msra.mxu0 %v10287
  %10393 = vmatprep.subr.mxu0 0.0
  %10394 = vmatpush1.msra.mxu0 0.0
  %10395 = vmatprep.subr.mxu0 0.0
  %10396 = vmatpush1.msra.mxu0 0.0
  %10397 = vmatprep.subr.mxu0 0.0
  %10398 = vmatpush1.msra.mxu0 0.0
  %10399 = vmatprep.subr.mxu0 0.0
  %10400 = vmatpush1.msra.mxu0 0.0
  %10401 = vmatprep.subr.mxu0 0.0
  %10402 = vmatpush1.msra.mxu0 0.0
  %10403 = vmatprep.subr.mxu0 0.0
  %10404 = vmatpush1.msra.mxu0 0.0
  %10405 = vmatprep.subr.mxu0 0.0
  %10406 = vmatpush1.msra.mxu0 0.0
  %10407 = vmatprep.subr.mxu0 0.0
  %10408 = vmatpush1.msra.mxu0 0.0
  %10409 = vmatprep.subr.mxu0 0.0
  %10410 = vmatpush1.msra.mxu0 0.0
  %10411 = vmatprep.subr.mxu0 0.0
  %10412 = vmatpush1.msra.mxu0 0.0
  %10413 = vmatprep.subr.mxu0 0.0
  %10414 = vmatpush1.msra.mxu0 0.0
  %10415 = vmatprep.subr.mxu0 0.0
  %10416 = vmatpush1.msra.mxu0 0.0
  %10417 = vmatprep.subr.mxu0 0.0
  %10418 = vmatpush1.msra.mxu0 0.0
  %10419 = vmatprep.subr.mxu0 0.0
  %10420 = vmatpush1.msra.mxu0 0.0
  %10421 = vmatprep.subr.mxu0 0.0
  %10422 = vmatpush1.msra.mxu0 0.0
  %10423 = vmatprep.subr.mxu0 0.0
  %10424 = vmatpush1.msra.mxu0 0.0
  %10425 = vmatprep.subr.mxu0 0.0
  %10426 = vmatpush1.msra.mxu0 0.0
  %10427 = vmatprep.mubr.f32.mxu0 0.0
  %10428 = vmatmul.mubr.f32.gmra.mrb[0].mxu0 %v10304
  %v10429 = vpop.f32.mrb[0].mxu0
  %v10430 = vadd.f32 0.0, %v10429
  %v10431 = vpop.f32.mrb[0].mxu0
  %10432 = vmatprep.mubr.f32.mxu0 0.0
  %10433 = vmatmul.mubr.f32.gmra.mrb[0].mxu0 %v10307
  %v10434 = vpop.f32.mrb[0].mxu0
  %v10435 = vadd.f32 0.0, %v10434
  %v10436 = vpop.f32.mrb[0].mxu0
  %10437 = vmatprep.mubr.f32.mxu0 0.0
  %10438 = vmatmul.mubr.f32.gmra.mrb[0].mxu0 %v10310
  %v10439 = vpop.f32.mrb[0].mxu0
  %v10440 = vadd.f32 0.0, %v10439
  %v10441 = vpop.f32.mrb[0].mxu0
  %10442 = vmatprep.mubr.f32.mxu0 0.0
  %10443 = vmatmul.mubr.f32.gmra.mrb[0].mxu0 %v10313
  %v10444 = vpop.f32.mrb[0].mxu0
  %v10445 = vadd.f32 0.0, %v10444
  %v10446 = vpop.f32.mrb[0].mxu0
  %10447 = vmatprep.mubr.f32.mxu0 0.0
  %10448 = vmatmul.mubr.f32.gmra.mrb[0].mxu0 %v10316
  %v10449 = vpop.f32.mrb[0].mxu0
  %v10450 = vadd.f32 0.0, %v10449
  %v10451 = vpop.f32.mrb[0].mxu0
  %10452 = vmatprep.mubr.f32.mxu0 0.0
  %10453 = vmatmul.mubr.f32.gmra.mrb[0].mxu0 %v10319
  %v10454 = vpop.f32.mrb[0].mxu0
  %v10455 = vadd.f32 0.0, %v10454
  %v10456 = vpop.f32.mrb[0].mxu0
  %10457 = vmatprep.mubr.f32.mxu0 0.0
  %10458 = vmatmul.mubr.f32.gmra.mrb[0].mxu0 %v10322
  %v10459 = vpop.f32.mrb[0].mxu0
  %v10460 = vadd.f32 0.0, %v10459
  %v10461 = vpop.f32.mrb[0].mxu0
  %10462 = vmatprep.mubr.f32.mxu0 0.0
  %10463 = vmatmul.mubr.f32.gmra.mrb[0].mxu0 %v10325
  %v10464 = vpop.f32.mrb[0].mxu0
  %v10465 = vadd.f32 0.0, %v10464
  %v10466 = vpop.f32.mrb[0].mxu0
  %10467 = vmatprep.mubr.f32.mxu0 0.0
  %10468 = vmatmul.mubr.f32.gmra.mrb[0].mxu0 %v10328
  %v10469 = vpop.f32.mrb[0].mxu0
  %v10470 = vadd.f32 0.0, %v10469
  %v10471 = vpop.f32.mrb[0].mxu0
  %10472 = vmatprep.mubr.f32.mxu0 0.0
  %10473 = vmatmul.mubr.f32.gmra.mrb[0].mxu0 %v10331
  %v10474 = vpop.f32.mrb[0].mxu0
  %v10475 = vadd.f32 0.0, %v10474
  %v10476 = vpop.f32.mrb[0].mxu0
  %10477 = vmatprep.mubr.f32.mxu0 0.0
  %10478 = vmatmul.mubr.f32.gmra.mrb[0].mxu0 %v10334
  %v10479 = vpop.f32.mrb[0].mxu0
  %v10480 = vadd.f32 0.0, %v10479
  %v10481 = vpop.f32.mrb[0].mxu0
  %10482 = vmatprep.mubr.f32.mxu0 0.0
  %10483 = vmatmul.mubr.f32.gmra.mrb[0].mxu0 %v10337
  %v10484 = vpop.f32.mrb[0].mxu0
  %v10485 = vadd.f32 0.0, %v10484
  %v10486 = vpop.f32.mrb[0].mxu0
  %10487 = vmatprep.mubr.f32.mxu0 0.0
  %10488 = vmatmul.mubr.f32.gmra.mrb[0].mxu0 %v10340
  %v10489 = vpop.f32.mrb[0].mxu0
  %v10490 = vadd.f32 0.0, %v10489
  %v10491 = vpop.f32.mrb[0].mxu0
  %10492 = vmatprep.mubr.f32.mxu0 0.0
  %10493 = vmatmul.mubr.f32.gmra.mrb[0].mxu0 %v10343
  %v10494 = vpop.f32.mrb[0].mxu0
  %v10495 = vadd.f32 0.0, %v10494
  %v10496 = vpop.f32.mrb[0].mxu0
  %10497 = vmatprep.mubr.f32.mxu0 0.0
  %10498 = vmatmul.mubr.f32.gmra.mrb[0].mxu0 %v10346
  %v10499 = vpop.f32.mrb[0].mxu0
  %v10500 = vadd.f32 0.0, %v10499
  %v10501 = vpop.f32.mrb[0].mxu0
  %10502 = vmatprep.mubr.f32.mxu0 0.0
  %10503 = vmatmul.mubr.f32.gmra.mrb[0].mxu0 %v10349
  %v10504 = vpop.f32.mrb[0].mxu0
  %v10505 = vadd.f32 0.0, %v10504
  %v10506 = vpop.f32.mrb[0].mxu0
  %10507 = vmatprep.mubr.f32.mxu0 0.0
  %10508 = vmatmul.mubr.f32.gmra.mrb[0].mxu0 %v10352
  %v10509 = vpop.f32.mrb[0].mxu0
  %v10510 = vadd.f32 0.0, %v10509
  %v10511 = vpop.f32.mrb[0].mxu0
  %10512 = vmatprep.mubr.f32.mxu0 0.0
  %10513 = vmatmul.mubr.f32.gmra.mrb[0].mxu0 %v10355
  %v10514 = vpop.f32.mrb[0].mxu0
  %v10515 = vadd.f32 0.0, %v10514
  %v10516 = vpop.f32.mrb[0].mxu0
  %10517 = vmatprep.mubr.f32.mxu0 0.0
  %10518 = vmatmul.mubr.f32.gmra.mrb[0].mxu0 %v10358
  %v10519 = vpop.f32.mrb[0].mxu0
  %v10520 = vadd.f32 0.0, %v10519
  %v10521 = vpop.f32.mrb[0].mxu0
  %10522 = vmatprep.mubr.f32.mxu0 0.0
  %10523 = vmatmul.mubr.f32.gmra.mrb[0].mxu0 %v10361
  %v10524 = vpop.f32.mrb[0].mxu0
  %v10525 = vadd.f32 0.0, %v10524
  %v10526 = vpop.f32.mrb[0].mxu0
  %10527 = vdwg.mxu0
  %v10528 = vadd.f32 %v10218, %v10430
  %v10529 = vadd.f32 %v10219, %v10435
  %v10530 = vadd.f32 %v10220, %v10440
  %v10531 = vadd.f32 %v10221, %v10445
  %v10532 = vadd.f32 %v10222, %v10450
  %v10533 = vadd.f32 %v10223, %v10455
  %v10534 = vadd.f32 %v10224, %v10460
  %v10535 = vadd.f32 %v10225, %v10465
  %v10536 = vadd.f32 %v10226, %v10470
  %v10537 = vadd.f32 %v10227, %v10475
  %v10538 = vadd.f32 %v10228, %v10480
  %v10539 = vadd.f32 %v10229, %v10485
  %v10540 = vadd.f32 %v10230, %v10490
  %v10541 = vadd.f32 %v10231, %v10495
  %v10542 = vadd.f32 %v10232, %v10500
  %v10543 = vadd.f32 %v10233, %v10505
  %v10544 = vadd.f32 %v10234, %v10510
  %v10545 = vadd.f32 %v10235, %v10515
  %v10546 = vadd.f32 %v10236, %v10520
  %v10547 = vadd.f32 %v10237, %v10525
  %v10548 = vmax.f32 %v10528, 0.0
  %v10549 = vmax.f32 %v10529, 0.0
  %v10550 = vmax.f32 %v10530, 0.0
  %v10551 = vmax.f32 %v10531, 0.0
  %v10552 = vmax.f32 %v10532, 0.0
  %v10553 = vmax.f32 %v10533, 0.0
  %v10554 = vmax.f32 %v10534, 0.0
  %v10555 = vmax.f32 %v10535, 0.0
  %v10556 = vmax.f32 %v10536, 0.0
  %v10557 = vmax.f32 %v10537, 0.0
  %v10558 = vmax.f32 %v10538, 0.0
  %v10559 = vmax.f32 %v10539, 0.0
  %v10560 = vmax.f32 %v10540, 0.0
  %v10561 = vmax.f32 %v10541, 0.0
  %v10562 = vmax.f32 %v10542, 0.0
  %v10563 = vmax.f32 %v10543, 0.0
  %v10564 = vmax.f32 %v10544, 0.0
  %v10565 = vmax.f32 %v10545, 0.0
  %v10566 = vmax.f32 %v10546, 0.0
  %v10567 = vmax.f32 %v10547, 0.0
  %10588 = vrot.lane.b32.xlu0 %v10548, 127
  %v10589 = vpop.permute.xlu0 %10588
  %10590 = vrot.lane.b32.xlu0 %v10549, 127
  %v10591 = vpop.permute.xlu0 %10590
  %10592 = vrot.lane.b32.xlu0 %v10550, 127
  %v10593 = vpop.permute.xlu0 %10592
  %10594 = vrot.lane.b32.xlu0 %v10551, 127
  %v10595 = vpop.permute.xlu0 %10594
  %10596 = vrot.lane.b32.xlu0 %v10552, 127
  %v10597 = vpop.permute.xlu0 %10596
  %10598 = vrot.lane.b32.xlu0 %v10553, 127
  %v10599 = vpop.permute.xlu0 %10598
  %10600 = vrot.lane.b32.xlu0 %v10554, 127
  %v10601 = vpop.permute.xlu0 %10600
  %10602 = vrot.lane.b32.xlu0 %v10555, 127
  %v10603 = vpop.permute.xlu0 %10602
  %10604 = vrot.lane.b32.xlu0 %v10556, 127
  %v10605 = vpop.permute.xlu0 %10604
  %10606 = vrot.lane.b32.xlu0 %v10557, 127
  %v10607 = vpop.permute.xlu0 %10606
  %10608 = vrot.lane.b32.xlu0 %v10558, 127
  %v10609 = vpop.permute.xlu0 %10608
  %10610 = vrot.lane.b32.xlu0 %v10559, 127
  %v10611 = vpop.permute.xlu0 %10610
  %10612 = vrot.lane.b32.xlu0 %v10560, 127
  %v10613 = vpop.permute.xlu0 %10612
  %10614 = vrot.lane.b32.xlu0 %v10561, 127
  %v10615 = vpop.permute.xlu0 %10614
  %10616 = vrot.lane.b32.xlu0 %v10562, 127
  %v10617 = vpop.permute.xlu0 %10616
  %10618 = vrot.lane.b32.xlu0 %v10563, 127
  %v10619 = vpop.permute.xlu0 %10618
  %10620 = vrot.lane.b32.xlu0 %v10564, 127
  %v10621 = vpop.permute.xlu0 %10620
  %10622 = vrot.lane.b32.xlu0 %v10565, 127
  %v10623 = vpop.permute.xlu0 %10622
  %10624 = vrot.lane.b32.xlu0 %v10566, 127
  %v10625 = vpop.permute.xlu0 %10624
  %10626 = vrot.lane.b32.xlu0 %v10567, 127
  %v10627 = vpop.permute.xlu0 %10626
  %v10648 = vmax.f32 %v10548, %v10589
  %v10649 = vmax.f32 %v10549, %v10591
  %v10650 = vmax.f32 %v10550, %v10593
  %v10651 = vmax.f32 %v10551, %v10595
  %v10652 = vmax.f32 %v10552, %v10597
  %v10653 = vmax.f32 %v10553, %v10599
  %v10654 = vmax.f32 %v10554, %v10601
  %v10655 = vmax.f32 %v10555, %v10603
  %v10656 = vmax.f32 %v10556, %v10605
  %v10657 = vmax.f32 %v10557, %v10607
  %v10658 = vmax.f32 %v10558, %v10609
  %v10659 = vmax.f32 %v10559, %v10611
  %v10660 = vmax.f32 %v10560, %v10613
  %v10661 = vmax.f32 %v10561, %v10615
  %v10662 = vmax.f32 %v10562, %v10617
  %v10663 = vmax.f32 %v10563, %v10619
  %v10664 = vmax.f32 %v10564, %v10621
  %v10665 = vmax.f32 %v10565, %v10623
  %v10666 = vmax.f32 %v10566, %v10625
  %v10667 = vmax.f32 %v10567, %v10627
  %v10668 = vld [vmem:[%s7] sm:$0x7f]
  %v10670 = vsel %vm4737, %v10648, 0
  %v10673 = vsel %vm4737, %v10649, 0
  %v10676 = vsel %vm4737, %v10650, 0
  %v10679 = vsel %vm4737, %v10651, 0
  %v10682 = vsel %vm4737, %v10652, 0
  %v10685 = vsel %vm4737, %v10653, 0
  %v10688 = vsel %vm4737, %v10654, 0
  %v10691 = vsel %vm4737, %v10655, 0
  %v10694 = vsel %vm4737, %v10656, 0
  %v10697 = vsel %vm4737, %v10657, 0
  %v10700 = vsel %vm4737, %v10658, 0
  %v10703 = vsel %vm4737, %v10659, 0
  %v10706 = vsel %vm4737, %v10660, 0
  %v10709 = vsel %vm4737, %v10661, 0
  %v10712 = vsel %vm4737, %v10662, 0
  %v10715 = vsel %vm4737, %v10663, 0
  %v10718 = vsel %vm4737, %v10664, 0
  %v10721 = vsel %vm4737, %v10665, 0
  %v10724 = vsel %vm4737, %v10666, 0
  %v10727 = vsel %vm4737, %v10667, 0
  %v10730 = vsel %vm2384, %v10668, 0
  %10732 = vmatprep.subr.mxu0 0.0
  %10733 = vmatpush1.msra.mxu0 %v10730
  %10734 = vmatprep.subr.mxu0 0.0
  %10735 = vmatpush1.msra.mxu0 0.0
  %10736 = vmatprep.subr.mxu0 0.0
  %10737 = vmatpush1.msra.mxu0 0.0
  %10738 = vmatprep.subr.mxu0 0.0
  %10739 = vmatpush1.msra.mxu0 0.0
  %10740 = vmatprep.subr.mxu0 0.0
  %10741 = vmatpush1.msra.mxu0 0.0
  %10742 = vmatprep.subr.mxu0 0.0
  %10743 = vmatpush1.msra.mxu0 0.0
  %10744 = vmatprep.subr.mxu0 0.0
  %10745 = vmatpush1.msra.mxu0 0.0
  %10746 = vmatprep.subr.mxu0 0.0
  %10747 = vmatpush1.msra.mxu0 0.0
  %10748 = vmatprep.subr.mxu0 0.0
  %10749 = vmatpush1.msra.mxu0 0.0
  %10750 = vmatprep.subr.mxu0 0.0
  %10751 = vmatpush1.msra.mxu0 0.0
  %10752 = vmatprep.subr.mxu0 0.0
  %10753 = vmatpush1.msra.mxu0 0.0
  %10754 = vmatprep.subr.mxu0 0.0
  %10755 = vmatpush1.msra.mxu0 0.0
  %10756 = vmatprep.subr.mxu0 0.0
  %10757 = vmatpush1.msra.mxu0 0.0
  %10758 = vmatprep.subr.mxu0 0.0
  %10759 = vmatpush1.msra.mxu0 0.0
  %10760 = vmatprep.subr.mxu0 0.0
  %10761 = vmatpush1.msra.mxu0 0.0
  %10762 = vmatprep.subr.mxu0 0.0
  %10763 = vmatpush1.msra.mxu0 0.0
  %10764 = vmatprep.subr.mxu0 0.0
  %10765 = vmatpush1.msra.mxu0 0.0
  %10766 = vmatprep.subr.mxu0 0.0
  %10767 = vmatpush1.msra.mxu0 0.0
  %10768 = vmatprep.subr.mxu0 0.0
  %10769 = vmatpush1.msra.mxu0 0.0
  %10770 = vmatprep.subr.mxu0 0.0
  %10771 = vmatpush1.msra.mxu0 0.0
  %10772 = vmatprep.subr.mxu0 0.0
  %10773 = vmatpush1.msra.mxu0 0.0
  %10774 = vmatprep.subr.mxu0 0.0
  %10775 = vmatpush1.msra.mxu0 0.0
  %10776 = vmatprep.subr.mxu0 0.0
  %10777 = vmatpush1.msra.mxu0 0.0
  %10778 = vmatprep.subr.mxu0 0.0
  %10779 = vmatpush1.msra.mxu0 0.0
  %10780 = vmatprep.subr.mxu0 0.0
  %10781 = vmatpush1.msra.mxu0 0.0
  %10782 = vmatprep.subr.mxu0 0.0
  %10783 = vmatpush1.msra.mxu0 0.0
  %10784 = vmatprep.subr.mxu0 0.0
  %10785 = vmatpush1.msra.mxu0 0.0
  %10786 = vmatprep.subr.mxu0 0.0
  %10787 = vmatpush1.msra.mxu0 0.0
  %10788 = vmatprep.subr.mxu0 0.0
  %10789 = vmatpush1.msra.mxu0 0.0
  %10790 = vmatprep.subr.mxu0 0.0
  %10791 = vmatpush1.msra.mxu0 0.0
  %10792 = vmatprep.subr.mxu0 0.0
  %10793 = vmatpush1.msra.mxu0 0.0
  %10794 = vmatprep.subr.mxu0 0.0
  %10795 = vmatpush1.msra.mxu0 0.0
  %10796 = vmatprep.mubr.f32.mxu0 0.0
  %10797 = vmatmul.mubr.f32.gmra.mrb[0].mxu0 %v10670
  %v10798 = vpop.f32.mrb[0].mxu0
  %v10799 = vadd.f32 0.0, %v10798
  %v10800 = vpop.f32.mrb[0].mxu0
  %10801 = vmatprep.mubr.f32.mxu0 0.0
  %10802 = vmatmul.mubr.f32.gmra.mrb[0].mxu0 %v10673
  %v10803 = vpop.f32.mrb[0].mxu0
  %v10804 = vadd.f32 0.0, %v10803
  %v10805 = vpop.f32.mrb[0].mxu0
  %10806 = vmatprep.mubr.f32.mxu0 0.0
  %10807 = vmatmul.mubr.f32.gmra.mrb[0].mxu0 %v10676
  %v10808 = vpop.f32.mrb[0].mxu0
  %v10809 = vadd.f32 0.0, %v10808
  %v10810 = vpop.f32.mrb[0].mxu0
  %10811 = vmatprep.mubr.f32.mxu0 0.0
  %10812 = vmatmul.mubr.f32.gmra.mrb[0].mxu0 %v10679
  %v10813 = vpop.f32.mrb[0].mxu0
  %v10814 = vadd.f32 0.0, %v10813
  %v10815 = vpop.f32.mrb[0].mxu0
  %10816 = vmatprep.mubr.f32.mxu0 0.0
  %10817 = vmatmul.mubr.f32.gmra.mrb[0].mxu0 %v10682
  %v10818 = vpop.f32.mrb[0].mxu0
  %v10819 = vadd.f32 0.0, %v10818
  %v10820 = vpop.f32.mrb[0].mxu0
  %10821 = vmatprep.mubr.f32.mxu0 0.0
  %10822 = vmatmul.mubr.f32.gmra.mrb[0].mxu0 %v10685
  %v10823 = vpop.f32.mrb[0].mxu0
  %v10824 = vadd.f32 0.0, %v10823
  %v10825 = vpop.f32.mrb[0].mxu0
  %10826 = vmatprep.mubr.f32.mxu0 0.0
  %10827 = vmatmul.mubr.f32.gmra.mrb[0].mxu0 %v10688
  %v10828 = vpop.f32.mrb[0].mxu0
  %v10829 = vadd.f32 0.0, %v10828
  %v10830 = vpop.f32.mrb[0].mxu0
  %10831 = vmatprep.mubr.f32.mxu0 0.0
  %10832 = vmatmul.mubr.f32.gmra.mrb[0].mxu0 %v10691
  %v10833 = vpop.f32.mrb[0].mxu0
  %v10834 = vadd.f32 0.0, %v10833
  %v10835 = vpop.f32.mrb[0].mxu0
  %10836 = vmatprep.mubr.f32.mxu0 0.0
  %10837 = vmatmul.mubr.f32.gmra.mrb[0].mxu0 %v10694
  %v10838 = vpop.f32.mrb[0].mxu0
  %v10839 = vadd.f32 0.0, %v10838
  %v10840 = vpop.f32.mrb[0].mxu0
  %10841 = vmatprep.mubr.f32.mxu0 0.0
  %10842 = vmatmul.mubr.f32.gmra.mrb[0].mxu0 %v10697
  %v10843 = vpop.f32.mrb[0].mxu0
  %v10844 = vadd.f32 0.0, %v10843
  %v10845 = vpop.f32.mrb[0].mxu0
  %10846 = vmatprep.mubr.f32.mxu0 0.0
  %10847 = vmatmul.mubr.f32.gmra.mrb[0].mxu0 %v10700
  %v10848 = vpop.f32.mrb[0].mxu0
  %v10849 = vadd.f32 0.0, %v10848
  %v10850 = vpop.f32.mrb[0].mxu0
  %10851 = vmatprep.mubr.f32.mxu0 0.0
  %10852 = vmatmul.mubr.f32.gmra.mrb[0].mxu0 %v10703
  %v10853 = vpop.f32.mrb[0].mxu0
  %v10854 = vadd.f32 0.0, %v10853
  %v10855 = vpop.f32.mrb[0].mxu0
  %10856 = vmatprep.mubr.f32.mxu0 0.0
  %10857 = vmatmul.mubr.f32.gmra.mrb[0].mxu0 %v10706
  %v10858 = vpop.f32.mrb[0].mxu0
  %v10859 = vadd.f32 0.0, %v10858
  %v10860 = vpop.f32.mrb[0].mxu0
  %10861 = vmatprep.mubr.f32.mxu0 0.0
  %10862 = vmatmul.mubr.f32.gmra.mrb[0].mxu0 %v10709
  %v10863 = vpop.f32.mrb[0].mxu0
  %v10864 = vadd.f32 0.0, %v10863
  %v10865 = vpop.f32.mrb[0].mxu0
  %10866 = vmatprep.mubr.f32.mxu0 0.0
  %10867 = vmatmul.mubr.f32.gmra.mrb[0].mxu0 %v10712
  %v10868 = vpop.f32.mrb[0].mxu0
  %v10869 = vadd.f32 0.0, %v10868
  %v10870 = vpop.f32.mrb[0].mxu0
  %10871 = vmatprep.mubr.f32.mxu0 0.0
  %10872 = vmatmul.mubr.f32.gmra.mrb[0].mxu0 %v10715
  %v10873 = vpop.f32.mrb[0].mxu0
  %v10874 = vadd.f32 0.0, %v10873
  %v10875 = vpop.f32.mrb[0].mxu0
  %10876 = vmatprep.mubr.f32.mxu0 0.0
  %10877 = vmatmul.mubr.f32.gmra.mrb[0].mxu0 %v10718
  %v10878 = vpop.f32.mrb[0].mxu0
  %v10879 = vadd.f32 0.0, %v10878
  %v10880 = vpop.f32.mrb[0].mxu0
  %10881 = vmatprep.mubr.f32.mxu0 0.0
  %10882 = vmatmul.mubr.f32.gmra.mrb[0].mxu0 %v10721
  %v10883 = vpop.f32.mrb[0].mxu0
  %v10884 = vadd.f32 0.0, %v10883
  %v10885 = vpop.f32.mrb[0].mxu0
  %10886 = vmatprep.mubr.f32.mxu0 0.0
  %10887 = vmatmul.mubr.f32.gmra.mrb[0].mxu0 %v10724
  %v10888 = vpop.f32.mrb[0].mxu0
  %v10889 = vadd.f32 0.0, %v10888
  %v10890 = vpop.f32.mrb[0].mxu0
  %10891 = vmatprep.mubr.f32.mxu0 0.0
  %10892 = vmatmul.mubr.f32.gmra.mrb[0].mxu0 %v10727
  %v10893 = vpop.f32.mrb[0].mxu0
  %v10894 = vadd.f32 0.0, %v10893
  %v10895 = vpop.f32.mrb[0].mxu0
  %10896 = vdwg.mxu0
  %v10917 = vrot.slane %v10799, 1
  %v10918 = vrot.slane %v10804, 1
  %v10919 = vsel %vm2384, %v10917, %v10918
  %v10920 = vrot.slane %v10809, 1
  %v10921 = vsel %vm2384, %v10918, %v10920
  %v10922 = vrot.slane %v10814, 1
  %v10923 = vsel %vm2384, %v10920, %v10922
  %v10924 = vrot.slane %v10819, 1
  %v10925 = vsel %vm2384, %v10922, %v10924
  %v10926 = vrot.slane %v10824, 1
  %v10927 = vsel %vm2384, %v10924, %v10926
  %v10928 = vrot.slane %v10829, 1
  %v10929 = vsel %vm2384, %v10926, %v10928
  %v10930 = vrot.slane %v10834, 1
  %v10931 = vsel %vm2384, %v10928, %v10930
  %v10932 = vrot.slane %v10839, 1
  %v10933 = vsel %vm2384, %v10930, %v10932
  %v10934 = vrot.slane %v10844, 1
  %v10935 = vsel %vm2384, %v10932, %v10934
  %v10936 = vrot.slane %v10849, 1
  %v10937 = vsel %vm2384, %v10934, %v10936
  %v10938 = vrot.slane %v10854, 1
  %v10939 = vsel %vm2384, %v10936, %v10938
  %v10940 = vrot.slane %v10859, 1
  %v10941 = vsel %vm2384, %v10938, %v10940
  %v10942 = vrot.slane %v10864, 1
  %v10943 = vsel %vm2384, %v10940, %v10942
  %v10944 = vrot.slane %v10869, 1
  %v10945 = vsel %vm2384, %v10942, %v10944
  %v10946 = vrot.slane %v10874, 1
  %v10947 = vsel %vm2384, %v10944, %v10946
  %v10948 = vrot.slane %v10879, 1
  %v10949 = vsel %vm2384, %v10946, %v10948
  %v10950 = vrot.slane %v10884, 1
  %v10951 = vsel %vm2384, %v10948, %v10950
  %v10952 = vrot.slane %v10889, 1
  %v10953 = vsel %vm2384, %v10950, %v10952
  %v10954 = vrot.slane %v10894, 1
  %v10955 = vsel %vm2384, %v10952, %v10954
  %v10976 = vmax.f32 %v10799, %v10919
  %v10977 = vmax.f32 %v10804, %v10921
  %v10978 = vmax.f32 %v10809, %v10923
  %v10979 = vmax.f32 %v10814, %v10925
  %v10980 = vmax.f32 %v10819, %v10927
  %v10981 = vmax.f32 %v10824, %v10929
  %v10982 = vmax.f32 %v10829, %v10931
  %v10983 = vmax.f32 %v10834, %v10933
  %v10984 = vmax.f32 %v10839, %v10935
  %v10985 = vmax.f32 %v10844, %v10937
  %v10986 = vmax.f32 %v10849, %v10939
  %v10987 = vmax.f32 %v10854, %v10941
  %v10988 = vmax.f32 %v10859, %v10943
  %v10989 = vmax.f32 %v10864, %v10945
  %v10990 = vmax.f32 %v10869, %v10947
  %v10991 = vmax.f32 %v10874, %v10949
  %v10992 = vmax.f32 %v10879, %v10951
  %v10993 = vmax.f32 %v10884, %v10953
  %v10994 = vmax.f32 %v10889, %v10955
  %v10995 = vmax.f32 %v10894, %v10954
  %v10996 = vld [vmem:[%s8] sm:$0xff]
  %v10997 = vld [vmem:[%s8 + $0x8] sm:$0xff]
  %v10998 = vld [vmem:[%s8 + $0x10] sm:$0xff]
  %v10999 = vld [vmem:[%s8 + $0x18] sm:$0xff]
  %v11000 = vld [vmem:[%s8 + $0x20] sm:$0xff]
  %v11001 = vld [vmem:[%s8 + $0x28] sm:$0xff]
  %v11002 = vld [vmem:[%s8 + $0x30] sm:$0xff]
  %v11003 = vld [vmem:[%s8 + $0x38] sm:$0xff]
  %v11004 = vld [vmem:[%s8 + $0x40] sm:$0xff]
  %v11005 = vld [vmem:[%s8 + $0x48] sm:$0xff]
  %v11006 = vld [vmem:[%s8 + $0x50] sm:$0xff]
  %v11007 = vld [vmem:[%s8 + $0x58] sm:$0xff]
  %v11008 = vld [vmem:[%s8 + $0x60] sm:$0xff]
  %v11009 = vld [vmem:[%s8 + $0x68] sm:$0xff]
  %v11010 = vld [vmem:[%s8 + $0x70] sm:$0xff]
  %v11011 = vld [vmem:[%s8 + $0x78] sm:$0xff]
  %v11012 = vld [vmem:[%s8 + $0x80] sm:$0xff]
  %v11013 = vld [vmem:[%s8 + $0x88] sm:$0xff]
  %v11014 = vld [vmem:[%s8 + $0x90] sm:$0xff]
  %v11015 = vld [vmem:[%s8 + $0x98] sm:$0xff]
  %v11017 = vsel %vm5085, %v10997, 0
  %v11020 = vsel %vm5085, %v10999, 0
  %v11023 = vsel %vm5085, %v11001, 0
  %v11026 = vsel %vm5085, %v11003, 0
  %v11029 = vsel %vm5085, %v11005, 0
  %v11032 = vsel %vm5085, %v11007, 0
  %v11035 = vsel %vm5085, %v11009, 0
  %v11038 = vsel %vm5085, %v11011, 0
  %v11041 = vsel %vm5085, %v11013, 0
  %v11044 = vsel %vm5085, %v11015, 0
  %v11047 = vsel %vm2384, %v10995, 0
  %11049 = vmatprep.subr.mxu0 0.0
  %11050 = vmatpush1.msra.mxu0 %v10976
  %11051 = vmatprep.subr.mxu0 0.0
  %11052 = vmatpush1.msra.mxu0 %v10977
  %11053 = vmatprep.subr.mxu0 0.0
  %11054 = vmatpush1.msra.mxu0 %v10978
  %11055 = vmatprep.subr.mxu0 0.0
  %11056 = vmatpush1.msra.mxu0 %v10979
  %11057 = vmatprep.subr.mxu0 0.0
  %11058 = vmatpush1.msra.mxu0 %v10980
  %11059 = vmatprep.subr.mxu0 0.0
  %11060 = vmatpush1.msra.mxu0 %v10981
  %11061 = vmatprep.subr.mxu0 0.0
  %11062 = vmatpush1.msra.mxu0 %v10982
  %11063 = vmatprep.subr.mxu0 0.0
  %11064 = vmatpush1.msra.mxu0 %v10983
  %11065 = vmatprep.subr.mxu0 0.0
  %11066 = vmatpush1.msra.mxu0 %v10984
  %11067 = vmatprep.subr.mxu0 0.0
  %11068 = vmatpush1.msra.mxu0 %v10985
  %11069 = vmatprep.subr.mxu0 0.0
  %11070 = vmatpush1.msra.mxu0 %v10986
  %11071 = vmatprep.subr.mxu0 0.0
  %11072 = vmatpush1.msra.mxu0 %v10987
  %11073 = vmatprep.subr.mxu0 0.0
  %11074 = vmatpush1.msra.mxu0 %v10988
  %11075 = vmatprep.subr.mxu0 0.0
  %11076 = vmatpush1.msra.mxu0 %v10989
  %11077 = vmatprep.subr.mxu0 0.0
  %11078 = vmatpush1.msra.mxu0 %v10990
  %11079 = vmatprep.subr.mxu0 0.0
  %11080 = vmatpush1.msra.mxu0 %v10991
  %11081 = vmatprep.subr.mxu0 0.0
  %11082 = vmatpush1.msra.mxu0 %v10992
  %11083 = vmatprep.subr.mxu0 0.0
  %11084 = vmatpush1.msra.mxu0 %v10993
  %11085 = vmatprep.subr.mxu0 0.0
  %11086 = vmatpush1.msra.mxu0 %v10994
  %11087 = vmatprep.subr.mxu0 0.0
  %11088 = vmatpush1.msra.mxu0 %v11047
  %11089 = vmatprep.subr.mxu0 0.0
  %11090 = vmatpush1.msra.mxu0 0.0
  %11091 = vmatprep.subr.mxu0 0.0
  %11092 = vmatpush1.msra.mxu0 0.0
  %11093 = vmatprep.subr.mxu0 0.0
  %11094 = vmatpush1.msra.mxu0 0.0
  %11095 = vmatprep.subr.mxu0 0.0
  %11096 = vmatpush1.msra.mxu0 0.0
  %11097 = vmatprep.subr.mxu0 0.0
  %11098 = vmatpush1.msra.mxu0 0.0
  %11099 = vmatprep.subr.mxu0 0.0
  %11100 = vmatpush1.msra.mxu0 0.0
  %11101 = vmatprep.subr.mxu0 0.0
  %11102 = vmatpush1.msra.mxu0 0.0
  %11103 = vmatprep.subr.mxu0 0.0
  %11104 = vmatpush1.msra.mxu0 0.0
  %11105 = vmatprep.subr.mxu0 0.0
  %11106 = vmatpush1.msra.mxu0 0.0
  %11107 = vmatprep.subr.mxu0 0.0
  %11108 = vmatpush1.msra.mxu0 0.0
  %11109 = vmatprep.subr.mxu0 0.0
  %11110 = vmatpush1.msra.mxu0 0.0
  %11111 = vmatprep.subr.mxu0 0.0
  %11112 = vmatpush1.msra.mxu0 0.0
  %11113 = vmatprep.mubr.f32.mxu0 %v11017
  %11114 = vmatmul.mubr.f32.gmra.mrb[0].mxu0 %v10996
  %v11115 = vpop.f32.mrb[0].mxu0
  %v11116 = vadd.f32 0.0, %v11115
  %v11117 = vpop.f32.mrb[0].mxu0
  %11118 = vmatprep.mubr.f32.mxu0 %v11020
  %11119 = vmatmul.mubr.f32.gmra.mrb[0].mxu0 %v10998
  %v11120 = vpop.f32.mrb[0].mxu0
  %v11121 = vadd.f32 0.0, %v11120
  %v11122 = vpop.f32.mrb[0].mxu0
  %11123 = vmatprep.mubr.f32.mxu0 %v11023
  %11124 = vmatmul.mubr.f32.gmra.mrb[0].mxu0 %v11000
  %v11125 = vpop.f32.mrb[0].mxu0
  %v11126 = vadd.f32 0.0, %v11125
  %v11127 = vpop.f32.mrb[0].mxu0
  %11128 = vmatprep.mubr.f32.mxu0 %v11026
  %11129 = vmatmul.mubr.f32.gmra.mrb[0].mxu0 %v11002
  %v11130 = vpop.f32.mrb[0].mxu0
  %v11131 = vadd.f32 0.0, %v11130
  %v11132 = vpop.f32.mrb[0].mxu0
  %11133 = vmatprep.mubr.f32.mxu0 %v11029
  %11134 = vmatmul.mubr.f32.gmra.mrb[0].mxu0 %v11004
  %v11135 = vpop.f32.mrb[0].mxu0
  %v11136 = vadd.f32 0.0, %v11135
  %v11137 = vpop.f32.mrb[0].mxu0
  %11138 = vmatprep.mubr.f32.mxu0 %v11032
  %11139 = vmatmul.mubr.f32.gmra.mrb[0].mxu0 %v11006
  %v11140 = vpop.f32.mrb[0].mxu0
  %v11141 = vadd.f32 0.0, %v11140
  %v11142 = vpop.f32.mrb[0].mxu0
  %11143 = vmatprep.mubr.f32.mxu0 %v11035
  %11144 = vmatmul.mubr.f32.gmra.mrb[0].mxu0 %v11008
  %v11145 = vpop.f32.mrb[0].mxu0
  %v11146 = vadd.f32 0.0, %v11145
  %v11147 = vpop.f32.mrb[0].mxu0
  %11148 = vmatprep.mubr.f32.mxu0 %v11038
  %11149 = vmatmul.mubr.f32.gmra.mrb[0].mxu0 %v11010
  %v11150 = vpop.f32.mrb[0].mxu0
  %v11151 = vadd.f32 0.0, %v11150
  %v11152 = vpop.f32.mrb[0].mxu0
  %11153 = vmatprep.mubr.f32.mxu0 %v11041
  %11154 = vmatmul.mubr.f32.gmra.mrb[0].mxu0 %v11012
  %v11155 = vpop.f32.mrb[0].mxu0
  %v11156 = vadd.f32 0.0, %v11155
  %v11157 = vpop.f32.mrb[0].mxu0
  %11158 = vmatprep.mubr.f32.mxu0 %v11044
  %11159 = vmatmul.mubr.f32.gmra.mrb[0].mxu0 %v11014
  %v11160 = vpop.f32.mrb[0].mxu0
  %v11161 = vadd.f32 0.0, %v11160
  %v11162 = vpop.f32.mrb[0].mxu0
  %11163 = vdwg.mxu0
  %v11164 = vld [vmem:[%s10] sm:$0xff]
  %v11165 = vld [vmem:[%s10 + $0x8] sm:$0xff]
  %v11166 = vld [vmem:[%s10 + $0x10] sm:$0xff]
  %v11167 = vld [vmem:[%s10 + $0x18] sm:$0xff]
  %v11168 = vld [vmem:[%s10 + $0x20] sm:$0xff]
  %v11169 = vld [vmem:[%s10 + $0x28] sm:$0xff]
  %v11170 = vld [vmem:[%s10 + $0x30] sm:$0x3]
  %v11171 = vld [vmem:[%s9] sm:$0xff]
  %v11172 = vld [vmem:[%s9 + $0x8] sm:$0xff]
  %v11173 = vld [vmem:[%s9 + $0x10] sm:$0xff]
  %v11174 = vld [vmem:[%s9 + $0x18] sm:$0xff]
  %v11175 = vld [vmem:[%s9 + $0x20] sm:$0xff]
  %v11176 = vld [vmem:[%s9 + $0x28] sm:$0xff]
  %v11177 = vld [vmem:[%s9 + $0x30] sm:$0x3]
  %v11179 = vsel %vm5248, %v11171, 0
  %v11182 = vsel %vm5248, %v11172, 0
  %v11185 = vsel %vm5248, %v11173, 0
  %v11188 = vsel %vm5248, %v11174, 0
  %v11191 = vsel %vm5248, %v11175, 0
  %v11194 = vsel %vm5248, %v11176, 0
  %v11197 = vsel %vm5248, %v11177, 0
  %11199 = vmatprep.subr.mxu0 0.0
  %11200 = vmatpush1.msra.mxu0 %v11116
  %11201 = vmatprep.subr.mxu0 0.0
  %11202 = vmatpush1.msra.mxu0 %v11121
  %11203 = vmatprep.subr.mxu0 0.0
  %11204 = vmatpush1.msra.mxu0 %v11126
  %11205 = vmatprep.subr.mxu0 0.0
  %11206 = vmatpush1.msra.mxu0 %v11131
  %11207 = vmatprep.subr.mxu0 0.0
  %11208 = vmatpush1.msra.mxu0 %v11136
  %11209 = vmatprep.subr.mxu0 0.0
  %11210 = vmatpush1.msra.mxu0 %v11141
  %11211 = vmatprep.subr.mxu0 0.0
  %11212 = vmatpush1.msra.mxu0 %v11146
  %11213 = vmatprep.subr.mxu0 0.0
  %11214 = vmatpush1.msra.mxu0 %v11151
  %11215 = vmatprep.subr.mxu0 0.0
  %11216 = vmatpush1.msra.mxu0 %v11156
  %11217 = vmatprep.subr.mxu0 0.0
  %11218 = vmatpush1.msra.mxu0 %v11161
  %11219 = vmatprep.subr.mxu0 0.0
  %11220 = vmatpush1.msra.mxu0 0.0
  %11221 = vmatprep.subr.mxu0 0.0
  %11222 = vmatpush1.msra.mxu0 0.0
  %11223 = vmatprep.subr.mxu0 0.0
  %11224 = vmatpush1.msra.mxu0 0.0
  %11225 = vmatprep.subr.mxu0 0.0
  %11226 = vmatpush1.msra.mxu0 0.0
  %11227 = vmatprep.subr.mxu0 0.0
  %11228 = vmatpush1.msra.mxu0 0.0
  %11229 = vmatprep.subr.mxu0 0.0
  %11230 = vmatpush1.msra.mxu0 0.0
  %11231 = vmatprep.subr.mxu0 0.0
  %11232 = vmatpush1.msra.mxu0 0.0
  %11233 = vmatprep.subr.mxu0 0.0
  %11234 = vmatpush1.msra.mxu0 0.0
  %11235 = vmatprep.subr.mxu0 0.0
  %11236 = vmatpush1.msra.mxu0 0.0
  %11237 = vmatprep.subr.mxu0 0.0
  %11238 = vmatpush1.msra.mxu0 0.0
  %11239 = vmatprep.subr.mxu0 0.0
  %11240 = vmatpush1.msra.mxu0 0.0
  %11241 = vmatprep.subr.mxu0 0.0
  %11242 = vmatpush1.msra.mxu0 0.0
  %11243 = vmatprep.subr.mxu0 0.0
  %11244 = vmatpush1.msra.mxu0 0.0
  %11245 = vmatprep.subr.mxu0 0.0
  %11246 = vmatpush1.msra.mxu0 0.0
  %11247 = vmatprep.subr.mxu0 0.0
  %11248 = vmatpush1.msra.mxu0 0.0
  %11249 = vmatprep.subr.mxu0 0.0
  %11250 = vmatpush1.msra.mxu0 0.0
  %11251 = vmatprep.subr.mxu0 0.0
  %11252 = vmatpush1.msra.mxu0 0.0
  %11253 = vmatprep.subr.mxu0 0.0
  %11254 = vmatpush1.msra.mxu0 0.0
  %11255 = vmatprep.subr.mxu0 0.0
  %11256 = vmatpush1.msra.mxu0 0.0
  %11257 = vmatprep.subr.mxu0 0.0
  %11258 = vmatpush1.msra.mxu0 0.0
  %11259 = vmatprep.subr.mxu0 0.0
  %11260 = vmatpush1.msra.mxu0 0.0
  %11261 = vmatprep.subr.mxu0 0.0
  %11262 = vmatpush1.msra.mxu0 0.0
  %11263 = vmatprep.mubr.f32.mxu0 0.0
  %11264 = vmatmul.mubr.f32.gmra.mrb[0].mxu0 %v11179
  %v11265 = vpop.f32.mrb[0].mxu0
  %v11266 = vadd.f32 0.0, %v11265
  %v11267 = vpop.f32.mrb[0].mxu0
  %11268 = vmatprep.mubr.f32.mxu0 0.0
  %11269 = vmatmul.mubr.f32.gmra.mrb[0].mxu0 %v11182
  %v11270 = vpop.f32.mrb[0].mxu0
  %v11271 = vadd.f32 0.0, %v11270
  %v11272 = vpop.f32.mrb[0].mxu0
  %11273 = vmatprep.mubr.f32.mxu0 0.0
  %11274 = vmatmul.mubr.f32.gmra.mrb[0].mxu0 %v11185
  %v11275 = vpop.f32.mrb[0].mxu0
  %v11276 = vadd.f32 0.0, %v11275
  %v11277 = vpop.f32.mrb[0].mxu0
  %11278 = vmatprep.mubr.f32.mxu0 0.0
  %11279 = vmatmul.mubr.f32.gmra.mrb[0].mxu0 %v11188
  %v11280 = vpop.f32.mrb[0].mxu0
  %v11281 = vadd.f32 0.0, %v11280
  %v11282 = vpop.f32.mrb[0].mxu0
  %11283 = vmatprep.mubr.f32.mxu0 0.0
  %11284 = vmatmul.mubr.f32.gmra.mrb[0].mxu0 %v11191
  %v11285 = vpop.f32.mrb[0].mxu0
  %v11286 = vadd.f32 0.0, %v11285
  %v11287 = vpop.f32.mrb[0].mxu0
  %11288 = vmatprep.mubr.f32.mxu0 0.0
  %11289 = vmatmul.mubr.f32.gmra.mrb[0].mxu0 %v11194
  %v11290 = vpop.f32.mrb[0].mxu0
  %v11291 = vadd.f32 0.0, %v11290
  %v11292 = vpop.f32.mrb[0].mxu0
  %11293 = vmatprep.mubr.f32.mxu0 0.0
  %11294 = vmatmul.mubr.f32.gmra.mrb[0].mxu0 %v11197
  %v11295 = vpop.f32.mrb[0].mxu0
  %v11296 = vadd.f32 0.0, %v11295
  %v11297 = vpop.f32.mrb[0].mxu0
  %11298 = vdwg.mxu0
  %v11299 = vadd.f32 %v11164, %v11266
  %v11300 = vadd.f32 %v11165, %v11271
  %v11301 = vadd.f32 %v11166, %v11276
  %v11302 = vadd.f32 %v11167, %v11281
  %v11303 = vadd.f32 %v11168, %v11286
  %v11304 = vadd.f32 %v11169, %v11291
  %v11305 = vadd.f32 %v11170, %v11296
  %v11306 = vld [vmem:[%s5377] sm:$0xff]
  %v11307 = vld [vmem:[%s5377 + $0x8] sm:$0xff]
  %v11308 = vld [vmem:[%s5377 + $0x10] sm:$0xff]
  %v11309 = vld [vmem:[%s5377 + $0x18] sm:$0xff]
  %v11310 = vld [vmem:[%s5377 + $0x20] sm:$0xff]
  %v11311 = vld [vmem:[%s5377 + $0x28] sm:$0xff]
  %v11312 = vld [vmem:[%s5377 + $0x30] sm:$0x3]
  %11323 = vrot.lane.b32.xlu0 %v11116, 127
  %v11324 = vpop.permute.xlu0 %11323
  %11325 = vrot.lane.b32.xlu0 %v11121, 127
  %v11326 = vpop.permute.xlu0 %11325
  %11327 = vrot.lane.b32.xlu0 %v11126, 127
  %v11328 = vpop.permute.xlu0 %11327
  %11329 = vrot.lane.b32.xlu0 %v11131, 127
  %v11330 = vpop.permute.xlu0 %11329
  %11331 = vrot.lane.b32.xlu0 %v11136, 127
  %v11332 = vpop.permute.xlu0 %11331
  %11333 = vrot.lane.b32.xlu0 %v11141, 127
  %v11334 = vpop.permute.xlu0 %11333
  %11335 = vrot.lane.b32.xlu0 %v11146, 127
  %v11336 = vpop.permute.xlu0 %11335
  %11337 = vrot.lane.b32.xlu0 %v11151, 127
  %v11338 = vpop.permute.xlu0 %11337
  %11339 = vrot.lane.b32.xlu0 %v11156, 127
  %v11340 = vpop.permute.xlu0 %11339
  %11341 = vrot.lane.b32.xlu0 %v11161, 127
  %v11342 = vpop.permute.xlu0 %11341
  %v11354 = vsel %vm5248, %v11306, 0
  %v11357 = vsel %vm5248, %v11307, 0
  %v11360 = vsel %vm5248, %v11308, 0
  %v11363 = vsel %vm5248, %v11309, 0
  %v11366 = vsel %vm5248, %v11310, 0
  %v11369 = vsel %vm5248, %v11311, 0
  %v11372 = vsel %vm5248, %v11312, 0
  %11374 = vmatprep.subr.mxu0 0.0
  %11375 = vmatpush1.msra.mxu0 %v11324
  %11376 = vmatprep.subr.mxu0 0.0
  %11377 = vmatpush1.msra.mxu0 %v11326
  %11378 = vmatprep.subr.mxu0 0.0
  %11379 = vmatpush1.msra.mxu0 %v11328
  %11380 = vmatprep.subr.mxu0 0.0
  %11381 = vmatpush1.msra.mxu0 %v11330
  %11382 = vmatprep.subr.mxu0 0.0
  %11383 = vmatpush1.msra.mxu0 %v11332
  %11384 = vmatprep.subr.mxu0 0.0
  %11385 = vmatpush1.msra.mxu0 %v11334
  %11386 = vmatprep.subr.mxu0 0.0
  %11387 = vmatpush1.msra.mxu0 %v11336
  %11388 = vmatprep.subr.mxu0 0.0
  %11389 = vmatpush1.msra.mxu0 %v11338
  %11390 = vmatprep.subr.mxu0 0.0
  %11391 = vmatpush1.msra.mxu0 %v11340
  %11392 = vmatprep.subr.mxu0 0.0
  %11393 = vmatpush1.msra.mxu0 %v11342
  %11394 = vmatprep.subr.mxu0 0.0
  %11395 = vmatpush1.msra.mxu0 0.0
  %11396 = vmatprep.subr.mxu0 0.0
  %11397 = vmatpush1.msra.mxu0 0.0
  %11398 = vmatprep.subr.mxu0 0.0
  %11399 = vmatpush1.msra.mxu0 0.0
  %11400 = vmatprep.subr.mxu0 0.0
  %11401 = vmatpush1.msra.mxu0 0.0
  %11402 = vmatprep.subr.mxu0 0.0
  %11403 = vmatpush1.msra.mxu0 0.0
  %11404 = vmatprep.subr.mxu0 0.0
  %11405 = vmatpush1.msra.mxu0 0.0
  %11406 = vmatprep.subr.mxu0 0.0
  %11407 = vmatpush1.msra.mxu0 0.0
  %11408 = vmatprep.subr.mxu0 0.0
  %11409 = vmatpush1.msra.mxu0 0.0
  %11410 = vmatprep.subr.mxu0 0.0
  %11411 = vmatpush1.msra.mxu0 0.0
  %11412 = vmatprep.subr.mxu0 0.0
  %11413 = vmatpush1.msra.mxu0 0.0
  %11414 = vmatprep.subr.mxu0 0.0
  %11415 = vmatpush1.msra.mxu0 0.0
  %11416 = vmatprep.subr.mxu0 0.0
  %11417 = vmatpush1.msra.mxu0 0.0
  %11418 = vmatprep.subr.mxu0 0.0
  %11419 = vmatpush1.msra.mxu0 0.0
  %11420 = vmatprep.subr.mxu0 0.0
  %11421 = vmatpush1.msra.mxu0 0.0
  %11422 = vmatprep.subr.mxu0 0.0
  %11423 = vmatpush1.msra.mxu0 0.0
  %11424 = vmatprep.subr.mxu0 0.0
  %11425 = vmatpush1.msra.mxu0 0.0
  %11426 = vmatprep.subr.mxu0 0.0
  %11427 = vmatpush1.msra.mxu0 0.0
  %11428 = vmatprep.subr.mxu0 0.0
  %11429 = vmatpush1.msra.mxu0 0.0
  %11430 = vmatprep.subr.mxu0 0.0
  %11431 = vmatpush1.msra.mxu0 0.0
  %11432 = vmatprep.subr.mxu0 0.0
  %11433 = vmatpush1.msra.mxu0 0.0
  %11434 = vmatprep.subr.mxu0 0.0
  %11435 = vmatpush1.msra.mxu0 0.0
  %11436 = vmatprep.subr.mxu0 0.0
  %11437 = vmatpush1.msra.mxu0 0.0
  %11438 = vmatprep.mubr.f32.mxu0 0.0
  %11439 = vmatmul.mubr.f32.gmra.mrb[0].mxu0 %v11354
  %v11440 = vpop.f32.mrb[0].mxu0
  %v11441 = vadd.f32 0.0, %v11440
  %v11442 = vpop.f32.mrb[0].mxu0
  %11443 = vmatprep.mubr.f32.mxu0 0.0
  %11444 = vmatmul.mubr.f32.gmra.mrb[0].mxu0 %v11357
  %v11445 = vpop.f32.mrb[0].mxu0
  %v11446 = vadd.f32 0.0, %v11445
  %v11447 = vpop.f32.mrb[0].mxu0
  %11448 = vmatprep.mubr.f32.mxu0 0.0
  %11449 = vmatmul.mubr.f32.gmra.mrb[0].mxu0 %v11360
  %v11450 = vpop.f32.mrb[0].mxu0
  %v11451 = vadd.f32 0.0, %v11450
  %v11452 = vpop.f32.mrb[0].mxu0
  %11453 = vmatprep.mubr.f32.mxu0 0.0
  %11454 = vmatmul.mubr.f32.gmra.mrb[0].mxu0 %v11363
  %v11455 = vpop.f32.mrb[0].mxu0
  %v11456 = vadd.f32 0.0, %v11455
  %v11457 = vpop.f32.mrb[0].mxu0
  %11458 = vmatprep.mubr.f32.mxu0 0.0
  %11459 = vmatmul.mubr.f32.gmra.mrb[0].mxu0 %v11366
  %v11460 = vpop.f32.mrb[0].mxu0
  %v11461 = vadd.f32 0.0, %v11460
  %v11462 = vpop.f32.mrb[0].mxu0
  %11463 = vmatprep.mubr.f32.mxu0 0.0
  %11464 = vmatmul.mubr.f32.gmra.mrb[0].mxu0 %v11369
  %v11465 = vpop.f32.mrb[0].mxu0
  %v11466 = vadd.f32 0.0, %v11465
  %v11467 = vpop.f32.mrb[0].mxu0
  %11468 = vmatprep.mubr.f32.mxu0 0.0
  %11469 = vmatmul.mubr.f32.gmra.mrb[0].mxu0 %v11372
  %v11470 = vpop.f32.mrb[0].mxu0
  %v11471 = vadd.f32 0.0, %v11470
  %v11472 = vpop.f32.mrb[0].mxu0
  %11473 = vdwg.mxu0
  %v11474 = vadd.f32 %v11299, %v11441
  %v11475 = vadd.f32 %v11300, %v11446
  %v11476 = vadd.f32 %v11301, %v11451
  %v11477 = vadd.f32 %v11302, %v11456
  %v11478 = vadd.f32 %v11303, %v11461
  %v11479 = vadd.f32 %v11304, %v11466
  %v11480 = vadd.f32 %v11305, %v11471
  %v11481 = vld [vmem:[%s5553] sm:$0xff]
  %v11482 = vld [vmem:[%s5553 + $0x8] sm:$0xff]
  %v11483 = vld [vmem:[%s5553 + $0x10] sm:$0xff]
  %v11484 = vld [vmem:[%s5553 + $0x18] sm:$0xff]
  %v11485 = vld [vmem:[%s5553 + $0x20] sm:$0xff]
  %v11486 = vld [vmem:[%s5553 + $0x28] sm:$0xff]
  %v11487 = vld [vmem:[%s5553 + $0x30] sm:$0x3]
  %11488 = vrot.lane.b32.xlu0 %v11116, 126
  %v11489 = vpop.permute.xlu0 %11488
  %11490 = vrot.lane.b32.xlu0 %v11121, 126
  %v11491 = vpop.permute.xlu0 %11490
  %11492 = vrot.lane.b32.xlu0 %v11126, 126
  %v11493 = vpop.permute.xlu0 %11492
  %11494 = vrot.lane.b32.xlu0 %v11131, 126
  %v11495 = vpop.permute.xlu0 %11494
  %11496 = vrot.lane.b32.xlu0 %v11136, 126
  %v11497 = vpop.permute.xlu0 %11496
  %11498 = vrot.lane.b32.xlu0 %v11141, 126
  %v11499 = vpop.permute.xlu0 %11498
  %11500 = vrot.lane.b32.xlu0 %v11146, 126
  %v11501 = vpop.permute.xlu0 %11500
  %11502 = vrot.lane.b32.xlu0 %v11151, 126
  %v11503 = vpop.permute.xlu0 %11502
  %11504 = vrot.lane.b32.xlu0 %v11156, 126
  %v11505 = vpop.permute.xlu0 %11504
  %11506 = vrot.lane.b32.xlu0 %v11161, 126
  %v11507 = vpop.permute.xlu0 %11506
  %v11519 = vsel %vm5248, %v11481, 0
  %v11522 = vsel %vm5248, %v11482, 0
  %v11525 = vsel %vm5248, %v11483, 0
  %v11528 = vsel %vm5248, %v11484, 0
  %v11531 = vsel %vm5248, %v11485, 0
  %v11534 = vsel %vm5248, %v11486, 0
  %v11537 = vsel %vm5248, %v11487, 0
  %11539 = vmatprep.subr.mxu0 0.0
  %11540 = vmatpush1.msra.mxu0 %v11489
  %11541 = vmatprep.subr.mxu0 0.0
  %11542 = vmatpush1.msra.mxu0 %v11491
  %11543 = vmatprep.subr.mxu0 0.0
  %11544 = vmatpush1.msra.mxu0 %v11493
  %11545 = vmatprep.subr.mxu0 0.0
  %11546 = vmatpush1.msra.mxu0 %v11495
  %11547 = vmatprep.subr.mxu0 0.0
  %11548 = vmatpush1.msra.mxu0 %v11497
  %11549 = vmatprep.subr.mxu0 0.0
  %11550 = vmatpush1.msra.mxu0 %v11499
  %11551 = vmatprep.subr.mxu0 0.0
  %11552 = vmatpush1.msra.mxu0 %v11501
  %11553 = vmatprep.subr.mxu0 0.0
  %11554 = vmatpush1.msra.mxu0 %v11503
  %11555 = vmatprep.subr.mxu0 0.0
  %11556 = vmatpush1.msra.mxu0 %v11505
  %11557 = vmatprep.subr.mxu0 0.0
  %11558 = vmatpush1.msra.mxu0 %v11507
  %11559 = vmatprep.subr.mxu0 0.0
  %11560 = vmatpush1.msra.mxu0 0.0
  %11561 = vmatprep.subr.mxu0 0.0
  %11562 = vmatpush1.msra.mxu0 0.0
  %11563 = vmatprep.subr.mxu0 0.0
  %11564 = vmatpush1.msra.mxu0 0.0
  %11565 = vmatprep.subr.mxu0 0.0
  %11566 = vmatpush1.msra.mxu0 0.0
  %11567 = vmatprep.subr.mxu0 0.0
  %11568 = vmatpush1.msra.mxu0 0.0
  %11569 = vmatprep.subr.mxu0 0.0
  %11570 = vmatpush1.msra.mxu0 0.0
  %11571 = vmatprep.subr.mxu0 0.0
  %11572 = vmatpush1.msra.mxu0 0.0
  %11573 = vmatprep.subr.mxu0 0.0
  %11574 = vmatpush1.msra.mxu0 0.0
  %11575 = vmatprep.subr.mxu0 0.0
  %11576 = vmatpush1.msra.mxu0 0.0
  %11577 = vmatprep.subr.mxu0 0.0
  %11578 = vmatpush1.msra.mxu0 0.0
  %11579 = vmatprep.subr.mxu0 0.0
  %11580 = vmatpush1.msra.mxu0 0.0
  %11581 = vmatprep.subr.mxu0 0.0
  %11582 = vmatpush1.msra.mxu0 0.0
  %11583 = vmatprep.subr.mxu0 0.0
  %11584 = vmatpush1.msra.mxu0 0.0
  %11585 = vmatprep.subr.mxu0 0.0
  %11586 = vmatpush1.msra.mxu0 0.0
  %11587 = vmatprep.subr.mxu0 0.0
  %11588 = vmatpush1.msra.mxu0 0.0
  %11589 = vmatprep.subr.mxu0 0.0
  %11590 = vmatpush1.msra.mxu0 0.0
  %11591 = vmatprep.subr.mxu0 0.0
  %11592 = vmatpush1.msra.mxu0 0.0
  %11593 = vmatprep.subr.mxu0 0.0
  %11594 = vmatpush1.msra.mxu0 0.0
  %11595 = vmatprep.subr.mxu0 0.0
  %11596 = vmatpush1.msra.mxu0 0.0
  %11597 = vmatprep.subr.mxu0 0.0
  %11598 = vmatpush1.msra.mxu0 0.0
  %11599 = vmatprep.subr.mxu0 0.0
  %11600 = vmatpush1.msra.mxu0 0.0
  %11601 = vmatprep.subr.mxu0 0.0
  %11602 = vmatpush1.msra.mxu0 0.0
  %11603 = vmatprep.mubr.f32.mxu0 0.0
  %11604 = vmatmul.mubr.f32.gmra.mrb[0].mxu0 %v11519
  %v11605 = vpop.f32.mrb[0].mxu0
  %v11606 = vadd.f32 0.0, %v11605
  %v11607 = vpop.f32.mrb[0].mxu0
  %11608 = vmatprep.mubr.f32.mxu0 0.0
  %11609 = vmatmul.mubr.f32.gmra.mrb[0].mxu0 %v11522
  %v11610 = vpop.f32.mrb[0].mxu0
  %v11611 = vadd.f32 0.0, %v11610
  %v11612 = vpop.f32.mrb[0].mxu0
  %11613 = vmatprep.mubr.f32.mxu0 0.0
  %11614 = vmatmul.mubr.f32.gmra.mrb[0].mxu0 %v11525
  %v11615 = vpop.f32.mrb[0].mxu0
  %v11616 = vadd.f32 0.0, %v11615
  %v11617 = vpop.f32.mrb[0].mxu0
  %11618 = vmatprep.mubr.f32.mxu0 0.0
  %11619 = vmatmul.mubr.f32.gmra.mrb[0].mxu0 %v11528
  %v11620 = vpop.f32.mrb[0].mxu0
  %v11621 = vadd.f32 0.0, %v11620
  %v11622 = vpop.f32.mrb[0].mxu0
  %11623 = vmatprep.mubr.f32.mxu0 0.0
  %11624 = vmatmul.mubr.f32.gmra.mrb[0].mxu0 %v11531
  %v11625 = vpop.f32.mrb[0].mxu0
  %v11626 = vadd.f32 0.0, %v11625
  %v11627 = vpop.f32.mrb[0].mxu0
  %11628 = vmatprep.mubr.f32.mxu0 0.0
  %11629 = vmatmul.mubr.f32.gmra.mrb[0].mxu0 %v11534
  %v11630 = vpop.f32.mrb[0].mxu0
  %v11631 = vadd.f32 0.0, %v11630
  %v11632 = vpop.f32.mrb[0].mxu0
  %11633 = vmatprep.mubr.f32.mxu0 0.0
  %11634 = vmatmul.mubr.f32.gmra.mrb[0].mxu0 %v11537
  %v11635 = vpop.f32.mrb[0].mxu0
  %v11636 = vadd.f32 0.0, %v11635
  %v11637 = vpop.f32.mrb[0].mxu0
  %11638 = vdwg.mxu0
  %v11639 = vadd.f32 %v11474, %v11606
  %v11640 = vadd.f32 %v11475, %v11611
  %v11641 = vadd.f32 %v11476, %v11616
  %v11642 = vadd.f32 %v11477, %v11621
  %v11643 = vadd.f32 %v11478, %v11626
  %v11644 = vadd.f32 %v11479, %v11631
  %v11645 = vadd.f32 %v11480, %v11636
  %v11646 = vld [vmem:[%s5719] sm:$0xff]
  %v11647 = vld [vmem:[%s5719 + $0x8] sm:$0xff]
  %v11648 = vld [vmem:[%s5719 + $0x10] sm:$0xff]
  %v11649 = vld [vmem:[%s5719 + $0x18] sm:$0xff]
  %v11650 = vld [vmem:[%s5719 + $0x20] sm:$0xff]
  %v11651 = vld [vmem:[%s5719 + $0x28] sm:$0xff]
  %v11652 = vld [vmem:[%s5719 + $0x30] sm:$0x3]
  %11653 = vrot.lane.b32.xlu0 %v11116, 125
  %v11654 = vpop.permute.xlu0 %11653
  %11655 = vrot.lane.b32.xlu0 %v11121, 125
  %v11656 = vpop.permute.xlu0 %11655
  %11657 = vrot.lane.b32.xlu0 %v11126, 125
  %v11658 = vpop.permute.xlu0 %11657
  %11659 = vrot.lane.b32.xlu0 %v11131, 125
  %v11660 = vpop.permute.xlu0 %11659
  %11661 = vrot.lane.b32.xlu0 %v11136, 125
  %v11662 = vpop.permute.xlu0 %11661
  %11663 = vrot.lane.b32.xlu0 %v11141, 125
  %v11664 = vpop.permute.xlu0 %11663
  %11665 = vrot.lane.b32.xlu0 %v11146, 125
  %v11666 = vpop.permute.xlu0 %11665
  %11667 = vrot.lane.b32.xlu0 %v11151, 125
  %v11668 = vpop.permute.xlu0 %11667
  %11669 = vrot.lane.b32.xlu0 %v11156, 125
  %v11670 = vpop.permute.xlu0 %11669
  %11671 = vrot.lane.b32.xlu0 %v11161, 125
  %v11672 = vpop.permute.xlu0 %11671
  %v11684 = vsel %vm5248, %v11646, 0
  %v11687 = vsel %vm5248, %v11647, 0
  %v11690 = vsel %vm5248, %v11648, 0
  %v11693 = vsel %vm5248, %v11649, 0
  %v11696 = vsel %vm5248, %v11650, 0
  %v11699 = vsel %vm5248, %v11651, 0
  %v11702 = vsel %vm5248, %v11652, 0
  %11704 = vmatprep.subr.mxu0 0.0
  %11705 = vmatpush1.msra.mxu0 %v11654
  %11706 = vmatprep.subr.mxu0 0.0
  %11707 = vmatpush1.msra.mxu0 %v11656
  %11708 = vmatprep.subr.mxu0 0.0
  %11709 = vmatpush1.msra.mxu0 %v11658
  %11710 = vmatprep.subr.mxu0 0.0
  %11711 = vmatpush1.msra.mxu0 %v11660
  %11712 = vmatprep.subr.mxu0 0.0
  %11713 = vmatpush1.msra.mxu0 %v11662
  %11714 = vmatprep.subr.mxu0 0.0
  %11715 = vmatpush1.msra.mxu0 %v11664
  %11716 = vmatprep.subr.mxu0 0.0
  %11717 = vmatpush1.msra.mxu0 %v11666
  %11718 = vmatprep.subr.mxu0 0.0
  %11719 = vmatpush1.msra.mxu0 %v11668
  %11720 = vmatprep.subr.mxu0 0.0
  %11721 = vmatpush1.msra.mxu0 %v11670
  %11722 = vmatprep.subr.mxu0 0.0
  %11723 = vmatpush1.msra.mxu0 %v11672
  %11724 = vmatprep.subr.mxu0 0.0
  %11725 = vmatpush1.msra.mxu0 0.0
  %11726 = vmatprep.subr.mxu0 0.0
  %11727 = vmatpush1.msra.mxu0 0.0
  %11728 = vmatprep.subr.mxu0 0.0
  %11729 = vmatpush1.msra.mxu0 0.0
  %11730 = vmatprep.subr.mxu0 0.0
  %11731 = vmatpush1.msra.mxu0 0.0
  %11732 = vmatprep.subr.mxu0 0.0
  %11733 = vmatpush1.msra.mxu0 0.0
  %11734 = vmatprep.subr.mxu0 0.0
  %11735 = vmatpush1.msra.mxu0 0.0
  %11736 = vmatprep.subr.mxu0 0.0
  %11737 = vmatpush1.msra.mxu0 0.0
  %11738 = vmatprep.subr.mxu0 0.0
  %11739 = vmatpush1.msra.mxu0 0.0
  %11740 = vmatprep.subr.mxu0 0.0
  %11741 = vmatpush1.msra.mxu0 0.0
  %11742 = vmatprep.subr.mxu0 0.0
  %11743 = vmatpush1.msra.mxu0 0.0
  %11744 = vmatprep.subr.mxu0 0.0
  %11745 = vmatpush1.msra.mxu0 0.0
  %11746 = vmatprep.subr.mxu0 0.0
  %11747 = vmatpush1.msra.mxu0 0.0
  %11748 = vmatprep.subr.mxu0 0.0
  %11749 = vmatpush1.msra.mxu0 0.0
  %11750 = vmatprep.subr.mxu0 0.0
  %11751 = vmatpush1.msra.mxu0 0.0
  %11752 = vmatprep.subr.mxu0 0.0
  %11753 = vmatpush1.msra.mxu0 0.0
  %11754 = vmatprep.subr.mxu0 0.0
  %11755 = vmatpush1.msra.mxu0 0.0
  %11756 = vmatprep.subr.mxu0 0.0
  %11757 = vmatpush1.msra.mxu0 0.0
  %11758 = vmatprep.subr.mxu0 0.0
  %11759 = vmatpush1.msra.mxu0 0.0
  %11760 = vmatprep.subr.mxu0 0.0
  %11761 = vmatpush1.msra.mxu0 0.0
  %11762 = vmatprep.subr.mxu0 0.0
  %11763 = vmatpush1.msra.mxu0 0.0
  %11764 = vmatprep.subr.mxu0 0.0
  %11765 = vmatpush1.msra.mxu0 0.0
  %11766 = vmatprep.subr.mxu0 0.0
  %11767 = vmatpush1.msra.mxu0 0.0
  %11768 = vmatprep.mubr.f32.mxu0 0.0
  %11769 = vmatmul.mubr.f32.gmra.mrb[0].mxu0 %v11684
  %v11770 = vpop.f32.mrb[0].mxu0
  %v11771 = vadd.f32 0.0, %v11770
  %v11772 = vpop.f32.mrb[0].mxu0
  %11773 = vmatprep.mubr.f32.mxu0 0.0
  %11774 = vmatmul.mubr.f32.gmra.mrb[0].mxu0 %v11687
  %v11775 = vpop.f32.mrb[0].mxu0
  %v11776 = vadd.f32 0.0, %v11775
  %v11777 = vpop.f32.mrb[0].mxu0
  %11778 = vmatprep.mubr.f32.mxu0 0.0
  %11779 = vmatmul.mubr.f32.gmra.mrb[0].mxu0 %v11690
  %v11780 = vpop.f32.mrb[0].mxu0
  %v11781 = vadd.f32 0.0, %v11780
  %v11782 = vpop.f32.mrb[0].mxu0
  %11783 = vmatprep.mubr.f32.mxu0 0.0
  %11784 = vmatmul.mubr.f32.gmra.mrb[0].mxu0 %v11693
  %v11785 = vpop.f32.mrb[0].mxu0
  %v11786 = vadd.f32 0.0, %v11785
  %v11787 = vpop.f32.mrb[0].mxu0
  %11788 = vmatprep.mubr.f32.mxu0 0.0
  %11789 = vmatmul.mubr.f32.gmra.mrb[0].mxu0 %v11696
  %v11790 = vpop.f32.mrb[0].mxu0
  %v11791 = vadd.f32 0.0, %v11790
  %v11792 = vpop.f32.mrb[0].mxu0
  %11793 = vmatprep.mubr.f32.mxu0 0.0
  %11794 = vmatmul.mubr.f32.gmra.mrb[0].mxu0 %v11699
  %v11795 = vpop.f32.mrb[0].mxu0
  %v11796 = vadd.f32 0.0, %v11795
  %v11797 = vpop.f32.mrb[0].mxu0
  %11798 = vmatprep.mubr.f32.mxu0 0.0
  %11799 = vmatmul.mubr.f32.gmra.mrb[0].mxu0 %v11702
  %v11800 = vpop.f32.mrb[0].mxu0
  %v11801 = vadd.f32 0.0, %v11800
  %v11802 = vpop.f32.mrb[0].mxu0
  %11803 = vdwg.mxu0
  %v11804 = vadd.f32 %v11639, %v11771
  %v11805 = vadd.f32 %v11640, %v11776
  %v11806 = vadd.f32 %v11641, %v11781
  %v11807 = vadd.f32 %v11642, %v11786
  %v11808 = vadd.f32 %v11643, %v11791
  %v11809 = vadd.f32 %v11644, %v11796
  %v11810 = vadd.f32 %v11645, %v11801
  %v11811 = vmax.f32 %v11804, 0.0
  %v11812 = vmax.f32 %v11805, 0.0
  %v11813 = vmax.f32 %v11806, 0.0
  %v11814 = vmax.f32 %v11807, 0.0
  %v11815 = vmax.f32 %v11808, 0.0
  %v11816 = vmax.f32 %v11809, 0.0
  %v11817 = vmax.f32 %v11810, 0.0
  %v11818 = vld [vmem:[%s11] sm:$0xff]
  %v11819 = vld [vmem:[%s11 + $0x8] sm:$0x3]
  %v11820 = vld [vmem:[%s12] sm:$0xff]
  %v11821 = vld [vmem:[%s12 + $0x8] sm:$0x3]
  %v11823 = vsel %vm5896, %v11818, 0
  %v11826 = vsel %vm5896, %v11819, 0
  %v11829 = vsel %vm5903, %v11817, 0
  %11831 = vmatprep.subr.mxu0 0.0
  %11832 = vmatpush1.msra.mxu0 %v11811
  %11833 = vmatprep.subr.mxu0 0.0
  %11834 = vmatpush1.msra.mxu0 %v11812
  %11835 = vmatprep.subr.mxu0 0.0
  %11836 = vmatpush1.msra.mxu0 %v11813
  %11837 = vmatprep.subr.mxu0 0.0
  %11838 = vmatpush1.msra.mxu0 %v11814
  %11839 = vmatprep.subr.mxu0 0.0
  %11840 = vmatpush1.msra.mxu0 %v11815
  %11841 = vmatprep.subr.mxu0 0.0
  %11842 = vmatpush1.msra.mxu0 %v11816
  %11843 = vmatprep.subr.mxu0 0.0
  %11844 = vmatpush1.msra.mxu0 %v11829
  %11845 = vmatprep.subr.mxu0 0.0
  %11846 = vmatpush1.msra.mxu0 0.0
  %11847 = vmatprep.subr.mxu0 0.0
  %11848 = vmatpush1.msra.mxu0 0.0
  %11849 = vmatprep.subr.mxu0 0.0
  %11850 = vmatpush1.msra.mxu0 0.0
  %11851 = vmatprep.subr.mxu0 0.0
  %11852 = vmatpush1.msra.mxu0 0.0
  %11853 = vmatprep.subr.mxu0 0.0
  %11854 = vmatpush1.msra.mxu0 0.0
  %11855 = vmatprep.subr.mxu0 0.0
  %11856 = vmatpush1.msra.mxu0 0.0
  %11857 = vmatprep.subr.mxu0 0.0
  %11858 = vmatpush1.msra.mxu0 0.0
  %11859 = vmatprep.subr.mxu0 0.0
  %11860 = vmatpush1.msra.mxu0 0.0
  %11861 = vmatprep.subr.mxu0 0.0
  %11862 = vmatpush1.msra.mxu0 0.0
  %11863 = vmatprep.subr.mxu0 0.0
  %11864 = vmatpush1.msra.mxu0 0.0
  %11865 = vmatprep.subr.mxu0 0.0
  %11866 = vmatpush1.msra.mxu0 0.0
  %11867 = vmatprep.subr.mxu0 0.0
  %11868 = vmatpush1.msra.mxu0 0.0
  %11869 = vmatprep.subr.mxu0 0.0
  %11870 = vmatpush1.msra.mxu0 0.0
  %11871 = vmatprep.subr.mxu0 0.0
  %11872 = vmatpush1.msra.mxu0 0.0
  %11873 = vmatprep.subr.mxu0 0.0
  %11874 = vmatpush1.msra.mxu0 0.0
  %11875 = vmatprep.subr.mxu0 0.0
  %11876 = vmatpush1.msra.mxu0 0.0
  %11877 = vmatprep.subr.mxu0 0.0
  %11878 = vmatpush1.msra.mxu0 0.0
  %11879 = vmatprep.subr.mxu0 0.0
  %11880 = vmatpush1.msra.mxu0 0.0
  %11881 = vmatprep.subr.mxu0 0.0
  %11882 = vmatpush1.msra.mxu0 0.0
  %11883 = vmatprep.subr.mxu0 0.0
  %11884 = vmatpush1.msra.mxu0 0.0
  %11885 = vmatprep.subr.mxu0 0.0
  %11886 = vmatpush1.msra.mxu0 0.0
  %11887 = vmatprep.subr.mxu0 0.0
  %11888 = vmatpush1.msra.mxu0 0.0
  %11889 = vmatprep.subr.mxu0 0.0
  %11890 = vmatpush1.msra.mxu0 0.0
  %11891 = vmatprep.subr.mxu0 0.0
  %11892 = vmatpush1.msra.mxu0 0.0
  %11893 = vmatprep.subr.mxu0 0.0
  %11894 = vmatpush1.msra.mxu0 0.0
  %11895 = vmatprep.mubr.f32.mxu0 0.0
  %11896 = vmatmul.mubr.f32.gmra.mrb[0].mxu0 %v11823
  %v11897 = vpop.f32.mrb[0].mxu0
  %v11898 = vadd.f32 %v11820, %v11897
  %v11899 = vpop.f32.mrb[0].mxu0
  %11900 = vmatprep.mubr.f32.mxu0 0.0
  %11901 = vmatmul.mubr.f32.gmra.mrb[0].mxu0 %v11826
  %v11902 = vpop.f32.mrb[0].mxu0
  %v11903 = vadd.f32 %v11821, %v11902
  %v11904 = vpop.f32.mrb[0].mxu0
  %11905 = vdwg.mxu0
  %v11906 = vmax.f32 %v11898, 0.0
  %v11907 = vmax.f32 %v11903, 0.0
  %s11908 = scalar_lea.vmem %s13, 16
  %11909 = vst.msk [vmem:[%s11908] sm:$0xff] %vm5984, %v11906
  %11910 = vst.msk [vmem:[%s11908 + $0x8] sm:$0x3] %vm5986, %v11907
  // Predicated region
  $region54: #{mnist_cnn_forward.1} parent=0 // pred_check
    _
  $region55: #{mnist_cnn_forward.1} parent=0 // pred_check_branch
    %11912 = sbr.rel (0) target = $region57
  $region56: #{mnist_cnn_forward.1} parent=0 // pred_region
    _
  $region57: #{mnist_cnn_forward.1} parent=0 // pred_fallthru
    _
  // Predicated region
  $region58: #{mnist_cnn_forward.1} parent=0 // pred_check
    _
  $region59: #{mnist_cnn_forward.1} parent=0 // pred_check_branch
    %11914 = sbr.rel (0) target = $region61
  $region60: #{mnist_cnn_forward.1} parent=0 // pred_region
    _
  $region61: #{mnist_cnn_forward.1} parent=0 // pred_fallthru
    _

</llo_original>
